<compile_context>
chip_gen: v7x
topology: tpu7x:2x2x1
jax: 0.10.0
libtpu: 0.0.40
codegen_flags: <defaults>
</compile_context>

<pallas_src>
import functools

import numpy as np
import jax
import jax.numpy as jnp
from jax.experimental import pallas as pl
from jax.experimental.pallas import tpu as pltpu


BLOCK_CFG = [
    # (inp, oup, stride, expand_ratio)
    (16, 16, 1, 2),
    (16, 16, 1, 2),
    (16, 32, 2, 2),
    (32, 32, 1, 2),
    (32, 64, 2, 2),
    (64, 64, 1, 2),
    (64, 128, 1, 1),
    (128, 128, 1, 1),
]
LAST_CHANNEL = 128


def _round_up(a, b):
    return -(-a // b) * b


# --------------------------------------------------------------------------- #
# Pallas kernels
# --------------------------------------------------------------------------- #
def _stem_matmul_kernel(p_ref, w_ref, b_ref, o_ref):
    """(TILE_M, 49) @ (49, 16) + bias, ReLU6.  BN scale folded into w."""
    y = jnp.dot(p_ref[...].astype(jnp.bfloat16), w_ref[...],
                preferred_element_type=jnp.float32)
    o_ref[...] = jnp.clip(y + b_ref[...], 0.0, 6.0)


def _block_s1_kernel(x_ref, m_ref, w1_ref, b1_ref, wd_ref, bd_ref, w2_ref, b2_ref,
                     o_ref, hid_ref, *, has_expand, use_res, final_relu, fuse_mean,
                     W, Ho, Wo):
    """Fused stride-1 inverted-residual block for one batch element.

    x_ref   : (1, M, Cin)  flattened NHWC rows (M = H*W)
    m_ref   : (9, M, 1)    exact depthwise border masks
    w1/b1   : expansion 1x1 (bf16 / f32); unread when has_expand=False
    wd/bd   : depthwise taps (9, 1, hidden) f32 + bias
    w2/b2   : projection 1x1 (bf16 / f32)
    o_ref   : (1, M, Cout)  or (1, Wo, Cout) when fuse_mean
    hid_ref : VMEM scratch (pad_top + M + W + 1, hidden) -- zero-padded hidden act.
    """
    M = Ho * Wo
    pad_top = _round_up(W + 1, 8)

    x2 = x_ref[0]                                               # (M, Cin) f32
    if has_expand:
        hid = jnp.dot(x2.astype(jnp.bfloat16), w1_ref[...],
                      preferred_element_type=jnp.float32)
        hid = jnp.maximum(hid + b1_ref[...], 0.0)
    else:
        hid = x2

    # Pads must be finite zeros: masked taps still read them (0 * NaN would poison).
    hid_ref[...] = jnp.zeros(hid_ref.shape, jnp.float32)
    hid_ref[pad_top:pad_top + M, :] = hid

    # Depthwise 3x3 = 9 shifted VMEM reads of the flat padded hidden + border masks.
    partials = []
    for t in range(9):
        dy, dx = divmod(t, 3)
        off = (dy - 1) * W + (dx - 1)
        v = hid_ref[pad_top + off:pad_top + off + M, :]          # (M, hidden)
        c = v * wd_ref[t]
        if t != 4:                                               # center tap: no mask
            c = c * m_ref[t]
        partials.append(c)
    acc = ((partials[0] + partials[1] + partials[2]) +
           (partials[3] + partials[4] + partials[5]) +
           (partials[6] + partials[7] + partials[8]))
    dw = jnp.maximum(acc + bd_ref[...], 0.0)

    y = jnp.dot(dw.astype(jnp.bfloat16), w2_ref[...],
                preferred_element_type=jnp.float32) + b2_ref[...]
    if use_res:
        y = y + x2
    if final_relu:
        y = jnp.maximum(y, 0.0)
    if fuse_mean:
        # mean over the frequency (H) axis fused into the last block.
        s = y[0:Wo, :]
        for hh in range(1, Ho):
            s = s + y[hh * Wo:(hh + 1) * Wo, :]
        o_ref[0] = s * (1.0 / Ho)
    else:
        o_ref[0] = y


def _block_s2_kernel(xee_ref, xeo_ref, xoe_ref, xoo_ref, m_ref,
                     w1_ref, b1_ref, wd_ref, bd_ref, w2_ref, b2_ref,
                     o_ref, hee_ref, heo_ref, hoe_ref, hoo_ref, *, Wo):
    """Fused stride-2 inverted-residual block (expand_ratio != 1, no residual).

    The wrapper pre-splits the NHWC input into its 4 (row, col) parity planes, each
    flattened to (1, Ho*Wo, Cin), so every depthwise tap becomes a contiguous shifted
    read of one plane's zero-padded hidden activation held in VMEM.
    """
    x_refs = (xee_ref, xeo_ref, xoe_ref, xoo_ref)
    h_refs = (hee_ref, heo_ref, hoe_ref, hoo_ref)
    M = x_refs[0].shape[1]
    pad_top = _round_up(Wo + 1, 8)

    for p in range(4):
        xp = x_refs[p][0]                                        # (M, Cin) f32
        hp = jnp.dot(xp.astype(jnp.bfloat16), w1_ref[...],
                     preferred_element_type=jnp.float32)
        hp = jnp.maximum(hp + b1_ref[...], 0.0)
        h_refs[p][...] = jnp.zeros(h_refs[p].shape, jnp.float32)
        h_refs[p][pad_top:pad_top + M, :] = hp

    partials = []
    for t in range(9):
        dy, dx = divmod(t, 3)
        rp = 0 if dy == 1 else 1          # source row parity (0=even, 1=odd)
        cp = 0 if dx == 1 else 1          # source col parity
        a_off = -1 if dy == 0 else 0
        b_off = -1 if dx == 0 else 0
        src = h_refs[rp * 2 + cp]
        start = pad_top + a_off * Wo + b_off
        v = src[start:start + M, :]
        c = v * wd_ref[t]
        if t != 4:
            c = c * m_ref[t]
        partials.append(c)
    acc = ((partials[0] + partials[1] + partials[2]) +
           (partials[3] + partials[4] + partials[5]) +
           (partials[6] + partials[7] + partials[8]))
    dw = jnp.maximum(acc + bd_ref[...], 0.0)

    o_ref[0] = jnp.dot(dw.astype(jnp.bfloat16), w2_ref[...],
                       preferred_element_type=jnp.float32) + b2_ref[...]


# --------------------------------------------------------------------------- #
# Wrappers
# --------------------------------------------------------------------------- #
def _const_spec(a):
    zeros = (0,) * a.ndim
    return pl.BlockSpec(a.shape, lambda b, _z=zeros: _z)


def _dw_masks(H, W, stride):
    """Exact (9, Ho*Wo, 1) border-validity masks for a 3x3 / pad-1 depthwise conv."""
    Ho = (H - 1) // stride + 1
    Wo = (W - 1) // stride + 1
    ho = np.arange(Ho)[:, None]
    wo = np.arange(Wo)[None, :]
    ms = []
    for dy in range(3):
        for dx in range(3):
            r = stride * ho + dy - 1
            c = stride * wo + dx - 1
            m = ((r >= 0) & (r < H) & (c >= 0) & (c < W)).astype(np.float32)
            ms.append(m.reshape(Ho * Wo))
    return np.stack(ms, axis=0)[:, :, None]


def stem_conv(x, w, bias):
    """7x7 conv (1 in-channel, stride (2,1), pad 3) + folded BN + ReLU6.

    im2col in XLA (cheap for a 1-channel input); fused matmul+bias+ReLU6 runs as an
    M-tiled Pallas kernel on the MXU with 'parallel' grid semantics.
    """
    B, H, W, _ = x.shape
    sh, sw, pad, k = 2, 1, 3, 7
    Ho = (H + 2 * pad - k) // sh + 1
    Wo = (W + 2 * pad - k) // sw + 1
    xp = jnp.pad(x[..., 0], ((0, 0), (pad, pad), (pad, pad)))
    cols = []
    for dy in range(k):
        for dx in range(k):
            cols.append(xp[:, dy:dy + sh * (Ho - 1) + 1:sh,
                           dx:dx + sw * (Wo - 1) + 1:sw].reshape(B * Ho * Wo))
    patches = jnp.stack(cols, axis=1)                            # (M, 49)
    M = B * Ho * Wo
    N = w.shape[1]
    tile_m = min(512, _round_up(M, 8))
    Mp = _round_up(M, tile_m)
    patches = jnp.pad(patches, ((0, Mp - M), (0, 0)))
    out = pl.pallas_call(
        _stem_matmul_kernel,
        out_shape=jax.ShapeDtypeStruct((Mp, N), jnp.float32),
        grid=(Mp // tile_m,),
        in_specs=[pl.BlockSpec((tile_m, 49), lambda i: (i, 0)),
                  pl.BlockSpec(w.shape, lambda i: (0, 0)),
                  pl.BlockSpec(bias.shape, lambda i: (0, 0))],
        out_specs=pl.BlockSpec((tile_m, N), lambda i: (i, 0)),
        compiler_params=pltpu.CompilerParams(dimension_semantics=("parallel",)),
    )(patches, w, bias)
    return out[:M].reshape(B, Ho, Wo, N)


def fused_block(x, bp, cfg, is_last):
    """One InvertedResidual block as a single fused pallas_call, gridded over batch."""
    inp, oup, stride, e = cfg
    B, H, W, Cin = x.shape
    hidden = inp * e
    has_expand = (e != 1)
    use_res = (stride == 1 and inp == oup)
    Ho = (H - 1) // stride + 1
    Wo = (W - 1) // stride + 1
    M = Ho * Wo
    masks = jnp.asarray(_dw_masks(H, W, stride))                 # (9, M, 1) f32

    if has_expand:
        w1, b1 = bp["pw1_w"], bp["pw1_b"]
    else:                                                        # dummies (never read)
        w1 = jnp.zeros((8, 128), jnp.bfloat16)
        b1 = jnp.zeros((1, 128), jnp.float32)
    wd, bd, w2, b2 = bp["dw_w"], bp["dw_b"], bp["pw2_w"], bp["pw2_b"]

    if stride == 1:
        planes = [x.reshape(B, M, Cin)]
        pad_top = _round_up(W + 1, 8)
        scratch = [pltpu.VMEM((pad_top + M + W + 1, hidden), jnp.float32)]
        kern = functools.partial(_block_s1_kernel, has_expand=has_expand,
                                 use_res=use_res, final_relu=is_last,
                                 fuse_mean=is_last, W=W, Ho=Ho, Wo=Wo)
    else:
        planes = []
        for rp in range(2):
            for cp in range(2):
                pln = x[:, rp::2, cp::2, :]
                pln = jnp.pad(pln, ((0, 0), (0, Ho - pln.shape[1]),
                                    (0, Wo - pln.shape[2]), (0, 0)))
                planes.append(pln.reshape(B, M, Cin))
        pad_top = _round_up(Wo + 1, 8)
        scratch = [pltpu.VMEM((pad_top + M, hidden), jnp.float32) for _ in range(4)]
        kern = functools.partial(_block_s2_kernel, Wo=Wo)

    if is_last:
        out_shape = jax.ShapeDtypeStruct((B, Wo, oup), jnp.float32)
        out_spec = pl.BlockSpec((1, Wo, oup), lambda b: (b, 0, 0))
    else:
        out_shape = jax.ShapeDtypeStruct((B, M, oup), jnp.float32)
        out_spec = pl.BlockSpec((1, M, oup), lambda b: (b, 0, 0))

    plane_spec = pl.BlockSpec((1, M, Cin), lambda b: (b, 0, 0))
    consts = [masks, w1, b1, wd, bd, w2, b2]
    in_specs = [plane_spec] * len(planes) + [_const_spec(a) for a in consts]

    out = pl.pallas_call(
        kern,
        out_shape=out_shape,
        grid=(B,),
        in_specs=in_specs,
        out_specs=out_spec,
        scratch_shapes=scratch,
        compiler_params=pltpu.CompilerParams(dimension_semantics=("parallel",)),
    )(*(planes + consts))

    if is_last:
        return out
    return out.reshape(B, Ho, Wo, oup)


# --------------------------------------------------------------------------- #
# Model: parameters and forward
# --------------------------------------------------------------------------- #
def _fold_bn(key, c, eps=1e-5):
    k1, k2, k3, k4 = jax.random.split(key, 4)
    gamma = 1.0 + 0.1 * jax.random.normal(k1, (c,))
    beta = 0.1 * jax.random.normal(k2, (c,))
    mean = 0.1 * jax.random.normal(k3, (c,))
    var = 1.0 + 0.1 * jax.random.uniform(k4, (c,))
    scale = gamma / jnp.sqrt(var + eps)
    bias = beta - mean * scale
    return scale.astype(jnp.float32), bias.astype(jnp.float32)


def init_params(key):
    keys = iter(jax.random.split(key, 64))
    p = {}
    w = 0.1 * jax.random.normal(next(keys), (16, 1, 7, 7))        # PyTorch OIHW
    s, b = _fold_bn(next(keys), 16)
    p["stem_w"] = (w.reshape(16, 49).T * s[None, :]).astype(jnp.bfloat16)   # (49, 16)
    p["stem_b"] = b.reshape(1, 16)
    p["blocks"] = []
    for (inp, oup, stride, e) in BLOCK_CFG:
        hidden = inp * e
        bp = {}
        if e != 1:
            w1 = 0.1 * jax.random.normal(next(keys), (hidden, inp, 1, 1))
            s1, b1 = _fold_bn(next(keys), hidden)
            bp["pw1_w"] = (w1.reshape(hidden, inp).T * s1[None, :]).astype(jnp.bfloat16)
            bp["pw1_b"] = b1.reshape(1, hidden)
        wd = 0.1 * jax.random.normal(next(keys), (hidden, 1, 3, 3))
        sd, bd = _fold_bn(next(keys), hidden)
        bp["dw_w"] = (wd.reshape(hidden, 9).T * sd[None, :]).reshape(9, 1, hidden) \
                        .astype(jnp.float32)
        bp["dw_b"] = bd.reshape(1, hidden)
        w2 = 0.1 * jax.random.normal(next(keys), (oup, hidden, 1, 1))
        s2, b2 = _fold_bn(next(keys), oup)
        bp["pw2_w"] = (w2.reshape(oup, hidden).T * s2[None, :]).astype(jnp.bfloat16)
        bp["pw2_b"] = b2.reshape(1, oup)
        p["blocks"].append(bp)
    return p


def audionet_forward(params, x):
    """x: (B, T, F) -> (B, T // 4, 128)   (matches PyTorch AudioNet.forward)."""
    # PyTorch: x.unsqueeze(1).transpose(2, 3) -> NCHW (B,1,F,T) == NHWC (B,F,T,1)
    h = jnp.transpose(x, (0, 2, 1))[..., None]
    h = stem_conv(h, params["stem_w"], params["stem_b"])
    nblk = len(BLOCK_CFG)
    for idx, (cfg, bp) in enumerate(zip(BLOCK_CFG, params["blocks"])):
        h = fused_block(h, bp, cfg, is_last=(idx == nblk - 1))
    return h            # last block already emits (B, T//4, 128)


# --------------------------------------------------------------------------- #
# Pure-JAX reference (same folded bf16 weights / f32 accumulation)
# --------------------------------------------------------------------------- #
def ref_forward(params, x):
    f32 = jnp.float32
    h = jnp.transpose(x, (0, 2, 1))[..., None]
    wk = params["stem_w"].reshape(7, 7, 1, 16)                     # bf16 HWIO
    h = jax.lax.conv_general_dilated(h.astype(jnp.bfloat16), wk, (2, 1),
                                     [(3, 3), (3, 3)],
                                     dimension_numbers=("NHWC", "HWIO", "NHWC"),
                                     preferred_element_type=f32)
    h = jnp.clip(h + params["stem_b"], 0.0, 6.0)
    for (inp, oup, stride, e), bp in zip(BLOCK_CFG, params["blocks"]):
        y = h
        if e != 1:
            y = jnp.einsum("bhwc,cn->bhwn", y.astype(jnp.bfloat16), bp["pw1_w"],
                           preferred_element_type=f32)
            y = jnp.maximum(y + bp["pw1_b"], 0.0)
        Ch = y.shape[-1]
        wd = bp["dw_w"].reshape(3, 3, 1, Ch)                       # HWIO, I=1
        y = jax.lax.conv_general_dilated(y, wd, (stride, stride), [(1, 1), (1, 1)],
                                         dimension_numbers=("NHWC", "HWIO", "NHWC"),
                                         feature_group_count=Ch,
                                         precision=jax.lax.Precision.HIGHEST)
        y = jnp.maximum(y + bp["dw_b"], 0.0)
        y = jnp.einsum("bhwc,cn->bhwn", y.astype(jnp.bfloat16), bp["pw2_w"],
                       preferred_element_type=f32) + bp["pw2_b"]
        if stride == 1 and inp == oup:
            y = y + h
        h = y
    h = jnp.maximum(h, 0.0)
    return jnp.mean(h, axis=1)


# --------------------------------------------------------------------------- #
if __name__ == "__main__":
    key = jax.random.PRNGKey(0)
    kp, kx = jax.random.split(key)
    params = init_params(kp)

    B, T, F = 2, 8, 16                      # x: (batch, time, freq-features)
    x = jax.random.normal(kx, (B, T, F), dtype=jnp.float32)

    fwd = jax.jit(audionet_forward)
    out = jax.block_until_ready(fwd(params, x))

    ref = jax.block_until_ready(ref_forward(params, x))
    np.testing.assert_allclose(np.asarray(out), np.asarray(ref), rtol=5e-3, atol=5e-3)
    assert out.shape == (B, T // 4, LAST_CHANNEL), out.shape

    print("KERNEL_OK")
</pallas_src>

<mosaic_0001>
module attributes {stable_mosaic.version = 11 : i64} {
  func.func @_stem_matmul_kernel(%arg0: i32, %arg1: memref<128x49xf32, #tpu.memory_space<vmem>>, %arg2: memref<49x16xbf16, #tpu.memory_space<vmem>>, %arg3: memref<1x16xf32, #tpu.memory_space<vmem>>, %arg4: memref<128x16xf32, #tpu.memory_space<vmem>>) attributes {dimension_semantics = [#tpu.dimension_semantics<parallel>], iteration_bounds = array<i64: 1>, scalar_prefetch = 0 : i64, scratch_operands = 0 : i64, tpu.core_type = #tpu.core_type<tc>, window_params = [{transform_indices = @transform_0, window_bounds = array<i64: 128, 49>}, {pipeline_mode = #tpu.pipeline_mode<synchronous>, transform_indices = @transform_1, window_bounds = array<i64: 49, 16>}, {pipeline_mode = #tpu.pipeline_mode<synchronous>, transform_indices = @transform_2, window_bounds = array<i64: 1, 16>}, {transform_indices = @transform_3, window_bounds = array<i64: 128, 16>}]} {
    %c0 = arith.constant 0 : index
    %c0_0 = arith.constant 0 : index
    %0 = vector.load %arg1[%c0, %c0_0] : memref<128x49xf32, #tpu.memory_space<vmem>>, vector<128x49xf32>
    %1 = arith.truncf %0 : vector<128x49xf32> to vector<128x49xbf16>
    %c0_1 = arith.constant 0 : index
    %c0_2 = arith.constant 0 : index
    %2 = vector.load %arg2[%c0_1, %c0_2] : memref<49x16xbf16, #tpu.memory_space<vmem>>, vector<49x16xbf16>
    %cst = arith.constant dense<0.000000e+00> : vector<128x16xf32>
    %3 = tpu.matmul %1, %2, %cst {dimension_numbers = #tpu.dot_dimension_numbers<[1], [0], [0], [1], [0, 0, 1, 1], [], []>} : vector<128x49xbf16>, vector<49x16xbf16>, vector<128x16xf32> -> vector<128x16xf32>
    %c0_3 = arith.constant 0 : index
    %c0_4 = arith.constant 0 : index
    %4 = vector.load %arg3[%c0_3, %c0_4] : memref<1x16xf32, #tpu.memory_space<vmem>>, vector<1x16xf32>
    %5 = vector.broadcast %4 : vector<1x16xf32> to vector<128x16xf32>
    %6 = arith.addf %3, %5 : vector<128x16xf32>
    %cst_5 = arith.constant 0.000000e+00 : f32
    %cst_6 = arith.constant 6.000000e+00 : f32
    %7 = vector.broadcast %cst_5 : f32 to vector<128x16xf32>
    %8 = arith.maximumf %7, %6 : vector<128x16xf32>
    %9 = vector.broadcast %cst_6 : f32 to vector<128x16xf32>
    %10 = arith.minimumf %9, %8 : vector<128x16xf32>
    %c0_7 = arith.constant 0 : index
    %c0_8 = arith.constant 0 : index
    %11 = vector.load %arg4[%c0_7, %c0_8] : memref<128x16xf32, #tpu.memory_space<vmem>>, vector<128x16xf32>
    tpu.vector_store %arg4[%c0_7, %c0_8], %10 {strides = array<i32>} : memref<128x16xf32, #tpu.memory_space<vmem>>, vector<128x16xf32>,
    return
  }
  func.func @transform_0(%arg0: i32) -> (i32, i32) {
    %c0_i32 = arith.constant 0 : i32
    %c0_i32_0 = arith.constant 0 : i32
    return %arg0, %c0_i32 : i32, i32
  }
  func.func @transform_1(%arg0: i32) -> (i32, i32) {
    %c0_i32 = arith.constant 0 : i32
    %c0_i32_0 = arith.constant 0 : i32
    %c0_i32_1 = arith.constant 0 : i32
    return %c0_i32, %c0_i32_0 : i32, i32
  }
  func.func @transform_2(%arg0: i32) -> (i32, i32) {
    %c0_i32 = arith.constant 0 : i32
    %c0_i32_0 = arith.constant 0 : i32
    %c0_i32_1 = arith.constant 0 : i32
    return %c0_i32, %c0_i32_0 : i32, i32
  }
  func.func @transform_3(%arg0: i32) -> (i32, i32) {
    %c0_i32 = arith.constant 0 : i32
    %c0_i32_0 = arith.constant 0 : i32
    return %arg0, %c0_i32 : i32, i32
  }
}

module attributes {stable_mosaic.version = 11 : i64} {
  func.func @_block_s1_kernel(%arg0: i32, %arg1: memref<1x64x16xf32, #tpu.memory_space<vmem>>, %arg2: memref<9x64x1xf32, #tpu.memory_space<vmem>>, %arg3: memref<16x32xbf16, #tpu.memory_space<vmem>>, %arg4: memref<1x32xf32, #tpu.memory_space<vmem>>, %arg5: memref<9x1x32xf32, #tpu.memory_space<vmem>>, %arg6: memref<1x32xf32, #tpu.memory_space<vmem>>, %arg7: memref<32x16xbf16, #tpu.memory_space<vmem>>, %arg8: memref<1x16xf32, #tpu.memory_space<vmem>>, %arg9: memref<1x64x16xf32, #tpu.memory_space<vmem>>, %arg10: memref<89x32xf32, #tpu.memory_space<vmem>>) attributes {dimension_semantics = [#tpu.dimension_semantics<parallel>], iteration_bounds = array<i64: 2>, scalar_prefetch = 0 : i64, scratch_operands = 1 : i64, tpu.core_type = #tpu.core_type<tc>, window_params = [{transform_indices = @transform_0, window_bounds = array<i64: 1, 64, 16>}, {pipeline_mode = #tpu.pipeline_mode<synchronous>, transform_indices = @transform_1, window_bounds = array<i64: 9, 64, 1>}, {pipeline_mode = #tpu.pipeline_mode<synchronous>, transform_indices = @transform_2, window_bounds = array<i64: 16, 32>}, {pipeline_mode = #tpu.pipeline_mode<synchronous>, transform_indices = @transform_3, window_bounds = array<i64: 1, 32>}, {pipeline_mode = #tpu.pipeline_mode<synchronous>, transform_indices = @transform_4, window_bounds = array<i64: 9, 1, 32>}, {pipeline_mode = #tpu.pipeline_mode<synchronous>, transform_indices = @transform_5, window_bounds = array<i64: 1, 32>}, {pipeline_mode = #tpu.pipeline_mode<synchronous>, transform_indices = @transform_6, window_bounds = array<i64: 32, 16>}, {pipeline_mode = #tpu.pipeline_mode<synchronous>, transform_indices = @transform_7, window_bounds = array<i64: 1, 16>}, {transform_indices = @transform_8, window_bounds = array<i64: 1, 64, 16>}]} {
    %c0 = arith.constant 0 : index
    %c0_0 = arith.constant 0 : index
    %c0_1 = arith.constant 0 : index
    %0 = vector.load %arg1[%c0, %c0_0, %c0_1] : memref<1x64x16xf32, #tpu.memory_space<vmem>>, vector<1x64x16xf32>
    %1 = vector.shape_cast %0 : vector<1x64x16xf32> to vector<64x16xf32>
    %2 = arith.truncf %1 : vector<64x16xf32> to vector<64x16xbf16>
    %c0_2 = arith.constant 0 : index
    %c0_3 = arith.constant 0 : index
    %3 = vector.load %arg3[%c0_2, %c0_3] : memref<16x32xbf16, #tpu.memory_space<vmem>>, vector<16x32xbf16>
    %cst = arith.constant dense<0.000000e+00> : vector<64x32xf32>
    %4 = tpu.matmul %2, %3, %cst {dimension_numbers = #tpu.dot_dimension_numbers<[1], [0], [0], [1], [0, 0, 1, 1], [], []>} : vector<64x16xbf16>, vector<16x32xbf16>, vector<64x32xf32> -> vector<64x32xf32>
    %c0_4 = arith.constant 0 : index
    %c0_5 = arith.constant 0 : index
    %5 = vector.load %arg4[%c0_4, %c0_5] : memref<1x32xf32, #tpu.memory_space<vmem>>, vector<1x32xf32>
    %6 = vector.broadcast %5 : vector<1x32xf32> to vector<64x32xf32>
    %7 = arith.addf %4, %6 : vector<64x32xf32>
    %cst_6 = arith.constant 0.000000e+00 : f32
    %8 = vector.broadcast %cst_6 : f32 to vector<64x32xf32>
    %9 = arith.maximumf %7, %8 : vector<64x32xf32>
    %cst_7 = arith.constant 0.000000e+00 : f32
    %10 = vector.broadcast %cst_7 : f32 to vector<89x32xf32>
    %c0_8 = arith.constant 0 : index
    %c0_9 = arith.constant 0 : index
    %11 = vector.load %arg10[%c0_8, %c0_9] : memref<89x32xf32, #tpu.memory_space<vmem>>, vector<89x32xf32>
    tpu.vector_store %arg10[%c0_8, %c0_9], %10 {strides = array<i32>} : memref<89x32xf32, #tpu.memory_space<vmem>>, vector<89x32xf32>,
    %c16 = arith.constant 16 : index
    %c0_10 = arith.constant 0 : index
    %12 = vector.load %arg10[%c16, %c0_10] : memref<89x32xf32, #tpu.memory_space<vmem>>, vector<64x32xf32>
    tpu.vector_store %arg10[%c16, %c0_10], %9 {strides = array<i32>} : memref<89x32xf32, #tpu.memory_space<vmem>>, vector<64x32xf32>,
    %c7 = arith.constant 7 : index
    %c0_11 = arith.constant 0 : index
    %13 = vector.load %arg10[%c7, %c0_11] : memref<89x32xf32, #tpu.memory_space<vmem>>, vector<64x32xf32>
    %c0_12 = arith.constant 0 : index
    %c0_13 = arith.constant 0 : index
    %c0_14 = arith.constant 0 : index
    %14 = vector.load %arg5[%c0_12, %c0_13, %c0_14] : memref<9x1x32xf32, #tpu.memory_space<vmem>>, vector<1x1x32xf32>
    %15 = vector.shape_cast %14 : vector<1x1x32xf32> to vector<1x32xf32>
    %16 = vector.broadcast %15 : vector<1x32xf32> to vector<64x32xf32>
    %17 = arith.mulf %13, %16 : vector<64x32xf32>
    %c0_15 = arith.constant 0 : index
    %c0_16 = arith.constant 0 : index
    %c0_17 = arith.constant 0 : index
    %18 = vector.load %arg2[%c0_15, %c0_16, %c0_17] : memref<9x64x1xf32, #tpu.memory_space<vmem>>, vector<1x64x1xf32>
    %19 = vector.shape_cast %18 : vector<1x64x1xf32> to vector<64x1xf32>
    %20 = vector.broadcast %19 : vector<64x1xf32> to vector<64x32xf32>
    %21 = arith.mulf %17, %20 : vector<64x32xf32>
    %c8 = arith.constant 8 : index
    %c0_18 = arith.constant 0 : index
    %22 = vector.load %arg10[%c8, %c0_18] : memref<89x32xf32, #tpu.memory_space<vmem>>, vector<64x32xf32>
    %c1 = arith.constant 1 : index
    %c0_19 = arith.constant 0 : index
    %c0_20 = arith.constant 0 : index
    %23 = vector.load %arg5[%c1, %c0_19, %c0_20] : memref<9x1x32xf32, #tpu.memory_space<vmem>>, vector<1x1x32xf32>
    %24 = vector.shape_cast %23 : vector<1x1x32xf32> to vector<1x32xf32>
    %25 = vector.broadcast %24 : vector<1x32xf32> to vector<64x32xf32>
    %26 = arith.mulf %22, %25 : vector<64x32xf32>
    %c1_21 = arith.constant 1 : index
    %c0_22 = arith.constant 0 : index
    %c0_23 = arith.constant 0 : index
    %27 = vector.load %arg2[%c1_21, %c0_22, %c0_23] : memref<9x64x1xf32, #tpu.memory_space<vmem>>, vector<1x64x1xf32>
    %28 = vector.shape_cast %27 : vector<1x64x1xf32> to vector<64x1xf32>
    %29 = vector.broadcast %28 : vector<64x1xf32> to vector<64x32xf32>
    %30 = arith.mulf %26, %29 : vector<64x32xf32>
    %c9 = arith.constant 9 : index
    %c0_24 = arith.constant 0 : index
    %31 = vector.load %arg10[%c9, %c0_24] : memref<89x32xf32, #tpu.memory_space<vmem>>, vector<64x32xf32>
    %c2 = arith.constant 2 : index
    %c0_25 = arith.constant 0 : index
    %c0_26 = arith.constant 0 : index
    %32 = vector.load %arg5[%c2, %c0_25, %c0_26] : memref<9x1x32xf32, #tpu.memory_space<vmem>>, vector<1x1x32xf32>
    %33 = vector.shape_cast %32 : vector<1x1x32xf32> to vector<1x32xf32>
    %34 = vector.broadcast %33 : vector<1x32xf32> to vector<64x32xf32>
    %35 = arith.mulf %31, %34 : vector<64x32xf32>
    %c2_27 = arith.constant 2 : index
    %c0_28 = arith.constant 0 : index
    %c0_29 = arith.constant 0 : index
    %36 = vector.load %arg2[%c2_27, %c0_28, %c0_29] : memref<9x64x1xf32, #tpu.memory_space<vmem>>, vector<1x64x1xf32>
    %37 = vector.shape_cast %36 : vector<1x64x1xf32> to vector<64x1xf32>
    %38 = vector.broadcast %37 : vector<64x1xf32> to vector<64x32xf32>
    %39 = arith.mulf %35, %38 : vector<64x32xf32>
    %c15 = arith.constant 15 : index
    %c0_30 = arith.constant 0 : index
    %40 = vector.load %arg10[%c15, %c0_30] : memref<89x32xf32, #tpu.memory_space<vmem>>, vector<64x32xf32>
    %c3 = arith.constant 3 : index
    %c0_31 = arith.constant 0 : index
    %c0_32 = arith.constant 0 : index
    %41 = vector.load %arg5[%c3, %c0_31, %c0_32] : memref<9x1x32xf32, #tpu.memory_space<vmem>>, vector<1x1x32xf32>
    %42 = vector.shape_cast %41 : vector<1x1x32xf32> to vector<1x32xf32>
    %43 = vector.broadcast %42 : vector<1x32xf32> to vector<64x32xf32>
    %44 = arith.mulf %40, %43 : vector<64x32xf32>
    %c3_33 = arith.constant 3 : index
    %c0_34 = arith.constant 0 : index
    %c0_35 = arith.constant 0 : index
    %45 = vector.load %arg2[%c3_33, %c0_34, %c0_35] : memref<9x64x1xf32, #tpu.memory_space<vmem>>, vector<1x64x1xf32>
    %46 = vector.shape_cast %45 : vector<1x64x1xf32> to vector<64x1xf32>
    %47 = vector.broadcast %46 : vector<64x1xf32> to vector<64x32xf32>
    %48 = arith.mulf %44, %47 : vector<64x32xf32>
    %c16_36 = arith.constant 16 : index
    %c0_37 = arith.constant 0 : index
    %49 = vector.load %arg10[%c16_36, %c0_37] : memref<89x32xf32, #tpu.memory_space<vmem>>, vector<64x32xf32>
    %c4 = arith.constant 4 : index
    %c0_38 = arith.constant 0 : index
    %c0_39 = arith.constant 0 : index
    %50 = vector.load %arg5[%c4, %c0_38, %c0_39] : memref<9x1x32xf32, #tpu.memory_space<vmem>>, vector<1x1x32xf32>
    %51 = vector.shape_cast %50 : vector<1x1x32xf32> to vector<1x32xf32>
    %52 = vector.broadcast %51 : vector<1x32xf32> to vector<64x32xf32>
    %53 = arith.mulf %49, %52 : vector<64x32xf32>
    %c17 = arith.constant 17 : index
    %c0_40 = arith.constant 0 : index
    %54 = vector.load %arg10[%c17, %c0_40] : memref<89x32xf32, #tpu.memory_space<vmem>>, vector<64x32xf32>
    %c5 = arith.constant 5 : index
    %c0_41 = arith.constant 0 : index
    %c0_42 = arith.constant 0 : index
    %55 = vector.load %arg5[%c5, %c0_41, %c0_42] : memref<9x1x32xf32, #tpu.memory_space<vmem>>, vector<1x1x32xf32>
    %56 = vector.shape_cast %55 : vector<1x1x32xf32> to vector<1x32xf32>
    %57 = vector.broadcast %56 : vector<1x32xf32> to vector<64x32xf32>
    %58 = arith.mulf %54, %57 : vector<64x32xf32>
    %c5_43 = arith.constant 5 : index
    %c0_44 = arith.constant 0 : index
    %c0_45 = arith.constant 0 : index
    %59 = vector.load %arg2[%c5_43, %c0_44, %c0_45] : memref<9x64x1xf32, #tpu.memory_space<vmem>>, vector<1x64x1xf32>
    %60 = vector.shape_cast %59 : vector<1x64x1xf32> to vector<64x1xf32>
    %61 = vector.broadcast %60 : vector<64x1xf32> to vector<64x32xf32>
    %62 = arith.mulf %58, %61 : vector<64x32xf32>
    %c23 = arith.constant 23 : index
    %c0_46 = arith.constant 0 : index
    %63 = vector.load %arg10[%c23, %c0_46] : memref<89x32xf32, #tpu.memory_space<vmem>>, vector<64x32xf32>
    %c6 = arith.constant 6 : index
    %c0_47 = arith.constant 0 : index
    %c0_48 = arith.constant 0 : index
    %64 = vector.load %arg5[%c6, %c0_47, %c0_48] : memref<9x1x32xf32, #tpu.memory_space<vmem>>, vector<1x1x32xf32>
    %65 = vector.shape_cast %64 : vector<1x1x32xf32> to vector<1x32xf32>
    %66 = vector.broadcast %65 : vector<1x32xf32> to vector<64x32xf32>
    %67 = arith.mulf %63, %66 : vector<64x32xf32>
    %c6_49 = arith.constant 6 : index
    %c0_50 = arith.constant 0 : index
    %c0_51 = arith.constant 0 : index
    %68 = vector.load %arg2[%c6_49, %c0_50, %c0_51] : memref<9x64x1xf32, #tpu.memory_space<vmem>>, vector<1x64x1xf32>
    %69 = vector.shape_cast %68 : vector<1x64x1xf32> to vector<64x1xf32>
    %70 = vector.broadcast %69 : vector<64x1xf32> to vector<64x32xf32>
    %71 = arith.mulf %67, %70 : vector<64x32xf32>
    %c24 = arith.constant 24 : index
    %c0_52 = arith.constant 0 : index
    %72 = vector.load %arg10[%c24, %c0_52] : memref<89x32xf32, #tpu.memory_space<vmem>>, vector<64x32xf32>
    %c7_53 = arith.constant 7 : index
    %c0_54 = arith.constant 0 : index
    %c0_55 = arith.constant 0 : index
    %73 = vector.load %arg5[%c7_53, %c0_54, %c0_55] : memref<9x1x32xf32, #tpu.memory_space<vmem>>, vector<1x1x32xf32>
    %74 = vector.shape_cast %73 : vector<1x1x32xf32> to vector<1x32xf32>
    %75 = vector.broadcast %74 : vector<1x32xf32> to vector<64x32xf32>
    %76 = arith.mulf %72, %75 : vector<64x32xf32>
    %c7_56 = arith.constant 7 : index
    %c0_57 = arith.constant 0 : index
    %c0_58 = arith.constant 0 : index
    %77 = vector.load %arg2[%c7_56, %c0_57, %c0_58] : memref<9x64x1xf32, #tpu.memory_space<vmem>>, vector<1x64x1xf32>
    %78 = vector.shape_cast %77 : vector<1x64x1xf32> to vector<64x1xf32>
    %79 = vector.broadcast %78 : vector<64x1xf32> to vector<64x32xf32>
    %80 = arith.mulf %76, %79 : vector<64x32xf32>
    %c25 = arith.constant 25 : index
    %c0_59 = arith.constant 0 : index
    %81 = vector.load %arg10[%c25, %c0_59] : memref<89x32xf32, #tpu.memory_space<vmem>>, vector<64x32xf32>
    %c8_60 = arith.constant 8 : index
    %c0_61 = arith.constant 0 : index
    %c0_62 = arith.constant 0 : index
    %82 = vector.load %arg5[%c8_60, %c0_61, %c0_62] : memref<9x1x32xf32, #tpu.memory_space<vmem>>, vector<1x1x32xf32>
    %83 = vector.shape_cast %82 : vector<1x1x32xf32> to vector<1x32xf32>
    %84 = vector.broadcast %83 : vector<1x32xf32> to vector<64x32xf32>
    %85 = arith.mulf %81, %84 : vector<64x32xf32>
    %c8_63 = arith.constant 8 : index
    %c0_64 = arith.constant 0 : index
    %c0_65 = arith.constant 0 : index
    %86 = vector.load %arg2[%c8_63, %c0_64, %c0_65] : memref<9x64x1xf32, #tpu.memory_space<vmem>>, vector<1x64x1xf32>
    %87 = vector.shape_cast %86 : vector<1x64x1xf32> to vector<64x1xf32>
    %88 = vector.broadcast %87 : vector<64x1xf32> to vector<64x32xf32>
    %89 = arith.mulf %85, %88 : vector<64x32xf32>
    %90 = arith.addf %21, %30 : vector<64x32xf32>
    %91 = arith.addf %90, %39 : vector<64x32xf32>
    %92 = arith.addf %48, %53 : vector<64x32xf32>
    %93 = arith.addf %92, %62 : vector<64x32xf32>
    %94 = arith.addf %91, %93 : vector<64x32xf32>
    %95 = arith.addf %71, %80 : vector<64x32xf32>
    %96 = arith.addf %95, %89 : vector<64x32xf32>
    %97 = arith.addf %94, %96 : vector<64x32xf32>
    %c0_66 = arith.constant 0 : index
    %c0_67 = arith.constant 0 : index
    %98 = vector.load %arg6[%c0_66, %c0_67] : memref<1x32xf32, #tpu.memory_space<vmem>>, vector<1x32xf32>
    %99 = vector.broadcast %98 : vector<1x32xf32> to vector<64x32xf32>
    %100 = arith.addf %97, %99 : vector<64x32xf32>
    %cst_68 = arith.constant 0.000000e+00 : f32
    %101 = vector.broadcast %cst_68 : f32 to vector<64x32xf32>
    %102 = arith.maximumf %100, %101 : vector<64x32xf32>
    %103 = arith.truncf %102 : vector<64x32xf32> to vector<64x32xbf16>
    %c0_69 = arith.constant 0 : index
    %c0_70 = arith.constant 0 : index
    %104 = vector.load %arg7[%c0_69, %c0_70] : memref<32x16xbf16, #tpu.memory_space<vmem>>, vector<32x16xbf16>
    %cst_71 = arith.constant dense<0.000000e+00> : vector<64x16xf32>
    %105 = tpu.matmul %103, %104, %cst_71 {dimension_numbers = #tpu.dot_dimension_numbers<[1], [0], [0], [1], [0, 0, 1, 1], [], []>} : vector<64x32xbf16>, vector<32x16xbf16>, vector<64x16xf32> -> vector<64x16xf32>
    %c0_72 = arith.constant 0 : index
    %c0_73 = arith.constant 0 : index
    %106 = vector.load %arg8[%c0_72, %c0_73] : memref<1x16xf32, #tpu.memory_space<vmem>>, vector<1x16xf32>
    %107 = vector.broadcast %106 : vector<1x16xf32> to vector<64x16xf32>
    %108 = arith.addf %105, %107 : vector<64x16xf32>
    %109 = arith.addf %108, %1 : vector<64x16xf32>
    %c0_74 = arith.constant 0 : index
    %c0_75 = arith.constant 0 : index
    %c0_76 = arith.constant 0 : index
    %110 = vector.load %arg9[%c0_74, %c0_75, %c0_76] : memref<1x64x16xf32, #tpu.memory_space<vmem>>, vector<1x64x16xf32>
    %111 = vector.shape_cast %110 : vector<1x64x16xf32> to vector<64x16xf32>
    %112 = vector.shape_cast %109 : vector<64x16xf32> to vector<1x64x16xf32>
    tpu.vector_store %arg9[%c0_74, %c0_75, %c0_76], %112 {strides = array<i32>} : memref<1x64x16xf32, #tpu.memory_space<vmem>>, vector<1x64x16xf32>,
    return
  }
  func.func @transform_0(%arg0: i32) -> (i32, i32, i32) {
    %c0_i32 = arith.constant 0 : i32
    %c0_i32_0 = arith.constant 0 : i32
    %c0_i32_1 = arith.constant 0 : i32
    return %arg0, %c0_i32, %c0_i32_0 : i32, i32, i32
  }
  func.func @transform_1(%arg0: i32) -> (i32, i32, i32) {
    %c0_i32 = arith.constant 0 : i32
    %c0_i32_0 = arith.constant 0 : i32
    %c0_i32_1 = arith.constant 0 : i32
    %c0_i32_2 = arith.constant 0 : i32
    return %c0_i32, %c0_i32_0, %c0_i32_1 : i32, i32, i32
  }
  func.func @transform_2(%arg0: i32) -> (i32, i32) {
    %c0_i32 = arith.constant 0 : i32
    %c0_i32_0 = arith.constant 0 : i32
    %c0_i32_1 = arith.constant 0 : i32
    return %c0_i32, %c0_i32_0 : i32, i32
  }
  func.func @transform_3(%arg0: i32) -> (i32, i32) {
    %c0_i32 = arith.constant 0 : i32
    %c0_i32_0 = arith.constant 0 : i32
    %c0_i32_1 = arith.constant 0 : i32
    return %c0_i32, %c0_i32_0 : i32, i32
  }
  func.func @transform_4(%arg0: i32) -> (i32, i32, i32) {
    %c0_i32 = arith.constant 0 : i32
    %c0_i32_0 = arith.constant 0 : i32
    %c0_i32_1 = arith.constant 0 : i32
    %c0_i32_2 = arith.constant 0 : i32
    return %c0_i32, %c0_i32_0, %c0_i32_1 : i32, i32, i32
  }
  func.func @transform_5(%arg0: i32) -> (i32, i32) {
    %c0_i32 = arith.constant 0 : i32
    %c0_i32_0 = arith.constant 0 : i32
    %c0_i32_1 = arith.constant 0 : i32
    return %c0_i32, %c0_i32_0 : i32, i32
  }
  func.func @transform_6(%arg0: i32) -> (i32, i32) {
    %c0_i32 = arith.constant 0 : i32
    %c0_i32_0 = arith.constant 0 : i32
    %c0_i32_1 = arith.constant 0 : i32
    return %c0_i32, %c0_i32_0 : i32, i32
  }
  func.func @transform_7(%arg0: i32) -> (i32, i32) {
    %c0_i32 = arith.constant 0 : i32
    %c0_i32_0 = arith.constant 0 : i32
    %c0_i32_1 = arith.constant 0 : i32
    return %c0_i32, %c0_i32_0 : i32, i32
  }
  func.func @transform_8(%arg0: i32) -> (i32, i32, i32) {
    %c0_i32 = arith.constant 0 : i32
    %c0_i32_0 = arith.constant 0 : i32
    %c0_i32_1 = arith.constant 0 : i32
    return %arg0, %c0_i32, %c0_i32_0 : i32, i32, i32
  }
}

module attributes {stable_mosaic.version = 11 : i64} {
  func.func @_block_s2_kernel(%arg0: i32, %arg1: memref<1x16x16xf32, #tpu.memory_space<vmem>>, %arg2: memref<1x16x16xf32, #tpu.memory_space<vmem>>, %arg3: memref<1x16x16xf32, #tpu.memory_space<vmem>>, %arg4: memref<1x16x16xf32, #tpu.memory_space<vmem>>, %arg5: memref<9x16x1xf32, #tpu.memory_space<vmem>>, %arg6: memref<16x32xbf16, #tpu.memory_space<vmem>>, %arg7: memref<1x32xf32, #tpu.memory_space<vmem>>, %arg8: memref<9x1x32xf32, #tpu.memory_space<vmem>>, %arg9: memref<1x32xf32, #tpu.memory_space<vmem>>, %arg10: memref<32x32xbf16, #tpu.memory_space<vmem>>, %arg11: memref<1x32xf32, #tpu.memory_space<vmem>>, %arg12: memref<1x16x32xf32, #tpu.memory_space<vmem>>, %arg13: memref<24x32xf32, #tpu.memory_space<vmem>>, %arg14: memref<24x32xf32, #tpu.memory_space<vmem>>, %arg15: memref<24x32xf32, #tpu.memory_space<vmem>>, %arg16: memref<24x32xf32, #tpu.memory_space<vmem>>) attributes {dimension_semantics = [#tpu.dimension_semantics<parallel>], iteration_bounds = array<i64: 2>, scalar_prefetch = 0 : i64, scratch_operands = 4 : i64, tpu.core_type = #tpu.core_type<tc>, window_params = [{transform_indices = @transform_0, window_bounds = array<i64: 1, 16, 16>}, {transform_indices = @transform_1, window_bounds = array<i64: 1, 16, 16>}, {transform_indices = @transform_2, window_bounds = array<i64: 1, 16, 16>}, {transform_indices = @transform_3, window_bounds = array<i64: 1, 16, 16>}, {pipeline_mode = #tpu.pipeline_mode<synchronous>, transform_indices = @transform_4, window_bounds = array<i64: 9, 16, 1>}, {pipeline_mode = #tpu.pipeline_mode<synchronous>, transform_indices = @transform_5, window_bounds = array<i64: 16, 32>}, {pipeline_mode = #tpu.pipeline_mode<synchronous>, transform_indices = @transform_6, window_bounds = array<i64: 1, 32>}, {pipeline_mode = #tpu.pipeline_mode<synchronous>, transform_indices = @transform_7, window_bounds = array<i64: 9, 1, 32>}, {pipeline_mode = #tpu.pipeline_mode<synchronous>, transform_indices = @transform_8, window_bounds = array<i64: 1, 32>}, {pipeline_mode = #tpu.pipeline_mode<synchronous>, transform_indices = @transform_9, window_bounds = array<i64: 32, 32>}, {pipeline_mode = #tpu.pipeline_mode<synchronous>, transform_indices = @transform_10, window_bounds = array<i64: 1, 32>}, {transform_indices = @transform_11, window_bounds = array<i64: 1, 16, 32>}]} {
    %c0 = arith.constant 0 : index
    %c0_0 = arith.constant 0 : index
    %c0_1 = arith.constant 0 : index
    %0 = vector.load %arg1[%c0, %c0_0, %c0_1] : memref<1x16x16xf32, #tpu.memory_space<vmem>>, vector<1x16x16xf32>
    %1 = vector.shape_cast %0 : vector<1x16x16xf32> to vector<16x16xf32>
    %2 = arith.truncf %1 : vector<16x16xf32> to vector<16x16xbf16>
    %c0_2 = arith.constant 0 : index
    %c0_3 = arith.constant 0 : index
    %3 = vector.load %arg6[%c0_2, %c0_3] : memref<16x32xbf16, #tpu.memory_space<vmem>>, vector<16x32xbf16>
    %cst = arith.constant dense<0.000000e+00> : vector<16x32xf32>
    %4 = tpu.matmul %2, %3, %cst {dimension_numbers = #tpu.dot_dimension_numbers<[1], [0], [0], [1], [0, 0, 1, 1], [], []>} : vector<16x16xbf16>, vector<16x32xbf16>, vector<16x32xf32> -> vector<16x32xf32>
    %c0_4 = arith.constant 0 : index
    %c0_5 = arith.constant 0 : index
    %5 = vector.load %arg7[%c0_4, %c0_5] : memref<1x32xf32, #tpu.memory_space<vmem>>, vector<1x32xf32>
    %6 = vector.broadcast %5 : vector<1x32xf32> to vector<16x32xf32>
    %7 = arith.addf %4, %6 : vector<16x32xf32>
    %cst_6 = arith.constant 0.000000e+00 : f32
    %8 = vector.broadcast %cst_6 : f32 to vector<16x32xf32>
    %9 = arith.maximumf %7, %8 : vector<16x32xf32>
    %cst_7 = arith.constant 0.000000e+00 : f32
    %10 = vector.broadcast %cst_7 : f32 to vector<24x32xf32>
    %c0_8 = arith.constant 0 : index
    %c0_9 = arith.constant 0 : index
    %11 = vector.load %arg13[%c0_8, %c0_9] : memref<24x32xf32, #tpu.memory_space<vmem>>, vector<24x32xf32>
    tpu.vector_store %arg13[%c0_8, %c0_9], %10 {strides = array<i32>} : memref<24x32xf32, #tpu.memory_space<vmem>>, vector<24x32xf32>,
    %c8 = arith.constant 8 : index
    %c0_10 = arith.constant 0 : index
    %12 = vector.load %arg13[%c8, %c0_10] : memref<24x32xf32, #tpu.memory_space<vmem>>, vector<16x32xf32>
    tpu.vector_store %arg13[%c8, %c0_10], %9 {strides = array<i32>} : memref<24x32xf32, #tpu.memory_space<vmem>>, vector<16x32xf32>,
    %c0_11 = arith.constant 0 : index
    %c0_12 = arith.constant 0 : index
    %c0_13 = arith.constant 0 : index
    %13 = vector.load %arg2[%c0_11, %c0_12, %c0_13] : memref<1x16x16xf32, #tpu.memory_space<vmem>>, vector<1x16x16xf32>
    %14 = vector.shape_cast %13 : vector<1x16x16xf32> to vector<16x16xf32>
    %15 = arith.truncf %14 : vector<16x16xf32> to vector<16x16xbf16>
    %c0_14 = arith.constant 0 : index
    %c0_15 = arith.constant 0 : index
    %16 = vector.load %arg6[%c0_14, %c0_15] : memref<16x32xbf16, #tpu.memory_space<vmem>>, vector<16x32xbf16>
    %cst_16 = arith.constant dense<0.000000e+00> : vector<16x32xf32>
    %17 = tpu.matmul %15, %16, %cst_16 {dimension_numbers = #tpu.dot_dimension_numbers<[1], [0], [0], [1], [0, 0, 1, 1], [], []>} : vector<16x16xbf16>, vector<16x32xbf16>, vector<16x32xf32> -> vector<16x32xf32>
    %c0_17 = arith.constant 0 : index
    %c0_18 = arith.constant 0 : index
    %18 = vector.load %arg7[%c0_17, %c0_18] : memref<1x32xf32, #tpu.memory_space<vmem>>, vector<1x32xf32>
    %19 = vector.broadcast %18 : vector<1x32xf32> to vector<16x32xf32>
    %20 = arith.addf %17, %19 : vector<16x32xf32>
    %cst_19 = arith.constant 0.000000e+00 : f32
    %21 = vector.broadcast %cst_19 : f32 to vector<16x32xf32>
    %22 = arith.maximumf %20, %21 : vector<16x32xf32>
    %cst_20 = arith.constant 0.000000e+00 : f32
    %23 = vector.broadcast %cst_20 : f32 to vector<24x32xf32>
    %c0_21 = arith.constant 0 : index
    %c0_22 = arith.constant 0 : index
    %24 = vector.load %arg14[%c0_21, %c0_22] : memref<24x32xf32, #tpu.memory_space<vmem>>, vector<24x32xf32>
    tpu.vector_store %arg14[%c0_21, %c0_22], %23 {strides = array<i32>} : memref<24x32xf32, #tpu.memory_space<vmem>>, vector<24x32xf32>,
    %c8_23 = arith.constant 8 : index
    %c0_24 = arith.constant 0 : index
    %25 = vector.load %arg14[%c8_23, %c0_24] : memref<24x32xf32, #tpu.memory_space<vmem>>, vector<16x32xf32>
    tpu.vector_store %arg14[%c8_23, %c0_24], %22 {strides = array<i32>} : memref<24x32xf32, #tpu.memory_space<vmem>>, vector<16x32xf32>,
    %c0_25 = arith.constant 0 : index
    %c0_26 = arith.constant 0 : index
    %c0_27 = arith.constant 0 : index
    %26 = vector.load %arg3[%c0_25, %c0_26, %c0_27] : memref<1x16x16xf32, #tpu.memory_space<vmem>>, vector<1x16x16xf32>
    %27 = vector.shape_cast %26 : vector<1x16x16xf32> to vector<16x16xf32>
    %28 = arith.truncf %27 : vector<16x16xf32> to vector<16x16xbf16>
    %c0_28 = arith.constant 0 : index
    %c0_29 = arith.constant 0 : index
    %29 = vector.load %arg6[%c0_28, %c0_29] : memref<16x32xbf16, #tpu.memory_space<vmem>>, vector<16x32xbf16>
    %cst_30 = arith.constant dense<0.000000e+00> : vector<16x32xf32>
    %30 = tpu.matmul %28, %29, %cst_30 {dimension_numbers = #tpu.dot_dimension_numbers<[1], [0], [0], [1], [0, 0, 1, 1], [], []>} : vector<16x16xbf16>, vector<16x32xbf16>, vector<16x32xf32> -> vector<16x32xf32>
    %c0_31 = arith.constant 0 : index
    %c0_32 = arith.constant 0 : index
    %31 = vector.load %arg7[%c0_31, %c0_32] : memref<1x32xf32, #tpu.memory_space<vmem>>, vector<1x32xf32>
    %32 = vector.broadcast %31 : vector<1x32xf32> to vector<16x32xf32>
    %33 = arith.addf %30, %32 : vector<16x32xf32>
    %cst_33 = arith.constant 0.000000e+00 : f32
    %34 = vector.broadcast %cst_33 : f32 to vector<16x32xf32>
    %35 = arith.maximumf %33, %34 : vector<16x32xf32>
    %cst_34 = arith.constant 0.000000e+00 : f32
    %36 = vector.broadcast %cst_34 : f32 to vector<24x32xf32>
    %c0_35 = arith.constant 0 : index
    %c0_36 = arith.constant 0 : index
    %37 = vector.load %arg15[%c0_35, %c0_36] : memref<24x32xf32, #tpu.memory_space<vmem>>, vector<24x32xf32>
    tpu.vector_store %arg15[%c0_35, %c0_36], %36 {strides = array<i32>} : memref<24x32xf32, #tpu.memory_space<vmem>>, vector<24x32xf32>,
    %c8_37 = arith.constant 8 : index
    %c0_38 = arith.constant 0 : index
    %38 = vector.load %arg15[%c8_37, %c0_38] : memref<24x32xf32, #tpu.memory_space<vmem>>, vector<16x32xf32>
    tpu.vector_store %arg15[%c8_37, %c0_38], %35 {strides = array<i32>} : memref<24x32xf32, #tpu.memory_space<vmem>>, vector<16x32xf32>,
    %c0_39 = arith.constant 0 : index
    %c0_40 = arith.constant 0 : index
    %c0_41 = arith.constant 0 : index
    %39 = vector.load %arg4[%c0_39, %c0_40, %c0_41] : memref<1x16x16xf32, #tpu.memory_space<vmem>>, vector<1x16x16xf32>
    %40 = vector.shape_cast %39 : vector<1x16x16xf32> to vector<16x16xf32>
    %41 = arith.truncf %40 : vector<16x16xf32> to vector<16x16xbf16>
    %c0_42 = arith.constant 0 : index
    %c0_43 = arith.constant 0 : index
    %42 = vector.load %arg6[%c0_42, %c0_43] : memref<16x32xbf16, #tpu.memory_space<vmem>>, vector<16x32xbf16>
    %cst_44 = arith.constant dense<0.000000e+00> : vector<16x32xf32>
    %43 = tpu.matmul %41, %42, %cst_44 {dimension_numbers = #tpu.dot_dimension_numbers<[1], [0], [0], [1], [0, 0, 1, 1], [], []>} : vector<16x16xbf16>, vector<16x32xbf16>, vector<16x32xf32> -> vector<16x32xf32>
    %c0_45 = arith.constant 0 : index
    %c0_46 = arith.constant 0 : index
    %44 = vector.load %arg7[%c0_45, %c0_46] : memref<1x32xf32, #tpu.memory_space<vmem>>, vector<1x32xf32>
    %45 = vector.broadcast %44 : vector<1x32xf32> to vector<16x32xf32>
    %46 = arith.addf %43, %45 : vector<16x32xf32>
    %cst_47 = arith.constant 0.000000e+00 : f32
    %47 = vector.broadcast %cst_47 : f32 to vector<16x32xf32>
    %48 = arith.maximumf %46, %47 : vector<16x32xf32>
    %cst_48 = arith.constant 0.000000e+00 : f32
    %49 = vector.broadcast %cst_48 : f32 to vector<24x32xf32>
    %c0_49 = arith.constant 0 : index
    %c0_50 = arith.constant 0 : index
    %50 = vector.load %arg16[%c0_49, %c0_50] : memref<24x32xf32, #tpu.memory_space<vmem>>, vector<24x32xf32>
    tpu.vector_store %arg16[%c0_49, %c0_50], %49 {strides = array<i32>} : memref<24x32xf32, #tpu.memory_space<vmem>>, vector<24x32xf32>,
    %c8_51 = arith.constant 8 : index
    %c0_52 = arith.constant 0 : index
    %51 = vector.load %arg16[%c8_51, %c0_52] : memref<24x32xf32, #tpu.memory_space<vmem>>, vector<16x32xf32>
    tpu.vector_store %arg16[%c8_51, %c0_52], %48 {strides = array<i32>} : memref<24x32xf32, #tpu.memory_space<vmem>>, vector<16x32xf32>,
    %c3 = arith.constant 3 : index
    %c0_53 = arith.constant 0 : index
    %52 = vector.load %arg16[%c3, %c0_53] : memref<24x32xf32, #tpu.memory_space<vmem>>, vector<16x32xf32>
    %c0_54 = arith.constant 0 : index
    %c0_55 = arith.constant 0 : index
    %c0_56 = arith.constant 0 : index
    %53 = vector.load %arg8[%c0_54, %c0_55, %c0_56] : memref<9x1x32xf32, #tpu.memory_space<vmem>>, vector<1x1x32xf32>
    %54 = vector.shape_cast %53 : vector<1x1x32xf32> to vector<1x32xf32>
    %55 = vector.broadcast %54 : vector<1x32xf32> to vector<16x32xf32>
    %56 = arith.mulf %52, %55 : vector<16x32xf32>
    %c0_57 = arith.constant 0 : index
    %c0_58 = arith.constant 0 : index
    %c0_59 = arith.constant 0 : index
    %57 = vector.load %arg5[%c0_57, %c0_58, %c0_59] : memref<9x16x1xf32, #tpu.memory_space<vmem>>, vector<1x16x1xf32>
    %58 = vector.shape_cast %57 : vector<1x16x1xf32> to vector<16x1xf32>
    %59 = vector.broadcast %58 : vector<16x1xf32> to vector<16x32xf32>
    %60 = arith.mulf %56, %59 : vector<16x32xf32>
    %c4 = arith.constant 4 : index
    %c0_60 = arith.constant 0 : index
    %61 = vector.load %arg15[%c4, %c0_60] : memref<24x32xf32, #tpu.memory_space<vmem>>, vector<16x32xf32>
    %c1 = arith.constant 1 : index
    %c0_61 = arith.constant 0 : index
    %c0_62 = arith.constant 0 : index
    %62 = vector.load %arg8[%c1, %c0_61, %c0_62] : memref<9x1x32xf32, #tpu.memory_space<vmem>>, vector<1x1x32xf32>
    %63 = vector.shape_cast %62 : vector<1x1x32xf32> to vector<1x32xf32>
    %64 = vector.broadcast %63 : vector<1x32xf32> to vector<16x32xf32>
    %65 = arith.mulf %61, %64 : vector<16x32xf32>
    %c1_63 = arith.constant 1 : index
    %c0_64 = arith.constant 0 : index
    %c0_65 = arith.constant 0 : index
    %66 = vector.load %arg5[%c1_63, %c0_64, %c0_65] : memref<9x16x1xf32, #tpu.memory_space<vmem>>, vector<1x16x1xf32>
    %67 = vector.shape_cast %66 : vector<1x16x1xf32> to vector<16x1xf32>
    %68 = vector.broadcast %67 : vector<16x1xf32> to vector<16x32xf32>
    %69 = arith.mulf %65, %68 : vector<16x32xf32>
    %c4_66 = arith.constant 4 : index
    %c0_67 = arith.constant 0 : index
    %70 = vector.load %arg16[%c4_66, %c0_67] : memref<24x32xf32, #tpu.memory_space<vmem>>, vector<16x32xf32>
    %c2 = arith.constant 2 : index
    %c0_68 = arith.constant 0 : index
    %c0_69 = arith.constant 0 : index
    %71 = vector.load %arg8[%c2, %c0_68, %c0_69] : memref<9x1x32xf32, #tpu.memory_space<vmem>>, vector<1x1x32xf32>
    %72 = vector.shape_cast %71 : vector<1x1x32xf32> to vector<1x32xf32>
    %73 = vector.broadcast %72 : vector<1x32xf32> to vector<16x32xf32>
    %74 = arith.mulf %70, %73 : vector<16x32xf32>
    %c2_70 = arith.constant 2 : index
    %c0_71 = arith.constant 0 : index
    %c0_72 = arith.constant 0 : index
    %75 = vector.load %arg5[%c2_70, %c0_71, %c0_72] : memref<9x16x1xf32, #tpu.memory_space<vmem>>, vector<1x16x1xf32>
    %76 = vector.shape_cast %75 : vector<1x16x1xf32> to vector<16x1xf32>
    %77 = vector.broadcast %76 : vector<16x1xf32> to vector<16x32xf32>
    %78 = arith.mulf %74, %77 : vector<16x32xf32>
    %c7 = arith.constant 7 : index
    %c0_73 = arith.constant 0 : index
    %79 = vector.load %arg14[%c7, %c0_73] : memref<24x32xf32, #tpu.memory_space<vmem>>, vector<16x32xf32>
    %c3_74 = arith.constant 3 : index
    %c0_75 = arith.constant 0 : index
    %c0_76 = arith.constant 0 : index
    %80 = vector.load %arg8[%c3_74, %c0_75, %c0_76] : memref<9x1x32xf32, #tpu.memory_space<vmem>>, vector<1x1x32xf32>
    %81 = vector.shape_cast %80 : vector<1x1x32xf32> to vector<1x32xf32>
    %82 = vector.broadcast %81 : vector<1x32xf32> to vector<16x32xf32>
    %83 = arith.mulf %79, %82 : vector<16x32xf32>
    %c3_77 = arith.constant 3 : index
    %c0_78 = arith.constant 0 : index
    %c0_79 = arith.constant 0 : index
    %84 = vector.load %arg5[%c3_77, %c0_78, %c0_79] : memref<9x16x1xf32, #tpu.memory_space<vmem>>, vector<1x16x1xf32>
    %85 = vector.shape_cast %84 : vector<1x16x1xf32> to vector<16x1xf32>
    %86 = vector.broadcast %85 : vector<16x1xf32> to vector<16x32xf32>
    %87 = arith.mulf %83, %86 : vector<16x32xf32>
    %c8_80 = arith.constant 8 : index
    %c0_81 = arith.constant 0 : index
    %88 = vector.load %arg13[%c8_80, %c0_81] : memref<24x32xf32, #tpu.memory_space<vmem>>, vector<16x32xf32>
    %c4_82 = arith.constant 4 : index
    %c0_83 = arith.constant 0 : index
    %c0_84 = arith.constant 0 : index
    %89 = vector.load %arg8[%c4_82, %c0_83, %c0_84] : memref<9x1x32xf32, #tpu.memory_space<vmem>>, vector<1x1x32xf32>
    %90 = vector.shape_cast %89 : vector<1x1x32xf32> to vector<1x32xf32>
    %91 = vector.broadcast %90 : vector<1x32xf32> to vector<16x32xf32>
    %92 = arith.mulf %88, %91 : vector<16x32xf32>
    %c8_85 = arith.constant 8 : index
    %c0_86 = arith.constant 0 : index
    %93 = vector.load %arg14[%c8_85, %c0_86] : memref<24x32xf32, #tpu.memory_space<vmem>>, vector<16x32xf32>
    %c5 = arith.constant 5 : index
    %c0_87 = arith.constant 0 : index
    %c0_88 = arith.constant 0 : index
    %94 = vector.load %arg8[%c5, %c0_87, %c0_88] : memref<9x1x32xf32, #tpu.memory_space<vmem>>, vector<1x1x32xf32>
    %95 = vector.shape_cast %94 : vector<1x1x32xf32> to vector<1x32xf32>
    %96 = vector.broadcast %95 : vector<1x32xf32> to vector<16x32xf32>
    %97 = arith.mulf %93, %96 : vector<16x32xf32>
    %c5_89 = arith.constant 5 : index
    %c0_90 = arith.constant 0 : index
    %c0_91 = arith.constant 0 : index
    %98 = vector.load %arg5[%c5_89, %c0_90, %c0_91] : memref<9x16x1xf32, #tpu.memory_space<vmem>>, vector<1x16x1xf32>
    %99 = vector.shape_cast %98 : vector<1x16x1xf32> to vector<16x1xf32>
    %100 = vector.broadcast %99 : vector<16x1xf32> to vector<16x32xf32>
    %101 = arith.mulf %97, %100 : vector<16x32xf32>
    %c7_92 = arith.constant 7 : index
    %c0_93 = arith.constant 0 : index
    %102 = vector.load %arg16[%c7_92, %c0_93] : memref<24x32xf32, #tpu.memory_space<vmem>>, vector<16x32xf32>
    %c6 = arith.constant 6 : index
    %c0_94 = arith.constant 0 : index
    %c0_95 = arith.constant 0 : index
    %103 = vector.load %arg8[%c6, %c0_94, %c0_95] : memref<9x1x32xf32, #tpu.memory_space<vmem>>, vector<1x1x32xf32>
    %104 = vector.shape_cast %103 : vector<1x1x32xf32> to vector<1x32xf32>
    %105 = vector.broadcast %104 : vector<1x32xf32> to vector<16x32xf32>
    %106 = arith.mulf %102, %105 : vector<16x32xf32>
    %c6_96 = arith.constant 6 : index
    %c0_97 = arith.constant 0 : index
    %c0_98 = arith.constant 0 : index
    %107 = vector.load %arg5[%c6_96, %c0_97, %c0_98] : memref<9x16x1xf32, #tpu.memory_space<vmem>>, vector<1x16x1xf32>
    %108 = vector.shape_cast %107 : vector<1x16x1xf32> to vector<16x1xf32>
    %109 = vector.broadcast %108 : vector<16x1xf32> to vector<16x32xf32>
    %110 = arith.mulf %106, %109 : vector<16x32xf32>
    %c8_99 = arith.constant 8 : index
    %c0_100 = arith.constant 0 : index
    %111 = vector.load %arg15[%c8_99, %c0_100] : memref<24x32xf32, #tpu.memory_space<vmem>>, vector<16x32xf32>
    %c7_101 = arith.constant 7 : index
    %c0_102 = arith.constant 0 : index
    %c0_103 = arith.constant 0 : index
    %112 = vector.load %arg8[%c7_101, %c0_102, %c0_103] : memref<9x1x32xf32, #tpu.memory_space<vmem>>, vector<1x1x32xf32>
    %113 = vector.shape_cast %112 : vector<1x1x32xf32> to vector<1x32xf32>
    %114 = vector.broadcast %113 : vector<1x32xf32> to vector<16x32xf32>
    %115 = arith.mulf %111, %114 : vector<16x32xf32>
    %c7_104 = arith.constant 7 : index
    %c0_105 = arith.constant 0 : index
    %c0_106 = arith.constant 0 : index
    %116 = vector.load %arg5[%c7_104, %c0_105, %c0_106] : memref<9x16x1xf32, #tpu.memory_space<vmem>>, vector<1x16x1xf32>
    %117 = vector.shape_cast %116 : vector<1x16x1xf32> to vector<16x1xf32>
    %118 = vector.broadcast %117 : vector<16x1xf32> to vector<16x32xf32>
    %119 = arith.mulf %115, %118 : vector<16x32xf32>
    %c8_107 = arith.constant 8 : index
    %c0_108 = arith.constant 0 : index
    %120 = vector.load %arg16[%c8_107, %c0_108] : memref<24x32xf32, #tpu.memory_space<vmem>>, vector<16x32xf32>
    %c8_109 = arith.constant 8 : index
    %c0_110 = arith.constant 0 : index
    %c0_111 = arith.constant 0 : index
    %121 = vector.load %arg8[%c8_109, %c0_110, %c0_111] : memref<9x1x32xf32, #tpu.memory_space<vmem>>, vector<1x1x32xf32>
    %122 = vector.shape_cast %121 : vector<1x1x32xf32> to vector<1x32xf32>
    %123 = vector.broadcast %122 : vector<1x32xf32> to vector<16x32xf32>
    %124 = arith.mulf %120, %123 : vector<16x32xf32>
    %c8_112 = arith.constant 8 : index
    %c0_113 = arith.constant 0 : index
    %c0_114 = arith.constant 0 : index
    %125 = vector.load %arg5[%c8_112, %c0_113, %c0_114] : memref<9x16x1xf32, #tpu.memory_space<vmem>>, vector<1x16x1xf32>
    %126 = vector.shape_cast %125 : vector<1x16x1xf32> to vector<16x1xf32>
    %127 = vector.broadcast %126 : vector<16x1xf32> to vector<16x32xf32>
    %128 = arith.mulf %124, %127 : vector<16x32xf32>
    %129 = arith.addf %60, %69 : vector<16x32xf32>
    %130 = arith.addf %129, %78 : vector<16x32xf32>
    %131 = arith.addf %87, %92 : vector<16x32xf32>
    %132 = arith.addf %131, %101 : vector<16x32xf32>
    %133 = arith.addf %130, %132 : vector<16x32xf32>
    %134 = arith.addf %110, %119 : vector<16x32xf32>
    %135 = arith.addf %134, %128 : vector<16x32xf32>
    %136 = arith.addf %133, %135 : vector<16x32xf32>
    %c0_115 = arith.constant 0 : index
    %c0_116 = arith.constant 0 : index
    %137 = vector.load %arg9[%c0_115, %c0_116] : memref<1x32xf32, #tpu.memory_space<vmem>>, vector<1x32xf32>
    %138 = vector.broadcast %137 : vector<1x32xf32> to vector<16x32xf32>
    %139 = arith.addf %136, %138 : vector<16x32xf32>
    %cst_117 = arith.constant 0.000000e+00 : f32
    %140 = vector.broadcast %cst_117 : f32 to vector<16x32xf32>
    %141 = arith.maximumf %139, %140 : vector<16x32xf32>
    %142 = arith.truncf %141 : vector<16x32xf32> to vector<16x32xbf16>
    %c0_118 = arith.constant 0 : index
    %c0_119 = arith.constant 0 : index
    %143 = vector.load %arg10[%c0_118, %c0_119] : memref<32x32xbf16, #tpu.memory_space<vmem>>, vector<32x32xbf16>
    %cst_120 = arith.constant dense<0.000000e+00> : vector<16x32xf32>
    %144 = tpu.matmul %142, %143, %cst_120 {dimension_numbers = #tpu.dot_dimension_numbers<[1], [0], [0], [1], [0, 0, 1, 1], [], []>} : vector<16x32xbf16>, vector<32x32xbf16>, vector<16x32xf32> -> vector<16x32xf32>
    %c0_121 = arith.constant 0 : index
    %c0_122 = arith.constant 0 : index
    %145 = vector.load %arg11[%c0_121, %c0_122] : memref<1x32xf32, #tpu.memory_space<vmem>>, vector<1x32xf32>
    %146 = vector.broadcast %145 : vector<1x32xf32> to vector<16x32xf32>
    %147 = arith.addf %144, %146 : vector<16x32xf32>
    %c0_123 = arith.constant 0 : index
    %c0_124 = arith.constant 0 : index
    %c0_125 = arith.constant 0 : index
    %148 = vector.load %arg12[%c0_123, %c0_124, %c0_125] : memref<1x16x32xf32, #tpu.memory_space<vmem>>, vector<1x16x32xf32>
    %149 = vector.shape_cast %148 : vector<1x16x32xf32> to vector<16x32xf32>
    %150 = vector.shape_cast %147 : vector<16x32xf32> to vector<1x16x32xf32>
    tpu.vector_store %arg12[%c0_123, %c0_124, %c0_125], %150 {strides = array<i32>} : memref<1x16x32xf32, #tpu.memory_space<vmem>>, vector<1x16x32xf32>,
    return
  }
  func.func @transform_0(%arg0: i32) -> (i32, i32, i32) {
    %c0_i32 = arith.constant 0 : i32
    %c0_i32_0 = arith.constant 0 : i32
    %c0_i32_1 = arith.constant 0 : i32
    return %arg0, %c0_i32, %c0_i32_0 : i32, i32, i32
  }
  func.func @transform_1(%arg0: i32) -> (i32, i32, i32) {
    %c0_i32 = arith.constant 0 : i32
    %c0_i32_0 = arith.constant 0 : i32
    %c0_i32_1 = arith.constant 0 : i32
    return %arg0, %c0_i32, %c0_i32_0 : i32, i32, i32
  }
  func.func @transform_2(%arg0: i32) -> (i32, i32, i32) {
    %c0_i32 = arith.constant 0 : i32
    %c0_i32_0 = arith.constant 0 : i32
    %c0_i32_1 = arith.constant 0 : i32
    return %arg0, %c0_i32, %c0_i32_0 : i32, i32, i32
  }
  func.func @transform_3(%arg0: i32) -> (i32, i32, i32) {
    %c0_i32 = arith.constant 0 : i32
    %c0_i32_0 = arith.constant 0 : i32
    %c0_i32_1 = arith.constant 0 : i32
    return %arg0, %c0_i32, %c0_i32_0 : i32, i32, i32
  }
  func.func @transform_4(%arg0: i32) -> (i32, i32, i32) {
    %c0_i32 = arith.constant 0 : i32
    %c0_i32_0 = arith.constant 0 : i32
    %c0_i32_1 = arith.constant 0 : i32
    %c0_i32_2 = arith.constant 0 : i32
    return %c0_i32, %c0_i32_0, %c0_i32_1 : i32, i32, i32
  }
  func.func @transform_5(%arg0: i32) -> (i32, i32) {
    %c0_i32 = arith.constant 0 : i32
    %c0_i32_0 = arith.constant 0 : i32
    %c0_i32_1 = arith.constant 0 : i32
    return %c0_i32, %c0_i32_0 : i32, i32
  }
  func.func @transform_6(%arg0: i32) -> (i32, i32) {
    %c0_i32 = arith.constant 0 : i32
    %c0_i32_0 = arith.constant 0 : i32
    %c0_i32_1 = arith.constant 0 : i32
    return %c0_i32, %c0_i32_0 : i32, i32
  }
  func.func @transform_7(%arg0: i32) -> (i32, i32, i32) {
    %c0_i32 = arith.constant 0 : i32
    %c0_i32_0 = arith.constant 0 : i32
    %c0_i32_1 = arith.constant 0 : i32
    %c0_i32_2 = arith.constant 0 : i32
    return %c0_i32, %c0_i32_0, %c0_i32_1 : i32, i32, i32
  }
  func.func @transform_8(%arg0: i32) -> (i32, i32) {
    %c0_i32 = arith.constant 0 : i32
    %c0_i32_0 = arith.constant 0 : i32
    %c0_i32_1 = arith.constant 0 : i32
    return %c0_i32, %c0_i32_0 : i32, i32
  }
  func.func @transform_9(%arg0: i32) -> (i32, i32) {
    %c0_i32 = arith.constant 0 : i32
    %c0_i32_0 = arith.constant 0 : i32
    %c0_i32_1 = arith.constant 0 : i32
    return %c0_i32, %c0_i32_0 : i32, i32
  }
  func.func @transform_10(%arg0: i32) -> (i32, i32) {
    %c0_i32 = arith.constant 0 : i32
    %c0_i32_0 = arith.constant 0 : i32
    %c0_i32_1 = arith.constant 0 : i32
    return %c0_i32, %c0_i32_0 : i32, i32
  }
  func.func @transform_11(%arg0: i32) -> (i32, i32, i32) {
    %c0_i32 = arith.constant 0 : i32
    %c0_i32_0 = arith.constant 0 : i32
    %c0_i32_1 = arith.constant 0 : i32
    return %arg0, %c0_i32, %c0_i32_0 : i32, i32, i32
  }
}

module attributes {stable_mosaic.version = 11 : i64} {
  func.func @_block_s1_kernel(%arg0: i32, %arg1: memref<1x16x32xf32, #tpu.memory_space<vmem>>, %arg2: memref<9x16x1xf32, #tpu.memory_space<vmem>>, %arg3: memref<32x64xbf16, #tpu.memory_space<vmem>>, %arg4: memref<1x64xf32, #tpu.memory_space<vmem>>, %arg5: memref<9x1x64xf32, #tpu.memory_space<vmem>>, %arg6: memref<1x64xf32, #tpu.memory_space<vmem>>, %arg7: memref<64x32xbf16, #tpu.memory_space<vmem>>, %arg8: memref<1x32xf32, #tpu.memory_space<vmem>>, %arg9: memref<1x16x32xf32, #tpu.memory_space<vmem>>, %arg10: memref<29x64xf32, #tpu.memory_space<vmem>>) attributes {dimension_semantics = [#tpu.dimension_semantics<parallel>], iteration_bounds = array<i64: 2>, scalar_prefetch = 0 : i64, scratch_operands = 1 : i64, tpu.core_type = #tpu.core_type<tc>, window_params = [{transform_indices = @transform_0, window_bounds = array<i64: 1, 16, 32>}, {pipeline_mode = #tpu.pipeline_mode<synchronous>, transform_indices = @transform_1, window_bounds = array<i64: 9, 16, 1>}, {pipeline_mode = #tpu.pipeline_mode<synchronous>, transform_indices = @transform_2, window_bounds = array<i64: 32, 64>}, {pipeline_mode = #tpu.pipeline_mode<synchronous>, transform_indices = @transform_3, window_bounds = array<i64: 1, 64>}, {pipeline_mode = #tpu.pipeline_mode<synchronous>, transform_indices = @transform_4, window_bounds = array<i64: 9, 1, 64>}, {pipeline_mode = #tpu.pipeline_mode<synchronous>, transform_indices = @transform_5, window_bounds = array<i64: 1, 64>}, {pipeline_mode = #tpu.pipeline_mode<synchronous>, transform_indices = @transform_6, window_bounds = array<i64: 64, 32>}, {pipeline_mode = #tpu.pipeline_mode<synchronous>, transform_indices = @transform_7, window_bounds = array<i64: 1, 32>}, {transform_indices = @transform_8, window_bounds = array<i64: 1, 16, 32>}]} {
    %c0 = arith.constant 0 : index
    %c0_0 = arith.constant 0 : index
    %c0_1 = arith.constant 0 : index
    %0 = vector.load %arg1[%c0, %c0_0, %c0_1] : memref<1x16x32xf32, #tpu.memory_space<vmem>>, vector<1x16x32xf32>
    %1 = vector.shape_cast %0 : vector<1x16x32xf32> to vector<16x32xf32>
    %2 = arith.truncf %1 : vector<16x32xf32> to vector<16x32xbf16>
    %c0_2 = arith.constant 0 : index
    %c0_3 = arith.constant 0 : index
    %3 = vector.load %arg3[%c0_2, %c0_3] : memref<32x64xbf16, #tpu.memory_space<vmem>>, vector<32x64xbf16>
    %cst = arith.constant dense<0.000000e+00> : vector<16x64xf32>
    %4 = tpu.matmul %2, %3, %cst {dimension_numbers = #tpu.dot_dimension_numbers<[1], [0], [0], [1], [0, 0, 1, 1], [], []>} : vector<16x32xbf16>, vector<32x64xbf16>, vector<16x64xf32> -> vector<16x64xf32>
    %c0_4 = arith.constant 0 : index
    %c0_5 = arith.constant 0 : index
    %5 = vector.load %arg4[%c0_4, %c0_5] : memref<1x64xf32, #tpu.memory_space<vmem>>, vector<1x64xf32>
    %6 = vector.broadcast %5 : vector<1x64xf32> to vector<16x64xf32>
    %7 = arith.addf %4, %6 : vector<16x64xf32>
    %cst_6 = arith.constant 0.000000e+00 : f32
    %8 = vector.broadcast %cst_6 : f32 to vector<16x64xf32>
    %9 = arith.maximumf %7, %8 : vector<16x64xf32>
    %cst_7 = arith.constant 0.000000e+00 : f32
    %10 = vector.broadcast %cst_7 : f32 to vector<29x64xf32>
    %c0_8 = arith.constant 0 : index
    %c0_9 = arith.constant 0 : index
    %11 = vector.load %arg10[%c0_8, %c0_9] : memref<29x64xf32, #tpu.memory_space<vmem>>, vector<29x64xf32>
    tpu.vector_store %arg10[%c0_8, %c0_9], %10 {strides = array<i32>} : memref<29x64xf32, #tpu.memory_space<vmem>>, vector<29x64xf32>,
    %c8 = arith.constant 8 : index
    %c0_10 = arith.constant 0 : index
    %12 = vector.load %arg10[%c8, %c0_10] : memref<29x64xf32, #tpu.memory_space<vmem>>, vector<16x64xf32>
    tpu.vector_store %arg10[%c8, %c0_10], %9 {strides = array<i32>} : memref<29x64xf32, #tpu.memory_space<vmem>>, vector<16x64xf32>,
    %c3 = arith.constant 3 : index
    %c0_11 = arith.constant 0 : index
    %13 = vector.load %arg10[%c3, %c0_11] : memref<29x64xf32, #tpu.memory_space<vmem>>, vector<16x64xf32>
    %c0_12 = arith.constant 0 : index
    %c0_13 = arith.constant 0 : index
    %c0_14 = arith.constant 0 : index
    %14 = vector.load %arg5[%c0_12, %c0_13, %c0_14] : memref<9x1x64xf32, #tpu.memory_space<vmem>>, vector<1x1x64xf32>
    %15 = vector.shape_cast %14 : vector<1x1x64xf32> to vector<1x64xf32>
    %16 = vector.broadcast %15 : vector<1x64xf32> to vector<16x64xf32>
    %17 = arith.mulf %13, %16 : vector<16x64xf32>
    %c0_15 = arith.constant 0 : index
    %c0_16 = arith.constant 0 : index
    %c0_17 = arith.constant 0 : index
    %18 = vector.load %arg2[%c0_15, %c0_16, %c0_17] : memref<9x16x1xf32, #tpu.memory_space<vmem>>, vector<1x16x1xf32>
    %19 = vector.shape_cast %18 : vector<1x16x1xf32> to vector<16x1xf32>
    %20 = vector.broadcast %19 : vector<16x1xf32> to vector<16x64xf32>
    %21 = arith.mulf %17, %20 : vector<16x64xf32>
    %c4 = arith.constant 4 : index
    %c0_18 = arith.constant 0 : index
    %22 = vector.load %arg10[%c4, %c0_18] : memref<29x64xf32, #tpu.memory_space<vmem>>, vector<16x64xf32>
    %c1 = arith.constant 1 : index
    %c0_19 = arith.constant 0 : index
    %c0_20 = arith.constant 0 : index
    %23 = vector.load %arg5[%c1, %c0_19, %c0_20] : memref<9x1x64xf32, #tpu.memory_space<vmem>>, vector<1x1x64xf32>
    %24 = vector.shape_cast %23 : vector<1x1x64xf32> to vector<1x64xf32>
    %25 = vector.broadcast %24 : vector<1x64xf32> to vector<16x64xf32>
    %26 = arith.mulf %22, %25 : vector<16x64xf32>
    %c1_21 = arith.constant 1 : index
    %c0_22 = arith.constant 0 : index
    %c0_23 = arith.constant 0 : index
    %27 = vector.load %arg2[%c1_21, %c0_22, %c0_23] : memref<9x16x1xf32, #tpu.memory_space<vmem>>, vector<1x16x1xf32>
    %28 = vector.shape_cast %27 : vector<1x16x1xf32> to vector<16x1xf32>
    %29 = vector.broadcast %28 : vector<16x1xf32> to vector<16x64xf32>
    %30 = arith.mulf %26, %29 : vector<16x64xf32>
    %c5 = arith.constant 5 : index
    %c0_24 = arith.constant 0 : index
    %31 = vector.load %arg10[%c5, %c0_24] : memref<29x64xf32, #tpu.memory_space<vmem>>, vector<16x64xf32>
    %c2 = arith.constant 2 : index
    %c0_25 = arith.constant 0 : index
    %c0_26 = arith.constant 0 : index
    %32 = vector.load %arg5[%c2, %c0_25, %c0_26] : memref<9x1x64xf32, #tpu.memory_space<vmem>>, vector<1x1x64xf32>
    %33 = vector.shape_cast %32 : vector<1x1x64xf32> to vector<1x64xf32>
    %34 = vector.broadcast %33 : vector<1x64xf32> to vector<16x64xf32>
    %35 = arith.mulf %31, %34 : vector<16x64xf32>
    %c2_27 = arith.constant 2 : index
    %c0_28 = arith.constant 0 : index
    %c0_29 = arith.constant 0 : index
    %36 = vector.load %arg2[%c2_27, %c0_28, %c0_29] : memref<9x16x1xf32, #tpu.memory_space<vmem>>, vector<1x16x1xf32>
    %37 = vector.shape_cast %36 : vector<1x16x1xf32> to vector<16x1xf32>
    %38 = vector.broadcast %37 : vector<16x1xf32> to vector<16x64xf32>
    %39 = arith.mulf %35, %38 : vector<16x64xf32>
    %c7 = arith.constant 7 : index
    %c0_30 = arith.constant 0 : index
    %40 = vector.load %arg10[%c7, %c0_30] : memref<29x64xf32, #tpu.memory_space<vmem>>, vector<16x64xf32>
    %c3_31 = arith.constant 3 : index
    %c0_32 = arith.constant 0 : index
    %c0_33 = arith.constant 0 : index
    %41 = vector.load %arg5[%c3_31, %c0_32, %c0_33] : memref<9x1x64xf32, #tpu.memory_space<vmem>>, vector<1x1x64xf32>
    %42 = vector.shape_cast %41 : vector<1x1x64xf32> to vector<1x64xf32>
    %43 = vector.broadcast %42 : vector<1x64xf32> to vector<16x64xf32>
    %44 = arith.mulf %40, %43 : vector<16x64xf32>
    %c3_34 = arith.constant 3 : index
    %c0_35 = arith.constant 0 : index
    %c0_36 = arith.constant 0 : index
    %45 = vector.load %arg2[%c3_34, %c0_35, %c0_36] : memref<9x16x1xf32, #tpu.memory_space<vmem>>, vector<1x16x1xf32>
    %46 = vector.shape_cast %45 : vector<1x16x1xf32> to vector<16x1xf32>
    %47 = vector.broadcast %46 : vector<16x1xf32> to vector<16x64xf32>
    %48 = arith.mulf %44, %47 : vector<16x64xf32>
    %c8_37 = arith.constant 8 : index
    %c0_38 = arith.constant 0 : index
    %49 = vector.load %arg10[%c8_37, %c0_38] : memref<29x64xf32, #tpu.memory_space<vmem>>, vector<16x64xf32>
    %c4_39 = arith.constant 4 : index
    %c0_40 = arith.constant 0 : index
    %c0_41 = arith.constant 0 : index
    %50 = vector.load %arg5[%c4_39, %c0_40, %c0_41] : memref<9x1x64xf32, #tpu.memory_space<vmem>>, vector<1x1x64xf32>
    %51 = vector.shape_cast %50 : vector<1x1x64xf32> to vector<1x64xf32>
    %52 = vector.broadcast %51 : vector<1x64xf32> to vector<16x64xf32>
    %53 = arith.mulf %49, %52 : vector<16x64xf32>
    %c9 = arith.constant 9 : index
    %c0_42 = arith.constant 0 : index
    %54 = vector.load %arg10[%c9, %c0_42] : memref<29x64xf32, #tpu.memory_space<vmem>>, vector<16x64xf32>
    %c5_43 = arith.constant 5 : index
    %c0_44 = arith.constant 0 : index
    %c0_45 = arith.constant 0 : index
    %55 = vector.load %arg5[%c5_43, %c0_44, %c0_45] : memref<9x1x64xf32, #tpu.memory_space<vmem>>, vector<1x1x64xf32>
    %56 = vector.shape_cast %55 : vector<1x1x64xf32> to vector<1x64xf32>
    %57 = vector.broadcast %56 : vector<1x64xf32> to vector<16x64xf32>
    %58 = arith.mulf %54, %57 : vector<16x64xf32>
    %c5_46 = arith.constant 5 : index
    %c0_47 = arith.constant 0 : index
    %c0_48 = arith.constant 0 : index
    %59 = vector.load %arg2[%c5_46, %c0_47, %c0_48] : memref<9x16x1xf32, #tpu.memory_space<vmem>>, vector<1x16x1xf32>
    %60 = vector.shape_cast %59 : vector<1x16x1xf32> to vector<16x1xf32>
    %61 = vector.broadcast %60 : vector<16x1xf32> to vector<16x64xf32>
    %62 = arith.mulf %58, %61 : vector<16x64xf32>
    %c11 = arith.constant 11 : index
    %c0_49 = arith.constant 0 : index
    %63 = vector.load %arg10[%c11, %c0_49] : memref<29x64xf32, #tpu.memory_space<vmem>>, vector<16x64xf32>
    %c6 = arith.constant 6 : index
    %c0_50 = arith.constant 0 : index
    %c0_51 = arith.constant 0 : index
    %64 = vector.load %arg5[%c6, %c0_50, %c0_51] : memref<9x1x64xf32, #tpu.memory_space<vmem>>, vector<1x1x64xf32>
    %65 = vector.shape_cast %64 : vector<1x1x64xf32> to vector<1x64xf32>
    %66 = vector.broadcast %65 : vector<1x64xf32> to vector<16x64xf32>
    %67 = arith.mulf %63, %66 : vector<16x64xf32>
    %c6_52 = arith.constant 6 : index
    %c0_53 = arith.constant 0 : index
    %c0_54 = arith.constant 0 : index
    %68 = vector.load %arg2[%c6_52, %c0_53, %c0_54] : memref<9x16x1xf32, #tpu.memory_space<vmem>>, vector<1x16x1xf32>
    %69 = vector.shape_cast %68 : vector<1x16x1xf32> to vector<16x1xf32>
    %70 = vector.broadcast %69 : vector<16x1xf32> to vector<16x64xf32>
    %71 = arith.mulf %67, %70 : vector<16x64xf32>
    %c12 = arith.constant 12 : index
    %c0_55 = arith.constant 0 : index
    %72 = vector.load %arg10[%c12, %c0_55] : memref<29x64xf32, #tpu.memory_space<vmem>>, vector<16x64xf32>
    %c7_56 = arith.constant 7 : index
    %c0_57 = arith.constant 0 : index
    %c0_58 = arith.constant 0 : index
    %73 = vector.load %arg5[%c7_56, %c0_57, %c0_58] : memref<9x1x64xf32, #tpu.memory_space<vmem>>, vector<1x1x64xf32>
    %74 = vector.shape_cast %73 : vector<1x1x64xf32> to vector<1x64xf32>
    %75 = vector.broadcast %74 : vector<1x64xf32> to vector<16x64xf32>
    %76 = arith.mulf %72, %75 : vector<16x64xf32>
    %c7_59 = arith.constant 7 : index
    %c0_60 = arith.constant 0 : index
    %c0_61 = arith.constant 0 : index
    %77 = vector.load %arg2[%c7_59, %c0_60, %c0_61] : memref<9x16x1xf32, #tpu.memory_space<vmem>>, vector<1x16x1xf32>
    %78 = vector.shape_cast %77 : vector<1x16x1xf32> to vector<16x1xf32>
    %79 = vector.broadcast %78 : vector<16x1xf32> to vector<16x64xf32>
    %80 = arith.mulf %76, %79 : vector<16x64xf32>
    %c13 = arith.constant 13 : index
    %c0_62 = arith.constant 0 : index
    %81 = vector.load %arg10[%c13, %c0_62] : memref<29x64xf32, #tpu.memory_space<vmem>>, vector<16x64xf32>
    %c8_63 = arith.constant 8 : index
    %c0_64 = arith.constant 0 : index
    %c0_65 = arith.constant 0 : index
    %82 = vector.load %arg5[%c8_63, %c0_64, %c0_65] : memref<9x1x64xf32, #tpu.memory_space<vmem>>, vector<1x1x64xf32>
    %83 = vector.shape_cast %82 : vector<1x1x64xf32> to vector<1x64xf32>
    %84 = vector.broadcast %83 : vector<1x64xf32> to vector<16x64xf32>
    %85 = arith.mulf %81, %84 : vector<16x64xf32>
    %c8_66 = arith.constant 8 : index
    %c0_67 = arith.constant 0 : index
    %c0_68 = arith.constant 0 : index
    %86 = vector.load %arg2[%c8_66, %c0_67, %c0_68] : memref<9x16x1xf32, #tpu.memory_space<vmem>>, vector<1x16x1xf32>
    %87 = vector.shape_cast %86 : vector<1x16x1xf32> to vector<16x1xf32>
    %88 = vector.broadcast %87 : vector<16x1xf32> to vector<16x64xf32>
    %89 = arith.mulf %85, %88 : vector<16x64xf32>
    %90 = arith.addf %21, %30 : vector<16x64xf32>
    %91 = arith.addf %90, %39 : vector<16x64xf32>
    %92 = arith.addf %48, %53 : vector<16x64xf32>
    %93 = arith.addf %92, %62 : vector<16x64xf32>
    %94 = arith.addf %91, %93 : vector<16x64xf32>
    %95 = arith.addf %71, %80 : vector<16x64xf32>
    %96 = arith.addf %95, %89 : vector<16x64xf32>
    %97 = arith.addf %94, %96 : vector<16x64xf32>
    %c0_69 = arith.constant 0 : index
    %c0_70 = arith.constant 0 : index
    %98 = vector.load %arg6[%c0_69, %c0_70] : memref<1x64xf32, #tpu.memory_space<vmem>>, vector<1x64xf32>
    %99 = vector.broadcast %98 : vector<1x64xf32> to vector<16x64xf32>
    %100 = arith.addf %97, %99 : vector<16x64xf32>
    %cst_71 = arith.constant 0.000000e+00 : f32
    %101 = vector.broadcast %cst_71 : f32 to vector<16x64xf32>
    %102 = arith.maximumf %100, %101 : vector<16x64xf32>
    %103 = arith.truncf %102 : vector<16x64xf32> to vector<16x64xbf16>
    %c0_72 = arith.constant 0 : index
    %c0_73 = arith.constant 0 : index
    %104 = vector.load %arg7[%c0_72, %c0_73] : memref<64x32xbf16, #tpu.memory_space<vmem>>, vector<64x32xbf16>
    %cst_74 = arith.constant dense<0.000000e+00> : vector<16x32xf32>
    %105 = tpu.matmul %103, %104, %cst_74 {dimension_numbers = #tpu.dot_dimension_numbers<[1], [0], [0], [1], [0, 0, 1, 1], [], []>} : vector<16x64xbf16>, vector<64x32xbf16>, vector<16x32xf32> -> vector<16x32xf32>
    %c0_75 = arith.constant 0 : index
    %c0_76 = arith.constant 0 : index
    %106 = vector.load %arg8[%c0_75, %c0_76] : memref<1x32xf32, #tpu.memory_space<vmem>>, vector<1x32xf32>
    %107 = vector.broadcast %106 : vector<1x32xf32> to vector<16x32xf32>
    %108 = arith.addf %105, %107 : vector<16x32xf32>
    %109 = arith.addf %108, %1 : vector<16x32xf32>
    %c0_77 = arith.constant 0 : index
    %c0_78 = arith.constant 0 : index
    %c0_79 = arith.constant 0 : index
    %110 = vector.load %arg9[%c0_77, %c0_78, %c0_79] : memref<1x16x32xf32, #tpu.memory_space<vmem>>, vector<1x16x32xf32>
    %111 = vector.shape_cast %110 : vector<1x16x32xf32> to vector<16x32xf32>
    %112 = vector.shape_cast %109 : vector<16x32xf32> to vector<1x16x32xf32>
    tpu.vector_store %arg9[%c0_77, %c0_78, %c0_79], %112 {strides = array<i32>} : memref<1x16x32xf32, #tpu.memory_space<vmem>>, vector<1x16x32xf32>,
    return
  }
  func.func @transform_0(%arg0: i32) -> (i32, i32, i32) {
    %c0_i32 = arith.constant 0 : i32
    %c0_i32_0 = arith.constant 0 : i32
    %c0_i32_1 = arith.constant 0 : i32
    return %arg0, %c0_i32, %c0_i32_0 : i32, i32, i32
  }
  func.func @transform_1(%arg0: i32) -> (i32, i32, i32) {
    %c0_i32 = arith.constant 0 : i32
    %c0_i32_0 = arith.constant 0 : i32
    %c0_i32_1 = arith.constant 0 : i32
    %c0_i32_2 = arith.constant 0 : i32
    return %c0_i32, %c0_i32_0, %c0_i32_1 : i32, i32, i32
  }
  func.func @transform_2(%arg0: i32) -> (i32, i32) {
    %c0_i32 = arith.constant 0 : i32
    %c0_i32_0 = arith.constant 0 : i32
    %c0_i32_1 = arith.constant 0 : i32
    return %c0_i32, %c0_i32_0 : i32, i32
  }
  func.func @transform_3(%arg0: i32) -> (i32, i32) {
    %c0_i32 = arith.constant 0 : i32
    %c0_i32_0 = arith.constant 0 : i32
    %c0_i32_1 = arith.constant 0 : i32
    return %c0_i32, %c0_i32_0 : i32, i32
  }
  func.func @transform_4(%arg0: i32) -> (i32, i32, i32) {
    %c0_i32 = arith.constant 0 : i32
    %c0_i32_0 = arith.constant 0 : i32
    %c0_i32_1 = arith.constant 0 : i32
    %c0_i32_2 = arith.constant 0 : i32
    return %c0_i32, %c0_i32_0, %c0_i32_1 : i32, i32, i32
  }
  func.func @transform_5(%arg0: i32) -> (i32, i32) {
    %c0_i32 = arith.constant 0 : i32
    %c0_i32_0 = arith.constant 0 : i32
    %c0_i32_1 = arith.constant 0 : i32
    return %c0_i32, %c0_i32_0 : i32, i32
  }
  func.func @transform_6(%arg0: i32) -> (i32, i32) {
    %c0_i32 = arith.constant 0 : i32
    %c0_i32_0 = arith.constant 0 : i32
    %c0_i32_1 = arith.constant 0 : i32
    return %c0_i32, %c0_i32_0 : i32, i32
  }
  func.func @transform_7(%arg0: i32) -> (i32, i32) {
    %c0_i32 = arith.constant 0 : i32
    %c0_i32_0 = arith.constant 0 : i32
    %c0_i32_1 = arith.constant 0 : i32
    return %c0_i32, %c0_i32_0 : i32, i32
  }
  func.func @transform_8(%arg0: i32) -> (i32, i32, i32) {
    %c0_i32 = arith.constant 0 : i32
    %c0_i32_0 = arith.constant 0 : i32
    %c0_i32_1 = arith.constant 0 : i32
    return %arg0, %c0_i32, %c0_i32_0 : i32, i32, i32
  }
}

module attributes {stable_mosaic.version = 11 : i64} {
  func.func @_block_s1_kernel(%arg0: i32, %arg1: memref<1x4x64xf32, #tpu.memory_space<vmem>>, %arg2: memref<9x4x1xf32, #tpu.memory_space<vmem>>, %arg3: memref<64x128xbf16, #tpu.memory_space<vmem>>, %arg4: memref<1x128xf32, #tpu.memory_space<vmem>>, %arg5: memref<9x1x128xf32, #tpu.memory_space<vmem>>, %arg6: memref<1x128xf32, #tpu.memory_space<vmem>>, %arg7: memref<128x64xbf16, #tpu.memory_space<vmem>>, %arg8: memref<1x64xf32, #tpu.memory_space<vmem>>, %arg9: memref<1x4x64xf32, #tpu.memory_space<vmem>>, %arg10: memref<15x128xf32, #tpu.memory_space<vmem>>) attributes {dimension_semantics = [#tpu.dimension_semantics<parallel>], iteration_bounds = array<i64: 2>, scalar_prefetch = 0 : i64, scratch_operands = 1 : i64, tpu.core_type = #tpu.core_type<tc>, window_params = [{transform_indices = @transform_0, window_bounds = array<i64: 1, 4, 64>}, {pipeline_mode = #tpu.pipeline_mode<synchronous>, transform_indices = @transform_1, window_bounds = array<i64: 9, 4, 1>}, {pipeline_mode = #tpu.pipeline_mode<synchronous>, transform_indices = @transform_2, window_bounds = array<i64: 64, 128>}, {pipeline_mode = #tpu.pipeline_mode<synchronous>, transform_indices = @transform_3, window_bounds = array<i64: 1, 128>}, {pipeline_mode = #tpu.pipeline_mode<synchronous>, transform_indices = @transform_4, window_bounds = array<i64: 9, 1, 128>}, {pipeline_mode = #tpu.pipeline_mode<synchronous>, transform_indices = @transform_5, window_bounds = array<i64: 1, 128>}, {pipeline_mode = #tpu.pipeline_mode<synchronous>, transform_indices = @transform_6, window_bounds = array<i64: 128, 64>}, {pipeline_mode = #tpu.pipeline_mode<synchronous>, transform_indices = @transform_7, window_bounds = array<i64: 1, 64>}, {transform_indices = @transform_8, window_bounds = array<i64: 1, 4, 64>}]} {
    %c0 = arith.constant 0 : index
    %c0_0 = arith.constant 0 : index
    %c0_1 = arith.constant 0 : index
    %0 = vector.load %arg1[%c0, %c0_0, %c0_1] : memref<1x4x64xf32, #tpu.memory_space<vmem>>, vector<1x4x64xf32>
    %1 = vector.shape_cast %0 : vector<1x4x64xf32> to vector<4x64xf32>
    %2 = arith.truncf %1 : vector<4x64xf32> to vector<4x64xbf16>
    %c0_2 = arith.constant 0 : index
    %c0_3 = arith.constant 0 : index
    %3 = vector.load %arg3[%c0_2, %c0_3] : memref<64x128xbf16, #tpu.memory_space<vmem>>, vector<64x128xbf16>
    %cst = arith.constant dense<0.000000e+00> : vector<4x128xf32>
    %4 = tpu.matmul %2, %3, %cst {dimension_numbers = #tpu.dot_dimension_numbers<[1], [0], [0], [1], [0, 0, 1, 1], [], []>} : vector<4x64xbf16>, vector<64x128xbf16>, vector<4x128xf32> -> vector<4x128xf32>
    %c0_4 = arith.constant 0 : index
    %c0_5 = arith.constant 0 : index
    %5 = vector.load %arg4[%c0_4, %c0_5] : memref<1x128xf32, #tpu.memory_space<vmem>>, vector<1x128xf32>
    %6 = vector.broadcast %5 : vector<1x128xf32> to vector<4x128xf32>
    %7 = arith.addf %4, %6 : vector<4x128xf32>
    %cst_6 = arith.constant 0.000000e+00 : f32
    %8 = vector.broadcast %cst_6 : f32 to vector<4x128xf32>
    %9 = arith.maximumf %7, %8 : vector<4x128xf32>
    %cst_7 = arith.constant 0.000000e+00 : f32
    %10 = vector.broadcast %cst_7 : f32 to vector<15x128xf32>
    %c0_8 = arith.constant 0 : index
    %c0_9 = arith.constant 0 : index
    %11 = vector.load %arg10[%c0_8, %c0_9] : memref<15x128xf32, #tpu.memory_space<vmem>>, vector<15x128xf32>
    tpu.vector_store %arg10[%c0_8, %c0_9], %10 {strides = array<i32>} : memref<15x128xf32, #tpu.memory_space<vmem>>, vector<15x128xf32>,
    %c8 = arith.constant 8 : index
    %c0_10 = arith.constant 0 : index
    %12 = vector.load %arg10[%c8, %c0_10] : memref<15x128xf32, #tpu.memory_space<vmem>>, vector<4x128xf32>
    tpu.vector_store %arg10[%c8, %c0_10], %9 {strides = array<i32>} : memref<15x128xf32, #tpu.memory_space<vmem>>, vector<4x128xf32>,
    %c5 = arith.constant 5 : index
    %c0_11 = arith.constant 0 : index
    %13 = vector.load %arg10[%c5, %c0_11] : memref<15x128xf32, #tpu.memory_space<vmem>>, vector<4x128xf32>
    %c0_12 = arith.constant 0 : index
    %c0_13 = arith.constant 0 : index
    %c0_14 = arith.constant 0 : index
    %14 = vector.load %arg5[%c0_12, %c0_13, %c0_14] : memref<9x1x128xf32, #tpu.memory_space<vmem>>, vector<1x1x128xf32>
    %15 = vector.shape_cast %14 : vector<1x1x128xf32> to vector<1x128xf32>
    %16 = vector.broadcast %15 : vector<1x128xf32> to vector<4x128xf32>
    %17 = arith.mulf %13, %16 : vector<4x128xf32>
    %c0_15 = arith.constant 0 : index
    %c0_16 = arith.constant 0 : index
    %c0_17 = arith.constant 0 : index
    %18 = vector.load %arg2[%c0_15, %c0_16, %c0_17] : memref<9x4x1xf32, #tpu.memory_space<vmem>>, vector<1x4x1xf32>
    %19 = vector.shape_cast %18 : vector<1x4x1xf32> to vector<4x1xf32>
    %20 = vector.broadcast %19 : vector<4x1xf32> to vector<4x128xf32>
    %21 = arith.mulf %17, %20 : vector<4x128xf32>
    %c6 = arith.constant 6 : index
    %c0_18 = arith.constant 0 : index
    %22 = vector.load %arg10[%c6, %c0_18] : memref<15x128xf32, #tpu.memory_space<vmem>>, vector<4x128xf32>
    %c1 = arith.constant 1 : index
    %c0_19 = arith.constant 0 : index
    %c0_20 = arith.constant 0 : index
    %23 = vector.load %arg5[%c1, %c0_19, %c0_20] : memref<9x1x128xf32, #tpu.memory_space<vmem>>, vector<1x1x128xf32>
    %24 = vector.shape_cast %23 : vector<1x1x128xf32> to vector<1x128xf32>
    %25 = vector.broadcast %24 : vector<1x128xf32> to vector<4x128xf32>
    %26 = arith.mulf %22, %25 : vector<4x128xf32>
    %c1_21 = arith.constant 1 : index
    %c0_22 = arith.constant 0 : index
    %c0_23 = arith.constant 0 : index
    %27 = vector.load %arg2[%c1_21, %c0_22, %c0_23] : memref<9x4x1xf32, #tpu.memory_space<vmem>>, vector<1x4x1xf32>
    %28 = vector.shape_cast %27 : vector<1x4x1xf32> to vector<4x1xf32>
    %29 = vector.broadcast %28 : vector<4x1xf32> to vector<4x128xf32>
    %30 = arith.mulf %26, %29 : vector<4x128xf32>
    %c7 = arith.constant 7 : index
    %c0_24 = arith.constant 0 : index
    %31 = vector.load %arg10[%c7, %c0_24] : memref<15x128xf32, #tpu.memory_space<vmem>>, vector<4x128xf32>
    %c2 = arith.constant 2 : index
    %c0_25 = arith.constant 0 : index
    %c0_26 = arith.constant 0 : index
    %32 = vector.load %arg5[%c2, %c0_25, %c0_26] : memref<9x1x128xf32, #tpu.memory_space<vmem>>, vector<1x1x128xf32>
    %33 = vector.shape_cast %32 : vector<1x1x128xf32> to vector<1x128xf32>
    %34 = vector.broadcast %33 : vector<1x128xf32> to vector<4x128xf32>
    %35 = arith.mulf %31, %34 : vector<4x128xf32>
    %c2_27 = arith.constant 2 : index
    %c0_28 = arith.constant 0 : index
    %c0_29 = arith.constant 0 : index
    %36 = vector.load %arg2[%c2_27, %c0_28, %c0_29] : memref<9x4x1xf32, #tpu.memory_space<vmem>>, vector<1x4x1xf32>
    %37 = vector.shape_cast %36 : vector<1x4x1xf32> to vector<4x1xf32>
    %38 = vector.broadcast %37 : vector<4x1xf32> to vector<4x128xf32>
    %39 = arith.mulf %35, %38 : vector<4x128xf32>
    %c7_30 = arith.constant 7 : index
    %c0_31 = arith.constant 0 : index
    %40 = vector.load %arg10[%c7_30, %c0_31] : memref<15x128xf32, #tpu.memory_space<vmem>>, vector<4x128xf32>
    %c3 = arith.constant 3 : index
    %c0_32 = arith.constant 0 : index
    %c0_33 = arith.constant 0 : index
    %41 = vector.load %arg5[%c3, %c0_32, %c0_33] : memref<9x1x128xf32, #tpu.memory_space<vmem>>, vector<1x1x128xf32>
    %42 = vector.shape_cast %41 : vector<1x1x128xf32> to vector<1x128xf32>
    %43 = vector.broadcast %42 : vector<1x128xf32> to vector<4x128xf32>
    %44 = arith.mulf %40, %43 : vector<4x128xf32>
    %c3_34 = arith.constant 3 : index
    %c0_35 = arith.constant 0 : index
    %c0_36 = arith.constant 0 : index
    %45 = vector.load %arg2[%c3_34, %c0_35, %c0_36] : memref<9x4x1xf32, #tpu.memory_space<vmem>>, vector<1x4x1xf32>
    %46 = vector.shape_cast %45 : vector<1x4x1xf32> to vector<4x1xf32>
    %47 = vector.broadcast %46 : vector<4x1xf32> to vector<4x128xf32>
    %48 = arith.mulf %44, %47 : vector<4x128xf32>
    %c8_37 = arith.constant 8 : index
    %c0_38 = arith.constant 0 : index
    %49 = vector.load %arg10[%c8_37, %c0_38] : memref<15x128xf32, #tpu.memory_space<vmem>>, vector<4x128xf32>
    %c4 = arith.constant 4 : index
    %c0_39 = arith.constant 0 : index
    %c0_40 = arith.constant 0 : index
    %50 = vector.load %arg5[%c4, %c0_39, %c0_40] : memref<9x1x128xf32, #tpu.memory_space<vmem>>, vector<1x1x128xf32>
    %51 = vector.shape_cast %50 : vector<1x1x128xf32> to vector<1x128xf32>
    %52 = vector.broadcast %51 : vector<1x128xf32> to vector<4x128xf32>
    %53 = arith.mulf %49, %52 : vector<4x128xf32>
    %c9 = arith.constant 9 : index
    %c0_41 = arith.constant 0 : index
    %54 = vector.load %arg10[%c9, %c0_41] : memref<15x128xf32, #tpu.memory_space<vmem>>, vector<4x128xf32>
    %c5_42 = arith.constant 5 : index
    %c0_43 = arith.constant 0 : index
    %c0_44 = arith.constant 0 : index
    %55 = vector.load %arg5[%c5_42, %c0_43, %c0_44] : memref<9x1x128xf32, #tpu.memory_space<vmem>>, vector<1x1x128xf32>
    %56 = vector.shape_cast %55 : vector<1x1x128xf32> to vector<1x128xf32>
    %57 = vector.broadcast %56 : vector<1x128xf32> to vector<4x128xf32>
    %58 = arith.mulf %54, %57 : vector<4x128xf32>
    %c5_45 = arith.constant 5 : index
    %c0_46 = arith.constant 0 : index
    %c0_47 = arith.constant 0 : index
    %59 = vector.load %arg2[%c5_45, %c0_46, %c0_47] : memref<9x4x1xf32, #tpu.memory_space<vmem>>, vector<1x4x1xf32>
    %60 = vector.shape_cast %59 : vector<1x4x1xf32> to vector<4x1xf32>
    %61 = vector.broadcast %60 : vector<4x1xf32> to vector<4x128xf32>
    %62 = arith.mulf %58, %61 : vector<4x128xf32>
    %c9_48 = arith.constant 9 : index
    %c0_49 = arith.constant 0 : index
    %63 = vector.load %arg10[%c9_48, %c0_49] : memref<15x128xf32, #tpu.memory_space<vmem>>, vector<4x128xf32>
    %c6_50 = arith.constant 6 : index
    %c0_51 = arith.constant 0 : index
    %c0_52 = arith.constant 0 : index
    %64 = vector.load %arg5[%c6_50, %c0_51, %c0_52] : memref<9x1x128xf32, #tpu.memory_space<vmem>>, vector<1x1x128xf32>
    %65 = vector.shape_cast %64 : vector<1x1x128xf32> to vector<1x128xf32>
    %66 = vector.broadcast %65 : vector<1x128xf32> to vector<4x128xf32>
    %67 = arith.mulf %63, %66 : vector<4x128xf32>
    %c6_53 = arith.constant 6 : index
    %c0_54 = arith.constant 0 : index
    %c0_55 = arith.constant 0 : index
    %68 = vector.load %arg2[%c6_53, %c0_54, %c0_55] : memref<9x4x1xf32, #tpu.memory_space<vmem>>, vector<1x4x1xf32>
    %69 = vector.shape_cast %68 : vector<1x4x1xf32> to vector<4x1xf32>
    %70 = vector.broadcast %69 : vector<4x1xf32> to vector<4x128xf32>
    %71 = arith.mulf %67, %70 : vector<4x128xf32>
    %c10 = arith.constant 10 : index
    %c0_56 = arith.constant 0 : index
    %72 = vector.load %arg10[%c10, %c0_56] : memref<15x128xf32, #tpu.memory_space<vmem>>, vector<4x128xf32>
    %c7_57 = arith.constant 7 : index
    %c0_58 = arith.constant 0 : index
    %c0_59 = arith.constant 0 : index
    %73 = vector.load %arg5[%c7_57, %c0_58, %c0_59] : memref<9x1x128xf32, #tpu.memory_space<vmem>>, vector<1x1x128xf32>
    %74 = vector.shape_cast %73 : vector<1x1x128xf32> to vector<1x128xf32>
    %75 = vector.broadcast %74 : vector<1x128xf32> to vector<4x128xf32>
    %76 = arith.mulf %72, %75 : vector<4x128xf32>
    %c7_60 = arith.constant 7 : index
    %c0_61 = arith.constant 0 : index
    %c0_62 = arith.constant 0 : index
    %77 = vector.load %arg2[%c7_60, %c0_61, %c0_62] : memref<9x4x1xf32, #tpu.memory_space<vmem>>, vector<1x4x1xf32>
    %78 = vector.shape_cast %77 : vector<1x4x1xf32> to vector<4x1xf32>
    %79 = vector.broadcast %78 : vector<4x1xf32> to vector<4x128xf32>
    %80 = arith.mulf %76, %79 : vector<4x128xf32>
    %c11 = arith.constant 11 : index
    %c0_63 = arith.constant 0 : index
    %81 = vector.load %arg10[%c11, %c0_63] : memref<15x128xf32, #tpu.memory_space<vmem>>, vector<4x128xf32>
    %c8_64 = arith.constant 8 : index
    %c0_65 = arith.constant 0 : index
    %c0_66 = arith.constant 0 : index
    %82 = vector.load %arg5[%c8_64, %c0_65, %c0_66] : memref<9x1x128xf32, #tpu.memory_space<vmem>>, vector<1x1x128xf32>
    %83 = vector.shape_cast %82 : vector<1x1x128xf32> to vector<1x128xf32>
    %84 = vector.broadcast %83 : vector<1x128xf32> to vector<4x128xf32>
    %85 = arith.mulf %81, %84 : vector<4x128xf32>
    %c8_67 = arith.constant 8 : index
    %c0_68 = arith.constant 0 : index
    %c0_69 = arith.constant 0 : index
    %86 = vector.load %arg2[%c8_67, %c0_68, %c0_69] : memref<9x4x1xf32, #tpu.memory_space<vmem>>, vector<1x4x1xf32>
    %87 = vector.shape_cast %86 : vector<1x4x1xf32> to vector<4x1xf32>
    %88 = vector.broadcast %87 : vector<4x1xf32> to vector<4x128xf32>
    %89 = arith.mulf %85, %88 : vector<4x128xf32>
    %90 = arith.addf %21, %30 : vector<4x128xf32>
    %91 = arith.addf %90, %39 : vector<4x128xf32>
    %92 = arith.addf %48, %53 : vector<4x128xf32>
    %93 = arith.addf %92, %62 : vector<4x128xf32>
    %94 = arith.addf %91, %93 : vector<4x128xf32>
    %95 = arith.addf %71, %80 : vector<4x128xf32>
    %96 = arith.addf %95, %89 : vector<4x128xf32>
    %97 = arith.addf %94, %96 : vector<4x128xf32>
    %c0_70 = arith.constant 0 : index
    %c0_71 = arith.constant 0 : index
    %98 = vector.load %arg6[%c0_70, %c0_71] : memref<1x128xf32, #tpu.memory_space<vmem>>, vector<1x128xf32>
    %99 = vector.broadcast %98 : vector<1x128xf32> to vector<4x128xf32>
    %100 = arith.addf %97, %99 : vector<4x128xf32>
    %cst_72 = arith.constant 0.000000e+00 : f32
    %101 = vector.broadcast %cst_72 : f32 to vector<4x128xf32>
    %102 = arith.maximumf %100, %101 : vector<4x128xf32>
    %103 = arith.truncf %102 : vector<4x128xf32> to vector<4x128xbf16>
    %c0_73 = arith.constant 0 : index
    %c0_74 = arith.constant 0 : index
    %104 = vector.load %arg7[%c0_73, %c0_74] : memref<128x64xbf16, #tpu.memory_space<vmem>>, vector<128x64xbf16>
    %cst_75 = arith.constant dense<0.000000e+00> : vector<4x64xf32>
    %105 = tpu.matmul %103, %104, %cst_75 {dimension_numbers = #tpu.dot_dimension_numbers<[1], [0], [0], [1], [0, 0, 1, 1], [], []>} : vector<4x128xbf16>, vector<128x64xbf16>, vector<4x64xf32> -> vector<4x64xf32>
    %c0_76 = arith.constant 0 : index
    %c0_77 = arith.constant 0 : index
    %106 = vector.load %arg8[%c0_76, %c0_77] : memref<1x64xf32, #tpu.memory_space<vmem>>, vector<1x64xf32>
    %107 = vector.broadcast %106 : vector<1x64xf32> to vector<4x64xf32>
    %108 = arith.addf %105, %107 : vector<4x64xf32>
    %109 = arith.addf %108, %1 : vector<4x64xf32>
    %c0_78 = arith.constant 0 : index
    %c0_79 = arith.constant 0 : index
    %c0_80 = arith.constant 0 : index
    %110 = vector.load %arg9[%c0_78, %c0_79, %c0_80] : memref<1x4x64xf32, #tpu.memory_space<vmem>>, vector<1x4x64xf32>
    %111 = vector.shape_cast %110 : vector<1x4x64xf32> to vector<4x64xf32>
    %112 = vector.shape_cast %109 : vector<4x64xf32> to vector<1x4x64xf32>
    tpu.vector_store %arg9[%c0_78, %c0_79, %c0_80], %112 {strides = array<i32>} : memref<1x4x64xf32, #tpu.memory_space<vmem>>, vector<1x4x64xf32>,
    return
  }
  func.func @transform_0(%arg0: i32) -> (i32, i32, i32) {
    %c0_i32 = arith.constant 0 : i32
    %c0_i32_0 = arith.constant 0 : i32
    %c0_i32_1 = arith.constant 0 : i32
    return %arg0, %c0_i32, %c0_i32_0 : i32, i32, i32
  }
  func.func @transform_1(%arg0: i32) -> (i32, i32, i32) {
    %c0_i32 = arith.constant 0 : i32
    %c0_i32_0 = arith.constant 0 : i32
    %c0_i32_1 = arith.constant 0 : i32
    %c0_i32_2 = arith.constant 0 : i32
    return %c0_i32, %c0_i32_0, %c0_i32_1 : i32, i32, i32
  }
  func.func @transform_2(%arg0: i32) -> (i32, i32) {
    %c0_i32 = arith.constant 0 : i32
    %c0_i32_0 = arith.constant 0 : i32
    %c0_i32_1 = arith.constant 0 : i32
    return %c0_i32, %c0_i32_0 : i32, i32
  }
  func.func @transform_3(%arg0: i32) -> (i32, i32) {
    %c0_i32 = arith.constant 0 : i32
    %c0_i32_0 = arith.constant 0 : i32
    %c0_i32_1 = arith.constant 0 : i32
    return %c0_i32, %c0_i32_0 : i32, i32
  }
  func.func @transform_4(%arg0: i32) -> (i32, i32, i32) {
    %c0_i32 = arith.constant 0 : i32
    %c0_i32_0 = arith.constant 0 : i32
    %c0_i32_1 = arith.constant 0 : i32
    %c0_i32_2 = arith.constant 0 : i32
    return %c0_i32, %c0_i32_0, %c0_i32_1 : i32, i32, i32
  }
  func.func @transform_5(%arg0: i32) -> (i32, i32) {
    %c0_i32 = arith.constant 0 : i32
    %c0_i32_0 = arith.constant 0 : i32
    %c0_i32_1 = arith.constant 0 : i32
    return %c0_i32, %c0_i32_0 : i32, i32
  }
  func.func @transform_6(%arg0: i32) -> (i32, i32) {
    %c0_i32 = arith.constant 0 : i32
    %c0_i32_0 = arith.constant 0 : i32
    %c0_i32_1 = arith.constant 0 : i32
    return %c0_i32, %c0_i32_0 : i32, i32
  }
  func.func @transform_7(%arg0: i32) -> (i32, i32) {
    %c0_i32 = arith.constant 0 : i32
    %c0_i32_0 = arith.constant 0 : i32
    %c0_i32_1 = arith.constant 0 : i32
    return %c0_i32, %c0_i32_0 : i32, i32
  }
  func.func @transform_8(%arg0: i32) -> (i32, i32, i32) {
    %c0_i32 = arith.constant 0 : i32
    %c0_i32_0 = arith.constant 0 : i32
    %c0_i32_1 = arith.constant 0 : i32
    return %arg0, %c0_i32, %c0_i32_0 : i32, i32, i32
  }
}

module attributes {stable_mosaic.version = 11 : i64} {
  func.func @_block_s2_kernel(%arg0: i32, %arg1: memref<1x4x32xf32, #tpu.memory_space<vmem>>, %arg2: memref<1x4x32xf32, #tpu.memory_space<vmem>>, %arg3: memref<1x4x32xf32, #tpu.memory_space<vmem>>, %arg4: memref<1x4x32xf32, #tpu.memory_space<vmem>>, %arg5: memref<9x4x1xf32, #tpu.memory_space<vmem>>, %arg6: memref<32x64xbf16, #tpu.memory_space<vmem>>, %arg7: memref<1x64xf32, #tpu.memory_space<vmem>>, %arg8: memref<9x1x64xf32, #tpu.memory_space<vmem>>, %arg9: memref<1x64xf32, #tpu.memory_space<vmem>>, %arg10: memref<64x64xbf16, #tpu.memory_space<vmem>>, %arg11: memref<1x64xf32, #tpu.memory_space<vmem>>, %arg12: memref<1x4x64xf32, #tpu.memory_space<vmem>>, %arg13: memref<12x64xf32, #tpu.memory_space<vmem>>, %arg14: memref<12x64xf32, #tpu.memory_space<vmem>>, %arg15: memref<12x64xf32, #tpu.memory_space<vmem>>, %arg16: memref<12x64xf32, #tpu.memory_space<vmem>>) attributes {dimension_semantics = [#tpu.dimension_semantics<parallel>], iteration_bounds = array<i64: 2>, scalar_prefetch = 0 : i64, scratch_operands = 4 : i64, tpu.core_type = #tpu.core_type<tc>, window_params = [{transform_indices = @transform_0, window_bounds = array<i64: 1, 4, 32>}, {transform_indices = @transform_1, window_bounds = array<i64: 1, 4, 32>}, {transform_indices = @transform_2, window_bounds = array<i64: 1, 4, 32>}, {transform_indices = @transform_3, window_bounds = array<i64: 1, 4, 32>}, {pipeline_mode = #tpu.pipeline_mode<synchronous>, transform_indices = @transform_4, window_bounds = array<i64: 9, 4, 1>}, {pipeline_mode = #tpu.pipeline_mode<synchronous>, transform_indices = @transform_5, window_bounds = array<i64: 32, 64>}, {pipeline_mode = #tpu.pipeline_mode<synchronous>, transform_indices = @transform_6, window_bounds = array<i64: 1, 64>}, {pipeline_mode = #tpu.pipeline_mode<synchronous>, transform_indices = @transform_7, window_bounds = array<i64: 9, 1, 64>}, {pipeline_mode = #tpu.pipeline_mode<synchronous>, transform_indices = @transform_8, window_bounds = array<i64: 1, 64>}, {pipeline_mode = #tpu.pipeline_mode<synchronous>, transform_indices = @transform_9, window_bounds = array<i64: 64, 64>}, {pipeline_mode = #tpu.pipeline_mode<synchronous>, transform_indices = @transform_10, window_bounds = array<i64: 1, 64>}, {transform_indices = @transform_11, window_bounds = array<i64: 1, 4, 64>}]} {
    %c0 = arith.constant 0 : index
    %c0_0 = arith.constant 0 : index
    %c0_1 = arith.constant 0 : index
    %0 = vector.load %arg1[%c0, %c0_0, %c0_1] : memref<1x4x32xf32, #tpu.memory_space<vmem>>, vector<1x4x32xf32>
    %1 = vector.shape_cast %0 : vector<1x4x32xf32> to vector<4x32xf32>
    %2 = arith.truncf %1 : vector<4x32xf32> to vector<4x32xbf16>
    %c0_2 = arith.constant 0 : index
    %c0_3 = arith.constant 0 : index
    %3 = vector.load %arg6[%c0_2, %c0_3] : memref<32x64xbf16, #tpu.memory_space<vmem>>, vector<32x64xbf16>
    %cst = arith.constant dense<0.000000e+00> : vector<4x64xf32>
    %4 = tpu.matmul %2, %3, %cst {dimension_numbers = #tpu.dot_dimension_numbers<[1], [0], [0], [1], [0, 0, 1, 1], [], []>} : vector<4x32xbf16>, vector<32x64xbf16>, vector<4x64xf32> -> vector<4x64xf32>
    %c0_4 = arith.constant 0 : index
    %c0_5 = arith.constant 0 : index
    %5 = vector.load %arg7[%c0_4, %c0_5] : memref<1x64xf32, #tpu.memory_space<vmem>>, vector<1x64xf32>
    %6 = vector.broadcast %5 : vector<1x64xf32> to vector<4x64xf32>
    %7 = arith.addf %4, %6 : vector<4x64xf32>
    %cst_6 = arith.constant 0.000000e+00 : f32
    %8 = vector.broadcast %cst_6 : f32 to vector<4x64xf32>
    %9 = arith.maximumf %7, %8 : vector<4x64xf32>
    %cst_7 = arith.constant 0.000000e+00 : f32
    %10 = vector.broadcast %cst_7 : f32 to vector<12x64xf32>
    %c0_8 = arith.constant 0 : index
    %c0_9 = arith.constant 0 : index
    %11 = vector.load %arg13[%c0_8, %c0_9] : memref<12x64xf32, #tpu.memory_space<vmem>>, vector<12x64xf32>
    tpu.vector_store %arg13[%c0_8, %c0_9], %10 {strides = array<i32>} : memref<12x64xf32, #tpu.memory_space<vmem>>, vector<12x64xf32>,
    %c8 = arith.constant 8 : index
    %c0_10 = arith.constant 0 : index
    %12 = vector.load %arg13[%c8, %c0_10] : memref<12x64xf32, #tpu.memory_space<vmem>>, vector<4x64xf32>
    tpu.vector_store %arg13[%c8, %c0_10], %9 {strides = array<i32>} : memref<12x64xf32, #tpu.memory_space<vmem>>, vector<4x64xf32>,
    %c0_11 = arith.constant 0 : index
    %c0_12 = arith.constant 0 : index
    %c0_13 = arith.constant 0 : index
    %13 = vector.load %arg2[%c0_11, %c0_12, %c0_13] : memref<1x4x32xf32, #tpu.memory_space<vmem>>, vector<1x4x32xf32>
    %14 = vector.shape_cast %13 : vector<1x4x32xf32> to vector<4x32xf32>
    %15 = arith.truncf %14 : vector<4x32xf32> to vector<4x32xbf16>
    %c0_14 = arith.constant 0 : index
    %c0_15 = arith.constant 0 : index
    %16 = vector.load %arg6[%c0_14, %c0_15] : memref<32x64xbf16, #tpu.memory_space<vmem>>, vector<32x64xbf16>
    %cst_16 = arith.constant dense<0.000000e+00> : vector<4x64xf32>
    %17 = tpu.matmul %15, %16, %cst_16 {dimension_numbers = #tpu.dot_dimension_numbers<[1], [0], [0], [1], [0, 0, 1, 1], [], []>} : vector<4x32xbf16>, vector<32x64xbf16>, vector<4x64xf32> -> vector<4x64xf32>
    %c0_17 = arith.constant 0 : index
    %c0_18 = arith.constant 0 : index
    %18 = vector.load %arg7[%c0_17, %c0_18] : memref<1x64xf32, #tpu.memory_space<vmem>>, vector<1x64xf32>
    %19 = vector.broadcast %18 : vector<1x64xf32> to vector<4x64xf32>
    %20 = arith.addf %17, %19 : vector<4x64xf32>
    %cst_19 = arith.constant 0.000000e+00 : f32
    %21 = vector.broadcast %cst_19 : f32 to vector<4x64xf32>
    %22 = arith.maximumf %20, %21 : vector<4x64xf32>
    %cst_20 = arith.constant 0.000000e+00 : f32
    %23 = vector.broadcast %cst_20 : f32 to vector<12x64xf32>
    %c0_21 = arith.constant 0 : index
    %c0_22 = arith.constant 0 : index
    %24 = vector.load %arg14[%c0_21, %c0_22] : memref<12x64xf32, #tpu.memory_space<vmem>>, vector<12x64xf32>
    tpu.vector_store %arg14[%c0_21, %c0_22], %23 {strides = array<i32>} : memref<12x64xf32, #tpu.memory_space<vmem>>, vector<12x64xf32>,
    %c8_23 = arith.constant 8 : index
    %c0_24 = arith.constant 0 : index
    %25 = vector.load %arg14[%c8_23, %c0_24] : memref<12x64xf32, #tpu.memory_space<vmem>>, vector<4x64xf32>
    tpu.vector_store %arg14[%c8_23, %c0_24], %22 {strides = array<i32>} : memref<12x64xf32, #tpu.memory_space<vmem>>, vector<4x64xf32>,
    %c0_25 = arith.constant 0 : index
    %c0_26 = arith.constant 0 : index
    %c0_27 = arith.constant 0 : index
    %26 = vector.load %arg3[%c0_25, %c0_26, %c0_27] : memref<1x4x32xf32, #tpu.memory_space<vmem>>, vector<1x4x32xf32>
    %27 = vector.shape_cast %26 : vector<1x4x32xf32> to vector<4x32xf32>
    %28 = arith.truncf %27 : vector<4x32xf32> to vector<4x32xbf16>
    %c0_28 = arith.constant 0 : index
    %c0_29 = arith.constant 0 : index
    %29 = vector.load %arg6[%c0_28, %c0_29] : memref<32x64xbf16, #tpu.memory_space<vmem>>, vector<32x64xbf16>
    %cst_30 = arith.constant dense<0.000000e+00> : vector<4x64xf32>
    %30 = tpu.matmul %28, %29, %cst_30 {dimension_numbers = #tpu.dot_dimension_numbers<[1], [0], [0], [1], [0, 0, 1, 1], [], []>} : vector<4x32xbf16>, vector<32x64xbf16>, vector<4x64xf32> -> vector<4x64xf32>
    %c0_31 = arith.constant 0 : index
    %c0_32 = arith.constant 0 : index
    %31 = vector.load %arg7[%c0_31, %c0_32] : memref<1x64xf32, #tpu.memory_space<vmem>>, vector<1x64xf32>
    %32 = vector.broadcast %31 : vector<1x64xf32> to vector<4x64xf32>
    %33 = arith.addf %30, %32 : vector<4x64xf32>
    %cst_33 = arith.constant 0.000000e+00 : f32
    %34 = vector.broadcast %cst_33 : f32 to vector<4x64xf32>
    %35 = arith.maximumf %33, %34 : vector<4x64xf32>
    %cst_34 = arith.constant 0.000000e+00 : f32
    %36 = vector.broadcast %cst_34 : f32 to vector<12x64xf32>
    %c0_35 = arith.constant 0 : index
    %c0_36 = arith.constant 0 : index
    %37 = vector.load %arg15[%c0_35, %c0_36] : memref<12x64xf32, #tpu.memory_space<vmem>>, vector<12x64xf32>
    tpu.vector_store %arg15[%c0_35, %c0_36], %36 {strides = array<i32>} : memref<12x64xf32, #tpu.memory_space<vmem>>, vector<12x64xf32>,
    %c8_37 = arith.constant 8 : index
    %c0_38 = arith.constant 0 : index
    %38 = vector.load %arg15[%c8_37, %c0_38] : memref<12x64xf32, #tpu.memory_space<vmem>>, vector<4x64xf32>
    tpu.vector_store %arg15[%c8_37, %c0_38], %35 {strides = array<i32>} : memref<12x64xf32, #tpu.memory_space<vmem>>, vector<4x64xf32>,
    %c0_39 = arith.constant 0 : index
    %c0_40 = arith.constant 0 : index
    %c0_41 = arith.constant 0 : index
    %39 = vector.load %arg4[%c0_39, %c0_40, %c0_41] : memref<1x4x32xf32, #tpu.memory_space<vmem>>, vector<1x4x32xf32>
    %40 = vector.shape_cast %39 : vector<1x4x32xf32> to vector<4x32xf32>
    %41 = arith.truncf %40 : vector<4x32xf32> to vector<4x32xbf16>
    %c0_42 = arith.constant 0 : index
    %c0_43 = arith.constant 0 : index
    %42 = vector.load %arg6[%c0_42, %c0_43] : memref<32x64xbf16, #tpu.memory_space<vmem>>, vector<32x64xbf16>
    %cst_44 = arith.constant dense<0.000000e+00> : vector<4x64xf32>
    %43 = tpu.matmul %41, %42, %cst_44 {dimension_numbers = #tpu.dot_dimension_numbers<[1], [0], [0], [1], [0, 0, 1, 1], [], []>} : vector<4x32xbf16>, vector<32x64xbf16>, vector<4x64xf32> -> vector<4x64xf32>
    %c0_45 = arith.constant 0 : index
    %c0_46 = arith.constant 0 : index
    %44 = vector.load %arg7[%c0_45, %c0_46] : memref<1x64xf32, #tpu.memory_space<vmem>>, vector<1x64xf32>
    %45 = vector.broadcast %44 : vector<1x64xf32> to vector<4x64xf32>
    %46 = arith.addf %43, %45 : vector<4x64xf32>
    %cst_47 = arith.constant 0.000000e+00 : f32
    %47 = vector.broadcast %cst_47 : f32 to vector<4x64xf32>
    %48 = arith.maximumf %46, %47 : vector<4x64xf32>
    %cst_48 = arith.constant 0.000000e+00 : f32
    %49 = vector.broadcast %cst_48 : f32 to vector<12x64xf32>
    %c0_49 = arith.constant 0 : index
    %c0_50 = arith.constant 0 : index
    %50 = vector.load %arg16[%c0_49, %c0_50] : memref<12x64xf32, #tpu.memory_space<vmem>>, vector<12x64xf32>
    tpu.vector_store %arg16[%c0_49, %c0_50], %49 {strides = array<i32>} : memref<12x64xf32, #tpu.memory_space<vmem>>, vector<12x64xf32>,
    %c8_51 = arith.constant 8 : index
    %c0_52 = arith.constant 0 : index
    %51 = vector.load %arg16[%c8_51, %c0_52] : memref<12x64xf32, #tpu.memory_space<vmem>>, vector<4x64xf32>
    tpu.vector_store %arg16[%c8_51, %c0_52], %48 {strides = array<i32>} : memref<12x64xf32, #tpu.memory_space<vmem>>, vector<4x64xf32>,
    %c5 = arith.constant 5 : index
    %c0_53 = arith.constant 0 : index
    %52 = vector.load %arg16[%c5, %c0_53] : memref<12x64xf32, #tpu.memory_space<vmem>>, vector<4x64xf32>
    %c0_54 = arith.constant 0 : index
    %c0_55 = arith.constant 0 : index
    %c0_56 = arith.constant 0 : index
    %53 = vector.load %arg8[%c0_54, %c0_55, %c0_56] : memref<9x1x64xf32, #tpu.memory_space<vmem>>, vector<1x1x64xf32>
    %54 = vector.shape_cast %53 : vector<1x1x64xf32> to vector<1x64xf32>
    %55 = vector.broadcast %54 : vector<1x64xf32> to vector<4x64xf32>
    %56 = arith.mulf %52, %55 : vector<4x64xf32>
    %c0_57 = arith.constant 0 : index
    %c0_58 = arith.constant 0 : index
    %c0_59 = arith.constant 0 : index
    %57 = vector.load %arg5[%c0_57, %c0_58, %c0_59] : memref<9x4x1xf32, #tpu.memory_space<vmem>>, vector<1x4x1xf32>
    %58 = vector.shape_cast %57 : vector<1x4x1xf32> to vector<4x1xf32>
    %59 = vector.broadcast %58 : vector<4x1xf32> to vector<4x64xf32>
    %60 = arith.mulf %56, %59 : vector<4x64xf32>
    %c6 = arith.constant 6 : index
    %c0_60 = arith.constant 0 : index
    %61 = vector.load %arg15[%c6, %c0_60] : memref<12x64xf32, #tpu.memory_space<vmem>>, vector<4x64xf32>
    %c1 = arith.constant 1 : index
    %c0_61 = arith.constant 0 : index
    %c0_62 = arith.constant 0 : index
    %62 = vector.load %arg8[%c1, %c0_61, %c0_62] : memref<9x1x64xf32, #tpu.memory_space<vmem>>, vector<1x1x64xf32>
    %63 = vector.shape_cast %62 : vector<1x1x64xf32> to vector<1x64xf32>
    %64 = vector.broadcast %63 : vector<1x64xf32> to vector<4x64xf32>
    %65 = arith.mulf %61, %64 : vector<4x64xf32>
    %c1_63 = arith.constant 1 : index
    %c0_64 = arith.constant 0 : index
    %c0_65 = arith.constant 0 : index
    %66 = vector.load %arg5[%c1_63, %c0_64, %c0_65] : memref<9x4x1xf32, #tpu.memory_space<vmem>>, vector<1x4x1xf32>
    %67 = vector.shape_cast %66 : vector<1x4x1xf32> to vector<4x1xf32>
    %68 = vector.broadcast %67 : vector<4x1xf32> to vector<4x64xf32>
    %69 = arith.mulf %65, %68 : vector<4x64xf32>
    %c6_66 = arith.constant 6 : index
    %c0_67 = arith.constant 0 : index
    %70 = vector.load %arg16[%c6_66, %c0_67] : memref<12x64xf32, #tpu.memory_space<vmem>>, vector<4x64xf32>
    %c2 = arith.constant 2 : index
    %c0_68 = arith.constant 0 : index
    %c0_69 = arith.constant 0 : index
    %71 = vector.load %arg8[%c2, %c0_68, %c0_69] : memref<9x1x64xf32, #tpu.memory_space<vmem>>, vector<1x1x64xf32>
    %72 = vector.shape_cast %71 : vector<1x1x64xf32> to vector<1x64xf32>
    %73 = vector.broadcast %72 : vector<1x64xf32> to vector<4x64xf32>
    %74 = arith.mulf %70, %73 : vector<4x64xf32>
    %c2_70 = arith.constant 2 : index
    %c0_71 = arith.constant 0 : index
    %c0_72 = arith.constant 0 : index
    %75 = vector.load %arg5[%c2_70, %c0_71, %c0_72] : memref<9x4x1xf32, #tpu.memory_space<vmem>>, vector<1x4x1xf32>
    %76 = vector.shape_cast %75 : vector<1x4x1xf32> to vector<4x1xf32>
    %77 = vector.broadcast %76 : vector<4x1xf32> to vector<4x64xf32>
    %78 = arith.mulf %74, %77 : vector<4x64xf32>
    %c7 = arith.constant 7 : index
    %c0_73 = arith.constant 0 : index
    %79 = vector.load %arg14[%c7, %c0_73] : memref<12x64xf32, #tpu.memory_space<vmem>>, vector<4x64xf32>
    %c3 = arith.constant 3 : index
    %c0_74 = arith.constant 0 : index
    %c0_75 = arith.constant 0 : index
    %80 = vector.load %arg8[%c3, %c0_74, %c0_75] : memref<9x1x64xf32, #tpu.memory_space<vmem>>, vector<1x1x64xf32>
    %81 = vector.shape_cast %80 : vector<1x1x64xf32> to vector<1x64xf32>
    %82 = vector.broadcast %81 : vector<1x64xf32> to vector<4x64xf32>
    %83 = arith.mulf %79, %82 : vector<4x64xf32>
    %c3_76 = arith.constant 3 : index
    %c0_77 = arith.constant 0 : index
    %c0_78 = arith.constant 0 : index
    %84 = vector.load %arg5[%c3_76, %c0_77, %c0_78] : memref<9x4x1xf32, #tpu.memory_space<vmem>>, vector<1x4x1xf32>
    %85 = vector.shape_cast %84 : vector<1x4x1xf32> to vector<4x1xf32>
    %86 = vector.broadcast %85 : vector<4x1xf32> to vector<4x64xf32>
    %87 = arith.mulf %83, %86 : vector<4x64xf32>
    %c8_79 = arith.constant 8 : index
    %c0_80 = arith.constant 0 : index
    %88 = vector.load %arg13[%c8_79, %c0_80] : memref<12x64xf32, #tpu.memory_space<vmem>>, vector<4x64xf32>
    %c4 = arith.constant 4 : index
    %c0_81 = arith.constant 0 : index
    %c0_82 = arith.constant 0 : index
    %89 = vector.load %arg8[%c4, %c0_81, %c0_82] : memref<9x1x64xf32, #tpu.memory_space<vmem>>, vector<1x1x64xf32>
    %90 = vector.shape_cast %89 : vector<1x1x64xf32> to vector<1x64xf32>
    %91 = vector.broadcast %90 : vector<1x64xf32> to vector<4x64xf32>
    %92 = arith.mulf %88, %91 : vector<4x64xf32>
    %c8_83 = arith.constant 8 : index
    %c0_84 = arith.constant 0 : index
    %93 = vector.load %arg14[%c8_83, %c0_84] : memref<12x64xf32, #tpu.memory_space<vmem>>, vector<4x64xf32>
    %c5_85 = arith.constant 5 : index
    %c0_86 = arith.constant 0 : index
    %c0_87 = arith.constant 0 : index
    %94 = vector.load %arg8[%c5_85, %c0_86, %c0_87] : memref<9x1x64xf32, #tpu.memory_space<vmem>>, vector<1x1x64xf32>
    %95 = vector.shape_cast %94 : vector<1x1x64xf32> to vector<1x64xf32>
    %96 = vector.broadcast %95 : vector<1x64xf32> to vector<4x64xf32>
    %97 = arith.mulf %93, %96 : vector<4x64xf32>
    %c5_88 = arith.constant 5 : index
    %c0_89 = arith.constant 0 : index
    %c0_90 = arith.constant 0 : index
    %98 = vector.load %arg5[%c5_88, %c0_89, %c0_90] : memref<9x4x1xf32, #tpu.memory_space<vmem>>, vector<1x4x1xf32>
    %99 = vector.shape_cast %98 : vector<1x4x1xf32> to vector<4x1xf32>
    %100 = vector.broadcast %99 : vector<4x1xf32> to vector<4x64xf32>
    %101 = arith.mulf %97, %100 : vector<4x64xf32>
    %c7_91 = arith.constant 7 : index
    %c0_92 = arith.constant 0 : index
    %102 = vector.load %arg16[%c7_91, %c0_92] : memref<12x64xf32, #tpu.memory_space<vmem>>, vector<4x64xf32>
    %c6_93 = arith.constant 6 : index
    %c0_94 = arith.constant 0 : index
    %c0_95 = arith.constant 0 : index
    %103 = vector.load %arg8[%c6_93, %c0_94, %c0_95] : memref<9x1x64xf32, #tpu.memory_space<vmem>>, vector<1x1x64xf32>
    %104 = vector.shape_cast %103 : vector<1x1x64xf32> to vector<1x64xf32>
    %105 = vector.broadcast %104 : vector<1x64xf32> to vector<4x64xf32>
    %106 = arith.mulf %102, %105 : vector<4x64xf32>
    %c6_96 = arith.constant 6 : index
    %c0_97 = arith.constant 0 : index
    %c0_98 = arith.constant 0 : index
    %107 = vector.load %arg5[%c6_96, %c0_97, %c0_98] : memref<9x4x1xf32, #tpu.memory_space<vmem>>, vector<1x4x1xf32>
    %108 = vector.shape_cast %107 : vector<1x4x1xf32> to vector<4x1xf32>
    %109 = vector.broadcast %108 : vector<4x1xf32> to vector<4x64xf32>
    %110 = arith.mulf %106, %109 : vector<4x64xf32>
    %c8_99 = arith.constant 8 : index
    %c0_100 = arith.constant 0 : index
    %111 = vector.load %arg15[%c8_99, %c0_100] : memref<12x64xf32, #tpu.memory_space<vmem>>, vector<4x64xf32>
    %c7_101 = arith.constant 7 : index
    %c0_102 = arith.constant 0 : index
    %c0_103 = arith.constant 0 : index
    %112 = vector.load %arg8[%c7_101, %c0_102, %c0_103] : memref<9x1x64xf32, #tpu.memory_space<vmem>>, vector<1x1x64xf32>
    %113 = vector.shape_cast %112 : vector<1x1x64xf32> to vector<1x64xf32>
    %114 = vector.broadcast %113 : vector<1x64xf32> to vector<4x64xf32>
    %115 = arith.mulf %111, %114 : vector<4x64xf32>
    %c7_104 = arith.constant 7 : index
    %c0_105 = arith.constant 0 : index
    %c0_106 = arith.constant 0 : index
    %116 = vector.load %arg5[%c7_104, %c0_105, %c0_106] : memref<9x4x1xf32, #tpu.memory_space<vmem>>, vector<1x4x1xf32>
    %117 = vector.shape_cast %116 : vector<1x4x1xf32> to vector<4x1xf32>
    %118 = vector.broadcast %117 : vector<4x1xf32> to vector<4x64xf32>
    %119 = arith.mulf %115, %118 : vector<4x64xf32>
    %c8_107 = arith.constant 8 : index
    %c0_108 = arith.constant 0 : index
    %120 = vector.load %arg16[%c8_107, %c0_108] : memref<12x64xf32, #tpu.memory_space<vmem>>, vector<4x64xf32>
    %c8_109 = arith.constant 8 : index
    %c0_110 = arith.constant 0 : index
    %c0_111 = arith.constant 0 : index
    %121 = vector.load %arg8[%c8_109, %c0_110, %c0_111] : memref<9x1x64xf32, #tpu.memory_space<vmem>>, vector<1x1x64xf32>
    %122 = vector.shape_cast %121 : vector<1x1x64xf32> to vector<1x64xf32>
    %123 = vector.broadcast %122 : vector<1x64xf32> to vector<4x64xf32>
    %124 = arith.mulf %120, %123 : vector<4x64xf32>
    %c8_112 = arith.constant 8 : index
    %c0_113 = arith.constant 0 : index
    %c0_114 = arith.constant 0 : index
    %125 = vector.load %arg5[%c8_112, %c0_113, %c0_114] : memref<9x4x1xf32, #tpu.memory_space<vmem>>, vector<1x4x1xf32>
    %126 = vector.shape_cast %125 : vector<1x4x1xf32> to vector<4x1xf32>
    %127 = vector.broadcast %126 : vector<4x1xf32> to vector<4x64xf32>
    %128 = arith.mulf %124, %127 : vector<4x64xf32>
    %129 = arith.addf %60, %69 : vector<4x64xf32>
    %130 = arith.addf %129, %78 : vector<4x64xf32>
    %131 = arith.addf %87, %92 : vector<4x64xf32>
    %132 = arith.addf %131, %101 : vector<4x64xf32>
    %133 = arith.addf %130, %132 : vector<4x64xf32>
    %134 = arith.addf %110, %119 : vector<4x64xf32>
    %135 = arith.addf %134, %128 : vector<4x64xf32>
    %136 = arith.addf %133, %135 : vector<4x64xf32>
    %c0_115 = arith.constant 0 : index
    %c0_116 = arith.constant 0 : index
    %137 = vector.load %arg9[%c0_115, %c0_116] : memref<1x64xf32, #tpu.memory_space<vmem>>, vector<1x64xf32>
    %138 = vector.broadcast %137 : vector<1x64xf32> to vector<4x64xf32>
    %139 = arith.addf %136, %138 : vector<4x64xf32>
    %cst_117 = arith.constant 0.000000e+00 : f32
    %140 = vector.broadcast %cst_117 : f32 to vector<4x64xf32>
    %141 = arith.maximumf %139, %140 : vector<4x64xf32>
    %142 = arith.truncf %141 : vector<4x64xf32> to vector<4x64xbf16>
    %c0_118 = arith.constant 0 : index
    %c0_119 = arith.constant 0 : index
    %143 = vector.load %arg10[%c0_118, %c0_119] : memref<64x64xbf16, #tpu.memory_space<vmem>>, vector<64x64xbf16>
    %cst_120 = arith.constant dense<0.000000e+00> : vector<4x64xf32>
    %144 = tpu.matmul %142, %143, %cst_120 {dimension_numbers = #tpu.dot_dimension_numbers<[1], [0], [0], [1], [0, 0, 1, 1], [], []>} : vector<4x64xbf16>, vector<64x64xbf16>, vector<4x64xf32> -> vector<4x64xf32>
    %c0_121 = arith.constant 0 : index
    %c0_122 = arith.constant 0 : index
    %145 = vector.load %arg11[%c0_121, %c0_122] : memref<1x64xf32, #tpu.memory_space<vmem>>, vector<1x64xf32>
    %146 = vector.broadcast %145 : vector<1x64xf32> to vector<4x64xf32>
    %147 = arith.addf %144, %146 : vector<4x64xf32>
    %c0_123 = arith.constant 0 : index
    %c0_124 = arith.constant 0 : index
    %c0_125 = arith.constant 0 : index
    %148 = vector.load %arg12[%c0_123, %c0_124, %c0_125] : memref<1x4x64xf32, #tpu.memory_space<vmem>>, vector<1x4x64xf32>
    %149 = vector.shape_cast %148 : vector<1x4x64xf32> to vector<4x64xf32>
    %150 = vector.shape_cast %147 : vector<4x64xf32> to vector<1x4x64xf32>
    tpu.vector_store %arg12[%c0_123, %c0_124, %c0_125], %150 {strides = array<i32>} : memref<1x4x64xf32, #tpu.memory_space<vmem>>, vector<1x4x64xf32>,
    return
  }
  func.func @transform_0(%arg0: i32) -> (i32, i32, i32) {
    %c0_i32 = arith.constant 0 : i32
    %c0_i32_0 = arith.constant 0 : i32
    %c0_i32_1 = arith.constant 0 : i32
    return %arg0, %c0_i32, %c0_i32_0 : i32, i32, i32
  }
  func.func @transform_1(%arg0: i32) -> (i32, i32, i32) {
    %c0_i32 = arith.constant 0 : i32
    %c0_i32_0 = arith.constant 0 : i32
    %c0_i32_1 = arith.constant 0 : i32
    return %arg0, %c0_i32, %c0_i32_0 : i32, i32, i32
  }
  func.func @transform_2(%arg0: i32) -> (i32, i32, i32) {
    %c0_i32 = arith.constant 0 : i32
    %c0_i32_0 = arith.constant 0 : i32
    %c0_i32_1 = arith.constant 0 : i32
    return %arg0, %c0_i32, %c0_i32_0 : i32, i32, i32
  }
  func.func @transform_3(%arg0: i32) -> (i32, i32, i32) {
    %c0_i32 = arith.constant 0 : i32
    %c0_i32_0 = arith.constant 0 : i32
    %c0_i32_1 = arith.constant 0 : i32
    return %arg0, %c0_i32, %c0_i32_0 : i32, i32, i32
  }
  func.func @transform_4(%arg0: i32) -> (i32, i32, i32) {
    %c0_i32 = arith.constant 0 : i32
    %c0_i32_0 = arith.constant 0 : i32
    %c0_i32_1 = arith.constant 0 : i32
    %c0_i32_2 = arith.constant 0 : i32
    return %c0_i32, %c0_i32_0, %c0_i32_1 : i32, i32, i32
  }
  func.func @transform_5(%arg0: i32) -> (i32, i32) {
    %c0_i32 = arith.constant 0 : i32
    %c0_i32_0 = arith.constant 0 : i32
    %c0_i32_1 = arith.constant 0 : i32
    return %c0_i32, %c0_i32_0 : i32, i32
  }
  func.func @transform_6(%arg0: i32) -> (i32, i32) {
    %c0_i32 = arith.constant 0 : i32
    %c0_i32_0 = arith.constant 0 : i32
    %c0_i32_1 = arith.constant 0 : i32
    return %c0_i32, %c0_i32_0 : i32, i32
  }
  func.func @transform_7(%arg0: i32) -> (i32, i32, i32) {
    %c0_i32 = arith.constant 0 : i32
    %c0_i32_0 = arith.constant 0 : i32
    %c0_i32_1 = arith.constant 0 : i32
    %c0_i32_2 = arith.constant 0 : i32
    return %c0_i32, %c0_i32_0, %c0_i32_1 : i32, i32, i32
  }
  func.func @transform_8(%arg0: i32) -> (i32, i32) {
    %c0_i32 = arith.constant 0 : i32
    %c0_i32_0 = arith.constant 0 : i32
    %c0_i32_1 = arith.constant 0 : i32
    return %c0_i32, %c0_i32_0 : i32, i32
  }
  func.func @transform_9(%arg0: i32) -> (i32, i32) {
    %c0_i32 = arith.constant 0 : i32
    %c0_i32_0 = arith.constant 0 : i32
    %c0_i32_1 = arith.constant 0 : i32
    return %c0_i32, %c0_i32_0 : i32, i32
  }
  func.func @transform_10(%arg0: i32) -> (i32, i32) {
    %c0_i32 = arith.constant 0 : i32
    %c0_i32_0 = arith.constant 0 : i32
    %c0_i32_1 = arith.constant 0 : i32
    return %c0_i32, %c0_i32_0 : i32, i32
  }
  func.func @transform_11(%arg0: i32) -> (i32, i32, i32) {
    %c0_i32 = arith.constant 0 : i32
    %c0_i32_0 = arith.constant 0 : i32
    %c0_i32_1 = arith.constant 0 : i32
    return %arg0, %c0_i32, %c0_i32_0 : i32, i32, i32
  }
}

module attributes {stable_mosaic.version = 11 : i64} {
  func.func @_block_s1_kernel(%arg0: i32, %arg1: memref<1x4x64xf32, #tpu.memory_space<vmem>>, %arg2: memref<9x4x1xf32, #tpu.memory_space<vmem>>, %arg3: memref<8x128xbf16, #tpu.memory_space<vmem>>, %arg4: memref<1x128xf32, #tpu.memory_space<vmem>>, %arg5: memref<9x1x64xf32, #tpu.memory_space<vmem>>, %arg6: memref<1x64xf32, #tpu.memory_space<vmem>>, %arg7: memref<64x128xbf16, #tpu.memory_space<vmem>>, %arg8: memref<1x128xf32, #tpu.memory_space<vmem>>, %arg9: memref<1x4x128xf32, #tpu.memory_space<vmem>>, %arg10: memref<15x64xf32, #tpu.memory_space<vmem>>) attributes {dimension_semantics = [#tpu.dimension_semantics<parallel>], iteration_bounds = array<i64: 2>, scalar_prefetch = 0 : i64, scratch_operands = 1 : i64, tpu.core_type = #tpu.core_type<tc>, window_params = [{transform_indices = @transform_0, window_bounds = array<i64: 1, 4, 64>}, {pipeline_mode = #tpu.pipeline_mode<synchronous>, transform_indices = @transform_1, window_bounds = array<i64: 9, 4, 1>}, {pipeline_mode = #tpu.pipeline_mode<synchronous>, transform_indices = @transform_2, window_bounds = array<i64: 8, 128>}, {pipeline_mode = #tpu.pipeline_mode<synchronous>, transform_indices = @transform_3, window_bounds = array<i64: 1, 128>}, {pipeline_mode = #tpu.pipeline_mode<synchronous>, transform_indices = @transform_4, window_bounds = array<i64: 9, 1, 64>}, {pipeline_mode = #tpu.pipeline_mode<synchronous>, transform_indices = @transform_5, window_bounds = array<i64: 1, 64>}, {pipeline_mode = #tpu.pipeline_mode<synchronous>, transform_indices = @transform_6, window_bounds = array<i64: 64, 128>}, {pipeline_mode = #tpu.pipeline_mode<synchronous>, transform_indices = @transform_7, window_bounds = array<i64: 1, 128>}, {transform_indices = @transform_8, window_bounds = array<i64: 1, 4, 128>}]} {
    %c0 = arith.constant 0 : index
    %c0_0 = arith.constant 0 : index
    %c0_1 = arith.constant 0 : index
    %0 = vector.load %arg1[%c0, %c0_0, %c0_1] : memref<1x4x64xf32, #tpu.memory_space<vmem>>, vector<1x4x64xf32>
    %1 = vector.shape_cast %0 : vector<1x4x64xf32> to vector<4x64xf32>
    %cst = arith.constant 0.000000e+00 : f32
    %2 = vector.broadcast %cst : f32 to vector<15x64xf32>
    %c0_2 = arith.constant 0 : index
    %c0_3 = arith.constant 0 : index
    %3 = vector.load %arg10[%c0_2, %c0_3] : memref<15x64xf32, #tpu.memory_space<vmem>>, vector<15x64xf32>
    tpu.vector_store %arg10[%c0_2, %c0_3], %2 {strides = array<i32>} : memref<15x64xf32, #tpu.memory_space<vmem>>, vector<15x64xf32>,
    %c8 = arith.constant 8 : index
    %c0_4 = arith.constant 0 : index
    %4 = vector.load %arg10[%c8, %c0_4] : memref<15x64xf32, #tpu.memory_space<vmem>>, vector<4x64xf32>
    tpu.vector_store %arg10[%c8, %c0_4], %1 {strides = array<i32>} : memref<15x64xf32, #tpu.memory_space<vmem>>, vector<4x64xf32>,
    %c5 = arith.constant 5 : index
    %c0_5 = arith.constant 0 : index
    %5 = vector.load %arg10[%c5, %c0_5] : memref<15x64xf32, #tpu.memory_space<vmem>>, vector<4x64xf32>
    %c0_6 = arith.constant 0 : index
    %c0_7 = arith.constant 0 : index
    %c0_8 = arith.constant 0 : index
    %6 = vector.load %arg5[%c0_6, %c0_7, %c0_8] : memref<9x1x64xf32, #tpu.memory_space<vmem>>, vector<1x1x64xf32>
    %7 = vector.shape_cast %6 : vector<1x1x64xf32> to vector<1x64xf32>
    %8 = vector.broadcast %7 : vector<1x64xf32> to vector<4x64xf32>
    %9 = arith.mulf %5, %8 : vector<4x64xf32>
    %c0_9 = arith.constant 0 : index
    %c0_10 = arith.constant 0 : index
    %c0_11 = arith.constant 0 : index
    %10 = vector.load %arg2[%c0_9, %c0_10, %c0_11] : memref<9x4x1xf32, #tpu.memory_space<vmem>>, vector<1x4x1xf32>
    %11 = vector.shape_cast %10 : vector<1x4x1xf32> to vector<4x1xf32>
    %12 = vector.broadcast %11 : vector<4x1xf32> to vector<4x64xf32>
    %13 = arith.mulf %9, %12 : vector<4x64xf32>
    %c6 = arith.constant 6 : index
    %c0_12 = arith.constant 0 : index
    %14 = vector.load %arg10[%c6, %c0_12] : memref<15x64xf32, #tpu.memory_space<vmem>>, vector<4x64xf32>
    %c1 = arith.constant 1 : index
    %c0_13 = arith.constant 0 : index
    %c0_14 = arith.constant 0 : index
    %15 = vector.load %arg5[%c1, %c0_13, %c0_14] : memref<9x1x64xf32, #tpu.memory_space<vmem>>, vector<1x1x64xf32>
    %16 = vector.shape_cast %15 : vector<1x1x64xf32> to vector<1x64xf32>
    %17 = vector.broadcast %16 : vector<1x64xf32> to vector<4x64xf32>
    %18 = arith.mulf %14, %17 : vector<4x64xf32>
    %c1_15 = arith.constant 1 : index
    %c0_16 = arith.constant 0 : index
    %c0_17 = arith.constant 0 : index
    %19 = vector.load %arg2[%c1_15, %c0_16, %c0_17] : memref<9x4x1xf32, #tpu.memory_space<vmem>>, vector<1x4x1xf32>
    %20 = vector.shape_cast %19 : vector<1x4x1xf32> to vector<4x1xf32>
    %21 = vector.broadcast %20 : vector<4x1xf32> to vector<4x64xf32>
    %22 = arith.mulf %18, %21 : vector<4x64xf32>
    %c7 = arith.constant 7 : index
    %c0_18 = arith.constant 0 : index
    %23 = vector.load %arg10[%c7, %c0_18] : memref<15x64xf32, #tpu.memory_space<vmem>>, vector<4x64xf32>
    %c2 = arith.constant 2 : index
    %c0_19 = arith.constant 0 : index
    %c0_20 = arith.constant 0 : index
    %24 = vector.load %arg5[%c2, %c0_19, %c0_20] : memref<9x1x64xf32, #tpu.memory_space<vmem>>, vector<1x1x64xf32>
    %25 = vector.shape_cast %24 : vector<1x1x64xf32> to vector<1x64xf32>
    %26 = vector.broadcast %25 : vector<1x64xf32> to vector<4x64xf32>
    %27 = arith.mulf %23, %26 : vector<4x64xf32>
    %c2_21 = arith.constant 2 : index
    %c0_22 = arith.constant 0 : index
    %c0_23 = arith.constant 0 : index
    %28 = vector.load %arg2[%c2_21, %c0_22, %c0_23] : memref<9x4x1xf32, #tpu.memory_space<vmem>>, vector<1x4x1xf32>
    %29 = vector.shape_cast %28 : vector<1x4x1xf32> to vector<4x1xf32>
    %30 = vector.broadcast %29 : vector<4x1xf32> to vector<4x64xf32>
    %31 = arith.mulf %27, %30 : vector<4x64xf32>
    %c7_24 = arith.constant 7 : index
    %c0_25 = arith.constant 0 : index
    %32 = vector.load %arg10[%c7_24, %c0_25] : memref<15x64xf32, #tpu.memory_space<vmem>>, vector<4x64xf32>
    %c3 = arith.constant 3 : index
    %c0_26 = arith.constant 0 : index
    %c0_27 = arith.constant 0 : index
    %33 = vector.load %arg5[%c3, %c0_26, %c0_27] : memref<9x1x64xf32, #tpu.memory_space<vmem>>, vector<1x1x64xf32>
    %34 = vector.shape_cast %33 : vector<1x1x64xf32> to vector<1x64xf32>
    %35 = vector.broadcast %34 : vector<1x64xf32> to vector<4x64xf32>
    %36 = arith.mulf %32, %35 : vector<4x64xf32>
    %c3_28 = arith.constant 3 : index
    %c0_29 = arith.constant 0 : index
    %c0_30 = arith.constant 0 : index
    %37 = vector.load %arg2[%c3_28, %c0_29, %c0_30] : memref<9x4x1xf32, #tpu.memory_space<vmem>>, vector<1x4x1xf32>
    %38 = vector.shape_cast %37 : vector<1x4x1xf32> to vector<4x1xf32>
    %39 = vector.broadcast %38 : vector<4x1xf32> to vector<4x64xf32>
    %40 = arith.mulf %36, %39 : vector<4x64xf32>
    %c8_31 = arith.constant 8 : index
    %c0_32 = arith.constant 0 : index
    %41 = vector.load %arg10[%c8_31, %c0_32] : memref<15x64xf32, #tpu.memory_space<vmem>>, vector<4x64xf32>
    %c4 = arith.constant 4 : index
    %c0_33 = arith.constant 0 : index
    %c0_34 = arith.constant 0 : index
    %42 = vector.load %arg5[%c4, %c0_33, %c0_34] : memref<9x1x64xf32, #tpu.memory_space<vmem>>, vector<1x1x64xf32>
    %43 = vector.shape_cast %42 : vector<1x1x64xf32> to vector<1x64xf32>
    %44 = vector.broadcast %43 : vector<1x64xf32> to vector<4x64xf32>
    %45 = arith.mulf %41, %44 : vector<4x64xf32>
    %c9 = arith.constant 9 : index
    %c0_35 = arith.constant 0 : index
    %46 = vector.load %arg10[%c9, %c0_35] : memref<15x64xf32, #tpu.memory_space<vmem>>, vector<4x64xf32>
    %c5_36 = arith.constant 5 : index
    %c0_37 = arith.constant 0 : index
    %c0_38 = arith.constant 0 : index
    %47 = vector.load %arg5[%c5_36, %c0_37, %c0_38] : memref<9x1x64xf32, #tpu.memory_space<vmem>>, vector<1x1x64xf32>
    %48 = vector.shape_cast %47 : vector<1x1x64xf32> to vector<1x64xf32>
    %49 = vector.broadcast %48 : vector<1x64xf32> to vector<4x64xf32>
    %50 = arith.mulf %46, %49 : vector<4x64xf32>
    %c5_39 = arith.constant 5 : index
    %c0_40 = arith.constant 0 : index
    %c0_41 = arith.constant 0 : index
    %51 = vector.load %arg2[%c5_39, %c0_40, %c0_41] : memref<9x4x1xf32, #tpu.memory_space<vmem>>, vector<1x4x1xf32>
    %52 = vector.shape_cast %51 : vector<1x4x1xf32> to vector<4x1xf32>
    %53 = vector.broadcast %52 : vector<4x1xf32> to vector<4x64xf32>
    %54 = arith.mulf %50, %53 : vector<4x64xf32>
    %c9_42 = arith.constant 9 : index
    %c0_43 = arith.constant 0 : index
    %55 = vector.load %arg10[%c9_42, %c0_43] : memref<15x64xf32, #tpu.memory_space<vmem>>, vector<4x64xf32>
    %c6_44 = arith.constant 6 : index
    %c0_45 = arith.constant 0 : index
    %c0_46 = arith.constant 0 : index
    %56 = vector.load %arg5[%c6_44, %c0_45, %c0_46] : memref<9x1x64xf32, #tpu.memory_space<vmem>>, vector<1x1x64xf32>
    %57 = vector.shape_cast %56 : vector<1x1x64xf32> to vector<1x64xf32>
    %58 = vector.broadcast %57 : vector<1x64xf32> to vector<4x64xf32>
    %59 = arith.mulf %55, %58 : vector<4x64xf32>
    %c6_47 = arith.constant 6 : index
    %c0_48 = arith.constant 0 : index
    %c0_49 = arith.constant 0 : index
    %60 = vector.load %arg2[%c6_47, %c0_48, %c0_49] : memref<9x4x1xf32, #tpu.memory_space<vmem>>, vector<1x4x1xf32>
    %61 = vector.shape_cast %60 : vector<1x4x1xf32> to vector<4x1xf32>
    %62 = vector.broadcast %61 : vector<4x1xf32> to vector<4x64xf32>
    %63 = arith.mulf %59, %62 : vector<4x64xf32>
    %c10 = arith.constant 10 : index
    %c0_50 = arith.constant 0 : index
    %64 = vector.load %arg10[%c10, %c0_50] : memref<15x64xf32, #tpu.memory_space<vmem>>, vector<4x64xf32>
    %c7_51 = arith.constant 7 : index
    %c0_52 = arith.constant 0 : index
    %c0_53 = arith.constant 0 : index
    %65 = vector.load %arg5[%c7_51, %c0_52, %c0_53] : memref<9x1x64xf32, #tpu.memory_space<vmem>>, vector<1x1x64xf32>
    %66 = vector.shape_cast %65 : vector<1x1x64xf32> to vector<1x64xf32>
    %67 = vector.broadcast %66 : vector<1x64xf32> to vector<4x64xf32>
    %68 = arith.mulf %64, %67 : vector<4x64xf32>
    %c7_54 = arith.constant 7 : index
    %c0_55 = arith.constant 0 : index
    %c0_56 = arith.constant 0 : index
    %69 = vector.load %arg2[%c7_54, %c0_55, %c0_56] : memref<9x4x1xf32, #tpu.memory_space<vmem>>, vector<1x4x1xf32>
    %70 = vector.shape_cast %69 : vector<1x4x1xf32> to vector<4x1xf32>
    %71 = vector.broadcast %70 : vector<4x1xf32> to vector<4x64xf32>
    %72 = arith.mulf %68, %71 : vector<4x64xf32>
    %c11 = arith.constant 11 : index
    %c0_57 = arith.constant 0 : index
    %73 = vector.load %arg10[%c11, %c0_57] : memref<15x64xf32, #tpu.memory_space<vmem>>, vector<4x64xf32>
    %c8_58 = arith.constant 8 : index
    %c0_59 = arith.constant 0 : index
    %c0_60 = arith.constant 0 : index
    %74 = vector.load %arg5[%c8_58, %c0_59, %c0_60] : memref<9x1x64xf32, #tpu.memory_space<vmem>>, vector<1x1x64xf32>
    %75 = vector.shape_cast %74 : vector<1x1x64xf32> to vector<1x64xf32>
    %76 = vector.broadcast %75 : vector<1x64xf32> to vector<4x64xf32>
    %77 = arith.mulf %73, %76 : vector<4x64xf32>
    %c8_61 = arith.constant 8 : index
    %c0_62 = arith.constant 0 : index
    %c0_63 = arith.constant 0 : index
    %78 = vector.load %arg2[%c8_61, %c0_62, %c0_63] : memref<9x4x1xf32, #tpu.memory_space<vmem>>, vector<1x4x1xf32>
    %79 = vector.shape_cast %78 : vector<1x4x1xf32> to vector<4x1xf32>
    %80 = vector.broadcast %79 : vector<4x1xf32> to vector<4x64xf32>
    %81 = arith.mulf %77, %80 : vector<4x64xf32>
    %82 = arith.addf %13, %22 : vector<4x64xf32>
    %83 = arith.addf %82, %31 : vector<4x64xf32>
    %84 = arith.addf %40, %45 : vector<4x64xf32>
    %85 = arith.addf %84, %54 : vector<4x64xf32>
    %86 = arith.addf %83, %85 : vector<4x64xf32>
    %87 = arith.addf %63, %72 : vector<4x64xf32>
    %88 = arith.addf %87, %81 : vector<4x64xf32>
    %89 = arith.addf %86, %88 : vector<4x64xf32>
    %c0_64 = arith.constant 0 : index
    %c0_65 = arith.constant 0 : index
    %90 = vector.load %arg6[%c0_64, %c0_65] : memref<1x64xf32, #tpu.memory_space<vmem>>, vector<1x64xf32>
    %91 = vector.broadcast %90 : vector<1x64xf32> to vector<4x64xf32>
    %92 = arith.addf %89, %91 : vector<4x64xf32>
    %cst_66 = arith.constant 0.000000e+00 : f32
    %93 = vector.broadcast %cst_66 : f32 to vector<4x64xf32>
    %94 = arith.maximumf %92, %93 : vector<4x64xf32>
    %95 = arith.truncf %94 : vector<4x64xf32> to vector<4x64xbf16>
    %c0_67 = arith.constant 0 : index
    %c0_68 = arith.constant 0 : index
    %96 = vector.load %arg7[%c0_67, %c0_68] : memref<64x128xbf16, #tpu.memory_space<vmem>>, vector<64x128xbf16>
    %cst_69 = arith.constant dense<0.000000e+00> : vector<4x128xf32>
    %97 = tpu.matmul %95, %96, %cst_69 {dimension_numbers = #tpu.dot_dimension_numbers<[1], [0], [0], [1], [0, 0, 1, 1], [], []>} : vector<4x64xbf16>, vector<64x128xbf16>, vector<4x128xf32> -> vector<4x128xf32>
    %c0_70 = arith.constant 0 : index
    %c0_71 = arith.constant 0 : index
    %98 = vector.load %arg8[%c0_70, %c0_71] : memref<1x128xf32, #tpu.memory_space<vmem>>, vector<1x128xf32>
    %99 = vector.broadcast %98 : vector<1x128xf32> to vector<4x128xf32>
    %100 = arith.addf %97, %99 : vector<4x128xf32>
    %c0_72 = arith.constant 0 : index
    %c0_73 = arith.constant 0 : index
    %c0_74 = arith.constant 0 : index
    %101 = vector.load %arg9[%c0_72, %c0_73, %c0_74] : memref<1x4x128xf32, #tpu.memory_space<vmem>>, vector<1x4x128xf32>
    %102 = vector.shape_cast %101 : vector<1x4x128xf32> to vector<4x128xf32>
    %103 = vector.shape_cast %100 : vector<4x128xf32> to vector<1x4x128xf32>
    tpu.vector_store %arg9[%c0_72, %c0_73, %c0_74], %103 {strides = array<i32>} : memref<1x4x128xf32, #tpu.memory_space<vmem>>, vector<1x4x128xf32>,
    return
  }
  func.func @transform_0(%arg0: i32) -> (i32, i32, i32) {
    %c0_i32 = arith.constant 0 : i32
    %c0_i32_0 = arith.constant 0 : i32
    %c0_i32_1 = arith.constant 0 : i32
    return %arg0, %c0_i32, %c0_i32_0 : i32, i32, i32
  }
  func.func @transform_1(%arg0: i32) -> (i32, i32, i32) {
    %c0_i32 = arith.constant 0 : i32
    %c0_i32_0 = arith.constant 0 : i32
    %c0_i32_1 = arith.constant 0 : i32
    %c0_i32_2 = arith.constant 0 : i32
    return %c0_i32, %c0_i32_0, %c0_i32_1 : i32, i32, i32
  }
  func.func @transform_2(%arg0: i32) -> (i32, i32) {
    %c0_i32 = arith.constant 0 : i32
    %c0_i32_0 = arith.constant 0 : i32
    %c0_i32_1 = arith.constant 0 : i32
    return %c0_i32, %c0_i32_0 : i32, i32
  }
  func.func @transform_3(%arg0: i32) -> (i32, i32) {
    %c0_i32 = arith.constant 0 : i32
    %c0_i32_0 = arith.constant 0 : i32
    %c0_i32_1 = arith.constant 0 : i32
    return %c0_i32, %c0_i32_0 : i32, i32
  }
  func.func @transform_4(%arg0: i32) -> (i32, i32, i32) {
    %c0_i32 = arith.constant 0 : i32
    %c0_i32_0 = arith.constant 0 : i32
    %c0_i32_1 = arith.constant 0 : i32
    %c0_i32_2 = arith.constant 0 : i32
    return %c0_i32, %c0_i32_0, %c0_i32_1 : i32, i32, i32
  }
  func.func @transform_5(%arg0: i32) -> (i32, i32) {
    %c0_i32 = arith.constant 0 : i32
    %c0_i32_0 = arith.constant 0 : i32
    %c0_i32_1 = arith.constant 0 : i32
    return %c0_i32, %c0_i32_0 : i32, i32
  }
  func.func @transform_6(%arg0: i32) -> (i32, i32) {
    %c0_i32 = arith.constant 0 : i32
    %c0_i32_0 = arith.constant 0 : i32
    %c0_i32_1 = arith.constant 0 : i32
    return %c0_i32, %c0_i32_0 : i32, i32
  }
  func.func @transform_7(%arg0: i32) -> (i32, i32) {
    %c0_i32 = arith.constant 0 : i32
    %c0_i32_0 = arith.constant 0 : i32
    %c0_i32_1 = arith.constant 0 : i32
    return %c0_i32, %c0_i32_0 : i32, i32
  }
  func.func @transform_8(%arg0: i32) -> (i32, i32, i32) {
    %c0_i32 = arith.constant 0 : i32
    %c0_i32_0 = arith.constant 0 : i32
    %c0_i32_1 = arith.constant 0 : i32
    return %arg0, %c0_i32, %c0_i32_0 : i32, i32, i32
  }
}

module attributes {stable_mosaic.version = 11 : i64} {
  func.func @_block_s1_kernel(%arg0: i32, %arg1: memref<1x4x128xf32, #tpu.memory_space<vmem>>, %arg2: memref<9x4x1xf32, #tpu.memory_space<vmem>>, %arg3: memref<8x128xbf16, #tpu.memory_space<vmem>>, %arg4: memref<1x128xf32, #tpu.memory_space<vmem>>, %arg5: memref<9x1x128xf32, #tpu.memory_space<vmem>>, %arg6: memref<1x128xf32, #tpu.memory_space<vmem>>, %arg7: memref<128x128xbf16, #tpu.memory_space<vmem>>, %arg8: memref<1x128xf32, #tpu.memory_space<vmem>>, %arg9: memref<1x2x128xf32, #tpu.memory_space<vmem>>, %arg10: memref<15x128xf32, #tpu.memory_space<vmem>>) attributes {dimension_semantics = [#tpu.dimension_semantics<parallel>], iteration_bounds = array<i64: 2>, scalar_prefetch = 0 : i64, scratch_operands = 1 : i64, tpu.core_type = #tpu.core_type<tc>, window_params = [{transform_indices = @transform_0, window_bounds = array<i64: 1, 4, 128>}, {pipeline_mode = #tpu.pipeline_mode<synchronous>, transform_indices = @transform_1, window_bounds = array<i64: 9, 4, 1>}, {pipeline_mode = #tpu.pipeline_mode<synchronous>, transform_indices = @transform_2, window_bounds = array<i64: 8, 128>}, {pipeline_mode = #tpu.pipeline_mode<synchronous>, transform_indices = @transform_3, window_bounds = array<i64: 1, 128>}, {pipeline_mode = #tpu.pipeline_mode<synchronous>, transform_indices = @transform_4, window_bounds = array<i64: 9, 1, 128>}, {pipeline_mode = #tpu.pipeline_mode<synchronous>, transform_indices = @transform_5, window_bounds = array<i64: 1, 128>}, {pipeline_mode = #tpu.pipeline_mode<synchronous>, transform_indices = @transform_6, window_bounds = array<i64: 128, 128>}, {pipeline_mode = #tpu.pipeline_mode<synchronous>, transform_indices = @transform_7, window_bounds = array<i64: 1, 128>}, {transform_indices = @transform_8, window_bounds = array<i64: 1, 2, 128>}]} {
    %c0 = arith.constant 0 : index
    %c0_0 = arith.constant 0 : index
    %c0_1 = arith.constant 0 : index
    %0 = vector.load %arg1[%c0, %c0_0, %c0_1] : memref<1x4x128xf32, #tpu.memory_space<vmem>>, vector<1x4x128xf32>
    %1 = vector.shape_cast %0 : vector<1x4x128xf32> to vector<4x128xf32>
    %cst = arith.constant 0.000000e+00 : f32
    %2 = vector.broadcast %cst : f32 to vector<15x128xf32>
    %c0_2 = arith.constant 0 : index
    %c0_3 = arith.constant 0 : index
    %3 = vector.load %arg10[%c0_2, %c0_3] : memref<15x128xf32, #tpu.memory_space<vmem>>, vector<15x128xf32>
    tpu.vector_store %arg10[%c0_2, %c0_3], %2 {strides = array<i32>} : memref<15x128xf32, #tpu.memory_space<vmem>>, vector<15x128xf32>,
    %c8 = arith.constant 8 : index
    %c0_4 = arith.constant 0 : index
    %4 = vector.load %arg10[%c8, %c0_4] : memref<15x128xf32, #tpu.memory_space<vmem>>, vector<4x128xf32>
    tpu.vector_store %arg10[%c8, %c0_4], %1 {strides = array<i32>} : memref<15x128xf32, #tpu.memory_space<vmem>>, vector<4x128xf32>,
    %c5 = arith.constant 5 : index
    %c0_5 = arith.constant 0 : index
    %5 = vector.load %arg10[%c5, %c0_5] : memref<15x128xf32, #tpu.memory_space<vmem>>, vector<4x128xf32>
    %c0_6 = arith.constant 0 : index
    %c0_7 = arith.constant 0 : index
    %c0_8 = arith.constant 0 : index
    %6 = vector.load %arg5[%c0_6, %c0_7, %c0_8] : memref<9x1x128xf32, #tpu.memory_space<vmem>>, vector<1x1x128xf32>
    %7 = vector.shape_cast %6 : vector<1x1x128xf32> to vector<1x128xf32>
    %8 = vector.broadcast %7 : vector<1x128xf32> to vector<4x128xf32>
    %9 = arith.mulf %5, %8 : vector<4x128xf32>
    %c0_9 = arith.constant 0 : index
    %c0_10 = arith.constant 0 : index
    %c0_11 = arith.constant 0 : index
    %10 = vector.load %arg2[%c0_9, %c0_10, %c0_11] : memref<9x4x1xf32, #tpu.memory_space<vmem>>, vector<1x4x1xf32>
    %11 = vector.shape_cast %10 : vector<1x4x1xf32> to vector<4x1xf32>
    %12 = vector.broadcast %11 : vector<4x1xf32> to vector<4x128xf32>
    %13 = arith.mulf %9, %12 : vector<4x128xf32>
    %c6 = arith.constant 6 : index
    %c0_12 = arith.constant 0 : index
    %14 = vector.load %arg10[%c6, %c0_12] : memref<15x128xf32, #tpu.memory_space<vmem>>, vector<4x128xf32>
    %c1 = arith.constant 1 : index
    %c0_13 = arith.constant 0 : index
    %c0_14 = arith.constant 0 : index
    %15 = vector.load %arg5[%c1, %c0_13, %c0_14] : memref<9x1x128xf32, #tpu.memory_space<vmem>>, vector<1x1x128xf32>
    %16 = vector.shape_cast %15 : vector<1x1x128xf32> to vector<1x128xf32>
    %17 = vector.broadcast %16 : vector<1x128xf32> to vector<4x128xf32>
    %18 = arith.mulf %14, %17 : vector<4x128xf32>
    %c1_15 = arith.constant 1 : index
    %c0_16 = arith.constant 0 : index
    %c0_17 = arith.constant 0 : index
    %19 = vector.load %arg2[%c1_15, %c0_16, %c0_17] : memref<9x4x1xf32, #tpu.memory_space<vmem>>, vector<1x4x1xf32>
    %20 = vector.shape_cast %19 : vector<1x4x1xf32> to vector<4x1xf32>
    %21 = vector.broadcast %20 : vector<4x1xf32> to vector<4x128xf32>
    %22 = arith.mulf %18, %21 : vector<4x128xf32>
    %c7 = arith.constant 7 : index
    %c0_18 = arith.constant 0 : index
    %23 = vector.load %arg10[%c7, %c0_18] : memref<15x128xf32, #tpu.memory_space<vmem>>, vector<4x128xf32>
    %c2 = arith.constant 2 : index
    %c0_19 = arith.constant 0 : index
    %c0_20 = arith.constant 0 : index
    %24 = vector.load %arg5[%c2, %c0_19, %c0_20] : memref<9x1x128xf32, #tpu.memory_space<vmem>>, vector<1x1x128xf32>
    %25 = vector.shape_cast %24 : vector<1x1x128xf32> to vector<1x128xf32>
    %26 = vector.broadcast %25 : vector<1x128xf32> to vector<4x128xf32>
    %27 = arith.mulf %23, %26 : vector<4x128xf32>
    %c2_21 = arith.constant 2 : index
    %c0_22 = arith.constant 0 : index
    %c0_23 = arith.constant 0 : index
    %28 = vector.load %arg2[%c2_21, %c0_22, %c0_23] : memref<9x4x1xf32, #tpu.memory_space<vmem>>, vector<1x4x1xf32>
    %29 = vector.shape_cast %28 : vector<1x4x1xf32> to vector<4x1xf32>
    %30 = vector.broadcast %29 : vector<4x1xf32> to vector<4x128xf32>
    %31 = arith.mulf %27, %30 : vector<4x128xf32>
    %c7_24 = arith.constant 7 : index
    %c0_25 = arith.constant 0 : index
    %32 = vector.load %arg10[%c7_24, %c0_25] : memref<15x128xf32, #tpu.memory_space<vmem>>, vector<4x128xf32>
    %c3 = arith.constant 3 : index
    %c0_26 = arith.constant 0 : index
    %c0_27 = arith.constant 0 : index
    %33 = vector.load %arg5[%c3, %c0_26, %c0_27] : memref<9x1x128xf32, #tpu.memory_space<vmem>>, vector<1x1x128xf32>
    %34 = vector.shape_cast %33 : vector<1x1x128xf32> to vector<1x128xf32>
    %35 = vector.broadcast %34 : vector<1x128xf32> to vector<4x128xf32>
    %36 = arith.mulf %32, %35 : vector<4x128xf32>
    %c3_28 = arith.constant 3 : index
    %c0_29 = arith.constant 0 : index
    %c0_30 = arith.constant 0 : index
    %37 = vector.load %arg2[%c3_28, %c0_29, %c0_30] : memref<9x4x1xf32, #tpu.memory_space<vmem>>, vector<1x4x1xf32>
    %38 = vector.shape_cast %37 : vector<1x4x1xf32> to vector<4x1xf32>
    %39 = vector.broadcast %38 : vector<4x1xf32> to vector<4x128xf32>
    %40 = arith.mulf %36, %39 : vector<4x128xf32>
    %c8_31 = arith.constant 8 : index
    %c0_32 = arith.constant 0 : index
    %41 = vector.load %arg10[%c8_31, %c0_32] : memref<15x128xf32, #tpu.memory_space<vmem>>, vector<4x128xf32>
    %c4 = arith.constant 4 : index
    %c0_33 = arith.constant 0 : index
    %c0_34 = arith.constant 0 : index
    %42 = vector.load %arg5[%c4, %c0_33, %c0_34] : memref<9x1x128xf32, #tpu.memory_space<vmem>>, vector<1x1x128xf32>
    %43 = vector.shape_cast %42 : vector<1x1x128xf32> to vector<1x128xf32>
    %44 = vector.broadcast %43 : vector<1x128xf32> to vector<4x128xf32>
    %45 = arith.mulf %41, %44 : vector<4x128xf32>
    %c9 = arith.constant 9 : index
    %c0_35 = arith.constant 0 : index
    %46 = vector.load %arg10[%c9, %c0_35] : memref<15x128xf32, #tpu.memory_space<vmem>>, vector<4x128xf32>
    %c5_36 = arith.constant 5 : index
    %c0_37 = arith.constant 0 : index
    %c0_38 = arith.constant 0 : index
    %47 = vector.load %arg5[%c5_36, %c0_37, %c0_38] : memref<9x1x128xf32, #tpu.memory_space<vmem>>, vector<1x1x128xf32>
    %48 = vector.shape_cast %47 : vector<1x1x128xf32> to vector<1x128xf32>
    %49 = vector.broadcast %48 : vector<1x128xf32> to vector<4x128xf32>
    %50 = arith.mulf %46, %49 : vector<4x128xf32>
    %c5_39 = arith.constant 5 : index
    %c0_40 = arith.constant 0 : index
    %c0_41 = arith.constant 0 : index
    %51 = vector.load %arg2[%c5_39, %c0_40, %c0_41] : memref<9x4x1xf32, #tpu.memory_space<vmem>>, vector<1x4x1xf32>
    %52 = vector.shape_cast %51 : vector<1x4x1xf32> to vector<4x1xf32>
    %53 = vector.broadcast %52 : vector<4x1xf32> to vector<4x128xf32>
    %54 = arith.mulf %50, %53 : vector<4x128xf32>
    %c9_42 = arith.constant 9 : index
    %c0_43 = arith.constant 0 : index
    %55 = vector.load %arg10[%c9_42, %c0_43] : memref<15x128xf32, #tpu.memory_space<vmem>>, vector<4x128xf32>
    %c6_44 = arith.constant 6 : index
    %c0_45 = arith.constant 0 : index
    %c0_46 = arith.constant 0 : index
    %56 = vector.load %arg5[%c6_44, %c0_45, %c0_46] : memref<9x1x128xf32, #tpu.memory_space<vmem>>, vector<1x1x128xf32>
    %57 = vector.shape_cast %56 : vector<1x1x128xf32> to vector<1x128xf32>
    %58 = vector.broadcast %57 : vector<1x128xf32> to vector<4x128xf32>
    %59 = arith.mulf %55, %58 : vector<4x128xf32>
    %c6_47 = arith.constant 6 : index
    %c0_48 = arith.constant 0 : index
    %c0_49 = arith.constant 0 : index
    %60 = vector.load %arg2[%c6_47, %c0_48, %c0_49] : memref<9x4x1xf32, #tpu.memory_space<vmem>>, vector<1x4x1xf32>
    %61 = vector.shape_cast %60 : vector<1x4x1xf32> to vector<4x1xf32>
    %62 = vector.broadcast %61 : vector<4x1xf32> to vector<4x128xf32>
    %63 = arith.mulf %59, %62 : vector<4x128xf32>
    %c10 = arith.constant 10 : index
    %c0_50 = arith.constant 0 : index
    %64 = vector.load %arg10[%c10, %c0_50] : memref<15x128xf32, #tpu.memory_space<vmem>>, vector<4x128xf32>
    %c7_51 = arith.constant 7 : index
    %c0_52 = arith.constant 0 : index
    %c0_53 = arith.constant 0 : index
    %65 = vector.load %arg5[%c7_51, %c0_52, %c0_53] : memref<9x1x128xf32, #tpu.memory_space<vmem>>, vector<1x1x128xf32>
    %66 = vector.shape_cast %65 : vector<1x1x128xf32> to vector<1x128xf32>
    %67 = vector.broadcast %66 : vector<1x128xf32> to vector<4x128xf32>
    %68 = arith.mulf %64, %67 : vector<4x128xf32>
    %c7_54 = arith.constant 7 : index
    %c0_55 = arith.constant 0 : index
    %c0_56 = arith.constant 0 : index
    %69 = vector.load %arg2[%c7_54, %c0_55, %c0_56] : memref<9x4x1xf32, #tpu.memory_space<vmem>>, vector<1x4x1xf32>
    %70 = vector.shape_cast %69 : vector<1x4x1xf32> to vector<4x1xf32>
    %71 = vector.broadcast %70 : vector<4x1xf32> to vector<4x128xf32>
    %72 = arith.mulf %68, %71 : vector<4x128xf32>
    %c11 = arith.constant 11 : index
    %c0_57 = arith.constant 0 : index
    %73 = vector.load %arg10[%c11, %c0_57] : memref<15x128xf32, #tpu.memory_space<vmem>>, vector<4x128xf32>
    %c8_58 = arith.constant 8 : index
    %c0_59 = arith.constant 0 : index
    %c0_60 = arith.constant 0 : index
    %74 = vector.load %arg5[%c8_58, %c0_59, %c0_60] : memref<9x1x128xf32, #tpu.memory_space<vmem>>, vector<1x1x128xf32>
    %75 = vector.shape_cast %74 : vector<1x1x128xf32> to vector<1x128xf32>
    %76 = vector.broadcast %75 : vector<1x128xf32> to vector<4x128xf32>
    %77 = arith.mulf %73, %76 : vector<4x128xf32>
    %c8_61 = arith.constant 8 : index
    %c0_62 = arith.constant 0 : index
    %c0_63 = arith.constant 0 : index
    %78 = vector.load %arg2[%c8_61, %c0_62, %c0_63] : memref<9x4x1xf32, #tpu.memory_space<vmem>>, vector<1x4x1xf32>
    %79 = vector.shape_cast %78 : vector<1x4x1xf32> to vector<4x1xf32>
    %80 = vector.broadcast %79 : vector<4x1xf32> to vector<4x128xf32>
    %81 = arith.mulf %77, %80 : vector<4x128xf32>
    %82 = arith.addf %13, %22 : vector<4x128xf32>
    %83 = arith.addf %82, %31 : vector<4x128xf32>
    %84 = arith.addf %40, %45 : vector<4x128xf32>
    %85 = arith.addf %84, %54 : vector<4x128xf32>
    %86 = arith.addf %83, %85 : vector<4x128xf32>
    %87 = arith.addf %63, %72 : vector<4x128xf32>
    %88 = arith.addf %87, %81 : vector<4x128xf32>
    %89 = arith.addf %86, %88 : vector<4x128xf32>
    %c0_64 = arith.constant 0 : index
    %c0_65 = arith.constant 0 : index
    %90 = vector.load %arg6[%c0_64, %c0_65] : memref<1x128xf32, #tpu.memory_space<vmem>>, vector<1x128xf32>
    %91 = vector.broadcast %90 : vector<1x128xf32> to vector<4x128xf32>
    %92 = arith.addf %89, %91 : vector<4x128xf32>
    %cst_66 = arith.constant 0.000000e+00 : f32
    %93 = vector.broadcast %cst_66 : f32 to vector<4x128xf32>
    %94 = arith.maximumf %92, %93 : vector<4x128xf32>
    %95 = arith.truncf %94 : vector<4x128xf32> to vector<4x128xbf16>
    %c0_67 = arith.constant 0 : index
    %c0_68 = arith.constant 0 : index
    %96 = vector.load %arg7[%c0_67, %c0_68] : memref<128x128xbf16, #tpu.memory_space<vmem>>, vector<128x128xbf16>
    %cst_69 = arith.constant dense<0.000000e+00> : vector<4x128xf32>
    %97 = tpu.matmul %95, %96, %cst_69 {dimension_numbers = #tpu.dot_dimension_numbers<[1], [0], [0], [1], [0, 0, 1, 1], [], []>} : vector<4x128xbf16>, vector<128x128xbf16>, vector<4x128xf32> -> vector<4x128xf32>
    %c0_70 = arith.constant 0 : index
    %c0_71 = arith.constant 0 : index
    %98 = vector.load %arg8[%c0_70, %c0_71] : memref<1x128xf32, #tpu.memory_space<vmem>>, vector<1x128xf32>
    %99 = vector.broadcast %98 : vector<1x128xf32> to vector<4x128xf32>
    %100 = arith.addf %97, %99 : vector<4x128xf32>
    %101 = arith.addf %100, %1 : vector<4x128xf32>
    %cst_72 = arith.constant 0.000000e+00 : f32
    %102 = vector.broadcast %cst_72 : f32 to vector<4x128xf32>
    %103 = arith.maximumf %101, %102 : vector<4x128xf32>
    %104 = vector.extract_strided_slice %103 {offsets = [0, 0], sizes = [2, 128], strides = [1, 1]} : vector<4x128xf32> to vector<2x128xf32>
    %105 = vector.extract_strided_slice %103 {offsets = [2, 0], sizes = [2, 128], strides = [1, 1]} : vector<4x128xf32> to vector<2x128xf32>
    %106 = arith.addf %104, %105 : vector<2x128xf32>
    %cst_73 = arith.constant 5.000000e-01 : f32
    %107 = vector.broadcast %cst_73 : f32 to vector<2x128xf32>
    %108 = arith.mulf %106, %107 : vector<2x128xf32>
    %c0_74 = arith.constant 0 : index
    %c0_75 = arith.constant 0 : index
    %c0_76 = arith.constant 0 : index
    %109 = vector.load %arg9[%c0_74, %c0_75, %c0_76] : memref<1x2x128xf32, #tpu.memory_space<vmem>>, vector<1x2x128xf32>
    %110 = vector.shape_cast %109 : vector<1x2x128xf32> to vector<2x128xf32>
    %111 = vector.shape_cast %108 : vector<2x128xf32> to vector<1x2x128xf32>
    tpu.vector_store %arg9[%c0_74, %c0_75, %c0_76], %111 {strides = array<i32>} : memref<1x2x128xf32, #tpu.memory_space<vmem>>, vector<1x2x128xf32>,
    return
  }
  func.func @transform_0(%arg0: i32) -> (i32, i32, i32) {
    %c0_i32 = arith.constant 0 : i32
    %c0_i32_0 = arith.constant 0 : i32
    %c0_i32_1 = arith.constant 0 : i32
    return %arg0, %c0_i32, %c0_i32_0 : i32, i32, i32
  }
  func.func @transform_1(%arg0: i32) -> (i32, i32, i32) {
    %c0_i32 = arith.constant 0 : i32
    %c0_i32_0 = arith.constant 0 : i32
    %c0_i32_1 = arith.constant 0 : i32
    %c0_i32_2 = arith.constant 0 : i32
    return %c0_i32, %c0_i32_0, %c0_i32_1 : i32, i32, i32
  }
  func.func @transform_2(%arg0: i32) -> (i32, i32) {
    %c0_i32 = arith.constant 0 : i32
    %c0_i32_0 = arith.constant 0 : i32
    %c0_i32_1 = arith.constant 0 : i32
    return %c0_i32, %c0_i32_0 : i32, i32
  }
  func.func @transform_3(%arg0: i32) -> (i32, i32) {
    %c0_i32 = arith.constant 0 : i32
    %c0_i32_0 = arith.constant 0 : i32
    %c0_i32_1 = arith.constant 0 : i32
    return %c0_i32, %c0_i32_0 : i32, i32
  }
  func.func @transform_4(%arg0: i32) -> (i32, i32, i32) {
    %c0_i32 = arith.constant 0 : i32
    %c0_i32_0 = arith.constant 0 : i32
    %c0_i32_1 = arith.constant 0 : i32
    %c0_i32_2 = arith.constant 0 : i32
    return %c0_i32, %c0_i32_0, %c0_i32_1 : i32, i32, i32
  }
  func.func @transform_5(%arg0: i32) -> (i32, i32) {
    %c0_i32 = arith.constant 0 : i32
    %c0_i32_0 = arith.constant 0 : i32
    %c0_i32_1 = arith.constant 0 : i32
    return %c0_i32, %c0_i32_0 : i32, i32
  }
  func.func @transform_6(%arg0: i32) -> (i32, i32) {
    %c0_i32 = arith.constant 0 : i32
    %c0_i32_0 = arith.constant 0 : i32
    %c0_i32_1 = arith.constant 0 : i32
    return %c0_i32, %c0_i32_0 : i32, i32
  }
  func.func @transform_7(%arg0: i32) -> (i32, i32) {
    %c0_i32 = arith.constant 0 : i32
    %c0_i32_0 = arith.constant 0 : i32
    %c0_i32_1 = arith.constant 0 : i32
    return %c0_i32, %c0_i32_0 : i32, i32
  }
  func.func @transform_8(%arg0: i32) -> (i32, i32, i32) {
    %c0_i32 = arith.constant 0 : i32
    %c0_i32_0 = arith.constant 0 : i32
    %c0_i32_1 = arith.constant 0 : i32
    return %arg0, %c0_i32, %c0_i32_0 : i32, i32, i32
  }
}

</mosaic_0001>

<llo_original>
// kernel: audionet_forward.9
$region0: #{audionet_forward.9}
  #allocation0 [shape = 'u32[]', space=smem, size = 0x4, offset = 0x4, fixed_abs, tag = 'smem constant byte address 0x4 - core index']
  #allocation1 [shape = 'u32[144,128]{1,0:T(1,128)}', space=vmem, size = 0x12000, scoped, tag = 'internal scratch']
  %s0 = inlined_call_operand.vmem [shape: f32[128,49], index: 0, kind: input, shape index: {}]
  %s1 = inlined_call_operand.vmem [shape: bf16[49,16], index: 1, kind: input, shape index: {}]
  %s2 = inlined_call_operand.vmem [shape: f32[1,16], index: 2, kind: input, shape index: {}]
  %s3 = inlined_call_operand.vmem [shape: f32[128,16], index: 3, kind: output, shape index: {}]
  %s4 = sld [smem:[#allocation0]]
  $region22: #{audionet_forward.9} parent=0
    _
  %s6 = ssub.s32 1, %s4
  %s7 = scalar_select 0, %s6, %s4
  // Predicated region
  $region2: #{audionet_forward.9} parent=0 // pred_check
    _
  $region3: #{audionet_forward.9} parent=0 // pred_check_branch
    %9 = sbr.rel (0) target = $region5
  $region4: #{audionet_forward.9} parent=0 // pred_region
    _
  $region5: #{audionet_forward.9} parent=0 // pred_fallthru
    _
  // Predicated region
  $region6: #{audionet_forward.9} parent=0 // pred_check
    _
  $region7: #{audionet_forward.9} parent=0 // pred_check_branch
    %11 = sbr.rel (0) target = $region9
  $region8: #{audionet_forward.9} parent=0 // pred_region
    _
  $region9: #{audionet_forward.9} parent=0 // pred_fallthru
    _
  // Predicated region
  $region10: #{audionet_forward.9} parent=0 // pred_check
    _
  $region11: #{audionet_forward.9} parent=0 // pred_check_branch
    %13 = sbr.rel (0) target = $region13
  $region12: #{audionet_forward.9} parent=0 // pred_region
    _
  $region13: #{audionet_forward.9} parent=0 // pred_fallthru
    _
  %v15 = vld [vmem:[%s0] sm:$0xff]
  %v16 = vld [vmem:[%s0 + $0x8] sm:$0xff]
  %v17 = vld [vmem:[%s0 + $0x10] sm:$0xff]
  %v18 = vld [vmem:[%s0 + $0x18] sm:$0xff]
  %v19 = vld [vmem:[%s0 + $0x20] sm:$0xff]
  %v20 = vld [vmem:[%s0 + $0x28] sm:$0xff]
  %v21 = vld [vmem:[%s0 + $0x30] sm:$0xff]
  %v22 = vld [vmem:[%s0 + $0x38] sm:$0xff]
  %v23 = vld [vmem:[%s0 + $0x40] sm:$0xff]
  %v24 = vld [vmem:[%s0 + $0x48] sm:$0xff]
  %v25 = vld [vmem:[%s0 + $0x50] sm:$0xff]
  %v26 = vld [vmem:[%s0 + $0x58] sm:$0xff]
  %v27 = vld [vmem:[%s0 + $0x60] sm:$0xff]
  %v28 = vld [vmem:[%s0 + $0x68] sm:$0xff]
  %v29 = vld [vmem:[%s0 + $0x70] sm:$0xff]
  %v30 = vld [vmem:[%s0 + $0x78] sm:$0xff]
  %v31 = vpack.c.bf16 %v16, %v15
  %v32 = vpack.c.bf16 %v18, %v17
  %v33 = vpack.c.bf16 %v20, %v19
  %v34 = vpack.c.bf16 %v22, %v21
  %v35 = vpack.c.bf16 %v24, %v23
  %v36 = vpack.c.bf16 %v26, %v25
  %v37 = vpack.c.bf16 %v28, %v27
  %v38 = vpack.c.bf16 %v30, %v29
  %v39 = vld [vmem:[%s1] sm:$0xf]
  %v40 = vld [vmem:[%s1 + $0x4] sm:$0xf]
  %v41 = vld [vmem:[%s1 + $0x8] sm:$0xf]
  %v42 = vld [vmem:[%s1 + $0xc] sm:$0xf]
  %v43 = vld [vmem:[%s1 + $0x10] sm:$0xf]
  %v44 = vld [vmem:[%s1 + $0x14] sm:$0xf]
  %v45 = vld [vmem:[%s1 + $0x18] sm:$0x1]
  %v46 = vld [vmem:[%s2] sm:$0x1]
  %v48 = vlaneseq
  %v49 = vshrl.u32 %v48, 7
  %v50 = vsub.s32 0, %v49
  %v51 = vrot.slane %v46, %v50
  %v60 = vunpack.c.l.b16 %v39
  %v61 = vunpack.c.l.b16 %v40
  %v62 = vunpack.c.l.b16 %v41
  %v63 = vunpack.c.l.b16 %v42
  %v64 = vunpack.c.l.b16 %v43
  %v65 = vunpack.c.l.b16 %v44
  %v66 = vunpack.c.l.b16 %v45
  %v67 = vpack.c.b16 %v61, %v60
  %v68 = vpack.c.b16 %v63, %v62
  %v69 = vpack.c.b16 %v65, %v64
  %v70 = vpack.c.b16 %v66, %v66
  %vm74 = vcmask 400384
  %v76 = vsel %vm74, %v31, 0
  %v79 = vsel %vm74, %v32, 0
  %v82 = vsel %vm74, %v33, 0
  %v85 = vsel %vm74, %v34, 0
  %v88 = vsel %vm74, %v35, 0
  %v91 = vsel %vm74, %v36, 0
  %v94 = vsel %vm74, %v37, 0
  %v97 = vsel %vm74, %v38, 0
  %vm99 = vcmask 1040384
  %v100 = vsel 0, 4294967295, 65535
  %v101 = vsel %vm99, %v100, 0
  %v103 = vand.u32 %v70, %v101
  %105 = vmatprep.subr.bf16.mxu0 0
  %106 = vmatpush1.bf16.msra.mxu0 %v67
  %107 = vmatprep.subr.bf16.mxu0 0
  %108 = vmatpush1.bf16.msra.mxu0 %v68
  %109 = vmatprep.subr.bf16.mxu0 0
  %110 = vmatpush1.bf16.msra.mxu0 %v69
  %111 = vmatprep.subr.bf16.mxu0 0
  %112 = vmatpush1.bf16.msra.mxu0 %v103
  %113 = vmatprep.subr.bf16.mxu0 0
  %114 = vmatpush1.bf16.msra.mxu0 0
  %115 = vmatprep.subr.bf16.mxu0 0
  %116 = vmatpush1.bf16.msra.mxu0 0
  %117 = vmatprep.subr.bf16.mxu0 0
  %118 = vmatpush1.bf16.msra.mxu0 0
  %119 = vmatprep.subr.bf16.mxu0 0
  %120 = vmatpush1.bf16.msra.mxu0 0
  %121 = vmatprep.subr.bf16.mxu0 0
  %122 = vmatpush1.bf16.msra.mxu0 0
  %123 = vmatprep.subr.bf16.mxu0 0
  %124 = vmatpush1.bf16.msra.mxu0 0
  %125 = vmatprep.subr.bf16.mxu0 0
  %126 = vmatpush1.bf16.msra.mxu0 0
  %127 = vmatprep.subr.bf16.mxu0 0
  %128 = vmatpush1.bf16.msra.mxu0 0
  %129 = vmatprep.subr.bf16.mxu0 0
  %130 = vmatpush1.bf16.msra.mxu0 0
  %131 = vmatprep.subr.bf16.mxu0 0
  %132 = vmatpush1.bf16.msra.mxu0 0
  %133 = vmatprep.subr.bf16.mxu0 0
  %134 = vmatpush1.bf16.msra.mxu0 0
  %135 = vmatprep.subr.bf16.mxu0 0
  %136 = vmatpush1.bf16.msra.mxu0 0
  %137 = vmatprep.mubr.bf16.mxu0 0
  %138 = vmatmul.mubr.bf16.gmra.mrb[0].mxu0 %v76
  %v139 = vpop.f32.mrb[0].mxu0
  %v140 = vadd.f32 %v51, %v139
  %v141 = vpop.f32.mrb[0].mxu0
  %v142 = vpop.f32.mrb[0].mxu0
  %v143 = vadd.f32 %v51, %v142
  %v144 = vpop.f32.mrb[0].mxu0
  %145 = vmatprep.mubr.bf16.mxu0 0
  %146 = vmatmul.mubr.bf16.gmra.mrb[0].mxu0 %v79
  %v147 = vpop.f32.mrb[0].mxu0
  %v148 = vadd.f32 %v51, %v147
  %v149 = vpop.f32.mrb[0].mxu0
  %v150 = vpop.f32.mrb[0].mxu0
  %v151 = vadd.f32 %v51, %v150
  %v152 = vpop.f32.mrb[0].mxu0
  %153 = vmatprep.mubr.bf16.mxu0 0
  %154 = vmatmul.mubr.bf16.gmra.mrb[0].mxu0 %v82
  %v155 = vpop.f32.mrb[0].mxu0
  %v156 = vadd.f32 %v51, %v155
  %v157 = vpop.f32.mrb[0].mxu0
  %v158 = vpop.f32.mrb[0].mxu0
  %v159 = vadd.f32 %v51, %v158
  %v160 = vpop.f32.mrb[0].mxu0
  %161 = vmatprep.mubr.bf16.mxu0 0
  %162 = vmatmul.mubr.bf16.gmra.mrb[0].mxu0 %v85
  %v163 = vpop.f32.mrb[0].mxu0
  %v164 = vadd.f32 %v51, %v163
  %v165 = vpop.f32.mrb[0].mxu0
  %v166 = vpop.f32.mrb[0].mxu0
  %v167 = vadd.f32 %v51, %v166
  %v168 = vpop.f32.mrb[0].mxu0
  %169 = vmatprep.mubr.bf16.mxu0 0
  %170 = vmatmul.mubr.bf16.gmra.mrb[0].mxu0 %v88
  %v171 = vpop.f32.mrb[0].mxu0
  %v172 = vadd.f32 %v51, %v171
  %v173 = vpop.f32.mrb[0].mxu0
  %v174 = vpop.f32.mrb[0].mxu0
  %v175 = vadd.f32 %v51, %v174
  %v176 = vpop.f32.mrb[0].mxu0
  %177 = vmatprep.mubr.bf16.mxu0 0
  %178 = vmatmul.mubr.bf16.gmra.mrb[0].mxu0 %v91
  %v179 = vpop.f32.mrb[0].mxu0
  %v180 = vadd.f32 %v51, %v179
  %v181 = vpop.f32.mrb[0].mxu0
  %v182 = vpop.f32.mrb[0].mxu0
  %v183 = vadd.f32 %v51, %v182
  %v184 = vpop.f32.mrb[0].mxu0
  %185 = vmatprep.mubr.bf16.mxu0 0
  %186 = vmatmul.mubr.bf16.gmra.mrb[0].mxu0 %v94
  %v187 = vpop.f32.mrb[0].mxu0
  %v188 = vadd.f32 %v51, %v187
  %v189 = vpop.f32.mrb[0].mxu0
  %v190 = vpop.f32.mrb[0].mxu0
  %v191 = vadd.f32 %v51, %v190
  %v192 = vpop.f32.mrb[0].mxu0
  %193 = vmatprep.mubr.bf16.mxu0 0
  %194 = vmatmul.mubr.bf16.gmra.mrb[0].mxu0 %v97
  %v195 = vpop.f32.mrb[0].mxu0
  %v196 = vadd.f32 %v51, %v195
  %v197 = vpop.f32.mrb[0].mxu0
  %v198 = vpop.f32.mrb[0].mxu0
  %v199 = vadd.f32 %v51, %v198
  %v200 = vpop.f32.mrb[0].mxu0
  %201 = vdwg.mxu0
  %v202 = vmax.f32 %v140, 0.0
  %v203 = vmax.f32 %v143, 0.0
  %v204 = vmax.f32 %v148, 0.0
  %v205 = vmax.f32 %v151, 0.0
  %v206 = vmax.f32 %v156, 0.0
  %v207 = vmax.f32 %v159, 0.0
  %v208 = vmax.f32 %v164, 0.0
  %v209 = vmax.f32 %v167, 0.0
  %v210 = vmax.f32 %v172, 0.0
  %v211 = vmax.f32 %v175, 0.0
  %v212 = vmax.f32 %v180, 0.0
  %v213 = vmax.f32 %v183, 0.0
  %v214 = vmax.f32 %v188, 0.0
  %v215 = vmax.f32 %v191, 0.0
  %v216 = vmax.f32 %v196, 0.0
  %v217 = vmax.f32 %v199, 0.0
  %v218 = vmin.f32 %v202, 6.0
  %v219 = vmin.f32 %v203, 6.0
  %v220 = vmin.f32 %v204, 6.0
  %v221 = vmin.f32 %v205, 6.0
  %v222 = vmin.f32 %v206, 6.0
  %v223 = vmin.f32 %v207, 6.0
  %v224 = vmin.f32 %v208, 6.0
  %v225 = vmin.f32 %v209, 6.0
  %v226 = vmin.f32 %v210, 6.0
  %v227 = vmin.f32 %v211, 6.0
  %v228 = vmin.f32 %v212, 6.0
  %v229 = vmin.f32 %v213, 6.0
  %v230 = vmin.f32 %v214, 6.0
  %v231 = vmin.f32 %v215, 6.0
  %v232 = vmin.f32 %v216, 6.0
  %v233 = vmin.f32 %v217, 6.0
  %vm234 = vcmask 130048
  %235 = vst.msk [vmem:[%s3] sm:$0xff] %vm234, %v218
  %236 = vst.msk [vmem:[%s3 + $0x8] sm:$0xff] %vm234, %v219
  %237 = vst.msk [vmem:[%s3 + $0x10] sm:$0xff] %vm234, %v220
  %238 = vst.msk [vmem:[%s3 + $0x18] sm:$0xff] %vm234, %v221
  %239 = vst.msk [vmem:[%s3 + $0x20] sm:$0xff] %vm234, %v222
  %240 = vst.msk [vmem:[%s3 + $0x28] sm:$0xff] %vm234, %v223
  %241 = vst.msk [vmem:[%s3 + $0x30] sm:$0xff] %vm234, %v224
  %242 = vst.msk [vmem:[%s3 + $0x38] sm:$0xff] %vm234, %v225
  %243 = vst.msk [vmem:[%s3 + $0x40] sm:$0xff] %vm234, %v226
  %244 = vst.msk [vmem:[%s3 + $0x48] sm:$0xff] %vm234, %v227
  %245 = vst.msk [vmem:[%s3 + $0x50] sm:$0xff] %vm234, %v228
  %246 = vst.msk [vmem:[%s3 + $0x58] sm:$0xff] %vm234, %v229
  %247 = vst.msk [vmem:[%s3 + $0x60] sm:$0xff] %vm234, %v230
  %248 = vst.msk [vmem:[%s3 + $0x68] sm:$0xff] %vm234, %v231
  %249 = vst.msk [vmem:[%s3 + $0x70] sm:$0xff] %vm234, %v232
  %250 = vst.msk [vmem:[%s3 + $0x78] sm:$0xff] %vm234, %v233
  // Predicated region
  $region14: #{audionet_forward.9} parent=0 // pred_check
    _
  $region15: #{audionet_forward.9} parent=0 // pred_check_branch
    %252 = sbr.rel (0) target = $region17
  $region16: #{audionet_forward.9} parent=0 // pred_region
    _
  $region17: #{audionet_forward.9} parent=0 // pred_fallthru
    _
  // Predicated region
  $region18: #{audionet_forward.9} parent=0 // pred_check
    _
  $region19: #{audionet_forward.9} parent=0 // pred_check_branch
    %254 = sbr.rel (0) target = $region21
  $region20: #{audionet_forward.9} parent=0 // pred_region
    _
  $region21: #{audionet_forward.9} parent=0 // pred_fallthru
    _

// kernel: audionet_forward.13
$region0: #{audionet_forward.13}
  #allocation0 [shape = 'u32[]', space=smem, size = 0x4, offset = 0x4, fixed_abs, tag = 'smem constant byte address 0x4 - core index']
  #allocation1 [shape = 'u32[144,128]{1,0:T(1,128)}', space=vmem, size = 0x12000, scoped, tag = 'internal scratch']
  #allocation2 [shape = 'f32[29,64]{1,0:T(8,128)}', space=vmem, size = 0x4000, scoped, tag = 'scratch operand']
  %s0 = inlined_call_operand.vmem [shape: f32[2,16,32], index: 0, kind: input, shape index: {}]
  %s1 = inlined_call_operand.vmem [shape: f32[9,16,1], index: 1, kind: input, shape index: {}]
  %s2 = inlined_call_operand.vmem [shape: bf16[32,64], index: 2, kind: input, shape index: {}]
  %s3 = inlined_call_operand.vmem [shape: f32[1,64], index: 3, kind: input, shape index: {}]
  %s4 = inlined_call_operand.vmem [shape: f32[9,1,64], index: 4, kind: input, shape index: {}]
  %s5 = inlined_call_operand.vmem [shape: f32[1,64], index: 5, kind: input, shape index: {}]
  %s6 = inlined_call_operand.vmem [shape: bf16[64,32], index: 6, kind: input, shape index: {}]
  %s7 = inlined_call_operand.vmem [shape: f32[1,32], index: 7, kind: input, shape index: {}]
  %s8 = inlined_call_operand.vmem [shape: f32[2,16,32], index: 8, kind: output, shape index: {}]
  %s9 = sld [smem:[#allocation0]]
  $region65: #{audionet_forward.13} parent=0
    _
  %s11 = ssub.s32 1, %s9
  %s12 = scalar_select 0, %s11, %s9
  loop: start=0, step=1, limit=4
  $region2: #{audionet_forward.13} parent=0 // loop_pre_header
    _
  $region3: #{audionet_forward.13} parent=0 // loop_header
    %s14 = sphi 0, %s18
    %p15 = scmp.ge.s32.totalorder %s14, 4
    %s24 = sphi 0, %s26
    %s27 = sphi 0, %s24
    %s28 = sphi 0, %s27
    %s44 = sphi 0, %s28
    %s48 = sphi 0, %s48
    %s50 = sphi 0, %s48
    %s51 = sphi 0, %s50
    %s65 = sphi 0, %s51
    %s69 = sphi 0, %s69
    %s71 = sphi 0, %s69
    %s72 = sphi 0, %s71
    %s86 = sphi 0, %s72
    %s90 = sphi 0, %s90
    %s92 = sphi 0, %s90
    %s93 = sphi 0, %s92
    %s107 = sphi 0, %s93
    %s111 = sphi 0, %s111
    %s113 = sphi 0, %s111
    %s114 = sphi 0, %s113
    %s128 = sphi 0, %s114
    %s132 = sphi 0, %s132
    %s134 = sphi 0, %s132
    %s135 = sphi 0, %s134
    %s149 = sphi 0, %s135
    %s153 = sphi 0, %s153
    %s155 = sphi 0, %s153
    %s156 = sphi 0, %s155
    %s170 = sphi 0, %s156
    %s174 = sphi 0, %s174
    %s176 = sphi 0, %s174
    %s177 = sphi 0, %s176
    %s191 = sphi 0, %s177
    %s197 = sphi 0, %s199
    %s200 = sphi 0, %s197
    %s201 = sphi 0, %s200
    %s217 = sphi 0, %s201
  $region4: #{audionet_forward.13} parent=0 // loop_header_branch
    %17 = sbr.rel (%p15) target = $region8
  $region5: #{audionet_forward.13} parent=0 // loop_body
    %s19 = ssub.s32 %s14, 1
    %s20 = ssub.s32 %s14, 2
    %s21 = sadd.s32 %s14, 1
    %s22 = ssub.s32 %s14, %s21
    %p23 = scmp.eq.s32.totalorder %s22, 0
    %s25 = sadd.s32 %s24, 1
    %s26 = scalar_select %p23, %s24, %s25
    %p29 = pneg %p23
    %p30 = scmp.eq.s32.totalorder %s14, 1
    %p31 = por %p29, %p30
    %p32 = scmp.ne.s32.totalorder %s24, %s27
    %p33 = scmp.eq.s32.totalorder %s14, 0
    %p34 = por %p32, %p33
    %p35 = scmp.ne.s32.totalorder %s24, %s27
    %p36 = scmp.eq.s32.totalorder %s19, 1
    %p37 = por %p35, %p36
    %p38 = scmp.ne.s32.totalorder %s27, %s28
    %p39 = scmp.eq.s32.totalorder %s19, 0
    %p40 = por %p38, %p39
    %p41 = scmp.ne.s32.totalorder %s27, %s28
    %p42 = scmp.eq.s32.totalorder %s20, 1
    %p43 = por %p41, %p42
    %p45 = scmp.ne.s32.totalorder %s28, %s44
    %p46 = scmp.eq.s32.totalorder %s20, 0
    %p47 = por %p45, %p46
    %s49 = sadd.s32 %s48, 1
    %p52 = scmp.eq.s32.totalorder %s14, 1
    %p53 = scmp.ne.s32.totalorder %s48, %s50
    %p54 = scmp.eq.s32.totalorder %s14, 0
    %p55 = por %p53, %p54
    %p56 = scmp.ne.s32.totalorder %s48, %s50
    %p57 = scmp.eq.s32.totalorder %s19, 1
    %p58 = por %p56, %p57
    %p59 = scmp.ne.s32.totalorder %s50, %s51
    %p60 = scmp.eq.s32.totalorder %s19, 0
    %p61 = por %p59, %p60
    %p62 = scmp.ne.s32.totalorder %s50, %s51
    %p63 = scmp.eq.s32.totalorder %s20, 1
    %p64 = por %p62, %p63
    %p66 = scmp.ne.s32.totalorder %s51, %s65
    %p67 = scmp.eq.s32.totalorder %s20, 0
    %p68 = por %p66, %p67
    %s70 = sadd.s32 %s69, 1
    %p73 = scmp.eq.s32.totalorder %s14, 1
    %p74 = scmp.ne.s32.totalorder %s69, %s71
    %p75 = scmp.eq.s32.totalorder %s14, 0
    %p76 = por %p74, %p75
    %p77 = scmp.ne.s32.totalorder %s69, %s71
    %p78 = scmp.eq.s32.totalorder %s19, 1
    %p79 = por %p77, %p78
    %p80 = scmp.ne.s32.totalorder %s71, %s72
    %p81 = scmp.eq.s32.totalorder %s19, 0
    %p82 = por %p80, %p81
    %p83 = scmp.ne.s32.totalorder %s71, %s72
    %p84 = scmp.eq.s32.totalorder %s20, 1
    %p85 = por %p83, %p84
    %p87 = scmp.ne.s32.totalorder %s72, %s86
    %p88 = scmp.eq.s32.totalorder %s20, 0
    %p89 = por %p87, %p88
    %s91 = sadd.s32 %s90, 1
    %p94 = scmp.eq.s32.totalorder %s14, 1
    %p95 = scmp.ne.s32.totalorder %s90, %s92
    %p96 = scmp.eq.s32.totalorder %s14, 0
    %p97 = por %p95, %p96
    %p98 = scmp.ne.s32.totalorder %s90, %s92
    %p99 = scmp.eq.s32.totalorder %s19, 1
    %p100 = por %p98, %p99
    %p101 = scmp.ne.s32.totalorder %s92, %s93
    %p102 = scmp.eq.s32.totalorder %s19, 0
    %p103 = por %p101, %p102
    %p104 = scmp.ne.s32.totalorder %s92, %s93
    %p105 = scmp.eq.s32.totalorder %s20, 1
    %p106 = por %p104, %p105
    %p108 = scmp.ne.s32.totalorder %s93, %s107
    %p109 = scmp.eq.s32.totalorder %s20, 0
    %p110 = por %p108, %p109
    %s112 = sadd.s32 %s111, 1
    %p115 = scmp.eq.s32.totalorder %s14, 1
    %p116 = scmp.ne.s32.totalorder %s111, %s113
    %p117 = scmp.eq.s32.totalorder %s14, 0
    %p118 = por %p116, %p117
    %p119 = scmp.ne.s32.totalorder %s111, %s113
    %p120 = scmp.eq.s32.totalorder %s19, 1
    %p121 = por %p119, %p120
    %p122 = scmp.ne.s32.totalorder %s113, %s114
    %p123 = scmp.eq.s32.totalorder %s19, 0
    %p124 = por %p122, %p123
    %p125 = scmp.ne.s32.totalorder %s113, %s114
    %p126 = scmp.eq.s32.totalorder %s20, 1
    %p127 = por %p125, %p126
    %p129 = scmp.ne.s32.totalorder %s114, %s128
    %p130 = scmp.eq.s32.totalorder %s20, 0
    %p131 = por %p129, %p130
    %s133 = sadd.s32 %s132, 1
    %p136 = scmp.eq.s32.totalorder %s14, 1
    %p137 = scmp.ne.s32.totalorder %s132, %s134
    %p138 = scmp.eq.s32.totalorder %s14, 0
    %p139 = por %p137, %p138
    %p140 = scmp.ne.s32.totalorder %s132, %s134
    %p141 = scmp.eq.s32.totalorder %s19, 1
    %p142 = por %p140, %p141
    %p143 = scmp.ne.s32.totalorder %s134, %s135
    %p144 = scmp.eq.s32.totalorder %s19, 0
    %p145 = por %p143, %p144
    %p146 = scmp.ne.s32.totalorder %s134, %s135
    %p147 = scmp.eq.s32.totalorder %s20, 1
    %p148 = por %p146, %p147
    %p150 = scmp.ne.s32.totalorder %s135, %s149
    %p151 = scmp.eq.s32.totalorder %s20, 0
    %p152 = por %p150, %p151
    %s154 = sadd.s32 %s153, 1
    %p157 = scmp.eq.s32.totalorder %s14, 1
    %p158 = scmp.ne.s32.totalorder %s153, %s155
    %p159 = scmp.eq.s32.totalorder %s14, 0
    %p160 = por %p158, %p159
    %p161 = scmp.ne.s32.totalorder %s153, %s155
    %p162 = scmp.eq.s32.totalorder %s19, 1
    %p163 = por %p161, %p162
    %p164 = scmp.ne.s32.totalorder %s155, %s156
    %p165 = scmp.eq.s32.totalorder %s19, 0
    %p166 = por %p164, %p165
    %p167 = scmp.ne.s32.totalorder %s155, %s156
    %p168 = scmp.eq.s32.totalorder %s20, 1
    %p169 = por %p167, %p168
    %p171 = scmp.ne.s32.totalorder %s156, %s170
    %p172 = scmp.eq.s32.totalorder %s20, 0
    %p173 = por %p171, %p172
    %s175 = sadd.s32 %s174, 1
    %p178 = scmp.eq.s32.totalorder %s14, 1
    %p179 = scmp.ne.s32.totalorder %s174, %s176
    %p180 = scmp.eq.s32.totalorder %s14, 0
    %p181 = por %p179, %p180
    %p182 = scmp.ne.s32.totalorder %s174, %s176
    %p183 = scmp.eq.s32.totalorder %s19, 1
    %p184 = por %p182, %p183
    %p185 = scmp.ne.s32.totalorder %s176, %s177
    %p186 = scmp.eq.s32.totalorder %s19, 0
    %p187 = por %p185, %p186
    %p188 = scmp.ne.s32.totalorder %s176, %s177
    %p189 = scmp.eq.s32.totalorder %s20, 1
    %p190 = por %p188, %p189
    %p192 = scmp.ne.s32.totalorder %s177, %s191
    %p193 = scmp.eq.s32.totalorder %s20, 0
    %p194 = por %p192, %p193
    %s195 = ssub.s32 %s14, %s21
    %p196 = scmp.eq.s32.totalorder %s195, 0
    %s198 = sadd.s32 %s197, 1
    %s199 = scalar_select %p196, %s197, %s198
    %p202 = pneg %p196
    %p203 = scmp.eq.s32.totalorder %s14, 1
    %p204 = por %p202, %p203
    %p205 = scmp.ne.s32.totalorder %s197, %s200
    %p206 = scmp.eq.s32.totalorder %s14, 0
    %p207 = por %p205, %p206
    %p208 = scmp.ne.s32.totalorder %s197, %s200
    %p209 = scmp.eq.s32.totalorder %s19, 1
    %p210 = por %p208, %p209
    %p211 = scmp.ne.s32.totalorder %s200, %s201
    %p212 = scmp.eq.s32.totalorder %s19, 0
    %p213 = por %p211, %p212
    %p214 = scmp.ne.s32.totalorder %s200, %s201
    %p215 = scmp.eq.s32.totalorder %s20, 1
    %p216 = por %p214, %p215
    %p218 = scmp.ne.s32.totalorder %s201, %s217
    %p219 = scmp.eq.s32.totalorder %s20, 0
    %p220 = por %p218, %p219
    %p221 = scmp.le.s32.totalorder 1, %s14
    %p222 = scmp.lt.s32.totalorder %s14, 3
    %p223 = pnand %p221, %p222
    %p224 = pneg %p223
    // Predicated region
    $region9: #{audionet_forward.13} parent=5 // pred_check
      _
    $region10: #{audionet_forward.13} parent=5 // pred_check_branch
      %226 = sbr.rel (%p223) target = $region12
    $region11: #{audionet_forward.13} parent=5 // pred_region
      %s227 = ssub.s32 %s14, 1
      // Predicated region
      $region13: #{audionet_forward.13} parent=11 // pred_check
        %p228 = pneg %p61
      $region14: #{audionet_forward.13} parent=11 // pred_check_branch
        %230 = sbr.rel (%p228) target = $region16
      $region15: #{audionet_forward.13} parent=11 // pred_region
        _
      $region16: #{audionet_forward.13} parent=11 // pred_fallthru
        _
      // Predicated region
      $region17: #{audionet_forward.13} parent=11 // pred_check
        %p231 = pneg %p82
      $region18: #{audionet_forward.13} parent=11 // pred_check_branch
        %233 = sbr.rel (%p231) target = $region20
      $region19: #{audionet_forward.13} parent=11 // pred_region
        _
      $region20: #{audionet_forward.13} parent=11 // pred_fallthru
        _
      // Predicated region
      $region21: #{audionet_forward.13} parent=11 // pred_check
        %p234 = pneg %p103
      $region22: #{audionet_forward.13} parent=11 // pred_check_branch
        %236 = sbr.rel (%p234) target = $region24
      $region23: #{audionet_forward.13} parent=11 // pred_region
        _
      $region24: #{audionet_forward.13} parent=11 // pred_fallthru
        _
      // Predicated region
      $region25: #{audionet_forward.13} parent=11 // pred_check
        %p237 = pneg %p124
      $region26: #{audionet_forward.13} parent=11 // pred_check_branch
        %239 = sbr.rel (%p237) target = $region28
      $region27: #{audionet_forward.13} parent=11 // pred_region
        _
      $region28: #{audionet_forward.13} parent=11 // pred_fallthru
        _
      // Predicated region
      $region29: #{audionet_forward.13} parent=11 // pred_check
        %p240 = pneg %p145
      $region30: #{audionet_forward.13} parent=11 // pred_check_branch
        %242 = sbr.rel (%p240) target = $region32
      $region31: #{audionet_forward.13} parent=11 // pred_region
        _
      $region32: #{audionet_forward.13} parent=11 // pred_fallthru
        _
      // Predicated region
      $region33: #{audionet_forward.13} parent=11 // pred_check
        %p243 = pneg %p166
      $region34: #{audionet_forward.13} parent=11 // pred_check_branch
        %245 = sbr.rel (%p243) target = $region36
      $region35: #{audionet_forward.13} parent=11 // pred_region
        _
      $region36: #{audionet_forward.13} parent=11 // pred_fallthru
        _
      // Predicated region
      $region37: #{audionet_forward.13} parent=11 // pred_check
        %p246 = pneg %p187
      $region38: #{audionet_forward.13} parent=11 // pred_check_branch
        %248 = sbr.rel (%p246) target = $region40
      $region39: #{audionet_forward.13} parent=11 // pred_region
        _
      $region40: #{audionet_forward.13} parent=11 // pred_fallthru
        _
    $region12: #{audionet_forward.13} parent=5 // pred_fallthru
      _
    %p249 = scmp.lt.s32.totalorder %s14, 2
    // Predicated region
    $region41: #{audionet_forward.13} parent=5 // pred_check
      %p250 = pneg %p249
    $region42: #{audionet_forward.13} parent=5 // pred_check_branch
      %252 = sbr.rel (%p250) target = $region44
    $region43: #{audionet_forward.13} parent=5 // pred_region
      // Predicated region
      $region45: #{audionet_forward.13} parent=43 // pred_check
        %p253 = pneg %p34
      $region46: #{audionet_forward.13} parent=43 // pred_check_branch
        %255 = sbr.rel (%p253) target = $region48
      $region47: #{audionet_forward.13} parent=43 // pred_region
        %p256 = scmp.lt.s32.totalorder %s14, 1
        %s257 = scalar_select %p256, %s14, 1
        %s258 = smul.addr %s257, 2
        %s259 = smul.addr %s258, 8
        %s260 = scalar_lea.vmem %s0, %s259
      $region48: #{audionet_forward.13} parent=43 // pred_fallthru
        _
    $region44: #{audionet_forward.13} parent=5 // pred_fallthru
      _
    %p261 = scmp.le.s32.totalorder 1, %s14
    %p262 = scmp.lt.s32.totalorder %s14, 3
    %p263 = pnand %p261, %p262
    %p264 = pneg %p263
    // Predicated region
    $region49: #{audionet_forward.13} parent=5 // pred_check
      _
    $region50: #{audionet_forward.13} parent=5 // pred_check_branch
      %266 = sbr.rel (%p263) target = $region52
    $region51: #{audionet_forward.13} parent=5 // pred_region
      %s267 = ssub.s32 %s14, 1
      %p268 = scmp.lt.s32.totalorder %s19, 1
      %s269 = scalar_select %p268, %s19, 1
      %s270 = smul.addr %s269, 2
      %s271 = smul.addr %s270, 8
      %s272 = scalar_lea.vmem %s0, %s271
      %p273 = pneg %p40
      %p274 = pneg %p37
      %p275 = pneg %p61
      %p276 = pneg %p58
      %p277 = pneg %p82
      %p278 = pneg %p79
      %p279 = pneg %p103
      %p280 = pneg %p100
      %p281 = pneg %p124
      %p282 = pneg %p121
      %p283 = pneg %p145
      %p284 = pneg %p142
      %p285 = pneg %p166
      %p286 = pneg %p163
      %p287 = pneg %p187
      %p288 = pneg %p184
      %p289 = pneg %p213
      %p290 = pneg %p210
      %p291 = scmp.lt.s32.totalorder %s19, 1
      %s292 = scalar_select %p291, %s19, 1
      %s293 = smul.addr %s292, 2
      %s294 = smul.addr %s293, 8
      %s295 = scalar_lea.vmem %s8, %s294
      %p296 = scmp.lt.s32.totalorder %s19, 1
      %s297 = scalar_select %p296, %s19, 1
      %s298 = smul.addr %s297, 2
      %s299 = smul.addr %s298, 8
      %s300 = scalar_lea.vmem %s0, %s299
      %p301 = scmp.lt.s32.totalorder %s19, 1
      %s302 = scalar_select %p301, %s19, 1
      %s303 = smul.addr %s302, 2
      %s304 = smul.addr %s303, 8
      %s305 = scalar_lea.vmem %s8, %s304
      %v307 = vld [vmem:[%s300] sm:$0xff]
      %v308 = vld [vmem:[%s300 + $0x8] sm:$0xff]
      %v309 = vpack.c.bf16 %v308, %v307
      %v310 = vld [vmem:[%s2] sm:$0xf]
      %v311 = vld [vmem:[%s2 + $0x4] sm:$0xf]
      %v312 = vld [vmem:[%s2 + $0x8] sm:$0xf]
      %v313 = vld [vmem:[%s2 + $0xc] sm:$0xf]
      %v314 = vld [vmem:[%s3] sm:$0x1]
      %v316 = vlaneseq
      %v317 = vshrl.u32 %v316, 7
      %v318 = vsub.s32 0, %v317
      %v319 = vrot.slane %v314, %v318
      %v325 = vunpack.c.l.b16 %v310
      %v326 = vunpack.c.l.b16 %v311
      %v327 = vunpack.c.l.b16 %v312
      %v328 = vunpack.c.l.b16 %v313
      %v329 = vpack.c.b16 %v326, %v325
      %v330 = vpack.c.b16 %v328, %v327
      %vm333 = vcmask 261120
      %v335 = vsel %vm333, %v309, 0
      %337 = vmatprep.subr.bf16.mxu0 0
      %338 = vmatpush1.bf16.msra.mxu0 %v329
      %339 = vmatprep.subr.bf16.mxu0 0
      %340 = vmatpush1.bf16.msra.mxu0 %v330
      %341 = vmatprep.subr.bf16.mxu0 0
      %342 = vmatpush1.bf16.msra.mxu0 0
      %343 = vmatprep.subr.bf16.mxu0 0
      %344 = vmatpush1.bf16.msra.mxu0 0
      %345 = vmatprep.subr.bf16.mxu0 0
      %346 = vmatpush1.bf16.msra.mxu0 0
      %347 = vmatprep.subr.bf16.mxu0 0
      %348 = vmatpush1.bf16.msra.mxu0 0
      %349 = vmatprep.subr.bf16.mxu0 0
      %350 = vmatpush1.bf16.msra.mxu0 0
      %351 = vmatprep.subr.bf16.mxu0 0
      %352 = vmatpush1.bf16.msra.mxu0 0
      %353 = vmatprep.subr.bf16.mxu0 0
      %354 = vmatpush1.bf16.msra.mxu0 0
      %355 = vmatprep.subr.bf16.mxu0 0
      %356 = vmatpush1.bf16.msra.mxu0 0
      %357 = vmatprep.subr.bf16.mxu0 0
      %358 = vmatpush1.bf16.msra.mxu0 0
      %359 = vmatprep.subr.bf16.mxu0 0
      %360 = vmatpush1.bf16.msra.mxu0 0
      %361 = vmatprep.subr.bf16.mxu0 0
      %362 = vmatpush1.bf16.msra.mxu0 0
      %363 = vmatprep.subr.bf16.mxu0 0
      %364 = vmatpush1.bf16.msra.mxu0 0
      %365 = vmatprep.subr.bf16.mxu0 0
      %366 = vmatpush1.bf16.msra.mxu0 0
      %367 = vmatprep.subr.bf16.mxu0 0
      %368 = vmatpush1.bf16.msra.mxu0 0
      %369 = vmatprep.mubr.bf16.mxu0 0
      %370 = vmatmul.mubr.bf16.gmra.mrb[0].mxu0 %v335
      %v371 = vpop.f32.mrb[0].mxu0
      %v372 = vadd.f32 %v319, %v371
      %v373 = vpop.f32.mrb[0].mxu0
      %v374 = vpop.f32.mrb[0].mxu0
      %v375 = vadd.f32 %v319, %v374
      %v376 = vpop.f32.mrb[0].mxu0
      %377 = vdwg.mxu0
      %v378 = vmax.f32 %v372, 0.0
      %v379 = vmax.f32 %v375, 0.0
      %vm380 = vcmask 523264
      %381 = vst.msk [vmem:[#allocation2] sm:$0xff] %vm380, 0.0
      %382 = vst.msk [vmem:[#allocation2 + $0x8] sm:$0xff] %vm380, 0.0
      %383 = vst.msk [vmem:[#allocation2 + $0x10] sm:$0xff] %vm380, 0.0
      %vm384 = vcmask 520192
      %385 = vst.msk [vmem:[#allocation2 + $0x18] sm:$0x1f] %vm384, 0.0
      %386 = vst.msk [vmem:[#allocation2 + $0x8] sm:$0xff] %vm380, %v378
      %387 = vst.msk [vmem:[#allocation2 + $0x10] sm:$0xff] %vm380, %v379
      %v388 = vld [vmem:[#allocation2 + $0x3] sm:$0xff]
      %v389 = vld [vmem:[#allocation2 + $0xb] sm:$0xff]
      %v390 = vld [vmem:[%s4] sm:$0x1]
      %v392 = vlaneseq
      %v393 = vshrl.u32 %v392, 7
      %v394 = vsub.s32 0, %v393
      %v395 = vrot.slane %v390, %v394
      %v397 = vmul.f32 %v388, %v395
      %v398 = vmul.f32 %v389, %v395
      %v399 = vld [vmem:[%s1] sm:$0xff]
      %v400 = vld [vmem:[%s1 + $0x8] sm:$0xff]
      %402 = vset.pattern.permute.xlu0 0
      %403 = vperm.xlu0 %402, %v399
      %v404 = vpop.permute.xlu0 %403
      %407 = vset.pattern.permute.xlu0 0
      %408 = vperm.xlu0 %407, %v400
      %v409 = vpop.permute.xlu0 %408
      %v411 = vmul.f32 %v397, %v404
      %v412 = vmul.f32 %v398, %v409
      %v413 = vld [vmem:[#allocation2 + $0x4] sm:$0xff]
      %v414 = vld [vmem:[#allocation2 + $0xc] sm:$0xff]
      %s415 = scalar_lea.vmem %s4, 1
      %v416 = vld [vmem:[%s415] sm:$0x1]
      %v418 = vlaneseq
      %v419 = vshrl.u32 %v418, 7
      %v420 = vsub.s32 0, %v419
      %v421 = vrot.slane %v416, %v420
      %v423 = vmul.f32 %v413, %v421
      %v424 = vmul.f32 %v414, %v421
      %s425 = scalar_lea.vmem %s1, 16
      %v426 = vld [vmem:[%s425] sm:$0xff]
      %v427 = vld [vmem:[%s425 + $0x8] sm:$0xff]
      %429 = vset.pattern.permute.xlu0 0
      %430 = vperm.xlu0 %429, %v426
      %v431 = vpop.permute.xlu0 %430
      %434 = vset.pattern.permute.xlu0 0
      %435 = vperm.xlu0 %434, %v427
      %v436 = vpop.permute.xlu0 %435
      %v438 = vmul.f32 %v423, %v431
      %v439 = vmul.f32 %v424, %v436
      %v440 = vld [vmem:[#allocation2 + $0x5] sm:$0xff]
      %v441 = vld [vmem:[#allocation2 + $0xd] sm:$0xff]
      %s442 = scalar_lea.vmem %s4, 2
      %v443 = vld [vmem:[%s442] sm:$0x1]
      %v445 = vlaneseq
      %v446 = vshrl.u32 %v445, 7
      %v447 = vsub.s32 0, %v446
      %v448 = vrot.slane %v443, %v447
      %v450 = vmul.f32 %v440, %v448
      %v451 = vmul.f32 %v441, %v448
      %s452 = scalar_lea.vmem %s1, 32
      %v453 = vld [vmem:[%s452] sm:$0xff]
      %v454 = vld [vmem:[%s452 + $0x8] sm:$0xff]
      %456 = vset.pattern.permute.xlu0 0
      %457 = vperm.xlu0 %456, %v453
      %v458 = vpop.permute.xlu0 %457
      %461 = vset.pattern.permute.xlu0 0
      %462 = vperm.xlu0 %461, %v454
      %v463 = vpop.permute.xlu0 %462
      %v465 = vmul.f32 %v450, %v458
      %v466 = vmul.f32 %v451, %v463
      %v467 = vld [vmem:[#allocation2 + $0x7] sm:$0xff]
      %v468 = vld [vmem:[#allocation2 + $0xf] sm:$0xff]
      %s469 = scalar_lea.vmem %s4, 3
      %v470 = vld [vmem:[%s469] sm:$0x1]
      %v472 = vlaneseq
      %v473 = vshrl.u32 %v472, 7
      %v474 = vsub.s32 0, %v473
      %v475 = vrot.slane %v470, %v474
      %v477 = vmul.f32 %v467, %v475
      %v478 = vmul.f32 %v468, %v475
      %s479 = scalar_lea.vmem %s1, 48
      %v480 = vld [vmem:[%s479] sm:$0xff]
      %v481 = vld [vmem:[%s479 + $0x8] sm:$0xff]
      %483 = vset.pattern.permute.xlu0 0
      %484 = vperm.xlu0 %483, %v480
      %v485 = vpop.permute.xlu0 %484
      %488 = vset.pattern.permute.xlu0 0
      %489 = vperm.xlu0 %488, %v481
      %v490 = vpop.permute.xlu0 %489
      %v492 = vmul.f32 %v477, %v485
      %v493 = vmul.f32 %v478, %v490
      %v494 = vld [vmem:[#allocation2 + $0x8] sm:$0xff]
      %v495 = vld [vmem:[#allocation2 + $0x10] sm:$0xff]
      %s496 = scalar_lea.vmem %s4, 4
      %v497 = vld [vmem:[%s496] sm:$0x1]
      %v499 = vlaneseq
      %v500 = vshrl.u32 %v499, 7
      %v501 = vsub.s32 0, %v500
      %v502 = vrot.slane %v497, %v501
      %v504 = vmul.f32 %v494, %v502
      %v505 = vmul.f32 %v495, %v502
      %v506 = vld [vmem:[#allocation2 + $0x9] sm:$0xff]
      %v507 = vld [vmem:[#allocation2 + $0x11] sm:$0xff]
      %s508 = scalar_lea.vmem %s4, 5
      %v509 = vld [vmem:[%s508] sm:$0x1]
      %v511 = vlaneseq
      %v512 = vshrl.u32 %v511, 7
      %v513 = vsub.s32 0, %v512
      %v514 = vrot.slane %v509, %v513
      %v516 = vmul.f32 %v506, %v514
      %v517 = vmul.f32 %v507, %v514
      %s518 = scalar_lea.vmem %s1, 80
      %v519 = vld [vmem:[%s518] sm:$0xff]
      %v520 = vld [vmem:[%s518 + $0x8] sm:$0xff]
      %522 = vset.pattern.permute.xlu0 0
      %523 = vperm.xlu0 %522, %v519
      %v524 = vpop.permute.xlu0 %523
      %527 = vset.pattern.permute.xlu0 0
      %528 = vperm.xlu0 %527, %v520
      %v529 = vpop.permute.xlu0 %528
      %v531 = vmul.f32 %v516, %v524
      %v532 = vmul.f32 %v517, %v529
      %v533 = vld [vmem:[#allocation2 + $0xb] sm:$0xff]
      %v534 = vld [vmem:[#allocation2 + $0x13] sm:$0xff]
      %s535 = scalar_lea.vmem %s4, 6
      %v536 = vld [vmem:[%s535] sm:$0x1]
      %v538 = vlaneseq
      %v539 = vshrl.u32 %v538, 7
      %v540 = vsub.s32 0, %v539
      %v541 = vrot.slane %v536, %v540
      %v543 = vmul.f32 %v533, %v541
      %v544 = vmul.f32 %v534, %v541
      %s545 = scalar_lea.vmem %s1, 96
      %v546 = vld [vmem:[%s545] sm:$0xff]
      %v547 = vld [vmem:[%s545 + $0x8] sm:$0xff]
      %549 = vset.pattern.permute.xlu0 0
      %550 = vperm.xlu0 %549, %v546
      %v551 = vpop.permute.xlu0 %550
      %554 = vset.pattern.permute.xlu0 0
      %555 = vperm.xlu0 %554, %v547
      %v556 = vpop.permute.xlu0 %555
      %v558 = vmul.f32 %v543, %v551
      %v559 = vmul.f32 %v544, %v556
      %v560 = vld [vmem:[#allocation2 + $0xc] sm:$0xff]
      %v561 = vld [vmem:[#allocation2 + $0x14] sm:$0xff]
      %s562 = scalar_lea.vmem %s4, 7
      %v563 = vld [vmem:[%s562] sm:$0x1]
      %v565 = vlaneseq
      %v566 = vshrl.u32 %v565, 7
      %v567 = vsub.s32 0, %v566
      %v568 = vrot.slane %v563, %v567
      %v570 = vmul.f32 %v560, %v568
      %v571 = vmul.f32 %v561, %v568
      %s572 = scalar_lea.vmem %s1, 112
      %v573 = vld [vmem:[%s572] sm:$0xff]
      %v574 = vld [vmem:[%s572 + $0x8] sm:$0xff]
      %576 = vset.pattern.permute.xlu0 0
      %577 = vperm.xlu0 %576, %v573
      %v578 = vpop.permute.xlu0 %577
      %581 = vset.pattern.permute.xlu0 0
      %582 = vperm.xlu0 %581, %v574
      %v583 = vpop.permute.xlu0 %582
      %v585 = vmul.f32 %v570, %v578
      %v586 = vmul.f32 %v571, %v583
      %v587 = vld [vmem:[#allocation2 + $0xd] sm:$0xff]
      %v588 = vld [vmem:[#allocation2 + $0x15] sm:$0xff]
      %s589 = scalar_lea.vmem %s4, 8
      %v590 = vld [vmem:[%s589] sm:$0x1]
      %v592 = vlaneseq
      %v593 = vshrl.u32 %v592, 7
      %v594 = vsub.s32 0, %v593
      %v595 = vrot.slane %v590, %v594
      %v597 = vmul.f32 %v587, %v595
      %v598 = vmul.f32 %v588, %v595
      %s599 = scalar_lea.vmem %s1, 128
      %v600 = vld [vmem:[%s599] sm:$0xff]
      %v601 = vld [vmem:[%s599 + $0x8] sm:$0xff]
      %603 = vset.pattern.permute.xlu0 0
      %604 = vperm.xlu0 %603, %v600
      %v605 = vpop.permute.xlu0 %604
      %608 = vset.pattern.permute.xlu0 0
      %609 = vperm.xlu0 %608, %v601
      %v610 = vpop.permute.xlu0 %609
      %v612 = vmul.f32 %v597, %v605
      %v613 = vmul.f32 %v598, %v610
      %v614 = vadd.f32 %v411, %v438
      %v615 = vadd.f32 %v412, %v439
      %v616 = vadd.f32 %v614, %v465
      %v617 = vadd.f32 %v615, %v466
      %v618 = vadd.f32 %v492, %v504
      %v619 = vadd.f32 %v493, %v505
      %v620 = vadd.f32 %v618, %v531
      %v621 = vadd.f32 %v619, %v532
      %v622 = vadd.f32 %v616, %v620
      %v623 = vadd.f32 %v617, %v621
      %v624 = vadd.f32 %v558, %v585
      %v625 = vadd.f32 %v559, %v586
      %v626 = vadd.f32 %v624, %v612
      %v627 = vadd.f32 %v625, %v613
      %v628 = vadd.f32 %v622, %v626
      %v629 = vadd.f32 %v623, %v627
      %v630 = vld [vmem:[%s5] sm:$0x1]
      %v632 = vlaneseq
      %v633 = vshrl.u32 %v632, 7
      %v634 = vsub.s32 0, %v633
      %v635 = vrot.slane %v630, %v634
      %v637 = vadd.f32 %v628, %v635
      %v638 = vadd.f32 %v629, %v635
      %v639 = vmax.f32 %v637, 0.0
      %v640 = vmax.f32 %v638, 0.0
      %v641 = vpack.c.bf16 %v640, %v639
      %v642 = vld [vmem:[%s6] sm:$0xf]
      %v643 = vld [vmem:[%s6 + $0x4] sm:$0xf]
      %v644 = vld [vmem:[%s6 + $0x8] sm:$0xf]
      %v645 = vld [vmem:[%s6 + $0xc] sm:$0xf]
      %v646 = vld [vmem:[%s6 + $0x10] sm:$0xf]
      %v647 = vld [vmem:[%s6 + $0x14] sm:$0xf]
      %v648 = vld [vmem:[%s6 + $0x18] sm:$0xf]
      %v649 = vld [vmem:[%s6 + $0x1c] sm:$0xf]
      %v650 = vld [vmem:[%s7] sm:$0x1]
      %v652 = vlaneseq
      %v653 = vshrl.u32 %v652, 7
      %v654 = vsub.s32 0, %v653
      %v655 = vrot.slane %v650, %v654
      %v665 = vunpack.c.l.b16 %v642
      %v666 = vunpack.c.l.b16 %v643
      %v667 = vunpack.c.l.b16 %v644
      %v668 = vunpack.c.l.b16 %v645
      %v669 = vunpack.c.l.b16 %v646
      %v670 = vunpack.c.l.b16 %v647
      %v671 = vunpack.c.l.b16 %v648
      %v672 = vunpack.c.l.b16 %v649
      %v673 = vpack.c.b16 %v666, %v665
      %v674 = vpack.c.b16 %v668, %v667
      %v675 = vpack.c.b16 %v670, %v669
      %v676 = vpack.c.b16 %v672, %v671
      %v682 = vsel %vm380, %v641, 0
      %684 = vmatprep.subr.bf16.mxu0 0
      %685 = vmatpush1.bf16.msra.mxu0 %v673
      %686 = vmatprep.subr.bf16.mxu0 0
      %687 = vmatpush1.bf16.msra.mxu0 %v674
      %688 = vmatprep.subr.bf16.mxu0 0
      %689 = vmatpush1.bf16.msra.mxu0 %v675
      %690 = vmatprep.subr.bf16.mxu0 0
      %691 = vmatpush1.bf16.msra.mxu0 %v676
      %692 = vmatprep.subr.bf16.mxu0 0
      %693 = vmatpush1.bf16.msra.mxu0 0
      %694 = vmatprep.subr.bf16.mxu0 0
      %695 = vmatpush1.bf16.msra.mxu0 0
      %696 = vmatprep.subr.bf16.mxu0 0
      %697 = vmatpush1.bf16.msra.mxu0 0
      %698 = vmatprep.subr.bf16.mxu0 0
      %699 = vmatpush1.bf16.msra.mxu0 0
      %700 = vmatprep.subr.bf16.mxu0 0
      %701 = vmatpush1.bf16.msra.mxu0 0
      %702 = vmatprep.subr.bf16.mxu0 0
      %703 = vmatpush1.bf16.msra.mxu0 0
      %704 = vmatprep.subr.bf16.mxu0 0
      %705 = vmatpush1.bf16.msra.mxu0 0
      %706 = vmatprep.subr.bf16.mxu0 0
      %707 = vmatpush1.bf16.msra.mxu0 0
      %708 = vmatprep.subr.bf16.mxu0 0
      %709 = vmatpush1.bf16.msra.mxu0 0
      %710 = vmatprep.subr.bf16.mxu0 0
      %711 = vmatpush1.bf16.msra.mxu0 0
      %712 = vmatprep.subr.bf16.mxu0 0
      %713 = vmatpush1.bf16.msra.mxu0 0
      %714 = vmatprep.subr.bf16.mxu0 0
      %715 = vmatpush1.bf16.msra.mxu0 0
      %716 = vmatprep.mubr.bf16.mxu0 0
      %717 = vmatmul.mubr.bf16.gmra.mrb[0].mxu0 %v682
      %v718 = vpop.f32.mrb[0].mxu0
      %v719 = vadd.f32 %v655, %v718
      %v720 = vpop.f32.mrb[0].mxu0
      %v721 = vpop.f32.mrb[0].mxu0
      %v722 = vadd.f32 %v655, %v721
      %v723 = vpop.f32.mrb[0].mxu0
      %724 = vdwg.mxu0
      %v725 = vadd.f32 %v719, %v307
      %v726 = vadd.f32 %v722, %v308
      %727 = vst.msk [vmem:[%s305] sm:$0xff] %vm333, %v725
      %728 = vst.msk [vmem:[%s305 + $0x8] sm:$0xff] %vm333, %v726
      %p729 = scmp.lt.s32.totalorder %s19, 1
      %s730 = scalar_select %p729, %s19, 1
      %s731 = smul.addr %s730, 2
      %s732 = smul.addr %s731, 8
      %s733 = scalar_lea.vmem %s8, %s732
      // Predicated region
      $region53: #{audionet_forward.13} parent=51 // pred_check
        %p734 = pneg %p210
      $region54: #{audionet_forward.13} parent=51 // pred_check_branch
        %736 = sbr.rel (%p734) target = $region56
      $region55: #{audionet_forward.13} parent=51 // pred_region
        _
      $region56: #{audionet_forward.13} parent=51 // pred_fallthru
        _
    $region52: #{audionet_forward.13} parent=5 // pred_fallthru
      _
    %p737 = scmp.le.s32.totalorder 2, %s14
    // Predicated region
    $region57: #{audionet_forward.13} parent=5 // pred_check
      %p738 = pneg %p737
    $region58: #{audionet_forward.13} parent=5 // pred_check_branch
      %740 = sbr.rel (%p738) target = $region60
    $region59: #{audionet_forward.13} parent=5 // pred_region
      %s741 = ssub.s32 %s14, 2
      // Predicated region
      $region61: #{audionet_forward.13} parent=59 // pred_check
        %p742 = pneg %p216
      $region62: #{audionet_forward.13} parent=59 // pred_check_branch
        %744 = sbr.rel (%p742) target = $region64
      $region63: #{audionet_forward.13} parent=59 // pred_region
        %p745 = scmp.lt.s32.totalorder %s20, 1
        %s746 = scalar_select %p745, %s20, 1
        %s747 = smul.addr %s746, 2
        %s748 = smul.addr %s747, 8
        %s749 = scalar_lea.vmem %s8, %s748
      $region64: #{audionet_forward.13} parent=59 // pred_fallthru
        _
    $region60: #{audionet_forward.13} parent=5 // pred_fallthru
      _
  $region6: #{audionet_forward.13} parent=0 // loop_footer
    %s18 = sadd.s32 1, %s14
  $region7: #{audionet_forward.13} parent=0 // loop_footer_branch
    %13 = sbr.rel target = $region3
  $region8: #{audionet_forward.13} parent=0 // loop_exit
    _

// kernel: audionet_forward.10
$region0: #{audionet_forward.10}
  #allocation0 [shape = 'u32[]', space=smem, size = 0x4, offset = 0x4, fixed_abs, tag = 'smem constant byte address 0x4 - core index']
  #allocation1 [shape = 'u32[144,128]{1,0:T(1,128)}', space=vmem, size = 0x12000, scoped, tag = 'internal scratch']
  #allocation2 [shape = 'f32[89,32]{1,0:T(8,128)}', space=vmem, size = 0xc000, scoped, tag = 'scratch operand']
  %s0 = inlined_call_operand.vmem [shape: f32[2,64,16], index: 0, kind: input, shape index: {}]
  %s1 = inlined_call_operand.vmem [shape: f32[9,64,1], index: 1, kind: input, shape index: {}]
  %s2 = inlined_call_operand.vmem [shape: bf16[16,32], index: 2, kind: input, shape index: {}]
  %s3 = inlined_call_operand.vmem [shape: f32[1,32], index: 3, kind: input, shape index: {}]
  %s4 = inlined_call_operand.vmem [shape: f32[9,1,32], index: 4, kind: input, shape index: {}]
  %s5 = inlined_call_operand.vmem [shape: f32[1,32], index: 5, kind: input, shape index: {}]
  %s6 = inlined_call_operand.vmem [shape: bf16[32,16], index: 6, kind: input, shape index: {}]
  %s7 = inlined_call_operand.vmem [shape: f32[1,16], index: 7, kind: input, shape index: {}]
  %s8 = inlined_call_operand.vmem [shape: f32[2,64,16], index: 8, kind: output, shape index: {}]
  %s9 = sld [smem:[#allocation0]]
  $region65: #{audionet_forward.10} parent=0
    _
  %s11 = ssub.s32 1, %s9
  %s12 = scalar_select 0, %s11, %s9
  loop: start=0, step=1, limit=4
  $region2: #{audionet_forward.10} parent=0 // loop_pre_header
    _
  $region3: #{audionet_forward.10} parent=0 // loop_header
    %s14 = sphi 0, %s18
    %p15 = scmp.ge.s32.totalorder %s14, 4
    %s24 = sphi 0, %s26
    %s27 = sphi 0, %s24
    %s28 = sphi 0, %s27
    %s44 = sphi 0, %s28
    %s48 = sphi 0, %s48
    %s50 = sphi 0, %s48
    %s51 = sphi 0, %s50
    %s65 = sphi 0, %s51
    %s69 = sphi 0, %s69
    %s71 = sphi 0, %s69
    %s72 = sphi 0, %s71
    %s86 = sphi 0, %s72
    %s90 = sphi 0, %s90
    %s92 = sphi 0, %s90
    %s93 = sphi 0, %s92
    %s107 = sphi 0, %s93
    %s111 = sphi 0, %s111
    %s113 = sphi 0, %s111
    %s114 = sphi 0, %s113
    %s128 = sphi 0, %s114
    %s132 = sphi 0, %s132
    %s134 = sphi 0, %s132
    %s135 = sphi 0, %s134
    %s149 = sphi 0, %s135
    %s153 = sphi 0, %s153
    %s155 = sphi 0, %s153
    %s156 = sphi 0, %s155
    %s170 = sphi 0, %s156
    %s174 = sphi 0, %s174
    %s176 = sphi 0, %s174
    %s177 = sphi 0, %s176
    %s191 = sphi 0, %s177
    %s197 = sphi 0, %s199
    %s200 = sphi 0, %s197
    %s201 = sphi 0, %s200
    %s217 = sphi 0, %s201
  $region4: #{audionet_forward.10} parent=0 // loop_header_branch
    %17 = sbr.rel (%p15) target = $region8
  $region5: #{audionet_forward.10} parent=0 // loop_body
    %s19 = ssub.s32 %s14, 1
    %s20 = ssub.s32 %s14, 2
    %s21 = sadd.s32 %s14, 1
    %s22 = ssub.s32 %s14, %s21
    %p23 = scmp.eq.s32.totalorder %s22, 0
    %s25 = sadd.s32 %s24, 1
    %s26 = scalar_select %p23, %s24, %s25
    %p29 = pneg %p23
    %p30 = scmp.eq.s32.totalorder %s14, 1
    %p31 = por %p29, %p30
    %p32 = scmp.ne.s32.totalorder %s24, %s27
    %p33 = scmp.eq.s32.totalorder %s14, 0
    %p34 = por %p32, %p33
    %p35 = scmp.ne.s32.totalorder %s24, %s27
    %p36 = scmp.eq.s32.totalorder %s19, 1
    %p37 = por %p35, %p36
    %p38 = scmp.ne.s32.totalorder %s27, %s28
    %p39 = scmp.eq.s32.totalorder %s19, 0
    %p40 = por %p38, %p39
    %p41 = scmp.ne.s32.totalorder %s27, %s28
    %p42 = scmp.eq.s32.totalorder %s20, 1
    %p43 = por %p41, %p42
    %p45 = scmp.ne.s32.totalorder %s28, %s44
    %p46 = scmp.eq.s32.totalorder %s20, 0
    %p47 = por %p45, %p46
    %s49 = sadd.s32 %s48, 1
    %p52 = scmp.eq.s32.totalorder %s14, 1
    %p53 = scmp.ne.s32.totalorder %s48, %s50
    %p54 = scmp.eq.s32.totalorder %s14, 0
    %p55 = por %p53, %p54
    %p56 = scmp.ne.s32.totalorder %s48, %s50
    %p57 = scmp.eq.s32.totalorder %s19, 1
    %p58 = por %p56, %p57
    %p59 = scmp.ne.s32.totalorder %s50, %s51
    %p60 = scmp.eq.s32.totalorder %s19, 0
    %p61 = por %p59, %p60
    %p62 = scmp.ne.s32.totalorder %s50, %s51
    %p63 = scmp.eq.s32.totalorder %s20, 1
    %p64 = por %p62, %p63
    %p66 = scmp.ne.s32.totalorder %s51, %s65
    %p67 = scmp.eq.s32.totalorder %s20, 0
    %p68 = por %p66, %p67
    %s70 = sadd.s32 %s69, 1
    %p73 = scmp.eq.s32.totalorder %s14, 1
    %p74 = scmp.ne.s32.totalorder %s69, %s71
    %p75 = scmp.eq.s32.totalorder %s14, 0
    %p76 = por %p74, %p75
    %p77 = scmp.ne.s32.totalorder %s69, %s71
    %p78 = scmp.eq.s32.totalorder %s19, 1
    %p79 = por %p77, %p78
    %p80 = scmp.ne.s32.totalorder %s71, %s72
    %p81 = scmp.eq.s32.totalorder %s19, 0
    %p82 = por %p80, %p81
    %p83 = scmp.ne.s32.totalorder %s71, %s72
    %p84 = scmp.eq.s32.totalorder %s20, 1
    %p85 = por %p83, %p84
    %p87 = scmp.ne.s32.totalorder %s72, %s86
    %p88 = scmp.eq.s32.totalorder %s20, 0
    %p89 = por %p87, %p88
    %s91 = sadd.s32 %s90, 1
    %p94 = scmp.eq.s32.totalorder %s14, 1
    %p95 = scmp.ne.s32.totalorder %s90, %s92
    %p96 = scmp.eq.s32.totalorder %s14, 0
    %p97 = por %p95, %p96
    %p98 = scmp.ne.s32.totalorder %s90, %s92
    %p99 = scmp.eq.s32.totalorder %s19, 1
    %p100 = por %p98, %p99
    %p101 = scmp.ne.s32.totalorder %s92, %s93
    %p102 = scmp.eq.s32.totalorder %s19, 0
    %p103 = por %p101, %p102
    %p104 = scmp.ne.s32.totalorder %s92, %s93
    %p105 = scmp.eq.s32.totalorder %s20, 1
    %p106 = por %p104, %p105
    %p108 = scmp.ne.s32.totalorder %s93, %s107
    %p109 = scmp.eq.s32.totalorder %s20, 0
    %p110 = por %p108, %p109
    %s112 = sadd.s32 %s111, 1
    %p115 = scmp.eq.s32.totalorder %s14, 1
    %p116 = scmp.ne.s32.totalorder %s111, %s113
    %p117 = scmp.eq.s32.totalorder %s14, 0
    %p118 = por %p116, %p117
    %p119 = scmp.ne.s32.totalorder %s111, %s113
    %p120 = scmp.eq.s32.totalorder %s19, 1
    %p121 = por %p119, %p120
    %p122 = scmp.ne.s32.totalorder %s113, %s114
    %p123 = scmp.eq.s32.totalorder %s19, 0
    %p124 = por %p122, %p123
    %p125 = scmp.ne.s32.totalorder %s113, %s114
    %p126 = scmp.eq.s32.totalorder %s20, 1
    %p127 = por %p125, %p126
    %p129 = scmp.ne.s32.totalorder %s114, %s128
    %p130 = scmp.eq.s32.totalorder %s20, 0
    %p131 = por %p129, %p130
    %s133 = sadd.s32 %s132, 1
    %p136 = scmp.eq.s32.totalorder %s14, 1
    %p137 = scmp.ne.s32.totalorder %s132, %s134
    %p138 = scmp.eq.s32.totalorder %s14, 0
    %p139 = por %p137, %p138
    %p140 = scmp.ne.s32.totalorder %s132, %s134
    %p141 = scmp.eq.s32.totalorder %s19, 1
    %p142 = por %p140, %p141
    %p143 = scmp.ne.s32.totalorder %s134, %s135
    %p144 = scmp.eq.s32.totalorder %s19, 0
    %p145 = por %p143, %p144
    %p146 = scmp.ne.s32.totalorder %s134, %s135
    %p147 = scmp.eq.s32.totalorder %s20, 1
    %p148 = por %p146, %p147
    %p150 = scmp.ne.s32.totalorder %s135, %s149
    %p151 = scmp.eq.s32.totalorder %s20, 0
    %p152 = por %p150, %p151
    %s154 = sadd.s32 %s153, 1
    %p157 = scmp.eq.s32.totalorder %s14, 1
    %p158 = scmp.ne.s32.totalorder %s153, %s155
    %p159 = scmp.eq.s32.totalorder %s14, 0
    %p160 = por %p158, %p159
    %p161 = scmp.ne.s32.totalorder %s153, %s155
    %p162 = scmp.eq.s32.totalorder %s19, 1
    %p163 = por %p161, %p162
    %p164 = scmp.ne.s32.totalorder %s155, %s156
    %p165 = scmp.eq.s32.totalorder %s19, 0
    %p166 = por %p164, %p165
    %p167 = scmp.ne.s32.totalorder %s155, %s156
    %p168 = scmp.eq.s32.totalorder %s20, 1
    %p169 = por %p167, %p168
    %p171 = scmp.ne.s32.totalorder %s156, %s170
    %p172 = scmp.eq.s32.totalorder %s20, 0
    %p173 = por %p171, %p172
    %s175 = sadd.s32 %s174, 1
    %p178 = scmp.eq.s32.totalorder %s14, 1
    %p179 = scmp.ne.s32.totalorder %s174, %s176
    %p180 = scmp.eq.s32.totalorder %s14, 0
    %p181 = por %p179, %p180
    %p182 = scmp.ne.s32.totalorder %s174, %s176
    %p183 = scmp.eq.s32.totalorder %s19, 1
    %p184 = por %p182, %p183
    %p185 = scmp.ne.s32.totalorder %s176, %s177
    %p186 = scmp.eq.s32.totalorder %s19, 0
    %p187 = por %p185, %p186
    %p188 = scmp.ne.s32.totalorder %s176, %s177
    %p189 = scmp.eq.s32.totalorder %s20, 1
    %p190 = por %p188, %p189
    %p192 = scmp.ne.s32.totalorder %s177, %s191
    %p193 = scmp.eq.s32.totalorder %s20, 0
    %p194 = por %p192, %p193
    %s195 = ssub.s32 %s14, %s21
    %p196 = scmp.eq.s32.totalorder %s195, 0
    %s198 = sadd.s32 %s197, 1
    %s199 = scalar_select %p196, %s197, %s198
    %p202 = pneg %p196
    %p203 = scmp.eq.s32.totalorder %s14, 1
    %p204 = por %p202, %p203
    %p205 = scmp.ne.s32.totalorder %s197, %s200
    %p206 = scmp.eq.s32.totalorder %s14, 0
    %p207 = por %p205, %p206
    %p208 = scmp.ne.s32.totalorder %s197, %s200
    %p209 = scmp.eq.s32.totalorder %s19, 1
    %p210 = por %p208, %p209
    %p211 = scmp.ne.s32.totalorder %s200, %s201
    %p212 = scmp.eq.s32.totalorder %s19, 0
    %p213 = por %p211, %p212
    %p214 = scmp.ne.s32.totalorder %s200, %s201
    %p215 = scmp.eq.s32.totalorder %s20, 1
    %p216 = por %p214, %p215
    %p218 = scmp.ne.s32.totalorder %s201, %s217
    %p219 = scmp.eq.s32.totalorder %s20, 0
    %p220 = por %p218, %p219
    %p221 = scmp.le.s32.totalorder 1, %s14
    %p222 = scmp.lt.s32.totalorder %s14, 3
    %p223 = pnand %p221, %p222
    %p224 = pneg %p223
    // Predicated region
    $region9: #{audionet_forward.10} parent=5 // pred_check
      _
    $region10: #{audionet_forward.10} parent=5 // pred_check_branch
      %226 = sbr.rel (%p223) target = $region12
    $region11: #{audionet_forward.10} parent=5 // pred_region
      %s227 = ssub.s32 %s14, 1
      // Predicated region
      $region13: #{audionet_forward.10} parent=11 // pred_check
        %p228 = pneg %p61
      $region14: #{audionet_forward.10} parent=11 // pred_check_branch
        %230 = sbr.rel (%p228) target = $region16
      $region15: #{audionet_forward.10} parent=11 // pred_region
        _
      $region16: #{audionet_forward.10} parent=11 // pred_fallthru
        _
      // Predicated region
      $region17: #{audionet_forward.10} parent=11 // pred_check
        %p231 = pneg %p82
      $region18: #{audionet_forward.10} parent=11 // pred_check_branch
        %233 = sbr.rel (%p231) target = $region20
      $region19: #{audionet_forward.10} parent=11 // pred_region
        _
      $region20: #{audionet_forward.10} parent=11 // pred_fallthru
        _
      // Predicated region
      $region21: #{audionet_forward.10} parent=11 // pred_check
        %p234 = pneg %p103
      $region22: #{audionet_forward.10} parent=11 // pred_check_branch
        %236 = sbr.rel (%p234) target = $region24
      $region23: #{audionet_forward.10} parent=11 // pred_region
        _
      $region24: #{audionet_forward.10} parent=11 // pred_fallthru
        _
      // Predicated region
      $region25: #{audionet_forward.10} parent=11 // pred_check
        %p237 = pneg %p124
      $region26: #{audionet_forward.10} parent=11 // pred_check_branch
        %239 = sbr.rel (%p237) target = $region28
      $region27: #{audionet_forward.10} parent=11 // pred_region
        _
      $region28: #{audionet_forward.10} parent=11 // pred_fallthru
        _
      // Predicated region
      $region29: #{audionet_forward.10} parent=11 // pred_check
        %p240 = pneg %p145
      $region30: #{audionet_forward.10} parent=11 // pred_check_branch
        %242 = sbr.rel (%p240) target = $region32
      $region31: #{audionet_forward.10} parent=11 // pred_region
        _
      $region32: #{audionet_forward.10} parent=11 // pred_fallthru
        _
      // Predicated region
      $region33: #{audionet_forward.10} parent=11 // pred_check
        %p243 = pneg %p166
      $region34: #{audionet_forward.10} parent=11 // pred_check_branch
        %245 = sbr.rel (%p243) target = $region36
      $region35: #{audionet_forward.10} parent=11 // pred_region
        _
      $region36: #{audionet_forward.10} parent=11 // pred_fallthru
        _
      // Predicated region
      $region37: #{audionet_forward.10} parent=11 // pred_check
        %p246 = pneg %p187
      $region38: #{audionet_forward.10} parent=11 // pred_check_branch
        %248 = sbr.rel (%p246) target = $region40
      $region39: #{audionet_forward.10} parent=11 // pred_region
        _
      $region40: #{audionet_forward.10} parent=11 // pred_fallthru
        _
    $region12: #{audionet_forward.10} parent=5 // pred_fallthru
      _
    %p249 = scmp.lt.s32.totalorder %s14, 2
    // Predicated region
    $region41: #{audionet_forward.10} parent=5 // pred_check
      %p250 = pneg %p249
    $region42: #{audionet_forward.10} parent=5 // pred_check_branch
      %252 = sbr.rel (%p250) target = $region44
    $region43: #{audionet_forward.10} parent=5 // pred_region
      // Predicated region
      $region45: #{audionet_forward.10} parent=43 // pred_check
        %p253 = pneg %p34
      $region46: #{audionet_forward.10} parent=43 // pred_check_branch
        %255 = sbr.rel (%p253) target = $region48
      $region47: #{audionet_forward.10} parent=43 // pred_region
        %p256 = scmp.lt.s32.totalorder %s14, 1
        %s257 = scalar_select %p256, %s14, 1
        %s258 = smul.addr %s257, 8
        %s259 = smul.addr %s258, 8
        %s260 = scalar_lea.vmem %s0, %s259
      $region48: #{audionet_forward.10} parent=43 // pred_fallthru
        _
    $region44: #{audionet_forward.10} parent=5 // pred_fallthru
      _
    %p261 = scmp.le.s32.totalorder 1, %s14
    %p262 = scmp.lt.s32.totalorder %s14, 3
    %p263 = pnand %p261, %p262
    %p264 = pneg %p263
    // Predicated region
    $region49: #{audionet_forward.10} parent=5 // pred_check
      _
    $region50: #{audionet_forward.10} parent=5 // pred_check_branch
      %266 = sbr.rel (%p263) target = $region52
    $region51: #{audionet_forward.10} parent=5 // pred_region
      %s267 = ssub.s32 %s14, 1
      %p268 = scmp.lt.s32.totalorder %s19, 1
      %s269 = scalar_select %p268, %s19, 1
      %s270 = smul.addr %s269, 8
      %s271 = smul.addr %s270, 8
      %s272 = scalar_lea.vmem %s0, %s271
      %p273 = pneg %p40
      %p274 = pneg %p37
      %p275 = pneg %p61
      %p276 = pneg %p58
      %p277 = pneg %p82
      %p278 = pneg %p79
      %p279 = pneg %p103
      %p280 = pneg %p100
      %p281 = pneg %p124
      %p282 = pneg %p121
      %p283 = pneg %p145
      %p284 = pneg %p142
      %p285 = pneg %p166
      %p286 = pneg %p163
      %p287 = pneg %p187
      %p288 = pneg %p184
      %p289 = pneg %p213
      %p290 = pneg %p210
      %p291 = scmp.lt.s32.totalorder %s19, 1
      %s292 = scalar_select %p291, %s19, 1
      %s293 = smul.addr %s292, 8
      %s294 = smul.addr %s293, 8
      %s295 = scalar_lea.vmem %s8, %s294
      %p296 = scmp.lt.s32.totalorder %s19, 1
      %s297 = scalar_select %p296, %s19, 1
      %s298 = smul.addr %s297, 8
      %s299 = smul.addr %s298, 8
      %s300 = scalar_lea.vmem %s0, %s299
      %p301 = scmp.lt.s32.totalorder %s19, 1
      %s302 = scalar_select %p301, %s19, 1
      %s303 = smul.addr %s302, 8
      %s304 = smul.addr %s303, 8
      %s305 = scalar_lea.vmem %s8, %s304
      %v307 = vld [vmem:[%s300] sm:$0xff]
      %v308 = vld [vmem:[%s300 + $0x8] sm:$0xff]
      %v309 = vld [vmem:[%s300 + $0x10] sm:$0xff]
      %v310 = vld [vmem:[%s300 + $0x18] sm:$0xff]
      %v311 = vld [vmem:[%s300 + $0x20] sm:$0xff]
      %v312 = vld [vmem:[%s300 + $0x28] sm:$0xff]
      %v313 = vld [vmem:[%s300 + $0x30] sm:$0xff]
      %v314 = vld [vmem:[%s300 + $0x38] sm:$0xff]
      %v315 = vpack.c.bf16 %v308, %v307
      %v316 = vpack.c.bf16 %v310, %v309
      %v317 = vpack.c.bf16 %v312, %v311
      %v318 = vpack.c.bf16 %v314, %v313
      %v319 = vld [vmem:[%s2] sm:$0xf]
      %v320 = vld [vmem:[%s2 + $0x4] sm:$0xf]
      %v321 = vld [vmem:[%s3] sm:$0x1]
      %v323 = vlaneseq
      %v324 = vshrl.u32 %v323, 7
      %v325 = vsub.s32 0, %v324
      %v326 = vrot.slane %v321, %v325
      %v330 = vunpack.c.l.b16 %v319
      %v331 = vunpack.c.l.b16 %v320
      %v332 = vpack.c.b16 %v331, %v330
      %vm334 = vcmask 130048
      %v336 = vsel %vm334, %v315, 0
      %v339 = vsel %vm334, %v316, 0
      %v342 = vsel %vm334, %v317, 0
      %v345 = vsel %vm334, %v318, 0
      %347 = vmatprep.subr.bf16.mxu0 0
      %348 = vmatpush1.bf16.msra.mxu0 %v332
      %349 = vmatprep.subr.bf16.mxu0 0
      %350 = vmatpush1.bf16.msra.mxu0 0
      %351 = vmatprep.subr.bf16.mxu0 0
      %352 = vmatpush1.bf16.msra.mxu0 0
      %353 = vmatprep.subr.bf16.mxu0 0
      %354 = vmatpush1.bf16.msra.mxu0 0
      %355 = vmatprep.subr.bf16.mxu0 0
      %356 = vmatpush1.bf16.msra.mxu0 0
      %357 = vmatprep.subr.bf16.mxu0 0
      %358 = vmatpush1.bf16.msra.mxu0 0
      %359 = vmatprep.subr.bf16.mxu0 0
      %360 = vmatpush1.bf16.msra.mxu0 0
      %361 = vmatprep.subr.bf16.mxu0 0
      %362 = vmatpush1.bf16.msra.mxu0 0
      %363 = vmatprep.subr.bf16.mxu0 0
      %364 = vmatpush1.bf16.msra.mxu0 0
      %365 = vmatprep.subr.bf16.mxu0 0
      %366 = vmatpush1.bf16.msra.mxu0 0
      %367 = vmatprep.subr.bf16.mxu0 0
      %368 = vmatpush1.bf16.msra.mxu0 0
      %369 = vmatprep.subr.bf16.mxu0 0
      %370 = vmatpush1.bf16.msra.mxu0 0
      %371 = vmatprep.subr.bf16.mxu0 0
      %372 = vmatpush1.bf16.msra.mxu0 0
      %373 = vmatprep.subr.bf16.mxu0 0
      %374 = vmatpush1.bf16.msra.mxu0 0
      %375 = vmatprep.subr.bf16.mxu0 0
      %376 = vmatpush1.bf16.msra.mxu0 0
      %377 = vmatprep.subr.bf16.mxu0 0
      %378 = vmatpush1.bf16.msra.mxu0 0
      %379 = vmatprep.mubr.bf16.mxu0 0
      %380 = vmatmul.mubr.bf16.gmra.mrb[0].mxu0 %v336
      %v381 = vpop.f32.mrb[0].mxu0
      %v382 = vadd.f32 %v326, %v381
      %v383 = vpop.f32.mrb[0].mxu0
      %v384 = vpop.f32.mrb[0].mxu0
      %v385 = vadd.f32 %v326, %v384
      %v386 = vpop.f32.mrb[0].mxu0
      %387 = vmatprep.mubr.bf16.mxu0 0
      %388 = vmatmul.mubr.bf16.gmra.mrb[0].mxu0 %v339
      %v389 = vpop.f32.mrb[0].mxu0
      %v390 = vadd.f32 %v326, %v389
      %v391 = vpop.f32.mrb[0].mxu0
      %v392 = vpop.f32.mrb[0].mxu0
      %v393 = vadd.f32 %v326, %v392
      %v394 = vpop.f32.mrb[0].mxu0
      %395 = vmatprep.mubr.bf16.mxu0 0
      %396 = vmatmul.mubr.bf16.gmra.mrb[0].mxu0 %v342
      %v397 = vpop.f32.mrb[0].mxu0
      %v398 = vadd.f32 %v326, %v397
      %v399 = vpop.f32.mrb[0].mxu0
      %v400 = vpop.f32.mrb[0].mxu0
      %v401 = vadd.f32 %v326, %v400
      %v402 = vpop.f32.mrb[0].mxu0
      %403 = vmatprep.mubr.bf16.mxu0 0
      %404 = vmatmul.mubr.bf16.gmra.mrb[0].mxu0 %v345
      %v405 = vpop.f32.mrb[0].mxu0
      %v406 = vadd.f32 %v326, %v405
      %v407 = vpop.f32.mrb[0].mxu0
      %v408 = vpop.f32.mrb[0].mxu0
      %v409 = vadd.f32 %v326, %v408
      %v410 = vpop.f32.mrb[0].mxu0
      %411 = vdwg.mxu0
      %v412 = vmax.f32 %v382, 0.0
      %v413 = vmax.f32 %v385, 0.0
      %v414 = vmax.f32 %v390, 0.0
      %v415 = vmax.f32 %v393, 0.0
      %v416 = vmax.f32 %v398, 0.0
      %v417 = vmax.f32 %v401, 0.0
      %v418 = vmax.f32 %v406, 0.0
      %v419 = vmax.f32 %v409, 0.0
      %vm420 = vcmask 261120
      %421 = vst.msk [vmem:[#allocation2] sm:$0xff] %vm420, 0.0
      %422 = vst.msk [vmem:[#allocation2 + $0x8] sm:$0xff] %vm420, 0.0
      %423 = vst.msk [vmem:[#allocation2 + $0x10] sm:$0xff] %vm420, 0.0
      %424 = vst.msk [vmem:[#allocation2 + $0x18] sm:$0xff] %vm420, 0.0
      %425 = vst.msk [vmem:[#allocation2 + $0x20] sm:$0xff] %vm420, 0.0
      %426 = vst.msk [vmem:[#allocation2 + $0x28] sm:$0xff] %vm420, 0.0
      %427 = vst.msk [vmem:[#allocation2 + $0x30] sm:$0xff] %vm420, 0.0
      %428 = vst.msk [vmem:[#allocation2 + $0x38] sm:$0xff] %vm420, 0.0
      %429 = vst.msk [vmem:[#allocation2 + $0x40] sm:$0xff] %vm420, 0.0
      %430 = vst.msk [vmem:[#allocation2 + $0x48] sm:$0xff] %vm420, 0.0
      %431 = vst.msk [vmem:[#allocation2 + $0x50] sm:$0xff] %vm420, 0.0
      %vm432 = vcmask 253952
      %433 = vst.msk [vmem:[#allocation2 + $0x58] sm:$0x1] %vm432, 0.0
      %434 = vst.msk [vmem:[#allocation2 + $0x10] sm:$0xff] %vm420, %v412
      %435 = vst.msk [vmem:[#allocation2 + $0x18] sm:$0xff] %vm420, %v413
      %436 = vst.msk [vmem:[#allocation2 + $0x20] sm:$0xff] %vm420, %v414
      %437 = vst.msk [vmem:[#allocation2 + $0x28] sm:$0xff] %vm420, %v415
      %438 = vst.msk [vmem:[#allocation2 + $0x30] sm:$0xff] %vm420, %v416
      %439 = vst.msk [vmem:[#allocation2 + $0x38] sm:$0xff] %vm420, %v417
      %440 = vst.msk [vmem:[#allocation2 + $0x40] sm:$0xff] %vm420, %v418
      %441 = vst.msk [vmem:[#allocation2 + $0x48] sm:$0xff] %vm420, %v419
      %v442 = vld [vmem:[#allocation2 + $0x7] sm:$0xff]
      %v443 = vld [vmem:[#allocation2 + $0xf] sm:$0xff]
      %v444 = vld [vmem:[#allocation2 + $0x17] sm:$0xff]
      %v445 = vld [vmem:[#allocation2 + $0x1f] sm:$0xff]
      %v446 = vld [vmem:[#allocation2 + $0x27] sm:$0xff]
      %v447 = vld [vmem:[#allocation2 + $0x2f] sm:$0xff]
      %v448 = vld [vmem:[#allocation2 + $0x37] sm:$0xff]
      %v449 = vld [vmem:[#allocation2 + $0x3f] sm:$0xff]
      %v450 = vld [vmem:[%s4] sm:$0x1]
      %v452 = vlaneseq
      %v453 = vshrl.u32 %v452, 7
      %v454 = vsub.s32 0, %v453
      %v455 = vrot.slane %v450, %v454
      %v457 = vmul.f32 %v442, %v455
      %v458 = vmul.f32 %v443, %v455
      %v459 = vmul.f32 %v444, %v455
      %v460 = vmul.f32 %v445, %v455
      %v461 = vmul.f32 %v446, %v455
      %v462 = vmul.f32 %v447, %v455
      %v463 = vmul.f32 %v448, %v455
      %v464 = vmul.f32 %v449, %v455
      %v465 = vld [vmem:[%s1] sm:$0xff]
      %v466 = vld [vmem:[%s1 + $0x8] sm:$0xff]
      %v467 = vld [vmem:[%s1 + $0x10] sm:$0xff]
      %v468 = vld [vmem:[%s1 + $0x18] sm:$0xff]
      %v469 = vld [vmem:[%s1 + $0x20] sm:$0xff]
      %v470 = vld [vmem:[%s1 + $0x28] sm:$0xff]
      %v471 = vld [vmem:[%s1 + $0x30] sm:$0xff]
      %v472 = vld [vmem:[%s1 + $0x38] sm:$0xff]
      %474 = vset.pattern.permute.xlu0 0
      %475 = vperm.xlu0 %474, %v465
      %v476 = vpop.permute.xlu0 %475
      %479 = vset.pattern.permute.xlu0 0
      %480 = vperm.xlu0 %479, %v466
      %v481 = vpop.permute.xlu0 %480
      %484 = vset.pattern.permute.xlu0 0
      %485 = vperm.xlu0 %484, %v467
      %v486 = vpop.permute.xlu0 %485
      %489 = vset.pattern.permute.xlu0 0
      %490 = vperm.xlu0 %489, %v468
      %v491 = vpop.permute.xlu0 %490
      %494 = vset.pattern.permute.xlu0 0
      %495 = vperm.xlu0 %494, %v469
      %v496 = vpop.permute.xlu0 %495
      %499 = vset.pattern.permute.xlu0 0
      %500 = vperm.xlu0 %499, %v470
      %v501 = vpop.permute.xlu0 %500
      %504 = vset.pattern.permute.xlu0 0
      %505 = vperm.xlu0 %504, %v471
      %v506 = vpop.permute.xlu0 %505
      %509 = vset.pattern.permute.xlu0 0
      %510 = vperm.xlu0 %509, %v472
      %v511 = vpop.permute.xlu0 %510
      %v513 = vmul.f32 %v457, %v476
      %v514 = vmul.f32 %v458, %v481
      %v515 = vmul.f32 %v459, %v486
      %v516 = vmul.f32 %v460, %v491
      %v517 = vmul.f32 %v461, %v496
      %v518 = vmul.f32 %v462, %v501
      %v519 = vmul.f32 %v463, %v506
      %v520 = vmul.f32 %v464, %v511
      %v521 = vld [vmem:[#allocation2 + $0x8] sm:$0xff]
      %v522 = vld [vmem:[#allocation2 + $0x10] sm:$0xff]
      %v523 = vld [vmem:[#allocation2 + $0x18] sm:$0xff]
      %v524 = vld [vmem:[#allocation2 + $0x20] sm:$0xff]
      %v525 = vld [vmem:[#allocation2 + $0x28] sm:$0xff]
      %v526 = vld [vmem:[#allocation2 + $0x30] sm:$0xff]
      %v527 = vld [vmem:[#allocation2 + $0x38] sm:$0xff]
      %v528 = vld [vmem:[#allocation2 + $0x40] sm:$0xff]
      %s529 = scalar_lea.vmem %s4, 1
      %v530 = vld [vmem:[%s529] sm:$0x1]
      %v532 = vlaneseq
      %v533 = vshrl.u32 %v532, 7
      %v534 = vsub.s32 0, %v533
      %v535 = vrot.slane %v530, %v534
      %v537 = vmul.f32 %v521, %v535
      %v538 = vmul.f32 %v522, %v535
      %v539 = vmul.f32 %v523, %v535
      %v540 = vmul.f32 %v524, %v535
      %v541 = vmul.f32 %v525, %v535
      %v542 = vmul.f32 %v526, %v535
      %v543 = vmul.f32 %v527, %v535
      %v544 = vmul.f32 %v528, %v535
      %s545 = scalar_lea.vmem %s1, 64
      %v546 = vld [vmem:[%s545] sm:$0xff]
      %v547 = vld [vmem:[%s545 + $0x8] sm:$0xff]
      %v548 = vld [vmem:[%s545 + $0x10] sm:$0xff]
      %v549 = vld [vmem:[%s545 + $0x18] sm:$0xff]
      %v550 = vld [vmem:[%s545 + $0x20] sm:$0xff]
      %v551 = vld [vmem:[%s545 + $0x28] sm:$0xff]
      %v552 = vld [vmem:[%s545 + $0x30] sm:$0xff]
      %v553 = vld [vmem:[%s545 + $0x38] sm:$0xff]
      %555 = vset.pattern.permute.xlu0 0
      %556 = vperm.xlu0 %555, %v546
      %v557 = vpop.permute.xlu0 %556
      %560 = vset.pattern.permute.xlu0 0
      %561 = vperm.xlu0 %560, %v547
      %v562 = vpop.permute.xlu0 %561
      %565 = vset.pattern.permute.xlu0 0
      %566 = vperm.xlu0 %565, %v548
      %v567 = vpop.permute.xlu0 %566
      %570 = vset.pattern.permute.xlu0 0
      %571 = vperm.xlu0 %570, %v549
      %v572 = vpop.permute.xlu0 %571
      %575 = vset.pattern.permute.xlu0 0
      %576 = vperm.xlu0 %575, %v550
      %v577 = vpop.permute.xlu0 %576
      %580 = vset.pattern.permute.xlu0 0
      %581 = vperm.xlu0 %580, %v551
      %v582 = vpop.permute.xlu0 %581
      %585 = vset.pattern.permute.xlu0 0
      %586 = vperm.xlu0 %585, %v552
      %v587 = vpop.permute.xlu0 %586
      %590 = vset.pattern.permute.xlu0 0
      %591 = vperm.xlu0 %590, %v553
      %v592 = vpop.permute.xlu0 %591
      %v594 = vmul.f32 %v537, %v557
      %v595 = vmul.f32 %v538, %v562
      %v596 = vmul.f32 %v539, %v567
      %v597 = vmul.f32 %v540, %v572
      %v598 = vmul.f32 %v541, %v577
      %v599 = vmul.f32 %v542, %v582
      %v600 = vmul.f32 %v543, %v587
      %v601 = vmul.f32 %v544, %v592
      %v602 = vld [vmem:[#allocation2 + $0x9] sm:$0xff]
      %v603 = vld [vmem:[#allocation2 + $0x11] sm:$0xff]
      %v604 = vld [vmem:[#allocation2 + $0x19] sm:$0xff]
      %v605 = vld [vmem:[#allocation2 + $0x21] sm:$0xff]
      %v606 = vld [vmem:[#allocation2 + $0x29] sm:$0xff]
      %v607 = vld [vmem:[#allocation2 + $0x31] sm:$0xff]
      %v608 = vld [vmem:[#allocation2 + $0x39] sm:$0xff]
      %v609 = vld [vmem:[#allocation2 + $0x41] sm:$0xff]
      %s610 = scalar_lea.vmem %s4, 2
      %v611 = vld [vmem:[%s610] sm:$0x1]
      %v613 = vlaneseq
      %v614 = vshrl.u32 %v613, 7
      %v615 = vsub.s32 0, %v614
      %v616 = vrot.slane %v611, %v615
      %v618 = vmul.f32 %v602, %v616
      %v619 = vmul.f32 %v603, %v616
      %v620 = vmul.f32 %v604, %v616
      %v621 = vmul.f32 %v605, %v616
      %v622 = vmul.f32 %v606, %v616
      %v623 = vmul.f32 %v607, %v616
      %v624 = vmul.f32 %v608, %v616
      %v625 = vmul.f32 %v609, %v616
      %s626 = scalar_lea.vmem %s1, 128
      %v627 = vld [vmem:[%s626] sm:$0xff]
      %v628 = vld [vmem:[%s626 + $0x8] sm:$0xff]
      %v629 = vld [vmem:[%s626 + $0x10] sm:$0xff]
      %v630 = vld [vmem:[%s626 + $0x18] sm:$0xff]
      %v631 = vld [vmem:[%s626 + $0x20] sm:$0xff]
      %v632 = vld [vmem:[%s626 + $0x28] sm:$0xff]
      %v633 = vld [vmem:[%s626 + $0x30] sm:$0xff]
      %v634 = vld [vmem:[%s626 + $0x38] sm:$0xff]
      %636 = vset.pattern.permute.xlu0 0
      %637 = vperm.xlu0 %636, %v627
      %v638 = vpop.permute.xlu0 %637
      %641 = vset.pattern.permute.xlu0 0
      %642 = vperm.xlu0 %641, %v628
      %v643 = vpop.permute.xlu0 %642
      %646 = vset.pattern.permute.xlu0 0
      %647 = vperm.xlu0 %646, %v629
      %v648 = vpop.permute.xlu0 %647
      %651 = vset.pattern.permute.xlu0 0
      %652 = vperm.xlu0 %651, %v630
      %v653 = vpop.permute.xlu0 %652
      %656 = vset.pattern.permute.xlu0 0
      %657 = vperm.xlu0 %656, %v631
      %v658 = vpop.permute.xlu0 %657
      %661 = vset.pattern.permute.xlu0 0
      %662 = vperm.xlu0 %661, %v632
      %v663 = vpop.permute.xlu0 %662
      %666 = vset.pattern.permute.xlu0 0
      %667 = vperm.xlu0 %666, %v633
      %v668 = vpop.permute.xlu0 %667
      %671 = vset.pattern.permute.xlu0 0
      %672 = vperm.xlu0 %671, %v634
      %v673 = vpop.permute.xlu0 %672
      %v675 = vmul.f32 %v618, %v638
      %v676 = vmul.f32 %v619, %v643
      %v677 = vmul.f32 %v620, %v648
      %v678 = vmul.f32 %v621, %v653
      %v679 = vmul.f32 %v622, %v658
      %v680 = vmul.f32 %v623, %v663
      %v681 = vmul.f32 %v624, %v668
      %v682 = vmul.f32 %v625, %v673
      %v683 = vld [vmem:[#allocation2 + $0xf] sm:$0xff]
      %v684 = vld [vmem:[#allocation2 + $0x17] sm:$0xff]
      %v685 = vld [vmem:[#allocation2 + $0x1f] sm:$0xff]
      %v686 = vld [vmem:[#allocation2 + $0x27] sm:$0xff]
      %v687 = vld [vmem:[#allocation2 + $0x2f] sm:$0xff]
      %v688 = vld [vmem:[#allocation2 + $0x37] sm:$0xff]
      %v689 = vld [vmem:[#allocation2 + $0x3f] sm:$0xff]
      %v690 = vld [vmem:[#allocation2 + $0x47] sm:$0xff]
      %s691 = scalar_lea.vmem %s4, 3
      %v692 = vld [vmem:[%s691] sm:$0x1]
      %v694 = vlaneseq
      %v695 = vshrl.u32 %v694, 7
      %v696 = vsub.s32 0, %v695
      %v697 = vrot.slane %v692, %v696
      %v699 = vmul.f32 %v683, %v697
      %v700 = vmul.f32 %v684, %v697
      %v701 = vmul.f32 %v685, %v697
      %v702 = vmul.f32 %v686, %v697
      %v703 = vmul.f32 %v687, %v697
      %v704 = vmul.f32 %v688, %v697
      %v705 = vmul.f32 %v689, %v697
      %v706 = vmul.f32 %v690, %v697
      %s707 = scalar_lea.vmem %s1, 192
      %v708 = vld [vmem:[%s707] sm:$0xff]
      %v709 = vld [vmem:[%s707 + $0x8] sm:$0xff]
      %v710 = vld [vmem:[%s707 + $0x10] sm:$0xff]
      %v711 = vld [vmem:[%s707 + $0x18] sm:$0xff]
      %v712 = vld [vmem:[%s707 + $0x20] sm:$0xff]
      %v713 = vld [vmem:[%s707 + $0x28] sm:$0xff]
      %v714 = vld [vmem:[%s707 + $0x30] sm:$0xff]
      %v715 = vld [vmem:[%s707 + $0x38] sm:$0xff]
      %717 = vset.pattern.permute.xlu0 0
      %718 = vperm.xlu0 %717, %v708
      %v719 = vpop.permute.xlu0 %718
      %722 = vset.pattern.permute.xlu0 0
      %723 = vperm.xlu0 %722, %v709
      %v724 = vpop.permute.xlu0 %723
      %727 = vset.pattern.permute.xlu0 0
      %728 = vperm.xlu0 %727, %v710
      %v729 = vpop.permute.xlu0 %728
      %732 = vset.pattern.permute.xlu0 0
      %733 = vperm.xlu0 %732, %v711
      %v734 = vpop.permute.xlu0 %733
      %737 = vset.pattern.permute.xlu0 0
      %738 = vperm.xlu0 %737, %v712
      %v739 = vpop.permute.xlu0 %738
      %742 = vset.pattern.permute.xlu0 0
      %743 = vperm.xlu0 %742, %v713
      %v744 = vpop.permute.xlu0 %743
      %747 = vset.pattern.permute.xlu0 0
      %748 = vperm.xlu0 %747, %v714
      %v749 = vpop.permute.xlu0 %748
      %752 = vset.pattern.permute.xlu0 0
      %753 = vperm.xlu0 %752, %v715
      %v754 = vpop.permute.xlu0 %753
      %v756 = vmul.f32 %v699, %v719
      %v757 = vmul.f32 %v700, %v724
      %v758 = vmul.f32 %v701, %v729
      %v759 = vmul.f32 %v702, %v734
      %v760 = vmul.f32 %v703, %v739
      %v761 = vmul.f32 %v704, %v744
      %v762 = vmul.f32 %v705, %v749
      %v763 = vmul.f32 %v706, %v754
      %v764 = vld [vmem:[#allocation2 + $0x10] sm:$0xff]
      %v765 = vld [vmem:[#allocation2 + $0x18] sm:$0xff]
      %v766 = vld [vmem:[#allocation2 + $0x20] sm:$0xff]
      %v767 = vld [vmem:[#allocation2 + $0x28] sm:$0xff]
      %v768 = vld [vmem:[#allocation2 + $0x30] sm:$0xff]
      %v769 = vld [vmem:[#allocation2 + $0x38] sm:$0xff]
      %v770 = vld [vmem:[#allocation2 + $0x40] sm:$0xff]
      %v771 = vld [vmem:[#allocation2 + $0x48] sm:$0xff]
      %s772 = scalar_lea.vmem %s4, 4
      %v773 = vld [vmem:[%s772] sm:$0x1]
      %v775 = vlaneseq
      %v776 = vshrl.u32 %v775, 7
      %v777 = vsub.s32 0, %v776
      %v778 = vrot.slane %v773, %v777
      %v780 = vmul.f32 %v764, %v778
      %v781 = vmul.f32 %v765, %v778
      %v782 = vmul.f32 %v766, %v778
      %v783 = vmul.f32 %v767, %v778
      %v784 = vmul.f32 %v768, %v778
      %v785 = vmul.f32 %v769, %v778
      %v786 = vmul.f32 %v770, %v778
      %v787 = vmul.f32 %v771, %v778
      %v788 = vld [vmem:[#allocation2 + $0x11] sm:$0xff]
      %v789 = vld [vmem:[#allocation2 + $0x19] sm:$0xff]
      %v790 = vld [vmem:[#allocation2 + $0x21] sm:$0xff]
      %v791 = vld [vmem:[#allocation2 + $0x29] sm:$0xff]
      %v792 = vld [vmem:[#allocation2 + $0x31] sm:$0xff]
      %v793 = vld [vmem:[#allocation2 + $0x39] sm:$0xff]
      %v794 = vld [vmem:[#allocation2 + $0x41] sm:$0xff]
      %v795 = vld [vmem:[#allocation2 + $0x49] sm:$0xff]
      %s796 = scalar_lea.vmem %s4, 5
      %v797 = vld [vmem:[%s796] sm:$0x1]
      %v799 = vlaneseq
      %v800 = vshrl.u32 %v799, 7
      %v801 = vsub.s32 0, %v800
      %v802 = vrot.slane %v797, %v801
      %v804 = vmul.f32 %v788, %v802
      %v805 = vmul.f32 %v789, %v802
      %v806 = vmul.f32 %v790, %v802
      %v807 = vmul.f32 %v791, %v802
      %v808 = vmul.f32 %v792, %v802
      %v809 = vmul.f32 %v793, %v802
      %v810 = vmul.f32 %v794, %v802
      %v811 = vmul.f32 %v795, %v802
      %s812 = scalar_lea.vmem %s1, 320
      %v813 = vld [vmem:[%s812] sm:$0xff]
      %v814 = vld [vmem:[%s812 + $0x8] sm:$0xff]
      %v815 = vld [vmem:[%s812 + $0x10] sm:$0xff]
      %v816 = vld [vmem:[%s812 + $0x18] sm:$0xff]
      %v817 = vld [vmem:[%s812 + $0x20] sm:$0xff]
      %v818 = vld [vmem:[%s812 + $0x28] sm:$0xff]
      %v819 = vld [vmem:[%s812 + $0x30] sm:$0xff]
      %v820 = vld [vmem:[%s812 + $0x38] sm:$0xff]
      %822 = vset.pattern.permute.xlu0 0
      %823 = vperm.xlu0 %822, %v813
      %v824 = vpop.permute.xlu0 %823
      %827 = vset.pattern.permute.xlu0 0
      %828 = vperm.xlu0 %827, %v814
      %v829 = vpop.permute.xlu0 %828
      %832 = vset.pattern.permute.xlu0 0
      %833 = vperm.xlu0 %832, %v815
      %v834 = vpop.permute.xlu0 %833
      %837 = vset.pattern.permute.xlu0 0
      %838 = vperm.xlu0 %837, %v816
      %v839 = vpop.permute.xlu0 %838
      %842 = vset.pattern.permute.xlu0 0
      %843 = vperm.xlu0 %842, %v817
      %v844 = vpop.permute.xlu0 %843
      %847 = vset.pattern.permute.xlu0 0
      %848 = vperm.xlu0 %847, %v818
      %v849 = vpop.permute.xlu0 %848
      %852 = vset.pattern.permute.xlu0 0
      %853 = vperm.xlu0 %852, %v819
      %v854 = vpop.permute.xlu0 %853
      %857 = vset.pattern.permute.xlu0 0
      %858 = vperm.xlu0 %857, %v820
      %v859 = vpop.permute.xlu0 %858
      %v861 = vmul.f32 %v804, %v824
      %v862 = vmul.f32 %v805, %v829
      %v863 = vmul.f32 %v806, %v834
      %v864 = vmul.f32 %v807, %v839
      %v865 = vmul.f32 %v808, %v844
      %v866 = vmul.f32 %v809, %v849
      %v867 = vmul.f32 %v810, %v854
      %v868 = vmul.f32 %v811, %v859
      %v869 = vld [vmem:[#allocation2 + $0x17] sm:$0xff]
      %v870 = vld [vmem:[#allocation2 + $0x1f] sm:$0xff]
      %v871 = vld [vmem:[#allocation2 + $0x27] sm:$0xff]
      %v872 = vld [vmem:[#allocation2 + $0x2f] sm:$0xff]
      %v873 = vld [vmem:[#allocation2 + $0x37] sm:$0xff]
      %v874 = vld [vmem:[#allocation2 + $0x3f] sm:$0xff]
      %v875 = vld [vmem:[#allocation2 + $0x47] sm:$0xff]
      %v876 = vld [vmem:[#allocation2 + $0x4f] sm:$0xff]
      %s877 = scalar_lea.vmem %s4, 6
      %v878 = vld [vmem:[%s877] sm:$0x1]
      %v880 = vlaneseq
      %v881 = vshrl.u32 %v880, 7
      %v882 = vsub.s32 0, %v881
      %v883 = vrot.slane %v878, %v882
      %v885 = vmul.f32 %v869, %v883
      %v886 = vmul.f32 %v870, %v883
      %v887 = vmul.f32 %v871, %v883
      %v888 = vmul.f32 %v872, %v883
      %v889 = vmul.f32 %v873, %v883
      %v890 = vmul.f32 %v874, %v883
      %v891 = vmul.f32 %v875, %v883
      %v892 = vmul.f32 %v876, %v883
      %s893 = scalar_lea.vmem %s1, 384
      %v894 = vld [vmem:[%s893] sm:$0xff]
      %v895 = vld [vmem:[%s893 + $0x8] sm:$0xff]
      %v896 = vld [vmem:[%s893 + $0x10] sm:$0xff]
      %v897 = vld [vmem:[%s893 + $0x18] sm:$0xff]
      %v898 = vld [vmem:[%s893 + $0x20] sm:$0xff]
      %v899 = vld [vmem:[%s893 + $0x28] sm:$0xff]
      %v900 = vld [vmem:[%s893 + $0x30] sm:$0xff]
      %v901 = vld [vmem:[%s893 + $0x38] sm:$0xff]
      %903 = vset.pattern.permute.xlu0 0
      %904 = vperm.xlu0 %903, %v894
      %v905 = vpop.permute.xlu0 %904
      %908 = vset.pattern.permute.xlu0 0
      %909 = vperm.xlu0 %908, %v895
      %v910 = vpop.permute.xlu0 %909
      %913 = vset.pattern.permute.xlu0 0
      %914 = vperm.xlu0 %913, %v896
      %v915 = vpop.permute.xlu0 %914
      %918 = vset.pattern.permute.xlu0 0
      %919 = vperm.xlu0 %918, %v897
      %v920 = vpop.permute.xlu0 %919
      %923 = vset.pattern.permute.xlu0 0
      %924 = vperm.xlu0 %923, %v898
      %v925 = vpop.permute.xlu0 %924
      %928 = vset.pattern.permute.xlu0 0
      %929 = vperm.xlu0 %928, %v899
      %v930 = vpop.permute.xlu0 %929
      %933 = vset.pattern.permute.xlu0 0
      %934 = vperm.xlu0 %933, %v900
      %v935 = vpop.permute.xlu0 %934
      %938 = vset.pattern.permute.xlu0 0
      %939 = vperm.xlu0 %938, %v901
      %v940 = vpop.permute.xlu0 %939
      %v942 = vmul.f32 %v885, %v905
      %v943 = vmul.f32 %v886, %v910
      %v944 = vmul.f32 %v887, %v915
      %v945 = vmul.f32 %v888, %v920
      %v946 = vmul.f32 %v889, %v925
      %v947 = vmul.f32 %v890, %v930
      %v948 = vmul.f32 %v891, %v935
      %v949 = vmul.f32 %v892, %v940
      %v950 = vld [vmem:[#allocation2 + $0x18] sm:$0xff]
      %v951 = vld [vmem:[#allocation2 + $0x20] sm:$0xff]
      %v952 = vld [vmem:[#allocation2 + $0x28] sm:$0xff]
      %v953 = vld [vmem:[#allocation2 + $0x30] sm:$0xff]
      %v954 = vld [vmem:[#allocation2 + $0x38] sm:$0xff]
      %v955 = vld [vmem:[#allocation2 + $0x40] sm:$0xff]
      %v956 = vld [vmem:[#allocation2 + $0x48] sm:$0xff]
      %v957 = vld [vmem:[#allocation2 + $0x50] sm:$0xff]
      %s958 = scalar_lea.vmem %s4, 7
      %v959 = vld [vmem:[%s958] sm:$0x1]
      %v961 = vlaneseq
      %v962 = vshrl.u32 %v961, 7
      %v963 = vsub.s32 0, %v962
      %v964 = vrot.slane %v959, %v963
      %v966 = vmul.f32 %v950, %v964
      %v967 = vmul.f32 %v951, %v964
      %v968 = vmul.f32 %v952, %v964
      %v969 = vmul.f32 %v953, %v964
      %v970 = vmul.f32 %v954, %v964
      %v971 = vmul.f32 %v955, %v964
      %v972 = vmul.f32 %v956, %v964
      %v973 = vmul.f32 %v957, %v964
      %s974 = scalar_lea.vmem %s1, 448
      %v975 = vld [vmem:[%s974] sm:$0xff]
      %v976 = vld [vmem:[%s974 + $0x8] sm:$0xff]
      %v977 = vld [vmem:[%s974 + $0x10] sm:$0xff]
      %v978 = vld [vmem:[%s974 + $0x18] sm:$0xff]
      %v979 = vld [vmem:[%s974 + $0x20] sm:$0xff]
      %v980 = vld [vmem:[%s974 + $0x28] sm:$0xff]
      %v981 = vld [vmem:[%s974 + $0x30] sm:$0xff]
      %v982 = vld [vmem:[%s974 + $0x38] sm:$0xff]
      %984 = vset.pattern.permute.xlu0 0
      %985 = vperm.xlu0 %984, %v975
      %v986 = vpop.permute.xlu0 %985
      %989 = vset.pattern.permute.xlu0 0
      %990 = vperm.xlu0 %989, %v976
      %v991 = vpop.permute.xlu0 %990
      %994 = vset.pattern.permute.xlu0 0
      %995 = vperm.xlu0 %994, %v977
      %v996 = vpop.permute.xlu0 %995
      %999 = vset.pattern.permute.xlu0 0
      %1000 = vperm.xlu0 %999, %v978
      %v1001 = vpop.permute.xlu0 %1000
      %1004 = vset.pattern.permute.xlu0 0
      %1005 = vperm.xlu0 %1004, %v979
      %v1006 = vpop.permute.xlu0 %1005
      %1009 = vset.pattern.permute.xlu0 0
      %1010 = vperm.xlu0 %1009, %v980
      %v1011 = vpop.permute.xlu0 %1010
      %1014 = vset.pattern.permute.xlu0 0
      %1015 = vperm.xlu0 %1014, %v981
      %v1016 = vpop.permute.xlu0 %1015
      %1019 = vset.pattern.permute.xlu0 0
      %1020 = vperm.xlu0 %1019, %v982
      %v1021 = vpop.permute.xlu0 %1020
      %v1023 = vmul.f32 %v966, %v986
      %v1024 = vmul.f32 %v967, %v991
      %v1025 = vmul.f32 %v968, %v996
      %v1026 = vmul.f32 %v969, %v1001
      %v1027 = vmul.f32 %v970, %v1006
      %v1028 = vmul.f32 %v971, %v1011
      %v1029 = vmul.f32 %v972, %v1016
      %v1030 = vmul.f32 %v973, %v1021
      %v1031 = vld [vmem:[#allocation2 + $0x19] sm:$0xff]
      %v1032 = vld [vmem:[#allocation2 + $0x21] sm:$0xff]
      %v1033 = vld [vmem:[#allocation2 + $0x29] sm:$0xff]
      %v1034 = vld [vmem:[#allocation2 + $0x31] sm:$0xff]
      %v1035 = vld [vmem:[#allocation2 + $0x39] sm:$0xff]
      %v1036 = vld [vmem:[#allocation2 + $0x41] sm:$0xff]
      %v1037 = vld [vmem:[#allocation2 + $0x49] sm:$0xff]
      %v1038 = vld [vmem:[#allocation2 + $0x51] sm:$0xff]
      %s1039 = scalar_lea.vmem %s4, 8
      %v1040 = vld [vmem:[%s1039] sm:$0x1]
      %v1042 = vlaneseq
      %v1043 = vshrl.u32 %v1042, 7
      %v1044 = vsub.s32 0, %v1043
      %v1045 = vrot.slane %v1040, %v1044
      %v1047 = vmul.f32 %v1031, %v1045
      %v1048 = vmul.f32 %v1032, %v1045
      %v1049 = vmul.f32 %v1033, %v1045
      %v1050 = vmul.f32 %v1034, %v1045
      %v1051 = vmul.f32 %v1035, %v1045
      %v1052 = vmul.f32 %v1036, %v1045
      %v1053 = vmul.f32 %v1037, %v1045
      %v1054 = vmul.f32 %v1038, %v1045
      %s1055 = scalar_lea.vmem %s1, 512
      %v1056 = vld [vmem:[%s1055] sm:$0xff]
      %v1057 = vld [vmem:[%s1055 + $0x8] sm:$0xff]
      %v1058 = vld [vmem:[%s1055 + $0x10] sm:$0xff]
      %v1059 = vld [vmem:[%s1055 + $0x18] sm:$0xff]
      %v1060 = vld [vmem:[%s1055 + $0x20] sm:$0xff]
      %v1061 = vld [vmem:[%s1055 + $0x28] sm:$0xff]
      %v1062 = vld [vmem:[%s1055 + $0x30] sm:$0xff]
      %v1063 = vld [vmem:[%s1055 + $0x38] sm:$0xff]
      %1065 = vset.pattern.permute.xlu0 0
      %1066 = vperm.xlu0 %1065, %v1056
      %v1067 = vpop.permute.xlu0 %1066
      %1070 = vset.pattern.permute.xlu0 0
      %1071 = vperm.xlu0 %1070, %v1057
      %v1072 = vpop.permute.xlu0 %1071
      %1075 = vset.pattern.permute.xlu0 0
      %1076 = vperm.xlu0 %1075, %v1058
      %v1077 = vpop.permute.xlu0 %1076
      %1080 = vset.pattern.permute.xlu0 0
      %1081 = vperm.xlu0 %1080, %v1059
      %v1082 = vpop.permute.xlu0 %1081
      %1085 = vset.pattern.permute.xlu0 0
      %1086 = vperm.xlu0 %1085, %v1060
      %v1087 = vpop.permute.xlu0 %1086
      %1090 = vset.pattern.permute.xlu0 0
      %1091 = vperm.xlu0 %1090, %v1061
      %v1092 = vpop.permute.xlu0 %1091
      %1095 = vset.pattern.permute.xlu0 0
      %1096 = vperm.xlu0 %1095, %v1062
      %v1097 = vpop.permute.xlu0 %1096
      %1100 = vset.pattern.permute.xlu0 0
      %1101 = vperm.xlu0 %1100, %v1063
      %v1102 = vpop.permute.xlu0 %1101
      %v1104 = vmul.f32 %v1047, %v1067
      %v1105 = vmul.f32 %v1048, %v1072
      %v1106 = vmul.f32 %v1049, %v1077
      %v1107 = vmul.f32 %v1050, %v1082
      %v1108 = vmul.f32 %v1051, %v1087
      %v1109 = vmul.f32 %v1052, %v1092
      %v1110 = vmul.f32 %v1053, %v1097
      %v1111 = vmul.f32 %v1054, %v1102
      %v1112 = vadd.f32 %v513, %v594
      %v1113 = vadd.f32 %v514, %v595
      %v1114 = vadd.f32 %v515, %v596
      %v1115 = vadd.f32 %v516, %v597
      %v1116 = vadd.f32 %v517, %v598
      %v1117 = vadd.f32 %v518, %v599
      %v1118 = vadd.f32 %v519, %v600
      %v1119 = vadd.f32 %v520, %v601
      %v1120 = vadd.f32 %v1112, %v675
      %v1121 = vadd.f32 %v1113, %v676
      %v1122 = vadd.f32 %v1114, %v677
      %v1123 = vadd.f32 %v1115, %v678
      %v1124 = vadd.f32 %v1116, %v679
      %v1125 = vadd.f32 %v1117, %v680
      %v1126 = vadd.f32 %v1118, %v681
      %v1127 = vadd.f32 %v1119, %v682
      %v1128 = vadd.f32 %v756, %v780
      %v1129 = vadd.f32 %v757, %v781
      %v1130 = vadd.f32 %v758, %v782
      %v1131 = vadd.f32 %v759, %v783
      %v1132 = vadd.f32 %v760, %v784
      %v1133 = vadd.f32 %v761, %v785
      %v1134 = vadd.f32 %v762, %v786
      %v1135 = vadd.f32 %v763, %v787
      %v1136 = vadd.f32 %v1128, %v861
      %v1137 = vadd.f32 %v1129, %v862
      %v1138 = vadd.f32 %v1130, %v863
      %v1139 = vadd.f32 %v1131, %v864
      %v1140 = vadd.f32 %v1132, %v865
      %v1141 = vadd.f32 %v1133, %v866
      %v1142 = vadd.f32 %v1134, %v867
      %v1143 = vadd.f32 %v1135, %v868
      %v1144 = vadd.f32 %v1120, %v1136
      %v1145 = vadd.f32 %v1121, %v1137
      %v1146 = vadd.f32 %v1122, %v1138
      %v1147 = vadd.f32 %v1123, %v1139
      %v1148 = vadd.f32 %v1124, %v1140
      %v1149 = vadd.f32 %v1125, %v1141
      %v1150 = vadd.f32 %v1126, %v1142
      %v1151 = vadd.f32 %v1127, %v1143
      %v1152 = vadd.f32 %v942, %v1023
      %v1153 = vadd.f32 %v943, %v1024
      %v1154 = vadd.f32 %v944, %v1025
      %v1155 = vadd.f32 %v945, %v1026
      %v1156 = vadd.f32 %v946, %v1027
      %v1157 = vadd.f32 %v947, %v1028
      %v1158 = vadd.f32 %v948, %v1029
      %v1159 = vadd.f32 %v949, %v1030
      %v1160 = vadd.f32 %v1152, %v1104
      %v1161 = vadd.f32 %v1153, %v1105
      %v1162 = vadd.f32 %v1154, %v1106
      %v1163 = vadd.f32 %v1155, %v1107
      %v1164 = vadd.f32 %v1156, %v1108
      %v1165 = vadd.f32 %v1157, %v1109
      %v1166 = vadd.f32 %v1158, %v1110
      %v1167 = vadd.f32 %v1159, %v1111
      %v1168 = vadd.f32 %v1144, %v1160
      %v1169 = vadd.f32 %v1145, %v1161
      %v1170 = vadd.f32 %v1146, %v1162
      %v1171 = vadd.f32 %v1147, %v1163
      %v1172 = vadd.f32 %v1148, %v1164
      %v1173 = vadd.f32 %v1149, %v1165
      %v1174 = vadd.f32 %v1150, %v1166
      %v1175 = vadd.f32 %v1151, %v1167
      %v1176 = vld [vmem:[%s5] sm:$0x1]
      %v1178 = vlaneseq
      %v1179 = vshrl.u32 %v1178, 7
      %v1180 = vsub.s32 0, %v1179
      %v1181 = vrot.slane %v1176, %v1180
      %v1183 = vadd.f32 %v1168, %v1181
      %v1184 = vadd.f32 %v1169, %v1181
      %v1185 = vadd.f32 %v1170, %v1181
      %v1186 = vadd.f32 %v1171, %v1181
      %v1187 = vadd.f32 %v1172, %v1181
      %v1188 = vadd.f32 %v1173, %v1181
      %v1189 = vadd.f32 %v1174, %v1181
      %v1190 = vadd.f32 %v1175, %v1181
      %v1191 = vmax.f32 %v1183, 0.0
      %v1192 = vmax.f32 %v1184, 0.0
      %v1193 = vmax.f32 %v1185, 0.0
      %v1194 = vmax.f32 %v1186, 0.0
      %v1195 = vmax.f32 %v1187, 0.0
      %v1196 = vmax.f32 %v1188, 0.0
      %v1197 = vmax.f32 %v1189, 0.0
      %v1198 = vmax.f32 %v1190, 0.0
      %v1199 = vpack.c.bf16 %v1192, %v1191
      %v1200 = vpack.c.bf16 %v1194, %v1193
      %v1201 = vpack.c.bf16 %v1196, %v1195
      %v1202 = vpack.c.bf16 %v1198, %v1197
      %v1203 = vld [vmem:[%s6] sm:$0xf]
      %v1204 = vld [vmem:[%s6 + $0x4] sm:$0xf]
      %v1205 = vld [vmem:[%s6 + $0x8] sm:$0xf]
      %v1206 = vld [vmem:[%s6 + $0xc] sm:$0xf]
      %v1207 = vld [vmem:[%s7] sm:$0x1]
      %v1209 = vlaneseq
      %v1210 = vshrl.u32 %v1209, 7
      %v1211 = vsub.s32 0, %v1210
      %v1212 = vrot.slane %v1207, %v1211
      %v1218 = vunpack.c.l.b16 %v1203
      %v1219 = vunpack.c.l.b16 %v1204
      %v1220 = vunpack.c.l.b16 %v1205
      %v1221 = vunpack.c.l.b16 %v1206
      %v1222 = vpack.c.b16 %v1219, %v1218
      %v1223 = vpack.c.b16 %v1221, %v1220
      %v1227 = vsel %vm420, %v1199, 0
      %v1230 = vsel %vm420, %v1200, 0
      %v1233 = vsel %vm420, %v1201, 0
      %v1236 = vsel %vm420, %v1202, 0
      %1238 = vmatprep.subr.bf16.mxu0 0
      %1239 = vmatpush1.bf16.msra.mxu0 %v1222
      %1240 = vmatprep.subr.bf16.mxu0 0
      %1241 = vmatpush1.bf16.msra.mxu0 %v1223
      %1242 = vmatprep.subr.bf16.mxu0 0
      %1243 = vmatpush1.bf16.msra.mxu0 0
      %1244 = vmatprep.subr.bf16.mxu0 0
      %1245 = vmatpush1.bf16.msra.mxu0 0
      %1246 = vmatprep.subr.bf16.mxu0 0
      %1247 = vmatpush1.bf16.msra.mxu0 0
      %1248 = vmatprep.subr.bf16.mxu0 0
      %1249 = vmatpush1.bf16.msra.mxu0 0
      %1250 = vmatprep.subr.bf16.mxu0 0
      %1251 = vmatpush1.bf16.msra.mxu0 0
      %1252 = vmatprep.subr.bf16.mxu0 0
      %1253 = vmatpush1.bf16.msra.mxu0 0
      %1254 = vmatprep.subr.bf16.mxu0 0
      %1255 = vmatpush1.bf16.msra.mxu0 0
      %1256 = vmatprep.subr.bf16.mxu0 0
      %1257 = vmatpush1.bf16.msra.mxu0 0
      %1258 = vmatprep.subr.bf16.mxu0 0
      %1259 = vmatpush1.bf16.msra.mxu0 0
      %1260 = vmatprep.subr.bf16.mxu0 0
      %1261 = vmatpush1.bf16.msra.mxu0 0
      %1262 = vmatprep.subr.bf16.mxu0 0
      %1263 = vmatpush1.bf16.msra.mxu0 0
      %1264 = vmatprep.subr.bf16.mxu0 0
      %1265 = vmatpush1.bf16.msra.mxu0 0
      %1266 = vmatprep.subr.bf16.mxu0 0
      %1267 = vmatpush1.bf16.msra.mxu0 0
      %1268 = vmatprep.subr.bf16.mxu0 0
      %1269 = vmatpush1.bf16.msra.mxu0 0
      %1270 = vmatprep.mubr.bf16.mxu0 0
      %1271 = vmatmul.mubr.bf16.gmra.mrb[0].mxu0 %v1227
      %v1272 = vpop.f32.mrb[0].mxu0
      %v1273 = vadd.f32 %v1212, %v1272
      %v1274 = vpop.f32.mrb[0].mxu0
      %v1275 = vpop.f32.mrb[0].mxu0
      %v1276 = vadd.f32 %v1212, %v1275
      %v1277 = vpop.f32.mrb[0].mxu0
      %1278 = vmatprep.mubr.bf16.mxu0 0
      %1279 = vmatmul.mubr.bf16.gmra.mrb[0].mxu0 %v1230
      %v1280 = vpop.f32.mrb[0].mxu0
      %v1281 = vadd.f32 %v1212, %v1280
      %v1282 = vpop.f32.mrb[0].mxu0
      %v1283 = vpop.f32.mrb[0].mxu0
      %v1284 = vadd.f32 %v1212, %v1283
      %v1285 = vpop.f32.mrb[0].mxu0
      %1286 = vmatprep.mubr.bf16.mxu0 0
      %1287 = vmatmul.mubr.bf16.gmra.mrb[0].mxu0 %v1233
      %v1288 = vpop.f32.mrb[0].mxu0
      %v1289 = vadd.f32 %v1212, %v1288
      %v1290 = vpop.f32.mrb[0].mxu0
      %v1291 = vpop.f32.mrb[0].mxu0
      %v1292 = vadd.f32 %v1212, %v1291
      %v1293 = vpop.f32.mrb[0].mxu0
      %1294 = vmatprep.mubr.bf16.mxu0 0
      %1295 = vmatmul.mubr.bf16.gmra.mrb[0].mxu0 %v1236
      %v1296 = vpop.f32.mrb[0].mxu0
      %v1297 = vadd.f32 %v1212, %v1296
      %v1298 = vpop.f32.mrb[0].mxu0
      %v1299 = vpop.f32.mrb[0].mxu0
      %v1300 = vadd.f32 %v1212, %v1299
      %v1301 = vpop.f32.mrb[0].mxu0
      %1302 = vdwg.mxu0
      %v1303 = vadd.f32 %v1273, %v307
      %v1304 = vadd.f32 %v1276, %v308
      %v1305 = vadd.f32 %v1281, %v309
      %v1306 = vadd.f32 %v1284, %v310
      %v1307 = vadd.f32 %v1289, %v311
      %v1308 = vadd.f32 %v1292, %v312
      %v1309 = vadd.f32 %v1297, %v313
      %v1310 = vadd.f32 %v1300, %v314
      %1311 = vst.msk [vmem:[%s305] sm:$0xff] %vm334, %v1303
      %1312 = vst.msk [vmem:[%s305 + $0x8] sm:$0xff] %vm334, %v1304
      %1313 = vst.msk [vmem:[%s305 + $0x10] sm:$0xff] %vm334, %v1305
      %1314 = vst.msk [vmem:[%s305 + $0x18] sm:$0xff] %vm334, %v1306
      %1315 = vst.msk [vmem:[%s305 + $0x20] sm:$0xff] %vm334, %v1307
      %1316 = vst.msk [vmem:[%s305 + $0x28] sm:$0xff] %vm334, %v1308
      %1317 = vst.msk [vmem:[%s305 + $0x30] sm:$0xff] %vm334, %v1309
      %1318 = vst.msk [vmem:[%s305 + $0x38] sm:$0xff] %vm334, %v1310
      %p1319 = scmp.lt.s32.totalorder %s19, 1
      %s1320 = scalar_select %p1319, %s19, 1
      %s1321 = smul.addr %s1320, 8
      %s1322 = smul.addr %s1321, 8
      %s1323 = scalar_lea.vmem %s8, %s1322
      // Predicated region
      $region53: #{audionet_forward.10} parent=51 // pred_check
        %p1324 = pneg %p210
      $region54: #{audionet_forward.10} parent=51 // pred_check_branch
        %1326 = sbr.rel (%p1324) target = $region56
      $region55: #{audionet_forward.10} parent=51 // pred_region
        _
      $region56: #{audionet_forward.10} parent=51 // pred_fallthru
        _
    $region52: #{audionet_forward.10} parent=5 // pred_fallthru
      _
    %p1327 = scmp.le.s32.totalorder 2, %s14
    // Predicated region
    $region57: #{audionet_forward.10} parent=5 // pred_check
      %p1328 = pneg %p1327
    $region58: #{audionet_forward.10} parent=5 // pred_check_branch
      %1330 = sbr.rel (%p1328) target = $region60
    $region59: #{audionet_forward.10} parent=5 // pred_region
      %s1331 = ssub.s32 %s14, 2
      // Predicated region
      $region61: #{audionet_forward.10} parent=59 // pred_check
        %p1332 = pneg %p216
      $region62: #{audionet_forward.10} parent=59 // pred_check_branch
        %1334 = sbr.rel (%p1332) target = $region64
      $region63: #{audionet_forward.10} parent=59 // pred_region
        %p1335 = scmp.lt.s32.totalorder %s20, 1
        %s1336 = scalar_select %p1335, %s20, 1
        %s1337 = smul.addr %s1336, 8
        %s1338 = smul.addr %s1337, 8
        %s1339 = scalar_lea.vmem %s8, %s1338
      $region64: #{audionet_forward.10} parent=59 // pred_fallthru
        _
    $region60: #{audionet_forward.10} parent=5 // pred_fallthru
      _
  $region6: #{audionet_forward.10} parent=0 // loop_footer
    %s18 = sadd.s32 1, %s14
  $region7: #{audionet_forward.10} parent=0 // loop_footer_branch
    %13 = sbr.rel target = $region3
  $region8: #{audionet_forward.10} parent=0 // loop_exit
    _

// kernel: audionet_forward.12
$region0: #{audionet_forward.12}
  #allocation0 [shape = 'u32[]', space=smem, size = 0x4, offset = 0x4, fixed_abs, tag = 'smem constant byte address 0x4 - core index']
  #allocation1 [shape = 'u32[144,128]{1,0:T(1,128)}', space=vmem, size = 0x12000, scoped, tag = 'internal scratch']
  #allocation2 [shape = 'f32[24,32]{1,0:T(8,128)}', space=vmem, size = 0x3000, scoped, tag = 'scratch operand']
  #allocation3 [shape = 'f32[24,32]{1,0:T(8,128)}', space=vmem, size = 0x3000, scoped, tag = 'scratch operand']
  #allocation4 [shape = 'f32[24,32]{1,0:T(8,128)}', space=vmem, size = 0x3000, scoped, tag = 'scratch operand']
  #allocation5 [shape = 'f32[24,32]{1,0:T(8,128)}', space=vmem, size = 0x3000, scoped, tag = 'scratch operand']
  %s0 = inlined_call_operand.vmem [shape: f32[2,16,16], index: 0, kind: input, shape index: {}]
  %s1 = inlined_call_operand.vmem [shape: f32[2,16,16], index: 1, kind: input, shape index: {}]
  %s2 = inlined_call_operand.vmem [shape: f32[2,16,16], index: 2, kind: input, shape index: {}]
  %s3 = inlined_call_operand.vmem [shape: f32[2,16,16], index: 3, kind: input, shape index: {}]
  %s4 = inlined_call_operand.vmem [shape: f32[9,16,1], index: 4, kind: input, shape index: {}]
  %s5 = inlined_call_operand.vmem [shape: bf16[16,32], index: 5, kind: input, shape index: {}]
  %s6 = inlined_call_operand.vmem [shape: f32[1,32], index: 6, kind: input, shape index: {}]
  %s7 = inlined_call_operand.vmem [shape: f32[9,1,32], index: 7, kind: input, shape index: {}]
  %s8 = inlined_call_operand.vmem [shape: f32[1,32], index: 8, kind: input, shape index: {}]
  %s9 = inlined_call_operand.vmem [shape: bf16[32,32], index: 9, kind: input, shape index: {}]
  %s10 = inlined_call_operand.vmem [shape: f32[1,32], index: 10, kind: input, shape index: {}]
  %s11 = inlined_call_operand.vmem [shape: f32[2,16,32], index: 11, kind: output, shape index: {}]
  %s12 = sld [smem:[#allocation0]]
  $region77: #{audionet_forward.12} parent=0
    _
  %s14 = ssub.s32 1, %s12
  %s15 = scalar_select 0, %s14, %s12
  loop: start=0, step=1, limit=4
  $region2: #{audionet_forward.12} parent=0 // loop_pre_header
    _
  $region3: #{audionet_forward.12} parent=0 // loop_header
    %s17 = sphi 0, %s21
    %p18 = scmp.ge.s32.totalorder %s17, 4
    %s27 = sphi 0, %s29
    %s30 = sphi 0, %s27
    %s31 = sphi 0, %s30
    %s47 = sphi 0, %s31
    %s53 = sphi 0, %s55
    %s56 = sphi 0, %s53
    %s57 = sphi 0, %s56
    %s73 = sphi 0, %s57
    %s79 = sphi 0, %s81
    %s82 = sphi 0, %s79
    %s83 = sphi 0, %s82
    %s99 = sphi 0, %s83
    %s105 = sphi 0, %s107
    %s108 = sphi 0, %s105
    %s109 = sphi 0, %s108
    %s125 = sphi 0, %s109
    %s129 = sphi 0, %s129
    %s131 = sphi 0, %s129
    %s132 = sphi 0, %s131
    %s146 = sphi 0, %s132
    %s150 = sphi 0, %s150
    %s152 = sphi 0, %s150
    %s153 = sphi 0, %s152
    %s167 = sphi 0, %s153
    %s171 = sphi 0, %s171
    %s173 = sphi 0, %s171
    %s174 = sphi 0, %s173
    %s188 = sphi 0, %s174
    %s192 = sphi 0, %s192
    %s194 = sphi 0, %s192
    %s195 = sphi 0, %s194
    %s209 = sphi 0, %s195
    %s213 = sphi 0, %s213
    %s215 = sphi 0, %s213
    %s216 = sphi 0, %s215
    %s230 = sphi 0, %s216
    %s234 = sphi 0, %s234
    %s236 = sphi 0, %s234
    %s237 = sphi 0, %s236
    %s251 = sphi 0, %s237
    %s255 = sphi 0, %s255
    %s257 = sphi 0, %s255
    %s258 = sphi 0, %s257
    %s272 = sphi 0, %s258
    %s278 = sphi 0, %s280
    %s281 = sphi 0, %s278
    %s282 = sphi 0, %s281
    %s298 = sphi 0, %s282
  $region4: #{audionet_forward.12} parent=0 // loop_header_branch
    %20 = sbr.rel (%p18) target = $region8
  $region5: #{audionet_forward.12} parent=0 // loop_body
    %s22 = ssub.s32 %s17, 1
    %s23 = ssub.s32 %s17, 2
    %s24 = sadd.s32 %s17, 1
    %s25 = ssub.s32 %s17, %s24
    %p26 = scmp.eq.s32.totalorder %s25, 0
    %s28 = sadd.s32 %s27, 1
    %s29 = scalar_select %p26, %s27, %s28
    %p32 = pneg %p26
    %p33 = scmp.eq.s32.totalorder %s17, 1
    %p34 = por %p32, %p33
    %p35 = scmp.ne.s32.totalorder %s27, %s30
    %p36 = scmp.eq.s32.totalorder %s17, 0
    %p37 = por %p35, %p36
    %p38 = scmp.ne.s32.totalorder %s27, %s30
    %p39 = scmp.eq.s32.totalorder %s22, 1
    %p40 = por %p38, %p39
    %p41 = scmp.ne.s32.totalorder %s30, %s31
    %p42 = scmp.eq.s32.totalorder %s22, 0
    %p43 = por %p41, %p42
    %p44 = scmp.ne.s32.totalorder %s30, %s31
    %p45 = scmp.eq.s32.totalorder %s23, 1
    %p46 = por %p44, %p45
    %p48 = scmp.ne.s32.totalorder %s31, %s47
    %p49 = scmp.eq.s32.totalorder %s23, 0
    %p50 = por %p48, %p49
    %s51 = ssub.s32 %s17, %s24
    %p52 = scmp.eq.s32.totalorder %s51, 0
    %s54 = sadd.s32 %s53, 1
    %s55 = scalar_select %p52, %s53, %s54
    %p58 = pneg %p52
    %p59 = scmp.eq.s32.totalorder %s17, 1
    %p60 = por %p58, %p59
    %p61 = scmp.ne.s32.totalorder %s53, %s56
    %p62 = scmp.eq.s32.totalorder %s17, 0
    %p63 = por %p61, %p62
    %p64 = scmp.ne.s32.totalorder %s53, %s56
    %p65 = scmp.eq.s32.totalorder %s22, 1
    %p66 = por %p64, %p65
    %p67 = scmp.ne.s32.totalorder %s56, %s57
    %p68 = scmp.eq.s32.totalorder %s22, 0
    %p69 = por %p67, %p68
    %p70 = scmp.ne.s32.totalorder %s56, %s57
    %p71 = scmp.eq.s32.totalorder %s23, 1
    %p72 = por %p70, %p71
    %p74 = scmp.ne.s32.totalorder %s57, %s73
    %p75 = scmp.eq.s32.totalorder %s23, 0
    %p76 = por %p74, %p75
    %s77 = ssub.s32 %s17, %s24
    %p78 = scmp.eq.s32.totalorder %s77, 0
    %s80 = sadd.s32 %s79, 1
    %s81 = scalar_select %p78, %s79, %s80
    %p84 = pneg %p78
    %p85 = scmp.eq.s32.totalorder %s17, 1
    %p86 = por %p84, %p85
    %p87 = scmp.ne.s32.totalorder %s79, %s82
    %p88 = scmp.eq.s32.totalorder %s17, 0
    %p89 = por %p87, %p88
    %p90 = scmp.ne.s32.totalorder %s79, %s82
    %p91 = scmp.eq.s32.totalorder %s22, 1
    %p92 = por %p90, %p91
    %p93 = scmp.ne.s32.totalorder %s82, %s83
    %p94 = scmp.eq.s32.totalorder %s22, 0
    %p95 = por %p93, %p94
    %p96 = scmp.ne.s32.totalorder %s82, %s83
    %p97 = scmp.eq.s32.totalorder %s23, 1
    %p98 = por %p96, %p97
    %p100 = scmp.ne.s32.totalorder %s83, %s99
    %p101 = scmp.eq.s32.totalorder %s23, 0
    %p102 = por %p100, %p101
    %s103 = ssub.s32 %s17, %s24
    %p104 = scmp.eq.s32.totalorder %s103, 0
    %s106 = sadd.s32 %s105, 1
    %s107 = scalar_select %p104, %s105, %s106
    %p110 = pneg %p104
    %p111 = scmp.eq.s32.totalorder %s17, 1
    %p112 = por %p110, %p111
    %p113 = scmp.ne.s32.totalorder %s105, %s108
    %p114 = scmp.eq.s32.totalorder %s17, 0
    %p115 = por %p113, %p114
    %p116 = scmp.ne.s32.totalorder %s105, %s108
    %p117 = scmp.eq.s32.totalorder %s22, 1
    %p118 = por %p116, %p117
    %p119 = scmp.ne.s32.totalorder %s108, %s109
    %p120 = scmp.eq.s32.totalorder %s22, 0
    %p121 = por %p119, %p120
    %p122 = scmp.ne.s32.totalorder %s108, %s109
    %p123 = scmp.eq.s32.totalorder %s23, 1
    %p124 = por %p122, %p123
    %p126 = scmp.ne.s32.totalorder %s109, %s125
    %p127 = scmp.eq.s32.totalorder %s23, 0
    %p128 = por %p126, %p127
    %s130 = sadd.s32 %s129, 1
    %p133 = scmp.eq.s32.totalorder %s17, 1
    %p134 = scmp.ne.s32.totalorder %s129, %s131
    %p135 = scmp.eq.s32.totalorder %s17, 0
    %p136 = por %p134, %p135
    %p137 = scmp.ne.s32.totalorder %s129, %s131
    %p138 = scmp.eq.s32.totalorder %s22, 1
    %p139 = por %p137, %p138
    %p140 = scmp.ne.s32.totalorder %s131, %s132
    %p141 = scmp.eq.s32.totalorder %s22, 0
    %p142 = por %p140, %p141
    %p143 = scmp.ne.s32.totalorder %s131, %s132
    %p144 = scmp.eq.s32.totalorder %s23, 1
    %p145 = por %p143, %p144
    %p147 = scmp.ne.s32.totalorder %s132, %s146
    %p148 = scmp.eq.s32.totalorder %s23, 0
    %p149 = por %p147, %p148
    %s151 = sadd.s32 %s150, 1
    %p154 = scmp.eq.s32.totalorder %s17, 1
    %p155 = scmp.ne.s32.totalorder %s150, %s152
    %p156 = scmp.eq.s32.totalorder %s17, 0
    %p157 = por %p155, %p156
    %p158 = scmp.ne.s32.totalorder %s150, %s152
    %p159 = scmp.eq.s32.totalorder %s22, 1
    %p160 = por %p158, %p159
    %p161 = scmp.ne.s32.totalorder %s152, %s153
    %p162 = scmp.eq.s32.totalorder %s22, 0
    %p163 = por %p161, %p162
    %p164 = scmp.ne.s32.totalorder %s152, %s153
    %p165 = scmp.eq.s32.totalorder %s23, 1
    %p166 = por %p164, %p165
    %p168 = scmp.ne.s32.totalorder %s153, %s167
    %p169 = scmp.eq.s32.totalorder %s23, 0
    %p170 = por %p168, %p169
    %s172 = sadd.s32 %s171, 1
    %p175 = scmp.eq.s32.totalorder %s17, 1
    %p176 = scmp.ne.s32.totalorder %s171, %s173
    %p177 = scmp.eq.s32.totalorder %s17, 0
    %p178 = por %p176, %p177
    %p179 = scmp.ne.s32.totalorder %s171, %s173
    %p180 = scmp.eq.s32.totalorder %s22, 1
    %p181 = por %p179, %p180
    %p182 = scmp.ne.s32.totalorder %s173, %s174
    %p183 = scmp.eq.s32.totalorder %s22, 0
    %p184 = por %p182, %p183
    %p185 = scmp.ne.s32.totalorder %s173, %s174
    %p186 = scmp.eq.s32.totalorder %s23, 1
    %p187 = por %p185, %p186
    %p189 = scmp.ne.s32.totalorder %s174, %s188
    %p190 = scmp.eq.s32.totalorder %s23, 0
    %p191 = por %p189, %p190
    %s193 = sadd.s32 %s192, 1
    %p196 = scmp.eq.s32.totalorder %s17, 1
    %p197 = scmp.ne.s32.totalorder %s192, %s194
    %p198 = scmp.eq.s32.totalorder %s17, 0
    %p199 = por %p197, %p198
    %p200 = scmp.ne.s32.totalorder %s192, %s194
    %p201 = scmp.eq.s32.totalorder %s22, 1
    %p202 = por %p200, %p201
    %p203 = scmp.ne.s32.totalorder %s194, %s195
    %p204 = scmp.eq.s32.totalorder %s22, 0
    %p205 = por %p203, %p204
    %p206 = scmp.ne.s32.totalorder %s194, %s195
    %p207 = scmp.eq.s32.totalorder %s23, 1
    %p208 = por %p206, %p207
    %p210 = scmp.ne.s32.totalorder %s195, %s209
    %p211 = scmp.eq.s32.totalorder %s23, 0
    %p212 = por %p210, %p211
    %s214 = sadd.s32 %s213, 1
    %p217 = scmp.eq.s32.totalorder %s17, 1
    %p218 = scmp.ne.s32.totalorder %s213, %s215
    %p219 = scmp.eq.s32.totalorder %s17, 0
    %p220 = por %p218, %p219
    %p221 = scmp.ne.s32.totalorder %s213, %s215
    %p222 = scmp.eq.s32.totalorder %s22, 1
    %p223 = por %p221, %p222
    %p224 = scmp.ne.s32.totalorder %s215, %s216
    %p225 = scmp.eq.s32.totalorder %s22, 0
    %p226 = por %p224, %p225
    %p227 = scmp.ne.s32.totalorder %s215, %s216
    %p228 = scmp.eq.s32.totalorder %s23, 1
    %p229 = por %p227, %p228
    %p231 = scmp.ne.s32.totalorder %s216, %s230
    %p232 = scmp.eq.s32.totalorder %s23, 0
    %p233 = por %p231, %p232
    %s235 = sadd.s32 %s234, 1
    %p238 = scmp.eq.s32.totalorder %s17, 1
    %p239 = scmp.ne.s32.totalorder %s234, %s236
    %p240 = scmp.eq.s32.totalorder %s17, 0
    %p241 = por %p239, %p240
    %p242 = scmp.ne.s32.totalorder %s234, %s236
    %p243 = scmp.eq.s32.totalorder %s22, 1
    %p244 = por %p242, %p243
    %p245 = scmp.ne.s32.totalorder %s236, %s237
    %p246 = scmp.eq.s32.totalorder %s22, 0
    %p247 = por %p245, %p246
    %p248 = scmp.ne.s32.totalorder %s236, %s237
    %p249 = scmp.eq.s32.totalorder %s23, 1
    %p250 = por %p248, %p249
    %p252 = scmp.ne.s32.totalorder %s237, %s251
    %p253 = scmp.eq.s32.totalorder %s23, 0
    %p254 = por %p252, %p253
    %s256 = sadd.s32 %s255, 1
    %p259 = scmp.eq.s32.totalorder %s17, 1
    %p260 = scmp.ne.s32.totalorder %s255, %s257
    %p261 = scmp.eq.s32.totalorder %s17, 0
    %p262 = por %p260, %p261
    %p263 = scmp.ne.s32.totalorder %s255, %s257
    %p264 = scmp.eq.s32.totalorder %s22, 1
    %p265 = por %p263, %p264
    %p266 = scmp.ne.s32.totalorder %s257, %s258
    %p267 = scmp.eq.s32.totalorder %s22, 0
    %p268 = por %p266, %p267
    %p269 = scmp.ne.s32.totalorder %s257, %s258
    %p270 = scmp.eq.s32.totalorder %s23, 1
    %p271 = por %p269, %p270
    %p273 = scmp.ne.s32.totalorder %s258, %s272
    %p274 = scmp.eq.s32.totalorder %s23, 0
    %p275 = por %p273, %p274
    %s276 = ssub.s32 %s17, %s24
    %p277 = scmp.eq.s32.totalorder %s276, 0
    %s279 = sadd.s32 %s278, 1
    %s280 = scalar_select %p277, %s278, %s279
    %p283 = pneg %p277
    %p284 = scmp.eq.s32.totalorder %s17, 1
    %p285 = por %p283, %p284
    %p286 = scmp.ne.s32.totalorder %s278, %s281
    %p287 = scmp.eq.s32.totalorder %s17, 0
    %p288 = por %p286, %p287
    %p289 = scmp.ne.s32.totalorder %s278, %s281
    %p290 = scmp.eq.s32.totalorder %s22, 1
    %p291 = por %p289, %p290
    %p292 = scmp.ne.s32.totalorder %s281, %s282
    %p293 = scmp.eq.s32.totalorder %s22, 0
    %p294 = por %p292, %p293
    %p295 = scmp.ne.s32.totalorder %s281, %s282
    %p296 = scmp.eq.s32.totalorder %s23, 1
    %p297 = por %p295, %p296
    %p299 = scmp.ne.s32.totalorder %s282, %s298
    %p300 = scmp.eq.s32.totalorder %s23, 0
    %p301 = por %p299, %p300
    %p302 = scmp.le.s32.totalorder 1, %s17
    %p303 = scmp.lt.s32.totalorder %s17, 3
    %p304 = pnand %p302, %p303
    %p305 = pneg %p304
    // Predicated region
    $region9: #{audionet_forward.12} parent=5 // pred_check
      _
    $region10: #{audionet_forward.12} parent=5 // pred_check_branch
      %307 = sbr.rel (%p304) target = $region12
    $region11: #{audionet_forward.12} parent=5 // pred_region
      %s308 = ssub.s32 %s17, 1
      // Predicated region
      $region13: #{audionet_forward.12} parent=11 // pred_check
        %p309 = pneg %p142
      $region14: #{audionet_forward.12} parent=11 // pred_check_branch
        %311 = sbr.rel (%p309) target = $region16
      $region15: #{audionet_forward.12} parent=11 // pred_region
        _
      $region16: #{audionet_forward.12} parent=11 // pred_fallthru
        _
      // Predicated region
      $region17: #{audionet_forward.12} parent=11 // pred_check
        %p312 = pneg %p163
      $region18: #{audionet_forward.12} parent=11 // pred_check_branch
        %314 = sbr.rel (%p312) target = $region20
      $region19: #{audionet_forward.12} parent=11 // pred_region
        _
      $region20: #{audionet_forward.12} parent=11 // pred_fallthru
        _
      // Predicated region
      $region21: #{audionet_forward.12} parent=11 // pred_check
        %p315 = pneg %p184
      $region22: #{audionet_forward.12} parent=11 // pred_check_branch
        %317 = sbr.rel (%p315) target = $region24
      $region23: #{audionet_forward.12} parent=11 // pred_region
        _
      $region24: #{audionet_forward.12} parent=11 // pred_fallthru
        _
      // Predicated region
      $region25: #{audionet_forward.12} parent=11 // pred_check
        %p318 = pneg %p205
      $region26: #{audionet_forward.12} parent=11 // pred_check_branch
        %320 = sbr.rel (%p318) target = $region28
      $region27: #{audionet_forward.12} parent=11 // pred_region
        _
      $region28: #{audionet_forward.12} parent=11 // pred_fallthru
        _
      // Predicated region
      $region29: #{audionet_forward.12} parent=11 // pred_check
        %p321 = pneg %p226
      $region30: #{audionet_forward.12} parent=11 // pred_check_branch
        %323 = sbr.rel (%p321) target = $region32
      $region31: #{audionet_forward.12} parent=11 // pred_region
        _
      $region32: #{audionet_forward.12} parent=11 // pred_fallthru
        _
      // Predicated region
      $region33: #{audionet_forward.12} parent=11 // pred_check
        %p324 = pneg %p247
      $region34: #{audionet_forward.12} parent=11 // pred_check_branch
        %326 = sbr.rel (%p324) target = $region36
      $region35: #{audionet_forward.12} parent=11 // pred_region
        _
      $region36: #{audionet_forward.12} parent=11 // pred_fallthru
        _
      // Predicated region
      $region37: #{audionet_forward.12} parent=11 // pred_check
        %p327 = pneg %p268
      $region38: #{audionet_forward.12} parent=11 // pred_check_branch
        %329 = sbr.rel (%p327) target = $region40
      $region39: #{audionet_forward.12} parent=11 // pred_region
        _
      $region40: #{audionet_forward.12} parent=11 // pred_fallthru
        _
    $region12: #{audionet_forward.12} parent=5 // pred_fallthru
      _
    %p330 = scmp.lt.s32.totalorder %s17, 2
    // Predicated region
    $region41: #{audionet_forward.12} parent=5 // pred_check
      %p331 = pneg %p330
    $region42: #{audionet_forward.12} parent=5 // pred_check_branch
      %333 = sbr.rel (%p331) target = $region44
    $region43: #{audionet_forward.12} parent=5 // pred_region
      // Predicated region
      $region45: #{audionet_forward.12} parent=43 // pred_check
        %p334 = pneg %p37
      $region46: #{audionet_forward.12} parent=43 // pred_check_branch
        %336 = sbr.rel (%p334) target = $region48
      $region47: #{audionet_forward.12} parent=43 // pred_region
        %p337 = scmp.lt.s32.totalorder %s17, 1
        %s338 = scalar_select %p337, %s17, 1
        %s339 = smul.addr %s338, 2
        %s340 = smul.addr %s339, 8
        %s341 = scalar_lea.vmem %s0, %s340
      $region48: #{audionet_forward.12} parent=43 // pred_fallthru
        _
      // Predicated region
      $region49: #{audionet_forward.12} parent=43 // pred_check
        %p342 = pneg %p63
      $region50: #{audionet_forward.12} parent=43 // pred_check_branch
        %344 = sbr.rel (%p342) target = $region52
      $region51: #{audionet_forward.12} parent=43 // pred_region
        %p345 = scmp.lt.s32.totalorder %s17, 1
        %s346 = scalar_select %p345, %s17, 1
        %s347 = smul.addr %s346, 2
        %s348 = smul.addr %s347, 8
        %s349 = scalar_lea.vmem %s1, %s348
      $region52: #{audionet_forward.12} parent=43 // pred_fallthru
        _
      // Predicated region
      $region53: #{audionet_forward.12} parent=43 // pred_check
        %p350 = pneg %p89
      $region54: #{audionet_forward.12} parent=43 // pred_check_branch
        %352 = sbr.rel (%p350) target = $region56
      $region55: #{audionet_forward.12} parent=43 // pred_region
        %p353 = scmp.lt.s32.totalorder %s17, 1
        %s354 = scalar_select %p353, %s17, 1
        %s355 = smul.addr %s354, 2
        %s356 = smul.addr %s355, 8
        %s357 = scalar_lea.vmem %s2, %s356
      $region56: #{audionet_forward.12} parent=43 // pred_fallthru
        _
      // Predicated region
      $region57: #{audionet_forward.12} parent=43 // pred_check
        %p358 = pneg %p115
      $region58: #{audionet_forward.12} parent=43 // pred_check_branch
        %360 = sbr.rel (%p358) target = $region60
      $region59: #{audionet_forward.12} parent=43 // pred_region
        %p361 = scmp.lt.s32.totalorder %s17, 1
        %s362 = scalar_select %p361, %s17, 1
        %s363 = smul.addr %s362, 2
        %s364 = smul.addr %s363, 8
        %s365 = scalar_lea.vmem %s3, %s364
      $region60: #{audionet_forward.12} parent=43 // pred_fallthru
        _
    $region44: #{audionet_forward.12} parent=5 // pred_fallthru
      _
    %p366 = scmp.le.s32.totalorder 1, %s17
    %p367 = scmp.lt.s32.totalorder %s17, 3
    %p368 = pnand %p366, %p367
    %p369 = pneg %p368
    // Predicated region
    $region61: #{audionet_forward.12} parent=5 // pred_check
      _
    $region62: #{audionet_forward.12} parent=5 // pred_check_branch
      %371 = sbr.rel (%p368) target = $region64
    $region63: #{audionet_forward.12} parent=5 // pred_region
      %s372 = ssub.s32 %s17, 1
      %p373 = scmp.lt.s32.totalorder %s22, 1
      %s374 = scalar_select %p373, %s22, 1
      %s375 = smul.addr %s374, 2
      %s376 = smul.addr %s375, 8
      %s377 = scalar_lea.vmem %s0, %s376
      %p378 = pneg %p43
      %p379 = pneg %p40
      %p380 = scmp.lt.s32.totalorder %s22, 1
      %s381 = scalar_select %p380, %s22, 1
      %s382 = smul.addr %s381, 2
      %s383 = smul.addr %s382, 8
      %s384 = scalar_lea.vmem %s1, %s383
      %p385 = pneg %p69
      %p386 = pneg %p66
      %p387 = scmp.lt.s32.totalorder %s22, 1
      %s388 = scalar_select %p387, %s22, 1
      %s389 = smul.addr %s388, 2
      %s390 = smul.addr %s389, 8
      %s391 = scalar_lea.vmem %s2, %s390
      %p392 = pneg %p95
      %p393 = pneg %p92
      %p394 = scmp.lt.s32.totalorder %s22, 1
      %s395 = scalar_select %p394, %s22, 1
      %s396 = smul.addr %s395, 2
      %s397 = smul.addr %s396, 8
      %s398 = scalar_lea.vmem %s3, %s397
      %p399 = pneg %p121
      %p400 = pneg %p118
      %p401 = pneg %p142
      %p402 = pneg %p139
      %p403 = pneg %p163
      %p404 = pneg %p160
      %p405 = pneg %p184
      %p406 = pneg %p181
      %p407 = pneg %p205
      %p408 = pneg %p202
      %p409 = pneg %p226
      %p410 = pneg %p223
      %p411 = pneg %p247
      %p412 = pneg %p244
      %p413 = pneg %p268
      %p414 = pneg %p265
      %p415 = pneg %p294
      %p416 = pneg %p291
      %p417 = scmp.lt.s32.totalorder %s22, 1
      %s418 = scalar_select %p417, %s22, 1
      %s419 = smul.addr %s418, 2
      %s420 = smul.addr %s419, 8
      %s421 = scalar_lea.vmem %s11, %s420
      %p422 = scmp.lt.s32.totalorder %s22, 1
      %s423 = scalar_select %p422, %s22, 1
      %s424 = smul.addr %s423, 2
      %s425 = smul.addr %s424, 8
      %s426 = scalar_lea.vmem %s0, %s425
      %p427 = scmp.lt.s32.totalorder %s22, 1
      %s428 = scalar_select %p427, %s22, 1
      %s429 = smul.addr %s428, 2
      %s430 = smul.addr %s429, 8
      %s431 = scalar_lea.vmem %s1, %s430
      %p432 = scmp.lt.s32.totalorder %s22, 1
      %s433 = scalar_select %p432, %s22, 1
      %s434 = smul.addr %s433, 2
      %s435 = smul.addr %s434, 8
      %s436 = scalar_lea.vmem %s2, %s435
      %p437 = scmp.lt.s32.totalorder %s22, 1
      %s438 = scalar_select %p437, %s22, 1
      %s439 = smul.addr %s438, 2
      %s440 = smul.addr %s439, 8
      %s441 = scalar_lea.vmem %s3, %s440
      %p442 = scmp.lt.s32.totalorder %s22, 1
      %s443 = scalar_select %p442, %s22, 1
      %s444 = smul.addr %s443, 2
      %s445 = smul.addr %s444, 8
      %s446 = scalar_lea.vmem %s11, %s445
      %v448 = vld [vmem:[%s426] sm:$0xff]
      %v449 = vld [vmem:[%s426 + $0x8] sm:$0xff]
      %v450 = vpack.c.bf16 %v449, %v448
      %v451 = vld [vmem:[%s5] sm:$0xf]
      %v452 = vld [vmem:[%s5 + $0x4] sm:$0xf]
      %v453 = vld [vmem:[%s6] sm:$0x1]
      %v455 = vlaneseq
      %v456 = vshrl.u32 %v455, 7
      %v457 = vsub.s32 0, %v456
      %v458 = vrot.slane %v453, %v457
      %v462 = vunpack.c.l.b16 %v451
      %v463 = vunpack.c.l.b16 %v452
      %v464 = vpack.c.b16 %v463, %v462
      %vm466 = vcmask 130048
      %v468 = vsel %vm466, %v450, 0
      %470 = vmatprep.subr.bf16.mxu0 0
      %471 = vmatpush1.bf16.msra.mxu0 %v464
      %472 = vmatprep.subr.bf16.mxu0 0
      %473 = vmatpush1.bf16.msra.mxu0 0
      %474 = vmatprep.subr.bf16.mxu0 0
      %475 = vmatpush1.bf16.msra.mxu0 0
      %476 = vmatprep.subr.bf16.mxu0 0
      %477 = vmatpush1.bf16.msra.mxu0 0
      %478 = vmatprep.subr.bf16.mxu0 0
      %479 = vmatpush1.bf16.msra.mxu0 0
      %480 = vmatprep.subr.bf16.mxu0 0
      %481 = vmatpush1.bf16.msra.mxu0 0
      %482 = vmatprep.subr.bf16.mxu0 0
      %483 = vmatpush1.bf16.msra.mxu0 0
      %484 = vmatprep.subr.bf16.mxu0 0
      %485 = vmatpush1.bf16.msra.mxu0 0
      %486 = vmatprep.subr.bf16.mxu0 0
      %487 = vmatpush1.bf16.msra.mxu0 0
      %488 = vmatprep.subr.bf16.mxu0 0
      %489 = vmatpush1.bf16.msra.mxu0 0
      %490 = vmatprep.subr.bf16.mxu0 0
      %491 = vmatpush1.bf16.msra.mxu0 0
      %492 = vmatprep.subr.bf16.mxu0 0
      %493 = vmatpush1.bf16.msra.mxu0 0
      %494 = vmatprep.subr.bf16.mxu0 0
      %495 = vmatpush1.bf16.msra.mxu0 0
      %496 = vmatprep.subr.bf16.mxu0 0
      %497 = vmatpush1.bf16.msra.mxu0 0
      %498 = vmatprep.subr.bf16.mxu0 0
      %499 = vmatpush1.bf16.msra.mxu0 0
      %500 = vmatprep.subr.bf16.mxu0 0
      %501 = vmatpush1.bf16.msra.mxu0 0
      %502 = vmatprep.mubr.bf16.mxu0 0
      %503 = vmatmul.mubr.bf16.gmra.mrb[0].mxu0 %v468
      %v504 = vpop.f32.mrb[0].mxu0
      %v505 = vadd.f32 %v458, %v504
      %v506 = vpop.f32.mrb[0].mxu0
      %v507 = vpop.f32.mrb[0].mxu0
      %v508 = vadd.f32 %v458, %v507
      %v509 = vpop.f32.mrb[0].mxu0
      %510 = vdwg.mxu0
      %v511 = vmax.f32 %v505, 0.0
      %v512 = vmax.f32 %v508, 0.0
      %vm513 = vcmask 261120
      %514 = vst.msk [vmem:[#allocation2] sm:$0xff] %vm513, 0.0
      %515 = vst.msk [vmem:[#allocation2 + $0x8] sm:$0xff] %vm513, 0.0
      %516 = vst.msk [vmem:[#allocation2 + $0x10] sm:$0xff] %vm513, 0.0
      %517 = vst.msk [vmem:[#allocation2 + $0x8] sm:$0xff] %vm513, %v511
      %518 = vst.msk [vmem:[#allocation2 + $0x10] sm:$0xff] %vm513, %v512
      %v519 = vld [vmem:[%s431] sm:$0xff]
      %v520 = vld [vmem:[%s431 + $0x8] sm:$0xff]
      %v521 = vpack.c.bf16 %v520, %v519
      %v522 = vld [vmem:[%s5] sm:$0xf]
      %v523 = vld [vmem:[%s5 + $0x4] sm:$0xf]
      %v524 = vld [vmem:[%s6] sm:$0x1]
      %v526 = vlaneseq
      %v527 = vshrl.u32 %v526, 7
      %v528 = vsub.s32 0, %v527
      %v529 = vrot.slane %v524, %v528
      %v533 = vunpack.c.l.b16 %v522
      %v534 = vunpack.c.l.b16 %v523
      %v535 = vpack.c.b16 %v534, %v533
      %v538 = vsel %vm466, %v521, 0
      %540 = vmatprep.subr.bf16.mxu0 0
      %541 = vmatpush1.bf16.msra.mxu0 %v535
      %542 = vmatprep.subr.bf16.mxu0 0
      %543 = vmatpush1.bf16.msra.mxu0 0
      %544 = vmatprep.subr.bf16.mxu0 0
      %545 = vmatpush1.bf16.msra.mxu0 0
      %546 = vmatprep.subr.bf16.mxu0 0
      %547 = vmatpush1.bf16.msra.mxu0 0
      %548 = vmatprep.subr.bf16.mxu0 0
      %549 = vmatpush1.bf16.msra.mxu0 0
      %550 = vmatprep.subr.bf16.mxu0 0
      %551 = vmatpush1.bf16.msra.mxu0 0
      %552 = vmatprep.subr.bf16.mxu0 0
      %553 = vmatpush1.bf16.msra.mxu0 0
      %554 = vmatprep.subr.bf16.mxu0 0
      %555 = vmatpush1.bf16.msra.mxu0 0
      %556 = vmatprep.subr.bf16.mxu0 0
      %557 = vmatpush1.bf16.msra.mxu0 0
      %558 = vmatprep.subr.bf16.mxu0 0
      %559 = vmatpush1.bf16.msra.mxu0 0
      %560 = vmatprep.subr.bf16.mxu0 0
      %561 = vmatpush1.bf16.msra.mxu0 0
      %562 = vmatprep.subr.bf16.mxu0 0
      %563 = vmatpush1.bf16.msra.mxu0 0
      %564 = vmatprep.subr.bf16.mxu0 0
      %565 = vmatpush1.bf16.msra.mxu0 0
      %566 = vmatprep.subr.bf16.mxu0 0
      %567 = vmatpush1.bf16.msra.mxu0 0
      %568 = vmatprep.subr.bf16.mxu0 0
      %569 = vmatpush1.bf16.msra.mxu0 0
      %570 = vmatprep.subr.bf16.mxu0 0
      %571 = vmatpush1.bf16.msra.mxu0 0
      %572 = vmatprep.mubr.bf16.mxu0 0
      %573 = vmatmul.mubr.bf16.gmra.mrb[0].mxu0 %v538
      %v574 = vpop.f32.mrb[0].mxu0
      %v575 = vadd.f32 %v529, %v574
      %v576 = vpop.f32.mrb[0].mxu0
      %v577 = vpop.f32.mrb[0].mxu0
      %v578 = vadd.f32 %v529, %v577
      %v579 = vpop.f32.mrb[0].mxu0
      %580 = vdwg.mxu0
      %v581 = vmax.f32 %v575, 0.0
      %v582 = vmax.f32 %v578, 0.0
      %583 = vst.msk [vmem:[#allocation3] sm:$0xff] %vm513, 0.0
      %584 = vst.msk [vmem:[#allocation3 + $0x8] sm:$0xff] %vm513, 0.0
      %585 = vst.msk [vmem:[#allocation3 + $0x10] sm:$0xff] %vm513, 0.0
      %586 = vst.msk [vmem:[#allocation3 + $0x8] sm:$0xff] %vm513, %v581
      %587 = vst.msk [vmem:[#allocation3 + $0x10] sm:$0xff] %vm513, %v582
      %v588 = vld [vmem:[%s436] sm:$0xff]
      %v589 = vld [vmem:[%s436 + $0x8] sm:$0xff]
      %v590 = vpack.c.bf16 %v589, %v588
      %v591 = vld [vmem:[%s5] sm:$0xf]
      %v592 = vld [vmem:[%s5 + $0x4] sm:$0xf]
      %v593 = vld [vmem:[%s6] sm:$0x1]
      %v595 = vlaneseq
      %v596 = vshrl.u32 %v595, 7
      %v597 = vsub.s32 0, %v596
      %v598 = vrot.slane %v593, %v597
      %v602 = vunpack.c.l.b16 %v591
      %v603 = vunpack.c.l.b16 %v592
      %v604 = vpack.c.b16 %v603, %v602
      %v607 = vsel %vm466, %v590, 0
      %609 = vmatprep.subr.bf16.mxu0 0
      %610 = vmatpush1.bf16.msra.mxu0 %v604
      %611 = vmatprep.subr.bf16.mxu0 0
      %612 = vmatpush1.bf16.msra.mxu0 0
      %613 = vmatprep.subr.bf16.mxu0 0
      %614 = vmatpush1.bf16.msra.mxu0 0
      %615 = vmatprep.subr.bf16.mxu0 0
      %616 = vmatpush1.bf16.msra.mxu0 0
      %617 = vmatprep.subr.bf16.mxu0 0
      %618 = vmatpush1.bf16.msra.mxu0 0
      %619 = vmatprep.subr.bf16.mxu0 0
      %620 = vmatpush1.bf16.msra.mxu0 0
      %621 = vmatprep.subr.bf16.mxu0 0
      %622 = vmatpush1.bf16.msra.mxu0 0
      %623 = vmatprep.subr.bf16.mxu0 0
      %624 = vmatpush1.bf16.msra.mxu0 0
      %625 = vmatprep.subr.bf16.mxu0 0
      %626 = vmatpush1.bf16.msra.mxu0 0
      %627 = vmatprep.subr.bf16.mxu0 0
      %628 = vmatpush1.bf16.msra.mxu0 0
      %629 = vmatprep.subr.bf16.mxu0 0
      %630 = vmatpush1.bf16.msra.mxu0 0
      %631 = vmatprep.subr.bf16.mxu0 0
      %632 = vmatpush1.bf16.msra.mxu0 0
      %633 = vmatprep.subr.bf16.mxu0 0
      %634 = vmatpush1.bf16.msra.mxu0 0
      %635 = vmatprep.subr.bf16.mxu0 0
      %636 = vmatpush1.bf16.msra.mxu0 0
      %637 = vmatprep.subr.bf16.mxu0 0
      %638 = vmatpush1.bf16.msra.mxu0 0
      %639 = vmatprep.subr.bf16.mxu0 0
      %640 = vmatpush1.bf16.msra.mxu0 0
      %641 = vmatprep.mubr.bf16.mxu0 0
      %642 = vmatmul.mubr.bf16.gmra.mrb[0].mxu0 %v607
      %v643 = vpop.f32.mrb[0].mxu0
      %v644 = vadd.f32 %v598, %v643
      %v645 = vpop.f32.mrb[0].mxu0
      %v646 = vpop.f32.mrb[0].mxu0
      %v647 = vadd.f32 %v598, %v646
      %v648 = vpop.f32.mrb[0].mxu0
      %649 = vdwg.mxu0
      %v650 = vmax.f32 %v644, 0.0
      %v651 = vmax.f32 %v647, 0.0
      %652 = vst.msk [vmem:[#allocation4] sm:$0xff] %vm513, 0.0
      %653 = vst.msk [vmem:[#allocation4 + $0x8] sm:$0xff] %vm513, 0.0
      %654 = vst.msk [vmem:[#allocation4 + $0x10] sm:$0xff] %vm513, 0.0
      %655 = vst.msk [vmem:[#allocation4 + $0x8] sm:$0xff] %vm513, %v650
      %656 = vst.msk [vmem:[#allocation4 + $0x10] sm:$0xff] %vm513, %v651
      %v657 = vld [vmem:[%s441] sm:$0xff]
      %v658 = vld [vmem:[%s441 + $0x8] sm:$0xff]
      %v659 = vpack.c.bf16 %v658, %v657
      %v660 = vld [vmem:[%s5] sm:$0xf]
      %v661 = vld [vmem:[%s5 + $0x4] sm:$0xf]
      %v662 = vld [vmem:[%s6] sm:$0x1]
      %v664 = vlaneseq
      %v665 = vshrl.u32 %v664, 7
      %v666 = vsub.s32 0, %v665
      %v667 = vrot.slane %v662, %v666
      %v671 = vunpack.c.l.b16 %v660
      %v672 = vunpack.c.l.b16 %v661
      %v673 = vpack.c.b16 %v672, %v671
      %v676 = vsel %vm466, %v659, 0
      %678 = vmatprep.subr.bf16.mxu0 0
      %679 = vmatpush1.bf16.msra.mxu0 %v673
      %680 = vmatprep.subr.bf16.mxu0 0
      %681 = vmatpush1.bf16.msra.mxu0 0
      %682 = vmatprep.subr.bf16.mxu0 0
      %683 = vmatpush1.bf16.msra.mxu0 0
      %684 = vmatprep.subr.bf16.mxu0 0
      %685 = vmatpush1.bf16.msra.mxu0 0
      %686 = vmatprep.subr.bf16.mxu0 0
      %687 = vmatpush1.bf16.msra.mxu0 0
      %688 = vmatprep.subr.bf16.mxu0 0
      %689 = vmatpush1.bf16.msra.mxu0 0
      %690 = vmatprep.subr.bf16.mxu0 0
      %691 = vmatpush1.bf16.msra.mxu0 0
      %692 = vmatprep.subr.bf16.mxu0 0
      %693 = vmatpush1.bf16.msra.mxu0 0
      %694 = vmatprep.subr.bf16.mxu0 0
      %695 = vmatpush1.bf16.msra.mxu0 0
      %696 = vmatprep.subr.bf16.mxu0 0
      %697 = vmatpush1.bf16.msra.mxu0 0
      %698 = vmatprep.subr.bf16.mxu0 0
      %699 = vmatpush1.bf16.msra.mxu0 0
      %700 = vmatprep.subr.bf16.mxu0 0
      %701 = vmatpush1.bf16.msra.mxu0 0
      %702 = vmatprep.subr.bf16.mxu0 0
      %703 = vmatpush1.bf16.msra.mxu0 0
      %704 = vmatprep.subr.bf16.mxu0 0
      %705 = vmatpush1.bf16.msra.mxu0 0
      %706 = vmatprep.subr.bf16.mxu0 0
      %707 = vmatpush1.bf16.msra.mxu0 0
      %708 = vmatprep.subr.bf16.mxu0 0
      %709 = vmatpush1.bf16.msra.mxu0 0
      %710 = vmatprep.mubr.bf16.mxu0 0
      %711 = vmatmul.mubr.bf16.gmra.mrb[0].mxu0 %v676
      %v712 = vpop.f32.mrb[0].mxu0
      %v713 = vadd.f32 %v667, %v712
      %v714 = vpop.f32.mrb[0].mxu0
      %v715 = vpop.f32.mrb[0].mxu0
      %v716 = vadd.f32 %v667, %v715
      %v717 = vpop.f32.mrb[0].mxu0
      %718 = vdwg.mxu0
      %v719 = vmax.f32 %v713, 0.0
      %v720 = vmax.f32 %v716, 0.0
      %721 = vst.msk [vmem:[#allocation5] sm:$0xff] %vm513, 0.0
      %722 = vst.msk [vmem:[#allocation5 + $0x8] sm:$0xff] %vm513, 0.0
      %723 = vst.msk [vmem:[#allocation5 + $0x10] sm:$0xff] %vm513, 0.0
      %724 = vst.msk [vmem:[#allocation5 + $0x8] sm:$0xff] %vm513, %v719
      %725 = vst.msk [vmem:[#allocation5 + $0x10] sm:$0xff] %vm513, %v720
      %v726 = vld [vmem:[#allocation5 + $0x3] sm:$0xff]
      %v727 = vld [vmem:[#allocation5 + $0xb] sm:$0xff]
      %v728 = vld [vmem:[%s7] sm:$0x1]
      %v730 = vlaneseq
      %v731 = vshrl.u32 %v730, 7
      %v732 = vsub.s32 0, %v731
      %v733 = vrot.slane %v728, %v732
      %v735 = vmul.f32 %v726, %v733
      %v736 = vmul.f32 %v727, %v733
      %v737 = vld [vmem:[%s4] sm:$0xff]
      %v738 = vld [vmem:[%s4 + $0x8] sm:$0xff]
      %740 = vset.pattern.permute.xlu0 0
      %741 = vperm.xlu0 %740, %v737
      %v742 = vpop.permute.xlu0 %741
      %745 = vset.pattern.permute.xlu0 0
      %746 = vperm.xlu0 %745, %v738
      %v747 = vpop.permute.xlu0 %746
      %v749 = vmul.f32 %v735, %v742
      %v750 = vmul.f32 %v736, %v747
      %v751 = vld [vmem:[#allocation4 + $0x4] sm:$0xff]
      %v752 = vld [vmem:[#allocation4 + $0xc] sm:$0xff]
      %s753 = scalar_lea.vmem %s7, 1
      %v754 = vld [vmem:[%s753] sm:$0x1]
      %v756 = vlaneseq
      %v757 = vshrl.u32 %v756, 7
      %v758 = vsub.s32 0, %v757
      %v759 = vrot.slane %v754, %v758
      %v761 = vmul.f32 %v751, %v759
      %v762 = vmul.f32 %v752, %v759
      %s763 = scalar_lea.vmem %s4, 16
      %v764 = vld [vmem:[%s763] sm:$0xff]
      %v765 = vld [vmem:[%s763 + $0x8] sm:$0xff]
      %767 = vset.pattern.permute.xlu0 0
      %768 = vperm.xlu0 %767, %v764
      %v769 = vpop.permute.xlu0 %768
      %772 = vset.pattern.permute.xlu0 0
      %773 = vperm.xlu0 %772, %v765
      %v774 = vpop.permute.xlu0 %773
      %v776 = vmul.f32 %v761, %v769
      %v777 = vmul.f32 %v762, %v774
      %v778 = vld [vmem:[#allocation5 + $0x4] sm:$0xff]
      %v779 = vld [vmem:[#allocation5 + $0xc] sm:$0xff]
      %s780 = scalar_lea.vmem %s7, 2
      %v781 = vld [vmem:[%s780] sm:$0x1]
      %v783 = vlaneseq
      %v784 = vshrl.u32 %v783, 7
      %v785 = vsub.s32 0, %v784
      %v786 = vrot.slane %v781, %v785
      %v788 = vmul.f32 %v778, %v786
      %v789 = vmul.f32 %v779, %v786
      %s790 = scalar_lea.vmem %s4, 32
      %v791 = vld [vmem:[%s790] sm:$0xff]
      %v792 = vld [vmem:[%s790 + $0x8] sm:$0xff]
      %794 = vset.pattern.permute.xlu0 0
      %795 = vperm.xlu0 %794, %v791
      %v796 = vpop.permute.xlu0 %795
      %799 = vset.pattern.permute.xlu0 0
      %800 = vperm.xlu0 %799, %v792
      %v801 = vpop.permute.xlu0 %800
      %v803 = vmul.f32 %v788, %v796
      %v804 = vmul.f32 %v789, %v801
      %v805 = vld [vmem:[#allocation3 + $0x7] sm:$0xff]
      %v806 = vld [vmem:[#allocation3 + $0xf] sm:$0xff]
      %s807 = scalar_lea.vmem %s7, 3
      %v808 = vld [vmem:[%s807] sm:$0x1]
      %v810 = vlaneseq
      %v811 = vshrl.u32 %v810, 7
      %v812 = vsub.s32 0, %v811
      %v813 = vrot.slane %v808, %v812
      %v815 = vmul.f32 %v805, %v813
      %v816 = vmul.f32 %v806, %v813
      %s817 = scalar_lea.vmem %s4, 48
      %v818 = vld [vmem:[%s817] sm:$0xff]
      %v819 = vld [vmem:[%s817 + $0x8] sm:$0xff]
      %821 = vset.pattern.permute.xlu0 0
      %822 = vperm.xlu0 %821, %v818
      %v823 = vpop.permute.xlu0 %822
      %826 = vset.pattern.permute.xlu0 0
      %827 = vperm.xlu0 %826, %v819
      %v828 = vpop.permute.xlu0 %827
      %v830 = vmul.f32 %v815, %v823
      %v831 = vmul.f32 %v816, %v828
      %v832 = vld [vmem:[#allocation2 + $0x8] sm:$0xff]
      %v833 = vld [vmem:[#allocation2 + $0x10] sm:$0xff]
      %s834 = scalar_lea.vmem %s7, 4
      %v835 = vld [vmem:[%s834] sm:$0x1]
      %v837 = vlaneseq
      %v838 = vshrl.u32 %v837, 7
      %v839 = vsub.s32 0, %v838
      %v840 = vrot.slane %v835, %v839
      %v842 = vmul.f32 %v832, %v840
      %v843 = vmul.f32 %v833, %v840
      %v844 = vld [vmem:[#allocation3 + $0x8] sm:$0xff]
      %v845 = vld [vmem:[#allocation3 + $0x10] sm:$0xff]
      %s846 = scalar_lea.vmem %s7, 5
      %v847 = vld [vmem:[%s846] sm:$0x1]
      %v849 = vlaneseq
      %v850 = vshrl.u32 %v849, 7
      %v851 = vsub.s32 0, %v850
      %v852 = vrot.slane %v847, %v851
      %v854 = vmul.f32 %v844, %v852
      %v855 = vmul.f32 %v845, %v852
      %s856 = scalar_lea.vmem %s4, 80
      %v857 = vld [vmem:[%s856] sm:$0xff]
      %v858 = vld [vmem:[%s856 + $0x8] sm:$0xff]
      %860 = vset.pattern.permute.xlu0 0
      %861 = vperm.xlu0 %860, %v857
      %v862 = vpop.permute.xlu0 %861
      %865 = vset.pattern.permute.xlu0 0
      %866 = vperm.xlu0 %865, %v858
      %v867 = vpop.permute.xlu0 %866
      %v869 = vmul.f32 %v854, %v862
      %v870 = vmul.f32 %v855, %v867
      %v871 = vld [vmem:[#allocation5 + $0x7] sm:$0xff]
      %v872 = vld [vmem:[#allocation5 + $0xf] sm:$0xff]
      %s873 = scalar_lea.vmem %s7, 6
      %v874 = vld [vmem:[%s873] sm:$0x1]
      %v876 = vlaneseq
      %v877 = vshrl.u32 %v876, 7
      %v878 = vsub.s32 0, %v877
      %v879 = vrot.slane %v874, %v878
      %v881 = vmul.f32 %v871, %v879
      %v882 = vmul.f32 %v872, %v879
      %s883 = scalar_lea.vmem %s4, 96
      %v884 = vld [vmem:[%s883] sm:$0xff]
      %v885 = vld [vmem:[%s883 + $0x8] sm:$0xff]
      %887 = vset.pattern.permute.xlu0 0
      %888 = vperm.xlu0 %887, %v884
      %v889 = vpop.permute.xlu0 %888
      %892 = vset.pattern.permute.xlu0 0
      %893 = vperm.xlu0 %892, %v885
      %v894 = vpop.permute.xlu0 %893
      %v896 = vmul.f32 %v881, %v889
      %v897 = vmul.f32 %v882, %v894
      %v898 = vld [vmem:[#allocation4 + $0x8] sm:$0xff]
      %v899 = vld [vmem:[#allocation4 + $0x10] sm:$0xff]
      %s900 = scalar_lea.vmem %s7, 7
      %v901 = vld [vmem:[%s900] sm:$0x1]
      %v903 = vlaneseq
      %v904 = vshrl.u32 %v903, 7
      %v905 = vsub.s32 0, %v904
      %v906 = vrot.slane %v901, %v905
      %v908 = vmul.f32 %v898, %v906
      %v909 = vmul.f32 %v899, %v906
      %s910 = scalar_lea.vmem %s4, 112
      %v911 = vld [vmem:[%s910] sm:$0xff]
      %v912 = vld [vmem:[%s910 + $0x8] sm:$0xff]
      %914 = vset.pattern.permute.xlu0 0
      %915 = vperm.xlu0 %914, %v911
      %v916 = vpop.permute.xlu0 %915
      %919 = vset.pattern.permute.xlu0 0
      %920 = vperm.xlu0 %919, %v912
      %v921 = vpop.permute.xlu0 %920
      %v923 = vmul.f32 %v908, %v916
      %v924 = vmul.f32 %v909, %v921
      %v925 = vld [vmem:[#allocation5 + $0x8] sm:$0xff]
      %v926 = vld [vmem:[#allocation5 + $0x10] sm:$0xff]
      %s927 = scalar_lea.vmem %s7, 8
      %v928 = vld [vmem:[%s927] sm:$0x1]
      %v930 = vlaneseq
      %v931 = vshrl.u32 %v930, 7
      %v932 = vsub.s32 0, %v931
      %v933 = vrot.slane %v928, %v932
      %v935 = vmul.f32 %v925, %v933
      %v936 = vmul.f32 %v926, %v933
      %s937 = scalar_lea.vmem %s4, 128
      %v938 = vld [vmem:[%s937] sm:$0xff]
      %v939 = vld [vmem:[%s937 + $0x8] sm:$0xff]
      %941 = vset.pattern.permute.xlu0 0
      %942 = vperm.xlu0 %941, %v938
      %v943 = vpop.permute.xlu0 %942
      %946 = vset.pattern.permute.xlu0 0
      %947 = vperm.xlu0 %946, %v939
      %v948 = vpop.permute.xlu0 %947
      %v950 = vmul.f32 %v935, %v943
      %v951 = vmul.f32 %v936, %v948
      %v952 = vadd.f32 %v749, %v776
      %v953 = vadd.f32 %v750, %v777
      %v954 = vadd.f32 %v952, %v803
      %v955 = vadd.f32 %v953, %v804
      %v956 = vadd.f32 %v830, %v842
      %v957 = vadd.f32 %v831, %v843
      %v958 = vadd.f32 %v956, %v869
      %v959 = vadd.f32 %v957, %v870
      %v960 = vadd.f32 %v954, %v958
      %v961 = vadd.f32 %v955, %v959
      %v962 = vadd.f32 %v896, %v923
      %v963 = vadd.f32 %v897, %v924
      %v964 = vadd.f32 %v962, %v950
      %v965 = vadd.f32 %v963, %v951
      %v966 = vadd.f32 %v960, %v964
      %v967 = vadd.f32 %v961, %v965
      %v968 = vld [vmem:[%s8] sm:$0x1]
      %v970 = vlaneseq
      %v971 = vshrl.u32 %v970, 7
      %v972 = vsub.s32 0, %v971
      %v973 = vrot.slane %v968, %v972
      %v975 = vadd.f32 %v966, %v973
      %v976 = vadd.f32 %v967, %v973
      %v977 = vmax.f32 %v975, 0.0
      %v978 = vmax.f32 %v976, 0.0
      %v979 = vpack.c.bf16 %v978, %v977
      %v980 = vld [vmem:[%s9] sm:$0xf]
      %v981 = vld [vmem:[%s9 + $0x4] sm:$0xf]
      %v982 = vld [vmem:[%s9 + $0x8] sm:$0xf]
      %v983 = vld [vmem:[%s9 + $0xc] sm:$0xf]
      %v984 = vld [vmem:[%s10] sm:$0x1]
      %v986 = vlaneseq
      %v987 = vshrl.u32 %v986, 7
      %v988 = vsub.s32 0, %v987
      %v989 = vrot.slane %v984, %v988
      %v995 = vunpack.c.l.b16 %v980
      %v996 = vunpack.c.l.b16 %v981
      %v997 = vunpack.c.l.b16 %v982
      %v998 = vunpack.c.l.b16 %v983
      %v999 = vpack.c.b16 %v996, %v995
      %v1000 = vpack.c.b16 %v998, %v997
      %v1004 = vsel %vm513, %v979, 0
      %1006 = vmatprep.subr.bf16.mxu0 0
      %1007 = vmatpush1.bf16.msra.mxu0 %v999
      %1008 = vmatprep.subr.bf16.mxu0 0
      %1009 = vmatpush1.bf16.msra.mxu0 %v1000
      %1010 = vmatprep.subr.bf16.mxu0 0
      %1011 = vmatpush1.bf16.msra.mxu0 0
      %1012 = vmatprep.subr.bf16.mxu0 0
      %1013 = vmatpush1.bf16.msra.mxu0 0
      %1014 = vmatprep.subr.bf16.mxu0 0
      %1015 = vmatpush1.bf16.msra.mxu0 0
      %1016 = vmatprep.subr.bf16.mxu0 0
      %1017 = vmatpush1.bf16.msra.mxu0 0
      %1018 = vmatprep.subr.bf16.mxu0 0
      %1019 = vmatpush1.bf16.msra.mxu0 0
      %1020 = vmatprep.subr.bf16.mxu0 0
      %1021 = vmatpush1.bf16.msra.mxu0 0
      %1022 = vmatprep.subr.bf16.mxu0 0
      %1023 = vmatpush1.bf16.msra.mxu0 0
      %1024 = vmatprep.subr.bf16.mxu0 0
      %1025 = vmatpush1.bf16.msra.mxu0 0
      %1026 = vmatprep.subr.bf16.mxu0 0
      %1027 = vmatpush1.bf16.msra.mxu0 0
      %1028 = vmatprep.subr.bf16.mxu0 0
      %1029 = vmatpush1.bf16.msra.mxu0 0
      %1030 = vmatprep.subr.bf16.mxu0 0
      %1031 = vmatpush1.bf16.msra.mxu0 0
      %1032 = vmatprep.subr.bf16.mxu0 0
      %1033 = vmatpush1.bf16.msra.mxu0 0
      %1034 = vmatprep.subr.bf16.mxu0 0
      %1035 = vmatpush1.bf16.msra.mxu0 0
      %1036 = vmatprep.subr.bf16.mxu0 0
      %1037 = vmatpush1.bf16.msra.mxu0 0
      %1038 = vmatprep.mubr.bf16.mxu0 0
      %1039 = vmatmul.mubr.bf16.gmra.mrb[0].mxu0 %v1004
      %v1040 = vpop.f32.mrb[0].mxu0
      %v1041 = vadd.f32 %v989, %v1040
      %v1042 = vpop.f32.mrb[0].mxu0
      %v1043 = vpop.f32.mrb[0].mxu0
      %v1044 = vadd.f32 %v989, %v1043
      %v1045 = vpop.f32.mrb[0].mxu0
      %1046 = vdwg.mxu0
      %1047 = vst.msk [vmem:[%s446] sm:$0xff] %vm513, %v1041
      %1048 = vst.msk [vmem:[%s446 + $0x8] sm:$0xff] %vm513, %v1044
      %p1049 = scmp.lt.s32.totalorder %s22, 1
      %s1050 = scalar_select %p1049, %s22, 1
      %s1051 = smul.addr %s1050, 2
      %s1052 = smul.addr %s1051, 8
      %s1053 = scalar_lea.vmem %s11, %s1052
      // Predicated region
      $region65: #{audionet_forward.12} parent=63 // pred_check
        %p1054 = pneg %p291
      $region66: #{audionet_forward.12} parent=63 // pred_check_branch
        %1056 = sbr.rel (%p1054) target = $region68
      $region67: #{audionet_forward.12} parent=63 // pred_region
        _
      $region68: #{audionet_forward.12} parent=63 // pred_fallthru
        _
    $region64: #{audionet_forward.12} parent=5 // pred_fallthru
      _
    %p1057 = scmp.le.s32.totalorder 2, %s17
    // Predicated region
    $region69: #{audionet_forward.12} parent=5 // pred_check
      %p1058 = pneg %p1057
    $region70: #{audionet_forward.12} parent=5 // pred_check_branch
      %1060 = sbr.rel (%p1058) target = $region72
    $region71: #{audionet_forward.12} parent=5 // pred_region
      %s1061 = ssub.s32 %s17, 2
      // Predicated region
      $region73: #{audionet_forward.12} parent=71 // pred_check
        %p1062 = pneg %p297
      $region74: #{audionet_forward.12} parent=71 // pred_check_branch
        %1064 = sbr.rel (%p1062) target = $region76
      $region75: #{audionet_forward.12} parent=71 // pred_region
        %p1065 = scmp.lt.s32.totalorder %s23, 1
        %s1066 = scalar_select %p1065, %s23, 1
        %s1067 = smul.addr %s1066, 2
        %s1068 = smul.addr %s1067, 8
        %s1069 = scalar_lea.vmem %s11, %s1068
      $region76: #{audionet_forward.12} parent=71 // pred_fallthru
        _
    $region72: #{audionet_forward.12} parent=5 // pred_fallthru
      _
  $region6: #{audionet_forward.12} parent=0 // loop_footer
    %s21 = sadd.s32 1, %s17
  $region7: #{audionet_forward.12} parent=0 // loop_footer_branch
    %16 = sbr.rel target = $region3
  $region8: #{audionet_forward.12} parent=0 // loop_exit
    _

// kernel: audionet_forward.15
$region0: #{audionet_forward.15}
  #allocation0 [shape = 'u32[]', space=smem, size = 0x4, offset = 0x4, fixed_abs, tag = 'smem constant byte address 0x4 - core index']
  #allocation1 [shape = 'u32[144,128]{1,0:T(1,128)}', space=vmem, size = 0x12000, scoped, tag = 'internal scratch']
  #allocation2 [shape = 'f32[15,128]{1,0:T(8,128)}', space=vmem, size = 0x2000, scoped, tag = 'scratch operand']
  %s0 = inlined_call_operand.vmem [shape: f32[2,4,64], index: 0, kind: input, shape index: {}]
  %s1 = inlined_call_operand.vmem [shape: f32[9,4,1], index: 1, kind: input, shape index: {}]
  %s2 = inlined_call_operand.vmem [shape: bf16[64,128], index: 2, kind: input, shape index: {}]
  %s3 = inlined_call_operand.vmem [shape: f32[1,128], index: 3, kind: input, shape index: {}]
  %s4 = inlined_call_operand.vmem [shape: f32[9,1,128], index: 4, kind: input, shape index: {}]
  %s5 = inlined_call_operand.vmem [shape: f32[1,128], index: 5, kind: input, shape index: {}]
  %s6 = inlined_call_operand.vmem [shape: bf16[128,64], index: 6, kind: input, shape index: {}]
  %s7 = inlined_call_operand.vmem [shape: f32[1,64], index: 7, kind: input, shape index: {}]
  %s8 = inlined_call_operand.vmem [shape: f32[2,4,64], index: 8, kind: output, shape index: {}]
  %s9 = sld [smem:[#allocation0]]
  $region65: #{audionet_forward.15} parent=0
    _
  %s11 = ssub.s32 1, %s9
  %s12 = scalar_select 0, %s11, %s9
  loop: start=0, step=1, limit=4
  $region2: #{audionet_forward.15} parent=0 // loop_pre_header
    _
  $region3: #{audionet_forward.15} parent=0 // loop_header
    %s14 = sphi 0, %s18
    %p15 = scmp.ge.s32.totalorder %s14, 4
    %s24 = sphi 0, %s26
    %s27 = sphi 0, %s24
    %s28 = sphi 0, %s27
    %s44 = sphi 0, %s28
    %s48 = sphi 0, %s48
    %s50 = sphi 0, %s48
    %s51 = sphi 0, %s50
    %s65 = sphi 0, %s51
    %s69 = sphi 0, %s69
    %s71 = sphi 0, %s69
    %s72 = sphi 0, %s71
    %s86 = sphi 0, %s72
    %s90 = sphi 0, %s90
    %s92 = sphi 0, %s90
    %s93 = sphi 0, %s92
    %s107 = sphi 0, %s93
    %s111 = sphi 0, %s111
    %s113 = sphi 0, %s111
    %s114 = sphi 0, %s113
    %s128 = sphi 0, %s114
    %s132 = sphi 0, %s132
    %s134 = sphi 0, %s132
    %s135 = sphi 0, %s134
    %s149 = sphi 0, %s135
    %s153 = sphi 0, %s153
    %s155 = sphi 0, %s153
    %s156 = sphi 0, %s155
    %s170 = sphi 0, %s156
    %s174 = sphi 0, %s174
    %s176 = sphi 0, %s174
    %s177 = sphi 0, %s176
    %s191 = sphi 0, %s177
    %s197 = sphi 0, %s199
    %s200 = sphi 0, %s197
    %s201 = sphi 0, %s200
    %s217 = sphi 0, %s201
  $region4: #{audionet_forward.15} parent=0 // loop_header_branch
    %17 = sbr.rel (%p15) target = $region8
  $region5: #{audionet_forward.15} parent=0 // loop_body
    %s19 = ssub.s32 %s14, 1
    %s20 = ssub.s32 %s14, 2
    %s21 = sadd.s32 %s14, 1
    %s22 = ssub.s32 %s14, %s21
    %p23 = scmp.eq.s32.totalorder %s22, 0
    %s25 = sadd.s32 %s24, 1
    %s26 = scalar_select %p23, %s24, %s25
    %p29 = pneg %p23
    %p30 = scmp.eq.s32.totalorder %s14, 1
    %p31 = por %p29, %p30
    %p32 = scmp.ne.s32.totalorder %s24, %s27
    %p33 = scmp.eq.s32.totalorder %s14, 0
    %p34 = por %p32, %p33
    %p35 = scmp.ne.s32.totalorder %s24, %s27
    %p36 = scmp.eq.s32.totalorder %s19, 1
    %p37 = por %p35, %p36
    %p38 = scmp.ne.s32.totalorder %s27, %s28
    %p39 = scmp.eq.s32.totalorder %s19, 0
    %p40 = por %p38, %p39
    %p41 = scmp.ne.s32.totalorder %s27, %s28
    %p42 = scmp.eq.s32.totalorder %s20, 1
    %p43 = por %p41, %p42
    %p45 = scmp.ne.s32.totalorder %s28, %s44
    %p46 = scmp.eq.s32.totalorder %s20, 0
    %p47 = por %p45, %p46
    %s49 = sadd.s32 %s48, 1
    %p52 = scmp.eq.s32.totalorder %s14, 1
    %p53 = scmp.ne.s32.totalorder %s48, %s50
    %p54 = scmp.eq.s32.totalorder %s14, 0
    %p55 = por %p53, %p54
    %p56 = scmp.ne.s32.totalorder %s48, %s50
    %p57 = scmp.eq.s32.totalorder %s19, 1
    %p58 = por %p56, %p57
    %p59 = scmp.ne.s32.totalorder %s50, %s51
    %p60 = scmp.eq.s32.totalorder %s19, 0
    %p61 = por %p59, %p60
    %p62 = scmp.ne.s32.totalorder %s50, %s51
    %p63 = scmp.eq.s32.totalorder %s20, 1
    %p64 = por %p62, %p63
    %p66 = scmp.ne.s32.totalorder %s51, %s65
    %p67 = scmp.eq.s32.totalorder %s20, 0
    %p68 = por %p66, %p67
    %s70 = sadd.s32 %s69, 1
    %p73 = scmp.eq.s32.totalorder %s14, 1
    %p74 = scmp.ne.s32.totalorder %s69, %s71
    %p75 = scmp.eq.s32.totalorder %s14, 0
    %p76 = por %p74, %p75
    %p77 = scmp.ne.s32.totalorder %s69, %s71
    %p78 = scmp.eq.s32.totalorder %s19, 1
    %p79 = por %p77, %p78
    %p80 = scmp.ne.s32.totalorder %s71, %s72
    %p81 = scmp.eq.s32.totalorder %s19, 0
    %p82 = por %p80, %p81
    %p83 = scmp.ne.s32.totalorder %s71, %s72
    %p84 = scmp.eq.s32.totalorder %s20, 1
    %p85 = por %p83, %p84
    %p87 = scmp.ne.s32.totalorder %s72, %s86
    %p88 = scmp.eq.s32.totalorder %s20, 0
    %p89 = por %p87, %p88
    %s91 = sadd.s32 %s90, 1
    %p94 = scmp.eq.s32.totalorder %s14, 1
    %p95 = scmp.ne.s32.totalorder %s90, %s92
    %p96 = scmp.eq.s32.totalorder %s14, 0
    %p97 = por %p95, %p96
    %p98 = scmp.ne.s32.totalorder %s90, %s92
    %p99 = scmp.eq.s32.totalorder %s19, 1
    %p100 = por %p98, %p99
    %p101 = scmp.ne.s32.totalorder %s92, %s93
    %p102 = scmp.eq.s32.totalorder %s19, 0
    %p103 = por %p101, %p102
    %p104 = scmp.ne.s32.totalorder %s92, %s93
    %p105 = scmp.eq.s32.totalorder %s20, 1
    %p106 = por %p104, %p105
    %p108 = scmp.ne.s32.totalorder %s93, %s107
    %p109 = scmp.eq.s32.totalorder %s20, 0
    %p110 = por %p108, %p109
    %s112 = sadd.s32 %s111, 1
    %p115 = scmp.eq.s32.totalorder %s14, 1
    %p116 = scmp.ne.s32.totalorder %s111, %s113
    %p117 = scmp.eq.s32.totalorder %s14, 0
    %p118 = por %p116, %p117
    %p119 = scmp.ne.s32.totalorder %s111, %s113
    %p120 = scmp.eq.s32.totalorder %s19, 1
    %p121 = por %p119, %p120
    %p122 = scmp.ne.s32.totalorder %s113, %s114
    %p123 = scmp.eq.s32.totalorder %s19, 0
    %p124 = por %p122, %p123
    %p125 = scmp.ne.s32.totalorder %s113, %s114
    %p126 = scmp.eq.s32.totalorder %s20, 1
    %p127 = por %p125, %p126
    %p129 = scmp.ne.s32.totalorder %s114, %s128
    %p130 = scmp.eq.s32.totalorder %s20, 0
    %p131 = por %p129, %p130
    %s133 = sadd.s32 %s132, 1
    %p136 = scmp.eq.s32.totalorder %s14, 1
    %p137 = scmp.ne.s32.totalorder %s132, %s134
    %p138 = scmp.eq.s32.totalorder %s14, 0
    %p139 = por %p137, %p138
    %p140 = scmp.ne.s32.totalorder %s132, %s134
    %p141 = scmp.eq.s32.totalorder %s19, 1
    %p142 = por %p140, %p141
    %p143 = scmp.ne.s32.totalorder %s134, %s135
    %p144 = scmp.eq.s32.totalorder %s19, 0
    %p145 = por %p143, %p144
    %p146 = scmp.ne.s32.totalorder %s134, %s135
    %p147 = scmp.eq.s32.totalorder %s20, 1
    %p148 = por %p146, %p147
    %p150 = scmp.ne.s32.totalorder %s135, %s149
    %p151 = scmp.eq.s32.totalorder %s20, 0
    %p152 = por %p150, %p151
    %s154 = sadd.s32 %s153, 1
    %p157 = scmp.eq.s32.totalorder %s14, 1
    %p158 = scmp.ne.s32.totalorder %s153, %s155
    %p159 = scmp.eq.s32.totalorder %s14, 0
    %p160 = por %p158, %p159
    %p161 = scmp.ne.s32.totalorder %s153, %s155
    %p162 = scmp.eq.s32.totalorder %s19, 1
    %p163 = por %p161, %p162
    %p164 = scmp.ne.s32.totalorder %s155, %s156
    %p165 = scmp.eq.s32.totalorder %s19, 0
    %p166 = por %p164, %p165
    %p167 = scmp.ne.s32.totalorder %s155, %s156
    %p168 = scmp.eq.s32.totalorder %s20, 1
    %p169 = por %p167, %p168
    %p171 = scmp.ne.s32.totalorder %s156, %s170
    %p172 = scmp.eq.s32.totalorder %s20, 0
    %p173 = por %p171, %p172
    %s175 = sadd.s32 %s174, 1
    %p178 = scmp.eq.s32.totalorder %s14, 1
    %p179 = scmp.ne.s32.totalorder %s174, %s176
    %p180 = scmp.eq.s32.totalorder %s14, 0
    %p181 = por %p179, %p180
    %p182 = scmp.ne.s32.totalorder %s174, %s176
    %p183 = scmp.eq.s32.totalorder %s19, 1
    %p184 = por %p182, %p183
    %p185 = scmp.ne.s32.totalorder %s176, %s177
    %p186 = scmp.eq.s32.totalorder %s19, 0
    %p187 = por %p185, %p186
    %p188 = scmp.ne.s32.totalorder %s176, %s177
    %p189 = scmp.eq.s32.totalorder %s20, 1
    %p190 = por %p188, %p189
    %p192 = scmp.ne.s32.totalorder %s177, %s191
    %p193 = scmp.eq.s32.totalorder %s20, 0
    %p194 = por %p192, %p193
    %s195 = ssub.s32 %s14, %s21
    %p196 = scmp.eq.s32.totalorder %s195, 0
    %s198 = sadd.s32 %s197, 1
    %s199 = scalar_select %p196, %s197, %s198
    %p202 = pneg %p196
    %p203 = scmp.eq.s32.totalorder %s14, 1
    %p204 = por %p202, %p203
    %p205 = scmp.ne.s32.totalorder %s197, %s200
    %p206 = scmp.eq.s32.totalorder %s14, 0
    %p207 = por %p205, %p206
    %p208 = scmp.ne.s32.totalorder %s197, %s200
    %p209 = scmp.eq.s32.totalorder %s19, 1
    %p210 = por %p208, %p209
    %p211 = scmp.ne.s32.totalorder %s200, %s201
    %p212 = scmp.eq.s32.totalorder %s19, 0
    %p213 = por %p211, %p212
    %p214 = scmp.ne.s32.totalorder %s200, %s201
    %p215 = scmp.eq.s32.totalorder %s20, 1
    %p216 = por %p214, %p215
    %p218 = scmp.ne.s32.totalorder %s201, %s217
    %p219 = scmp.eq.s32.totalorder %s20, 0
    %p220 = por %p218, %p219
    %p221 = scmp.le.s32.totalorder 1, %s14
    %p222 = scmp.lt.s32.totalorder %s14, 3
    %p223 = pnand %p221, %p222
    %p224 = pneg %p223
    // Predicated region
    $region9: #{audionet_forward.15} parent=5 // pred_check
      _
    $region10: #{audionet_forward.15} parent=5 // pred_check_branch
      %226 = sbr.rel (%p223) target = $region12
    $region11: #{audionet_forward.15} parent=5 // pred_region
      %s227 = ssub.s32 %s14, 1
      // Predicated region
      $region13: #{audionet_forward.15} parent=11 // pred_check
        %p228 = pneg %p61
      $region14: #{audionet_forward.15} parent=11 // pred_check_branch
        %230 = sbr.rel (%p228) target = $region16
      $region15: #{audionet_forward.15} parent=11 // pred_region
        _
      $region16: #{audionet_forward.15} parent=11 // pred_fallthru
        _
      // Predicated region
      $region17: #{audionet_forward.15} parent=11 // pred_check
        %p231 = pneg %p82
      $region18: #{audionet_forward.15} parent=11 // pred_check_branch
        %233 = sbr.rel (%p231) target = $region20
      $region19: #{audionet_forward.15} parent=11 // pred_region
        _
      $region20: #{audionet_forward.15} parent=11 // pred_fallthru
        _
      // Predicated region
      $region21: #{audionet_forward.15} parent=11 // pred_check
        %p234 = pneg %p103
      $region22: #{audionet_forward.15} parent=11 // pred_check_branch
        %236 = sbr.rel (%p234) target = $region24
      $region23: #{audionet_forward.15} parent=11 // pred_region
        _
      $region24: #{audionet_forward.15} parent=11 // pred_fallthru
        _
      // Predicated region
      $region25: #{audionet_forward.15} parent=11 // pred_check
        %p237 = pneg %p124
      $region26: #{audionet_forward.15} parent=11 // pred_check_branch
        %239 = sbr.rel (%p237) target = $region28
      $region27: #{audionet_forward.15} parent=11 // pred_region
        _
      $region28: #{audionet_forward.15} parent=11 // pred_fallthru
        _
      // Predicated region
      $region29: #{audionet_forward.15} parent=11 // pred_check
        %p240 = pneg %p145
      $region30: #{audionet_forward.15} parent=11 // pred_check_branch
        %242 = sbr.rel (%p240) target = $region32
      $region31: #{audionet_forward.15} parent=11 // pred_region
        _
      $region32: #{audionet_forward.15} parent=11 // pred_fallthru
        _
      // Predicated region
      $region33: #{audionet_forward.15} parent=11 // pred_check
        %p243 = pneg %p166
      $region34: #{audionet_forward.15} parent=11 // pred_check_branch
        %245 = sbr.rel (%p243) target = $region36
      $region35: #{audionet_forward.15} parent=11 // pred_region
        _
      $region36: #{audionet_forward.15} parent=11 // pred_fallthru
        _
      // Predicated region
      $region37: #{audionet_forward.15} parent=11 // pred_check
        %p246 = pneg %p187
      $region38: #{audionet_forward.15} parent=11 // pred_check_branch
        %248 = sbr.rel (%p246) target = $region40
      $region39: #{audionet_forward.15} parent=11 // pred_region
        _
      $region40: #{audionet_forward.15} parent=11 // pred_fallthru
        _
    $region12: #{audionet_forward.15} parent=5 // pred_fallthru
      _
    %p249 = scmp.lt.s32.totalorder %s14, 2
    // Predicated region
    $region41: #{audionet_forward.15} parent=5 // pred_check
      %p250 = pneg %p249
    $region42: #{audionet_forward.15} parent=5 // pred_check_branch
      %252 = sbr.rel (%p250) target = $region44
    $region43: #{audionet_forward.15} parent=5 // pred_region
      // Predicated region
      $region45: #{audionet_forward.15} parent=43 // pred_check
        %p253 = pneg %p34
      $region46: #{audionet_forward.15} parent=43 // pred_check_branch
        %255 = sbr.rel (%p253) target = $region48
      $region47: #{audionet_forward.15} parent=43 // pred_region
        %p256 = scmp.lt.s32.totalorder %s14, 1
        %s257 = scalar_select %p256, %s14, 1
        %s258 = smul.addr %s257, 4
        %s259 = scalar_lea.vmem %s0, %s258
      $region48: #{audionet_forward.15} parent=43 // pred_fallthru
        _
    $region44: #{audionet_forward.15} parent=5 // pred_fallthru
      _
    %p260 = scmp.le.s32.totalorder 1, %s14
    %p261 = scmp.lt.s32.totalorder %s14, 3
    %p262 = pnand %p260, %p261
    %p263 = pneg %p262
    // Predicated region
    $region49: #{audionet_forward.15} parent=5 // pred_check
      _
    $region50: #{audionet_forward.15} parent=5 // pred_check_branch
      %265 = sbr.rel (%p262) target = $region52
    $region51: #{audionet_forward.15} parent=5 // pred_region
      %s266 = ssub.s32 %s14, 1
      %p267 = scmp.lt.s32.totalorder %s19, 1
      %s268 = scalar_select %p267, %s19, 1
      %s269 = smul.addr %s268, 4
      %s270 = scalar_lea.vmem %s0, %s269
      %p271 = pneg %p40
      %p272 = pneg %p37
      %p273 = pneg %p61
      %p274 = pneg %p58
      %p275 = pneg %p82
      %p276 = pneg %p79
      %p277 = pneg %p103
      %p278 = pneg %p100
      %p279 = pneg %p124
      %p280 = pneg %p121
      %p281 = pneg %p145
      %p282 = pneg %p142
      %p283 = pneg %p166
      %p284 = pneg %p163
      %p285 = pneg %p187
      %p286 = pneg %p184
      %p287 = pneg %p213
      %p288 = pneg %p210
      %p289 = scmp.lt.s32.totalorder %s19, 1
      %s290 = scalar_select %p289, %s19, 1
      %s291 = smul.addr %s290, 4
      %s292 = scalar_lea.vmem %s8, %s291
      %p293 = scmp.lt.s32.totalorder %s19, 1
      %s294 = scalar_select %p293, %s19, 1
      %s295 = smul.addr %s294, 4
      %s296 = scalar_lea.vmem %s0, %s295
      %p297 = scmp.lt.s32.totalorder %s19, 1
      %s298 = scalar_select %p297, %s19, 1
      %s299 = smul.addr %s298, 4
      %s300 = scalar_lea.vmem %s8, %s299
      %v302 = vld [vmem:[%s296] sm:$0xf]
      %v303 = vpack.c.bf16 %v302, %v302
      %v304 = vld [vmem:[%s2] sm:$0xf]
      %v305 = vld [vmem:[%s2 + $0x4] sm:$0xf]
      %v306 = vld [vmem:[%s2 + $0x8] sm:$0xf]
      %v307 = vld [vmem:[%s2 + $0xc] sm:$0xf]
      %v308 = vld [vmem:[%s2 + $0x10] sm:$0xf]
      %v309 = vld [vmem:[%s2 + $0x14] sm:$0xf]
      %v310 = vld [vmem:[%s2 + $0x18] sm:$0xf]
      %v311 = vld [vmem:[%s2 + $0x1c] sm:$0xf]
      %v312 = vld [vmem:[%s3] sm:$0x1]
      %v314 = vlaneseq
      %v315 = vshrl.u32 %v314, 7
      %v316 = vsub.s32 0, %v315
      %v317 = vrot.slane %v312, %v316
      %v327 = vunpack.c.l.b16 %v304
      %v328 = vunpack.c.l.b16 %v305
      %v329 = vunpack.c.l.b16 %v306
      %v330 = vunpack.c.l.b16 %v307
      %v331 = vunpack.c.l.b16 %v308
      %v332 = vunpack.c.l.b16 %v309
      %v333 = vunpack.c.l.b16 %v310
      %v334 = vunpack.c.l.b16 %v311
      %v335 = vpack.c.b16 %v328, %v327
      %v336 = vpack.c.b16 %v330, %v329
      %v337 = vpack.c.b16 %v332, %v331
      %v338 = vpack.c.b16 %v334, %v333
      %vm343 = vcmask 523264
      %v345 = vsel %vm343, %v303, 0
      %347 = vmatprep.subr.bf16.mxu0 0
      %348 = vmatpush1.bf16.msra.mxu0 %v335
      %349 = vmatprep.subr.bf16.mxu0 0
      %350 = vmatpush1.bf16.msra.mxu0 %v336
      %351 = vmatprep.subr.bf16.mxu0 0
      %352 = vmatpush1.bf16.msra.mxu0 %v337
      %353 = vmatprep.subr.bf16.mxu0 0
      %354 = vmatpush1.bf16.msra.mxu0 %v338
      %355 = vmatprep.subr.bf16.mxu0 0
      %356 = vmatpush1.bf16.msra.mxu0 0
      %357 = vmatprep.subr.bf16.mxu0 0
      %358 = vmatpush1.bf16.msra.mxu0 0
      %359 = vmatprep.subr.bf16.mxu0 0
      %360 = vmatpush1.bf16.msra.mxu0 0
      %361 = vmatprep.subr.bf16.mxu0 0
      %362 = vmatpush1.bf16.msra.mxu0 0
      %363 = vmatprep.subr.bf16.mxu0 0
      %364 = vmatpush1.bf16.msra.mxu0 0
      %365 = vmatprep.subr.bf16.mxu0 0
      %366 = vmatpush1.bf16.msra.mxu0 0
      %367 = vmatprep.subr.bf16.mxu0 0
      %368 = vmatpush1.bf16.msra.mxu0 0
      %369 = vmatprep.subr.bf16.mxu0 0
      %370 = vmatpush1.bf16.msra.mxu0 0
      %371 = vmatprep.subr.bf16.mxu0 0
      %372 = vmatpush1.bf16.msra.mxu0 0
      %373 = vmatprep.subr.bf16.mxu0 0
      %374 = vmatpush1.bf16.msra.mxu0 0
      %375 = vmatprep.subr.bf16.mxu0 0
      %376 = vmatpush1.bf16.msra.mxu0 0
      %377 = vmatprep.subr.bf16.mxu0 0
      %378 = vmatpush1.bf16.msra.mxu0 0
      %379 = vmatprep.mubr.bf16.mxu0 0
      %380 = vmatmul.mubr.bf16.gmra.mrb[0].mxu0 %v345
      %v381 = vpop.f32.mrb[0].mxu0
      %v382 = vadd.f32 %v317, %v381
      %v383 = vpop.f32.mrb[0].mxu0
      %v384 = vpop.f32.mrb[0].mxu0
      %v385 = vpop.f32.mrb[0].mxu0
      %386 = vdwg.mxu0
      %v387 = vmax.f32 %v382, 0.0
      %388 = vst [vmem:[#allocation2] sm:$0xff] 0.0
      %389 = vst [vmem:[#allocation2 + $0x8] sm:$0x7f] 0.0
      %390 = vst [vmem:[#allocation2 + $0x8] sm:$0xf] %v387
      %v391 = vld [vmem:[#allocation2 + $0x5] sm:$0xf]
      %v392 = vld [vmem:[%s4] sm:$0x1]
      %v394 = vlaneseq
      %v395 = vshrl.u32 %v394, 7
      %v396 = vsub.s32 0, %v395
      %v397 = vrot.slane %v392, %v396
      %v399 = vmul.f32 %v391, %v397
      %v400 = vld [vmem:[%s1] sm:$0xf]
      %402 = vset.pattern.permute.xlu0 0
      %403 = vperm.xlu0 %402, %v400
      %v404 = vpop.permute.xlu0 %403
      %v406 = vmul.f32 %v399, %v404
      %v407 = vld [vmem:[#allocation2 + $0x6] sm:$0xf]
      %s408 = scalar_lea.vmem %s4, 1
      %v409 = vld [vmem:[%s408] sm:$0x1]
      %v411 = vlaneseq
      %v412 = vshrl.u32 %v411, 7
      %v413 = vsub.s32 0, %v412
      %v414 = vrot.slane %v409, %v413
      %v416 = vmul.f32 %v407, %v414
      %s417 = scalar_lea.vmem %s1, 4
      %v418 = vld [vmem:[%s417] sm:$0xf]
      %420 = vset.pattern.permute.xlu0 0
      %421 = vperm.xlu0 %420, %v418
      %v422 = vpop.permute.xlu0 %421
      %v424 = vmul.f32 %v416, %v422
      %v425 = vld [vmem:[#allocation2 + $0x7] sm:$0xf]
      %s426 = scalar_lea.vmem %s4, 2
      %v427 = vld [vmem:[%s426] sm:$0x1]
      %v429 = vlaneseq
      %v430 = vshrl.u32 %v429, 7
      %v431 = vsub.s32 0, %v430
      %v432 = vrot.slane %v427, %v431
      %v434 = vmul.f32 %v425, %v432
      %s435 = scalar_lea.vmem %s1, 8
      %v436 = vld [vmem:[%s435] sm:$0xf]
      %438 = vset.pattern.permute.xlu0 0
      %439 = vperm.xlu0 %438, %v436
      %v440 = vpop.permute.xlu0 %439
      %v442 = vmul.f32 %v434, %v440
      %s443 = scalar_lea.vmem %s4, 3
      %v444 = vld [vmem:[%s443] sm:$0x1]
      %v446 = vlaneseq
      %v447 = vshrl.u32 %v446, 7
      %v448 = vsub.s32 0, %v447
      %v449 = vrot.slane %v444, %v448
      %v451 = vmul.f32 %v425, %v449
      %s452 = scalar_lea.vmem %s1, 12
      %v453 = vld [vmem:[%s452] sm:$0xf]
      %455 = vset.pattern.permute.xlu0 0
      %456 = vperm.xlu0 %455, %v453
      %v457 = vpop.permute.xlu0 %456
      %v459 = vmul.f32 %v451, %v457
      %v460 = vld [vmem:[#allocation2 + $0x8] sm:$0xf]
      %s461 = scalar_lea.vmem %s4, 4
      %v462 = vld [vmem:[%s461] sm:$0x1]
      %v464 = vlaneseq
      %v465 = vshrl.u32 %v464, 7
      %v466 = vsub.s32 0, %v465
      %v467 = vrot.slane %v462, %v466
      %v469 = vmul.f32 %v460, %v467
      %v470 = vld [vmem:[#allocation2 + $0x9] sm:$0xf]
      %s471 = scalar_lea.vmem %s4, 5
      %v472 = vld [vmem:[%s471] sm:$0x1]
      %v474 = vlaneseq
      %v475 = vshrl.u32 %v474, 7
      %v476 = vsub.s32 0, %v475
      %v477 = vrot.slane %v472, %v476
      %v479 = vmul.f32 %v470, %v477
      %s480 = scalar_lea.vmem %s1, 20
      %v481 = vld [vmem:[%s480] sm:$0xf]
      %483 = vset.pattern.permute.xlu0 0
      %484 = vperm.xlu0 %483, %v481
      %v485 = vpop.permute.xlu0 %484
      %v487 = vmul.f32 %v479, %v485
      %s488 = scalar_lea.vmem %s4, 6
      %v489 = vld [vmem:[%s488] sm:$0x1]
      %v491 = vlaneseq
      %v492 = vshrl.u32 %v491, 7
      %v493 = vsub.s32 0, %v492
      %v494 = vrot.slane %v489, %v493
      %v496 = vmul.f32 %v470, %v494
      %s497 = scalar_lea.vmem %s1, 24
      %v498 = vld [vmem:[%s497] sm:$0xf]
      %500 = vset.pattern.permute.xlu0 0
      %501 = vperm.xlu0 %500, %v498
      %v502 = vpop.permute.xlu0 %501
      %v504 = vmul.f32 %v496, %v502
      %v505 = vld [vmem:[#allocation2 + $0xa] sm:$0xf]
      %s506 = scalar_lea.vmem %s4, 7
      %v507 = vld [vmem:[%s506] sm:$0x1]
      %v509 = vlaneseq
      %v510 = vshrl.u32 %v509, 7
      %v511 = vsub.s32 0, %v510
      %v512 = vrot.slane %v507, %v511
      %v514 = vmul.f32 %v505, %v512
      %s515 = scalar_lea.vmem %s1, 28
      %v516 = vld [vmem:[%s515] sm:$0xf]
      %518 = vset.pattern.permute.xlu0 0
      %519 = vperm.xlu0 %518, %v516
      %v520 = vpop.permute.xlu0 %519
      %v522 = vmul.f32 %v514, %v520
      %v523 = vld [vmem:[#allocation2 + $0xb] sm:$0xf]
      %s524 = scalar_lea.vmem %s4, 8
      %v525 = vld [vmem:[%s524] sm:$0x1]
      %v527 = vlaneseq
      %v528 = vshrl.u32 %v527, 7
      %v529 = vsub.s32 0, %v528
      %v530 = vrot.slane %v525, %v529
      %v532 = vmul.f32 %v523, %v530
      %s533 = scalar_lea.vmem %s1, 32
      %v534 = vld [vmem:[%s533] sm:$0xf]
      %536 = vset.pattern.permute.xlu0 0
      %537 = vperm.xlu0 %536, %v534
      %v538 = vpop.permute.xlu0 %537
      %v540 = vmul.f32 %v532, %v538
      %v541 = vadd.f32 %v406, %v424
      %v542 = vadd.f32 %v541, %v442
      %v543 = vadd.f32 %v459, %v469
      %v544 = vadd.f32 %v543, %v487
      %v545 = vadd.f32 %v542, %v544
      %v546 = vadd.f32 %v504, %v522
      %v547 = vadd.f32 %v546, %v540
      %v548 = vadd.f32 %v545, %v547
      %v549 = vld [vmem:[%s5] sm:$0x1]
      %v551 = vlaneseq
      %v552 = vshrl.u32 %v551, 7
      %v553 = vsub.s32 0, %v552
      %v554 = vrot.slane %v549, %v553
      %v556 = vadd.f32 %v548, %v554
      %v557 = vmax.f32 %v556, 0.0
      %v558 = vpack.c.bf16 %v557, %v557
      %v559 = vld [vmem:[%s6] sm:$0xf]
      %v560 = vld [vmem:[%s6 + $0x4] sm:$0xf]
      %v561 = vld [vmem:[%s6 + $0x8] sm:$0xf]
      %v562 = vld [vmem:[%s6 + $0xc] sm:$0xf]
      %v563 = vld [vmem:[%s6 + $0x10] sm:$0xf]
      %v564 = vld [vmem:[%s6 + $0x14] sm:$0xf]
      %v565 = vld [vmem:[%s6 + $0x18] sm:$0xf]
      %v566 = vld [vmem:[%s6 + $0x1c] sm:$0xf]
      %v567 = vld [vmem:[%s6 + $0x20] sm:$0xf]
      %v568 = vld [vmem:[%s6 + $0x24] sm:$0xf]
      %v569 = vld [vmem:[%s6 + $0x28] sm:$0xf]
      %v570 = vld [vmem:[%s6 + $0x2c] sm:$0xf]
      %v571 = vld [vmem:[%s6 + $0x30] sm:$0xf]
      %v572 = vld [vmem:[%s6 + $0x34] sm:$0xf]
      %v573 = vld [vmem:[%s6 + $0x38] sm:$0xf]
      %v574 = vld [vmem:[%s6 + $0x3c] sm:$0xf]
      %v575 = vld [vmem:[%s7] sm:$0x1]
      %v577 = vlaneseq
      %v578 = vshrl.u32 %v577, 7
      %v579 = vsub.s32 0, %v578
      %v580 = vrot.slane %v575, %v579
      %v598 = vunpack.c.l.b16 %v559
      %v599 = vunpack.c.l.b16 %v560
      %v600 = vunpack.c.l.b16 %v561
      %v601 = vunpack.c.l.b16 %v562
      %v602 = vunpack.c.l.b16 %v563
      %v603 = vunpack.c.l.b16 %v564
      %v604 = vunpack.c.l.b16 %v565
      %v605 = vunpack.c.l.b16 %v566
      %v606 = vunpack.c.l.b16 %v567
      %v607 = vunpack.c.l.b16 %v568
      %v608 = vunpack.c.l.b16 %v569
      %v609 = vunpack.c.l.b16 %v570
      %v610 = vunpack.c.l.b16 %v571
      %v611 = vunpack.c.l.b16 %v572
      %v612 = vunpack.c.l.b16 %v573
      %v613 = vunpack.c.l.b16 %v574
      %v614 = vpack.c.b16 %v599, %v598
      %v615 = vpack.c.b16 %v601, %v600
      %v616 = vpack.c.b16 %v603, %v602
      %v617 = vpack.c.b16 %v605, %v604
      %v618 = vpack.c.b16 %v607, %v606
      %v619 = vpack.c.b16 %v609, %v608
      %v620 = vpack.c.b16 %v611, %v610
      %v621 = vpack.c.b16 %v613, %v612
      %630 = vmatprep.subr.bf16.mxu0 0
      %631 = vmatpush1.bf16.msra.mxu0 %v614
      %632 = vmatprep.subr.bf16.mxu0 0
      %633 = vmatpush1.bf16.msra.mxu0 %v615
      %634 = vmatprep.subr.bf16.mxu0 0
      %635 = vmatpush1.bf16.msra.mxu0 %v616
      %636 = vmatprep.subr.bf16.mxu0 0
      %637 = vmatpush1.bf16.msra.mxu0 %v617
      %638 = vmatprep.subr.bf16.mxu0 0
      %639 = vmatpush1.bf16.msra.mxu0 %v618
      %640 = vmatprep.subr.bf16.mxu0 0
      %641 = vmatpush1.bf16.msra.mxu0 %v619
      %642 = vmatprep.subr.bf16.mxu0 0
      %643 = vmatpush1.bf16.msra.mxu0 %v620
      %644 = vmatprep.subr.bf16.mxu0 0
      %645 = vmatpush1.bf16.msra.mxu0 %v621
      %646 = vmatprep.subr.bf16.mxu0 0
      %647 = vmatpush1.bf16.msra.mxu0 0
      %648 = vmatprep.subr.bf16.mxu0 0
      %649 = vmatpush1.bf16.msra.mxu0 0
      %650 = vmatprep.subr.bf16.mxu0 0
      %651 = vmatpush1.bf16.msra.mxu0 0
      %652 = vmatprep.subr.bf16.mxu0 0
      %653 = vmatpush1.bf16.msra.mxu0 0
      %654 = vmatprep.subr.bf16.mxu0 0
      %655 = vmatpush1.bf16.msra.mxu0 0
      %656 = vmatprep.subr.bf16.mxu0 0
      %657 = vmatpush1.bf16.msra.mxu0 0
      %658 = vmatprep.subr.bf16.mxu0 0
      %659 = vmatpush1.bf16.msra.mxu0 0
      %660 = vmatprep.subr.bf16.mxu0 0
      %661 = vmatpush1.bf16.msra.mxu0 0
      %662 = vmatprep.mubr.bf16.mxu0 0
      %663 = vmatmul.mubr.bf16.gmra.mrb[0].mxu0 %v558
      %v664 = vpop.f32.mrb[0].mxu0
      %v665 = vadd.f32 %v580, %v664
      %v666 = vpop.f32.mrb[0].mxu0
      %v667 = vpop.f32.mrb[0].mxu0
      %v668 = vpop.f32.mrb[0].mxu0
      %669 = vdwg.mxu0
      %v670 = vadd.f32 %v665, %v302
      %vm671 = vcmask 519168
      %672 = vst.msk [vmem:[%s300] sm:$0xf] %vm671, %v670
      %p673 = scmp.lt.s32.totalorder %s19, 1
      %s674 = scalar_select %p673, %s19, 1
      %s675 = smul.addr %s674, 4
      %s676 = scalar_lea.vmem %s8, %s675
      // Predicated region
      $region53: #{audionet_forward.15} parent=51 // pred_check
        %p677 = pneg %p210
      $region54: #{audionet_forward.15} parent=51 // pred_check_branch
        %679 = sbr.rel (%p677) target = $region56
      $region55: #{audionet_forward.15} parent=51 // pred_region
        _
      $region56: #{audionet_forward.15} parent=51 // pred_fallthru
        _
    $region52: #{audionet_forward.15} parent=5 // pred_fallthru
      _
    %p680 = scmp.le.s32.totalorder 2, %s14
    // Predicated region
    $region57: #{audionet_forward.15} parent=5 // pred_check
      %p681 = pneg %p680
    $region58: #{audionet_forward.15} parent=5 // pred_check_branch
      %683 = sbr.rel (%p681) target = $region60
    $region59: #{audionet_forward.15} parent=5 // pred_region
      %s684 = ssub.s32 %s14, 2
      // Predicated region
      $region61: #{audionet_forward.15} parent=59 // pred_check
        %p685 = pneg %p216
      $region62: #{audionet_forward.15} parent=59 // pred_check_branch
        %687 = sbr.rel (%p685) target = $region64
      $region63: #{audionet_forward.15} parent=59 // pred_region
        %p688 = scmp.lt.s32.totalorder %s20, 1
        %s689 = scalar_select %p688, %s20, 1
        %s690 = smul.addr %s689, 4
        %s691 = scalar_lea.vmem %s8, %s690
      $region64: #{audionet_forward.15} parent=59 // pred_fallthru
        _
    $region60: #{audionet_forward.15} parent=5 // pred_fallthru
      _
  $region6: #{audionet_forward.15} parent=0 // loop_footer
    %s18 = sadd.s32 1, %s14
  $region7: #{audionet_forward.15} parent=0 // loop_footer_branch
    %13 = sbr.rel target = $region3
  $region8: #{audionet_forward.15} parent=0 // loop_exit
    _

// kernel: audionet_forward.16
$region0: #{audionet_forward.16}
  #allocation0 [shape = 'u32[]', space=smem, size = 0x4, offset = 0x4, fixed_abs, tag = 'smem constant byte address 0x4 - core index']
  #allocation1 [shape = 'u32[144,128]{1,0:T(1,128)}', space=vmem, size = 0x12000, scoped, tag = 'internal scratch']
  #allocation2 [shape = 'f32[15,64]{1,0:T(8,128)}', space=vmem, size = 0x2000, scoped, tag = 'scratch operand']
  %s0 = inlined_call_operand.vmem [shape: f32[2,4,64], index: 0, kind: input, shape index: {}]
  %s1 = inlined_call_operand.vmem [shape: f32[9,4,1], index: 1, kind: input, shape index: {}]
  %s2 = inlined_call_operand.vmem [shape: bf16[8,128], index: 2, kind: input, shape index: {}]
  %s3 = inlined_call_operand.vmem [shape: f32[1,128], index: 3, kind: input, shape index: {}]
  %s4 = inlined_call_operand.vmem [shape: f32[9,1,64], index: 4, kind: input, shape index: {}]
  %s5 = inlined_call_operand.vmem [shape: f32[1,64], index: 5, kind: input, shape index: {}]
  %s6 = inlined_call_operand.vmem [shape: bf16[64,128], index: 6, kind: input, shape index: {}]
  %s7 = inlined_call_operand.vmem [shape: f32[1,128], index: 7, kind: input, shape index: {}]
  %s8 = inlined_call_operand.vmem [shape: f32[2,4,128], index: 8, kind: output, shape index: {}]
  %s9 = sld [smem:[#allocation0]]
  $region65: #{audionet_forward.16} parent=0
    _
  %s11 = ssub.s32 1, %s9
  %s12 = scalar_select 0, %s11, %s9
  loop: start=0, step=1, limit=4
  $region2: #{audionet_forward.16} parent=0 // loop_pre_header
    _
  $region3: #{audionet_forward.16} parent=0 // loop_header
    %s14 = sphi 0, %s18
    %p15 = scmp.ge.s32.totalorder %s14, 4
    %s24 = sphi 0, %s26
    %s27 = sphi 0, %s24
    %s28 = sphi 0, %s27
    %s44 = sphi 0, %s28
    %s48 = sphi 0, %s48
    %s50 = sphi 0, %s48
    %s51 = sphi 0, %s50
    %s65 = sphi 0, %s51
    %s69 = sphi 0, %s69
    %s71 = sphi 0, %s69
    %s72 = sphi 0, %s71
    %s86 = sphi 0, %s72
    %s90 = sphi 0, %s90
    %s92 = sphi 0, %s90
    %s93 = sphi 0, %s92
    %s107 = sphi 0, %s93
    %s111 = sphi 0, %s111
    %s113 = sphi 0, %s111
    %s114 = sphi 0, %s113
    %s128 = sphi 0, %s114
    %s132 = sphi 0, %s132
    %s134 = sphi 0, %s132
    %s135 = sphi 0, %s134
    %s149 = sphi 0, %s135
    %s153 = sphi 0, %s153
    %s155 = sphi 0, %s153
    %s156 = sphi 0, %s155
    %s170 = sphi 0, %s156
    %s174 = sphi 0, %s174
    %s176 = sphi 0, %s174
    %s177 = sphi 0, %s176
    %s191 = sphi 0, %s177
    %s197 = sphi 0, %s199
    %s200 = sphi 0, %s197
    %s201 = sphi 0, %s200
    %s217 = sphi 0, %s201
  $region4: #{audionet_forward.16} parent=0 // loop_header_branch
    %17 = sbr.rel (%p15) target = $region8
  $region5: #{audionet_forward.16} parent=0 // loop_body
    %s19 = ssub.s32 %s14, 1
    %s20 = ssub.s32 %s14, 2
    %s21 = sadd.s32 %s14, 1
    %s22 = ssub.s32 %s14, %s21
    %p23 = scmp.eq.s32.totalorder %s22, 0
    %s25 = sadd.s32 %s24, 1
    %s26 = scalar_select %p23, %s24, %s25
    %p29 = pneg %p23
    %p30 = scmp.eq.s32.totalorder %s14, 1
    %p31 = por %p29, %p30
    %p32 = scmp.ne.s32.totalorder %s24, %s27
    %p33 = scmp.eq.s32.totalorder %s14, 0
    %p34 = por %p32, %p33
    %p35 = scmp.ne.s32.totalorder %s24, %s27
    %p36 = scmp.eq.s32.totalorder %s19, 1
    %p37 = por %p35, %p36
    %p38 = scmp.ne.s32.totalorder %s27, %s28
    %p39 = scmp.eq.s32.totalorder %s19, 0
    %p40 = por %p38, %p39
    %p41 = scmp.ne.s32.totalorder %s27, %s28
    %p42 = scmp.eq.s32.totalorder %s20, 1
    %p43 = por %p41, %p42
    %p45 = scmp.ne.s32.totalorder %s28, %s44
    %p46 = scmp.eq.s32.totalorder %s20, 0
    %p47 = por %p45, %p46
    %s49 = sadd.s32 %s48, 1
    %p52 = scmp.eq.s32.totalorder %s14, 1
    %p53 = scmp.ne.s32.totalorder %s48, %s50
    %p54 = scmp.eq.s32.totalorder %s14, 0
    %p55 = por %p53, %p54
    %p56 = scmp.ne.s32.totalorder %s48, %s50
    %p57 = scmp.eq.s32.totalorder %s19, 1
    %p58 = por %p56, %p57
    %p59 = scmp.ne.s32.totalorder %s50, %s51
    %p60 = scmp.eq.s32.totalorder %s19, 0
    %p61 = por %p59, %p60
    %p62 = scmp.ne.s32.totalorder %s50, %s51
    %p63 = scmp.eq.s32.totalorder %s20, 1
    %p64 = por %p62, %p63
    %p66 = scmp.ne.s32.totalorder %s51, %s65
    %p67 = scmp.eq.s32.totalorder %s20, 0
    %p68 = por %p66, %p67
    %s70 = sadd.s32 %s69, 1
    %p73 = scmp.eq.s32.totalorder %s14, 1
    %p74 = scmp.ne.s32.totalorder %s69, %s71
    %p75 = scmp.eq.s32.totalorder %s14, 0
    %p76 = por %p74, %p75
    %p77 = scmp.ne.s32.totalorder %s69, %s71
    %p78 = scmp.eq.s32.totalorder %s19, 1
    %p79 = por %p77, %p78
    %p80 = scmp.ne.s32.totalorder %s71, %s72
    %p81 = scmp.eq.s32.totalorder %s19, 0
    %p82 = por %p80, %p81
    %p83 = scmp.ne.s32.totalorder %s71, %s72
    %p84 = scmp.eq.s32.totalorder %s20, 1
    %p85 = por %p83, %p84
    %p87 = scmp.ne.s32.totalorder %s72, %s86
    %p88 = scmp.eq.s32.totalorder %s20, 0
    %p89 = por %p87, %p88
    %s91 = sadd.s32 %s90, 1
    %p94 = scmp.eq.s32.totalorder %s14, 1
    %p95 = scmp.ne.s32.totalorder %s90, %s92
    %p96 = scmp.eq.s32.totalorder %s14, 0
    %p97 = por %p95, %p96
    %p98 = scmp.ne.s32.totalorder %s90, %s92
    %p99 = scmp.eq.s32.totalorder %s19, 1
    %p100 = por %p98, %p99
    %p101 = scmp.ne.s32.totalorder %s92, %s93
    %p102 = scmp.eq.s32.totalorder %s19, 0
    %p103 = por %p101, %p102
    %p104 = scmp.ne.s32.totalorder %s92, %s93
    %p105 = scmp.eq.s32.totalorder %s20, 1
    %p106 = por %p104, %p105
    %p108 = scmp.ne.s32.totalorder %s93, %s107
    %p109 = scmp.eq.s32.totalorder %s20, 0
    %p110 = por %p108, %p109
    %s112 = sadd.s32 %s111, 1
    %p115 = scmp.eq.s32.totalorder %s14, 1
    %p116 = scmp.ne.s32.totalorder %s111, %s113
    %p117 = scmp.eq.s32.totalorder %s14, 0
    %p118 = por %p116, %p117
    %p119 = scmp.ne.s32.totalorder %s111, %s113
    %p120 = scmp.eq.s32.totalorder %s19, 1
    %p121 = por %p119, %p120
    %p122 = scmp.ne.s32.totalorder %s113, %s114
    %p123 = scmp.eq.s32.totalorder %s19, 0
    %p124 = por %p122, %p123
    %p125 = scmp.ne.s32.totalorder %s113, %s114
    %p126 = scmp.eq.s32.totalorder %s20, 1
    %p127 = por %p125, %p126
    %p129 = scmp.ne.s32.totalorder %s114, %s128
    %p130 = scmp.eq.s32.totalorder %s20, 0
    %p131 = por %p129, %p130
    %s133 = sadd.s32 %s132, 1
    %p136 = scmp.eq.s32.totalorder %s14, 1
    %p137 = scmp.ne.s32.totalorder %s132, %s134
    %p138 = scmp.eq.s32.totalorder %s14, 0
    %p139 = por %p137, %p138
    %p140 = scmp.ne.s32.totalorder %s132, %s134
    %p141 = scmp.eq.s32.totalorder %s19, 1
    %p142 = por %p140, %p141
    %p143 = scmp.ne.s32.totalorder %s134, %s135
    %p144 = scmp.eq.s32.totalorder %s19, 0
    %p145 = por %p143, %p144
    %p146 = scmp.ne.s32.totalorder %s134, %s135
    %p147 = scmp.eq.s32.totalorder %s20, 1
    %p148 = por %p146, %p147
    %p150 = scmp.ne.s32.totalorder %s135, %s149
    %p151 = scmp.eq.s32.totalorder %s20, 0
    %p152 = por %p150, %p151
    %s154 = sadd.s32 %s153, 1
    %p157 = scmp.eq.s32.totalorder %s14, 1
    %p158 = scmp.ne.s32.totalorder %s153, %s155
    %p159 = scmp.eq.s32.totalorder %s14, 0
    %p160 = por %p158, %p159
    %p161 = scmp.ne.s32.totalorder %s153, %s155
    %p162 = scmp.eq.s32.totalorder %s19, 1
    %p163 = por %p161, %p162
    %p164 = scmp.ne.s32.totalorder %s155, %s156
    %p165 = scmp.eq.s32.totalorder %s19, 0
    %p166 = por %p164, %p165
    %p167 = scmp.ne.s32.totalorder %s155, %s156
    %p168 = scmp.eq.s32.totalorder %s20, 1
    %p169 = por %p167, %p168
    %p171 = scmp.ne.s32.totalorder %s156, %s170
    %p172 = scmp.eq.s32.totalorder %s20, 0
    %p173 = por %p171, %p172
    %s175 = sadd.s32 %s174, 1
    %p178 = scmp.eq.s32.totalorder %s14, 1
    %p179 = scmp.ne.s32.totalorder %s174, %s176
    %p180 = scmp.eq.s32.totalorder %s14, 0
    %p181 = por %p179, %p180
    %p182 = scmp.ne.s32.totalorder %s174, %s176
    %p183 = scmp.eq.s32.totalorder %s19, 1
    %p184 = por %p182, %p183
    %p185 = scmp.ne.s32.totalorder %s176, %s177
    %p186 = scmp.eq.s32.totalorder %s19, 0
    %p187 = por %p185, %p186
    %p188 = scmp.ne.s32.totalorder %s176, %s177
    %p189 = scmp.eq.s32.totalorder %s20, 1
    %p190 = por %p188, %p189
    %p192 = scmp.ne.s32.totalorder %s177, %s191
    %p193 = scmp.eq.s32.totalorder %s20, 0
    %p194 = por %p192, %p193
    %s195 = ssub.s32 %s14, %s21
    %p196 = scmp.eq.s32.totalorder %s195, 0
    %s198 = sadd.s32 %s197, 1
    %s199 = scalar_select %p196, %s197, %s198
    %p202 = pneg %p196
    %p203 = scmp.eq.s32.totalorder %s14, 1
    %p204 = por %p202, %p203
    %p205 = scmp.ne.s32.totalorder %s197, %s200
    %p206 = scmp.eq.s32.totalorder %s14, 0
    %p207 = por %p205, %p206
    %p208 = scmp.ne.s32.totalorder %s197, %s200
    %p209 = scmp.eq.s32.totalorder %s19, 1
    %p210 = por %p208, %p209
    %p211 = scmp.ne.s32.totalorder %s200, %s201
    %p212 = scmp.eq.s32.totalorder %s19, 0
    %p213 = por %p211, %p212
    %p214 = scmp.ne.s32.totalorder %s200, %s201
    %p215 = scmp.eq.s32.totalorder %s20, 1
    %p216 = por %p214, %p215
    %p218 = scmp.ne.s32.totalorder %s201, %s217
    %p219 = scmp.eq.s32.totalorder %s20, 0
    %p220 = por %p218, %p219
    %p221 = scmp.le.s32.totalorder 1, %s14
    %p222 = scmp.lt.s32.totalorder %s14, 3
    %p223 = pnand %p221, %p222
    %p224 = pneg %p223
    // Predicated region
    $region9: #{audionet_forward.16} parent=5 // pred_check
      _
    $region10: #{audionet_forward.16} parent=5 // pred_check_branch
      %226 = sbr.rel (%p223) target = $region12
    $region11: #{audionet_forward.16} parent=5 // pred_region
      %s227 = ssub.s32 %s14, 1
      // Predicated region
      $region13: #{audionet_forward.16} parent=11 // pred_check
        %p228 = pneg %p61
      $region14: #{audionet_forward.16} parent=11 // pred_check_branch
        %230 = sbr.rel (%p228) target = $region16
      $region15: #{audionet_forward.16} parent=11 // pred_region
        _
      $region16: #{audionet_forward.16} parent=11 // pred_fallthru
        _
      // Predicated region
      $region17: #{audionet_forward.16} parent=11 // pred_check
        %p231 = pneg %p82
      $region18: #{audionet_forward.16} parent=11 // pred_check_branch
        %233 = sbr.rel (%p231) target = $region20
      $region19: #{audionet_forward.16} parent=11 // pred_region
        _
      $region20: #{audionet_forward.16} parent=11 // pred_fallthru
        _
      // Predicated region
      $region21: #{audionet_forward.16} parent=11 // pred_check
        %p234 = pneg %p103
      $region22: #{audionet_forward.16} parent=11 // pred_check_branch
        %236 = sbr.rel (%p234) target = $region24
      $region23: #{audionet_forward.16} parent=11 // pred_region
        _
      $region24: #{audionet_forward.16} parent=11 // pred_fallthru
        _
      // Predicated region
      $region25: #{audionet_forward.16} parent=11 // pred_check
        %p237 = pneg %p124
      $region26: #{audionet_forward.16} parent=11 // pred_check_branch
        %239 = sbr.rel (%p237) target = $region28
      $region27: #{audionet_forward.16} parent=11 // pred_region
        _
      $region28: #{audionet_forward.16} parent=11 // pred_fallthru
        _
      // Predicated region
      $region29: #{audionet_forward.16} parent=11 // pred_check
        %p240 = pneg %p145
      $region30: #{audionet_forward.16} parent=11 // pred_check_branch
        %242 = sbr.rel (%p240) target = $region32
      $region31: #{audionet_forward.16} parent=11 // pred_region
        _
      $region32: #{audionet_forward.16} parent=11 // pred_fallthru
        _
      // Predicated region
      $region33: #{audionet_forward.16} parent=11 // pred_check
        %p243 = pneg %p166
      $region34: #{audionet_forward.16} parent=11 // pred_check_branch
        %245 = sbr.rel (%p243) target = $region36
      $region35: #{audionet_forward.16} parent=11 // pred_region
        _
      $region36: #{audionet_forward.16} parent=11 // pred_fallthru
        _
      // Predicated region
      $region37: #{audionet_forward.16} parent=11 // pred_check
        %p246 = pneg %p187
      $region38: #{audionet_forward.16} parent=11 // pred_check_branch
        %248 = sbr.rel (%p246) target = $region40
      $region39: #{audionet_forward.16} parent=11 // pred_region
        _
      $region40: #{audionet_forward.16} parent=11 // pred_fallthru
        _
    $region12: #{audionet_forward.16} parent=5 // pred_fallthru
      _
    %p249 = scmp.lt.s32.totalorder %s14, 2
    // Predicated region
    $region41: #{audionet_forward.16} parent=5 // pred_check
      %p250 = pneg %p249
    $region42: #{audionet_forward.16} parent=5 // pred_check_branch
      %252 = sbr.rel (%p250) target = $region44
    $region43: #{audionet_forward.16} parent=5 // pred_region
      // Predicated region
      $region45: #{audionet_forward.16} parent=43 // pred_check
        %p253 = pneg %p34
      $region46: #{audionet_forward.16} parent=43 // pred_check_branch
        %255 = sbr.rel (%p253) target = $region48
      $region47: #{audionet_forward.16} parent=43 // pred_region
        %p256 = scmp.lt.s32.totalorder %s14, 1
        %s257 = scalar_select %p256, %s14, 1
        %s258 = smul.addr %s257, 4
        %s259 = scalar_lea.vmem %s0, %s258
      $region48: #{audionet_forward.16} parent=43 // pred_fallthru
        _
    $region44: #{audionet_forward.16} parent=5 // pred_fallthru
      _
    %p260 = scmp.le.s32.totalorder 1, %s14
    %p261 = scmp.lt.s32.totalorder %s14, 3
    %p262 = pnand %p260, %p261
    %p263 = pneg %p262
    // Predicated region
    $region49: #{audionet_forward.16} parent=5 // pred_check
      _
    $region50: #{audionet_forward.16} parent=5 // pred_check_branch
      %265 = sbr.rel (%p262) target = $region52
    $region51: #{audionet_forward.16} parent=5 // pred_region
      %s266 = ssub.s32 %s14, 1
      %p267 = scmp.lt.s32.totalorder %s19, 1
      %s268 = scalar_select %p267, %s19, 1
      %s269 = smul.addr %s268, 4
      %s270 = scalar_lea.vmem %s0, %s269
      %p271 = pneg %p40
      %p272 = pneg %p37
      %p273 = pneg %p61
      %p274 = pneg %p58
      %p275 = pneg %p82
      %p276 = pneg %p79
      %p277 = pneg %p103
      %p278 = pneg %p100
      %p279 = pneg %p124
      %p280 = pneg %p121
      %p281 = pneg %p145
      %p282 = pneg %p142
      %p283 = pneg %p166
      %p284 = pneg %p163
      %p285 = pneg %p187
      %p286 = pneg %p184
      %p287 = pneg %p213
      %p288 = pneg %p210
      %p289 = scmp.lt.s32.totalorder %s19, 1
      %s290 = scalar_select %p289, %s19, 1
      %s291 = smul.addr %s290, 4
      %s292 = scalar_lea.vmem %s8, %s291
      %p293 = scmp.lt.s32.totalorder %s19, 1
      %s294 = scalar_select %p293, %s19, 1
      %s295 = smul.addr %s294, 4
      %s296 = scalar_lea.vmem %s0, %s295
      %p297 = scmp.lt.s32.totalorder %s19, 1
      %s298 = scalar_select %p297, %s19, 1
      %s299 = smul.addr %s298, 4
      %s300 = scalar_lea.vmem %s8, %s299
      %v302 = vld [vmem:[%s296] sm:$0xf]
      %vm303 = vcmask 523264
      %304 = vst.msk [vmem:[#allocation2] sm:$0xff] %vm303, 0.0
      %vm305 = vcmask 522240
      %306 = vst.msk [vmem:[#allocation2 + $0x8] sm:$0x7f] %vm305, 0.0
      %vm307 = vcmask 519168
      %308 = vst.msk [vmem:[#allocation2 + $0x8] sm:$0xf] %vm307, %v302
      %v309 = vld [vmem:[#allocation2 + $0x5] sm:$0xf]
      %v310 = vld [vmem:[%s4] sm:$0x1]
      %v312 = vlaneseq
      %v313 = vshrl.u32 %v312, 7
      %v314 = vsub.s32 0, %v313
      %v315 = vrot.slane %v310, %v314
      %v317 = vmul.f32 %v309, %v315
      %v318 = vld [vmem:[%s1] sm:$0xf]
      %320 = vset.pattern.permute.xlu0 0
      %321 = vperm.xlu0 %320, %v318
      %v322 = vpop.permute.xlu0 %321
      %v324 = vmul.f32 %v317, %v322
      %v325 = vld [vmem:[#allocation2 + $0x6] sm:$0xf]
      %s326 = scalar_lea.vmem %s4, 1
      %v327 = vld [vmem:[%s326] sm:$0x1]
      %v329 = vlaneseq
      %v330 = vshrl.u32 %v329, 7
      %v331 = vsub.s32 0, %v330
      %v332 = vrot.slane %v327, %v331
      %v334 = vmul.f32 %v325, %v332
      %s335 = scalar_lea.vmem %s1, 4
      %v336 = vld [vmem:[%s335] sm:$0xf]
      %338 = vset.pattern.permute.xlu0 0
      %339 = vperm.xlu0 %338, %v336
      %v340 = vpop.permute.xlu0 %339
      %v342 = vmul.f32 %v334, %v340
      %v343 = vld [vmem:[#allocation2 + $0x7] sm:$0xf]
      %s344 = scalar_lea.vmem %s4, 2
      %v345 = vld [vmem:[%s344] sm:$0x1]
      %v347 = vlaneseq
      %v348 = vshrl.u32 %v347, 7
      %v349 = vsub.s32 0, %v348
      %v350 = vrot.slane %v345, %v349
      %v352 = vmul.f32 %v343, %v350
      %s353 = scalar_lea.vmem %s1, 8
      %v354 = vld [vmem:[%s353] sm:$0xf]
      %356 = vset.pattern.permute.xlu0 0
      %357 = vperm.xlu0 %356, %v354
      %v358 = vpop.permute.xlu0 %357
      %v360 = vmul.f32 %v352, %v358
      %s361 = scalar_lea.vmem %s4, 3
      %v362 = vld [vmem:[%s361] sm:$0x1]
      %v364 = vlaneseq
      %v365 = vshrl.u32 %v364, 7
      %v366 = vsub.s32 0, %v365
      %v367 = vrot.slane %v362, %v366
      %v369 = vmul.f32 %v343, %v367
      %s370 = scalar_lea.vmem %s1, 12
      %v371 = vld [vmem:[%s370] sm:$0xf]
      %373 = vset.pattern.permute.xlu0 0
      %374 = vperm.xlu0 %373, %v371
      %v375 = vpop.permute.xlu0 %374
      %v377 = vmul.f32 %v369, %v375
      %v378 = vld [vmem:[#allocation2 + $0x8] sm:$0xf]
      %s379 = scalar_lea.vmem %s4, 4
      %v380 = vld [vmem:[%s379] sm:$0x1]
      %v382 = vlaneseq
      %v383 = vshrl.u32 %v382, 7
      %v384 = vsub.s32 0, %v383
      %v385 = vrot.slane %v380, %v384
      %v387 = vmul.f32 %v378, %v385
      %v388 = vld [vmem:[#allocation2 + $0x9] sm:$0xf]
      %s389 = scalar_lea.vmem %s4, 5
      %v390 = vld [vmem:[%s389] sm:$0x1]
      %v392 = vlaneseq
      %v393 = vshrl.u32 %v392, 7
      %v394 = vsub.s32 0, %v393
      %v395 = vrot.slane %v390, %v394
      %v397 = vmul.f32 %v388, %v395
      %s398 = scalar_lea.vmem %s1, 20
      %v399 = vld [vmem:[%s398] sm:$0xf]
      %401 = vset.pattern.permute.xlu0 0
      %402 = vperm.xlu0 %401, %v399
      %v403 = vpop.permute.xlu0 %402
      %v405 = vmul.f32 %v397, %v403
      %s406 = scalar_lea.vmem %s4, 6
      %v407 = vld [vmem:[%s406] sm:$0x1]
      %v409 = vlaneseq
      %v410 = vshrl.u32 %v409, 7
      %v411 = vsub.s32 0, %v410
      %v412 = vrot.slane %v407, %v411
      %v414 = vmul.f32 %v388, %v412
      %s415 = scalar_lea.vmem %s1, 24
      %v416 = vld [vmem:[%s415] sm:$0xf]
      %418 = vset.pattern.permute.xlu0 0
      %419 = vperm.xlu0 %418, %v416
      %v420 = vpop.permute.xlu0 %419
      %v422 = vmul.f32 %v414, %v420
      %v423 = vld [vmem:[#allocation2 + $0xa] sm:$0xf]
      %s424 = scalar_lea.vmem %s4, 7
      %v425 = vld [vmem:[%s424] sm:$0x1]
      %v427 = vlaneseq
      %v428 = vshrl.u32 %v427, 7
      %v429 = vsub.s32 0, %v428
      %v430 = vrot.slane %v425, %v429
      %v432 = vmul.f32 %v423, %v430
      %s433 = scalar_lea.vmem %s1, 28
      %v434 = vld [vmem:[%s433] sm:$0xf]
      %436 = vset.pattern.permute.xlu0 0
      %437 = vperm.xlu0 %436, %v434
      %v438 = vpop.permute.xlu0 %437
      %v440 = vmul.f32 %v432, %v438
      %v441 = vld [vmem:[#allocation2 + $0xb] sm:$0xf]
      %s442 = scalar_lea.vmem %s4, 8
      %v443 = vld [vmem:[%s442] sm:$0x1]
      %v445 = vlaneseq
      %v446 = vshrl.u32 %v445, 7
      %v447 = vsub.s32 0, %v446
      %v448 = vrot.slane %v443, %v447
      %v450 = vmul.f32 %v441, %v448
      %s451 = scalar_lea.vmem %s1, 32
      %v452 = vld [vmem:[%s451] sm:$0xf]
      %454 = vset.pattern.permute.xlu0 0
      %455 = vperm.xlu0 %454, %v452
      %v456 = vpop.permute.xlu0 %455
      %v458 = vmul.f32 %v450, %v456
      %v459 = vadd.f32 %v324, %v342
      %v460 = vadd.f32 %v459, %v360
      %v461 = vadd.f32 %v377, %v387
      %v462 = vadd.f32 %v461, %v405
      %v463 = vadd.f32 %v460, %v462
      %v464 = vadd.f32 %v422, %v440
      %v465 = vadd.f32 %v464, %v458
      %v466 = vadd.f32 %v463, %v465
      %v467 = vld [vmem:[%s5] sm:$0x1]
      %v469 = vlaneseq
      %v470 = vshrl.u32 %v469, 7
      %v471 = vsub.s32 0, %v470
      %v472 = vrot.slane %v467, %v471
      %v474 = vadd.f32 %v466, %v472
      %v475 = vmax.f32 %v474, 0.0
      %v476 = vpack.c.bf16 %v475, %v475
      %v477 = vld [vmem:[%s6] sm:$0xf]
      %v478 = vld [vmem:[%s6 + $0x4] sm:$0xf]
      %v479 = vld [vmem:[%s6 + $0x8] sm:$0xf]
      %v480 = vld [vmem:[%s6 + $0xc] sm:$0xf]
      %v481 = vld [vmem:[%s6 + $0x10] sm:$0xf]
      %v482 = vld [vmem:[%s6 + $0x14] sm:$0xf]
      %v483 = vld [vmem:[%s6 + $0x18] sm:$0xf]
      %v484 = vld [vmem:[%s6 + $0x1c] sm:$0xf]
      %v485 = vld [vmem:[%s7] sm:$0x1]
      %v487 = vlaneseq
      %v488 = vshrl.u32 %v487, 7
      %v489 = vsub.s32 0, %v488
      %v490 = vrot.slane %v485, %v489
      %v500 = vunpack.c.l.b16 %v477
      %v501 = vunpack.c.l.b16 %v478
      %v502 = vunpack.c.l.b16 %v479
      %v503 = vunpack.c.l.b16 %v480
      %v504 = vunpack.c.l.b16 %v481
      %v505 = vunpack.c.l.b16 %v482
      %v506 = vunpack.c.l.b16 %v483
      %v507 = vunpack.c.l.b16 %v484
      %v508 = vpack.c.b16 %v501, %v500
      %v509 = vpack.c.b16 %v503, %v502
      %v510 = vpack.c.b16 %v505, %v504
      %v511 = vpack.c.b16 %v507, %v506
      %v517 = vsel %vm303, %v476, 0
      %519 = vmatprep.subr.bf16.mxu0 0
      %520 = vmatpush1.bf16.msra.mxu0 %v508
      %521 = vmatprep.subr.bf16.mxu0 0
      %522 = vmatpush1.bf16.msra.mxu0 %v509
      %523 = vmatprep.subr.bf16.mxu0 0
      %524 = vmatpush1.bf16.msra.mxu0 %v510
      %525 = vmatprep.subr.bf16.mxu0 0
      %526 = vmatpush1.bf16.msra.mxu0 %v511
      %527 = vmatprep.subr.bf16.mxu0 0
      %528 = vmatpush1.bf16.msra.mxu0 0
      %529 = vmatprep.subr.bf16.mxu0 0
      %530 = vmatpush1.bf16.msra.mxu0 0
      %531 = vmatprep.subr.bf16.mxu0 0
      %532 = vmatpush1.bf16.msra.mxu0 0
      %533 = vmatprep.subr.bf16.mxu0 0
      %534 = vmatpush1.bf16.msra.mxu0 0
      %535 = vmatprep.subr.bf16.mxu0 0
      %536 = vmatpush1.bf16.msra.mxu0 0
      %537 = vmatprep.subr.bf16.mxu0 0
      %538 = vmatpush1.bf16.msra.mxu0 0
      %539 = vmatprep.subr.bf16.mxu0 0
      %540 = vmatpush1.bf16.msra.mxu0 0
      %541 = vmatprep.subr.bf16.mxu0 0
      %542 = vmatpush1.bf16.msra.mxu0 0
      %543 = vmatprep.subr.bf16.mxu0 0
      %544 = vmatpush1.bf16.msra.mxu0 0
      %545 = vmatprep.subr.bf16.mxu0 0
      %546 = vmatpush1.bf16.msra.mxu0 0
      %547 = vmatprep.subr.bf16.mxu0 0
      %548 = vmatpush1.bf16.msra.mxu0 0
      %549 = vmatprep.subr.bf16.mxu0 0
      %550 = vmatpush1.bf16.msra.mxu0 0
      %551 = vmatprep.mubr.bf16.mxu0 0
      %552 = vmatmul.mubr.bf16.gmra.mrb[0].mxu0 %v517
      %v553 = vpop.f32.mrb[0].mxu0
      %v554 = vadd.f32 %v490, %v553
      %v555 = vpop.f32.mrb[0].mxu0
      %v556 = vpop.f32.mrb[0].mxu0
      %v557 = vpop.f32.mrb[0].mxu0
      %558 = vdwg.mxu0
      %559 = vst [vmem:[%s300] sm:$0xf] %v554
      %p560 = scmp.lt.s32.totalorder %s19, 1
      %s561 = scalar_select %p560, %s19, 1
      %s562 = smul.addr %s561, 4
      %s563 = scalar_lea.vmem %s8, %s562
      // Predicated region
      $region53: #{audionet_forward.16} parent=51 // pred_check
        %p564 = pneg %p210
      $region54: #{audionet_forward.16} parent=51 // pred_check_branch
        %566 = sbr.rel (%p564) target = $region56
      $region55: #{audionet_forward.16} parent=51 // pred_region
        _
      $region56: #{audionet_forward.16} parent=51 // pred_fallthru
        _
    $region52: #{audionet_forward.16} parent=5 // pred_fallthru
      _
    %p567 = scmp.le.s32.totalorder 2, %s14
    // Predicated region
    $region57: #{audionet_forward.16} parent=5 // pred_check
      %p568 = pneg %p567
    $region58: #{audionet_forward.16} parent=5 // pred_check_branch
      %570 = sbr.rel (%p568) target = $region60
    $region59: #{audionet_forward.16} parent=5 // pred_region
      %s571 = ssub.s32 %s14, 2
      // Predicated region
      $region61: #{audionet_forward.16} parent=59 // pred_check
        %p572 = pneg %p216
      $region62: #{audionet_forward.16} parent=59 // pred_check_branch
        %574 = sbr.rel (%p572) target = $region64
      $region63: #{audionet_forward.16} parent=59 // pred_region
        %p575 = scmp.lt.s32.totalorder %s20, 1
        %s576 = scalar_select %p575, %s20, 1
        %s577 = smul.addr %s576, 4
        %s578 = scalar_lea.vmem %s8, %s577
      $region64: #{audionet_forward.16} parent=59 // pred_fallthru
        _
    $region60: #{audionet_forward.16} parent=5 // pred_fallthru
      _
  $region6: #{audionet_forward.16} parent=0 // loop_footer
    %s18 = sadd.s32 1, %s14
  $region7: #{audionet_forward.16} parent=0 // loop_footer_branch
    %13 = sbr.rel target = $region3
  $region8: #{audionet_forward.16} parent=0 // loop_exit
    _

// kernel: audionet_forward.17
$region0: #{audionet_forward.17}
  #allocation0 [shape = 'u32[]', space=smem, size = 0x4, offset = 0x4, fixed_abs, tag = 'smem constant byte address 0x4 - core index']
  #allocation1 [shape = 'u32[144,128]{1,0:T(1,128)}', space=vmem, size = 0x12000, scoped, tag = 'internal scratch']
  #allocation2 [shape = 'f32[15,128]{1,0:T(8,128)}', space=vmem, size = 0x2000, scoped, tag = 'scratch operand']
  %s0 = inlined_call_operand.vmem [shape: f32[2,4,128], index: 0, kind: input, shape index: {}]
  %s1 = inlined_call_operand.vmem [shape: f32[9,4,1], index: 1, kind: input, shape index: {}]
  %s2 = inlined_call_operand.vmem [shape: bf16[8,128], index: 2, kind: input, shape index: {}]
  %s3 = inlined_call_operand.vmem [shape: f32[1,128], index: 3, kind: input, shape index: {}]
  %s4 = inlined_call_operand.vmem [shape: f32[9,1,128], index: 4, kind: input, shape index: {}]
  %s5 = inlined_call_operand.vmem [shape: f32[1,128], index: 5, kind: input, shape index: {}]
  %s6 = inlined_call_operand.vmem [shape: bf16[128,128], index: 6, kind: input, shape index: {}]
  %s7 = inlined_call_operand.vmem [shape: f32[1,128], index: 7, kind: input, shape index: {}]
  %s8 = inlined_call_operand.hbm [shape: f32[2,2,128], index: 8, kind: output, shape index: {}]
  %s9 = sld [smem:[#allocation0]]
  $region65: #{audionet_forward.17} parent=0
    _
  %s11 = ssub.s32 1, %s9
  %s12 = scalar_select 0, %s11, %s9
  $region1: #{audionet_forward.17} parent=0
    #allocation3 [shape = 'u8[2048]{0}', space=vmem, size = 0x800, scoped, tag = 'output window, operand 0']
    #allocation4 [shape = 's32[2]{0}', space=sflag, size = 0x8, scoped, tag = 'scoped memory for audionet_forward.17']
    %13 = vsyncpa [#allocation4], 0
    %s14 = scalar_lea.sflag [#allocation4], 1
    %15 = vsyncpa %s14, 0
    loop: start=0, step=1, limit=4
    $region2: #{audionet_forward.17} parent=1 // loop_pre_header
      _
    $region3: #{audionet_forward.17} parent=1 // loop_header
      %s17 = sphi 0, %s21
      %p18 = scmp.ge.s32.totalorder %s17, 4
      %s27 = sphi 0, %s29
      %s30 = sphi 0, %s27
      %s31 = sphi 0, %s30
      %s47 = sphi 0, %s31
      %s51 = sphi 0, %s51
      %s53 = sphi 0, %s51
      %s54 = sphi 0, %s53
      %s68 = sphi 0, %s54
      %s72 = sphi 0, %s72
      %s74 = sphi 0, %s72
      %s75 = sphi 0, %s74
      %s89 = sphi 0, %s75
      %s93 = sphi 0, %s93
      %s95 = sphi 0, %s93
      %s96 = sphi 0, %s95
      %s110 = sphi 0, %s96
      %s114 = sphi 0, %s114
      %s116 = sphi 0, %s114
      %s117 = sphi 0, %s116
      %s131 = sphi 0, %s117
      %s135 = sphi 0, %s135
      %s137 = sphi 0, %s135
      %s138 = sphi 0, %s137
      %s152 = sphi 0, %s138
      %s156 = sphi 0, %s156
      %s158 = sphi 0, %s156
      %s159 = sphi 0, %s158
      %s173 = sphi 0, %s159
      %s177 = sphi 0, %s177
      %s179 = sphi 0, %s177
      %s180 = sphi 0, %s179
      %s194 = sphi 0, %s180
      %s200 = sphi 0, %s202
      %s203 = sphi 0, %s200
      %s204 = sphi 0, %s203
      %s220 = sphi 0, %s204
    $region4: #{audionet_forward.17} parent=1 // loop_header_branch
      %20 = sbr.rel (%p18) target = $region8
    $region5: #{audionet_forward.17} parent=1 // loop_body
      %s22 = ssub.s32 %s17, 1
      %s23 = ssub.s32 %s17, 2
      %s24 = sadd.s32 %s17, 1
      %s25 = ssub.s32 %s17, %s24
      %p26 = scmp.eq.s32.totalorder %s25, 0
      %s28 = sadd.s32 %s27, 1
      %s29 = scalar_select %p26, %s27, %s28
      %p32 = pneg %p26
      %p33 = scmp.eq.s32.totalorder %s17, 1
      %p34 = por %p32, %p33
      %p35 = scmp.ne.s32.totalorder %s27, %s30
      %p36 = scmp.eq.s32.totalorder %s17, 0
      %p37 = por %p35, %p36
      %p38 = scmp.ne.s32.totalorder %s27, %s30
      %p39 = scmp.eq.s32.totalorder %s22, 1
      %p40 = por %p38, %p39
      %p41 = scmp.ne.s32.totalorder %s30, %s31
      %p42 = scmp.eq.s32.totalorder %s22, 0
      %p43 = por %p41, %p42
      %p44 = scmp.ne.s32.totalorder %s30, %s31
      %p45 = scmp.eq.s32.totalorder %s23, 1
      %p46 = por %p44, %p45
      %p48 = scmp.ne.s32.totalorder %s31, %s47
      %p49 = scmp.eq.s32.totalorder %s23, 0
      %p50 = por %p48, %p49
      %s52 = sadd.s32 %s51, 1
      %p55 = scmp.eq.s32.totalorder %s17, 1
      %p56 = scmp.ne.s32.totalorder %s51, %s53
      %p57 = scmp.eq.s32.totalorder %s17, 0
      %p58 = por %p56, %p57
      %p59 = scmp.ne.s32.totalorder %s51, %s53
      %p60 = scmp.eq.s32.totalorder %s22, 1
      %p61 = por %p59, %p60
      %p62 = scmp.ne.s32.totalorder %s53, %s54
      %p63 = scmp.eq.s32.totalorder %s22, 0
      %p64 = por %p62, %p63
      %p65 = scmp.ne.s32.totalorder %s53, %s54
      %p66 = scmp.eq.s32.totalorder %s23, 1
      %p67 = por %p65, %p66
      %p69 = scmp.ne.s32.totalorder %s54, %s68
      %p70 = scmp.eq.s32.totalorder %s23, 0
      %p71 = por %p69, %p70
      %s73 = sadd.s32 %s72, 1
      %p76 = scmp.eq.s32.totalorder %s17, 1
      %p77 = scmp.ne.s32.totalorder %s72, %s74
      %p78 = scmp.eq.s32.totalorder %s17, 0
      %p79 = por %p77, %p78
      %p80 = scmp.ne.s32.totalorder %s72, %s74
      %p81 = scmp.eq.s32.totalorder %s22, 1
      %p82 = por %p80, %p81
      %p83 = scmp.ne.s32.totalorder %s74, %s75
      %p84 = scmp.eq.s32.totalorder %s22, 0
      %p85 = por %p83, %p84
      %p86 = scmp.ne.s32.totalorder %s74, %s75
      %p87 = scmp.eq.s32.totalorder %s23, 1
      %p88 = por %p86, %p87
      %p90 = scmp.ne.s32.totalorder %s75, %s89
      %p91 = scmp.eq.s32.totalorder %s23, 0
      %p92 = por %p90, %p91
      %s94 = sadd.s32 %s93, 1
      %p97 = scmp.eq.s32.totalorder %s17, 1
      %p98 = scmp.ne.s32.totalorder %s93, %s95
      %p99 = scmp.eq.s32.totalorder %s17, 0
      %p100 = por %p98, %p99
      %p101 = scmp.ne.s32.totalorder %s93, %s95
      %p102 = scmp.eq.s32.totalorder %s22, 1
      %p103 = por %p101, %p102
      %p104 = scmp.ne.s32.totalorder %s95, %s96
      %p105 = scmp.eq.s32.totalorder %s22, 0
      %p106 = por %p104, %p105
      %p107 = scmp.ne.s32.totalorder %s95, %s96
      %p108 = scmp.eq.s32.totalorder %s23, 1
      %p109 = por %p107, %p108
      %p111 = scmp.ne.s32.totalorder %s96, %s110
      %p112 = scmp.eq.s32.totalorder %s23, 0
      %p113 = por %p111, %p112
      %s115 = sadd.s32 %s114, 1
      %p118 = scmp.eq.s32.totalorder %s17, 1
      %p119 = scmp.ne.s32.totalorder %s114, %s116
      %p120 = scmp.eq.s32.totalorder %s17, 0
      %p121 = por %p119, %p120
      %p122 = scmp.ne.s32.totalorder %s114, %s116
      %p123 = scmp.eq.s32.totalorder %s22, 1
      %p124 = por %p122, %p123
      %p125 = scmp.ne.s32.totalorder %s116, %s117
      %p126 = scmp.eq.s32.totalorder %s22, 0
      %p127 = por %p125, %p126
      %p128 = scmp.ne.s32.totalorder %s116, %s117
      %p129 = scmp.eq.s32.totalorder %s23, 1
      %p130 = por %p128, %p129
      %p132 = scmp.ne.s32.totalorder %s117, %s131
      %p133 = scmp.eq.s32.totalorder %s23, 0
      %p134 = por %p132, %p133
      %s136 = sadd.s32 %s135, 1
      %p139 = scmp.eq.s32.totalorder %s17, 1
      %p140 = scmp.ne.s32.totalorder %s135, %s137
      %p141 = scmp.eq.s32.totalorder %s17, 0
      %p142 = por %p140, %p141
      %p143 = scmp.ne.s32.totalorder %s135, %s137
      %p144 = scmp.eq.s32.totalorder %s22, 1
      %p145 = por %p143, %p144
      %p146 = scmp.ne.s32.totalorder %s137, %s138
      %p147 = scmp.eq.s32.totalorder %s22, 0
      %p148 = por %p146, %p147
      %p149 = scmp.ne.s32.totalorder %s137, %s138
      %p150 = scmp.eq.s32.totalorder %s23, 1
      %p151 = por %p149, %p150
      %p153 = scmp.ne.s32.totalorder %s138, %s152
      %p154 = scmp.eq.s32.totalorder %s23, 0
      %p155 = por %p153, %p154
      %s157 = sadd.s32 %s156, 1
      %p160 = scmp.eq.s32.totalorder %s17, 1
      %p161 = scmp.ne.s32.totalorder %s156, %s158
      %p162 = scmp.eq.s32.totalorder %s17, 0
      %p163 = por %p161, %p162
      %p164 = scmp.ne.s32.totalorder %s156, %s158
      %p165 = scmp.eq.s32.totalorder %s22, 1
      %p166 = por %p164, %p165
      %p167 = scmp.ne.s32.totalorder %s158, %s159
      %p168 = scmp.eq.s32.totalorder %s22, 0
      %p169 = por %p167, %p168
      %p170 = scmp.ne.s32.totalorder %s158, %s159
      %p171 = scmp.eq.s32.totalorder %s23, 1
      %p172 = por %p170, %p171
      %p174 = scmp.ne.s32.totalorder %s159, %s173
      %p175 = scmp.eq.s32.totalorder %s23, 0
      %p176 = por %p174, %p175
      %s178 = sadd.s32 %s177, 1
      %p181 = scmp.eq.s32.totalorder %s17, 1
      %p182 = scmp.ne.s32.totalorder %s177, %s179
      %p183 = scmp.eq.s32.totalorder %s17, 0
      %p184 = por %p182, %p183
      %p185 = scmp.ne.s32.totalorder %s177, %s179
      %p186 = scmp.eq.s32.totalorder %s22, 1
      %p187 = por %p185, %p186
      %p188 = scmp.ne.s32.totalorder %s179, %s180
      %p189 = scmp.eq.s32.totalorder %s22, 0
      %p190 = por %p188, %p189
      %p191 = scmp.ne.s32.totalorder %s179, %s180
      %p192 = scmp.eq.s32.totalorder %s23, 1
      %p193 = por %p191, %p192
      %p195 = scmp.ne.s32.totalorder %s180, %s194
      %p196 = scmp.eq.s32.totalorder %s23, 0
      %p197 = por %p195, %p196
      %s198 = ssub.s32 %s17, %s24
      %p199 = scmp.eq.s32.totalorder %s198, 0
      %s201 = sadd.s32 %s200, 1
      %s202 = scalar_select %p199, %s200, %s201
      %p205 = pneg %p199
      %p206 = scmp.eq.s32.totalorder %s17, 1
      %p207 = por %p205, %p206
      %p208 = scmp.ne.s32.totalorder %s200, %s203
      %p209 = scmp.eq.s32.totalorder %s17, 0
      %p210 = por %p208, %p209
      %p211 = scmp.ne.s32.totalorder %s200, %s203
      %p212 = scmp.eq.s32.totalorder %s22, 1
      %p213 = por %p211, %p212
      %p214 = scmp.ne.s32.totalorder %s203, %s204
      %p215 = scmp.eq.s32.totalorder %s22, 0
      %p216 = por %p214, %p215
      %p217 = scmp.ne.s32.totalorder %s203, %s204
      %p218 = scmp.eq.s32.totalorder %s23, 1
      %p219 = por %p217, %p218
      %p221 = scmp.ne.s32.totalorder %s204, %s220
      %p222 = scmp.eq.s32.totalorder %s23, 0
      %p223 = por %p221, %p222
      %p224 = scmp.le.s32.totalorder 1, %s17
      %p225 = scmp.lt.s32.totalorder %s17, 3
      %p226 = pnand %p224, %p225
      %p227 = pneg %p226
      // Predicated region
      $region9: #{audionet_forward.17} parent=5 // pred_check
        _
      $region10: #{audionet_forward.17} parent=5 // pred_check_branch
        %229 = sbr.rel (%p226) target = $region12
      $region11: #{audionet_forward.17} parent=5 // pred_region
        %s230 = ssub.s32 %s17, 1
        // Predicated region
        $region13: #{audionet_forward.17} parent=11 // pred_check
          %p231 = pneg %p64
        $region14: #{audionet_forward.17} parent=11 // pred_check_branch
          %233 = sbr.rel (%p231) target = $region16
        $region15: #{audionet_forward.17} parent=11 // pred_region
          _
        $region16: #{audionet_forward.17} parent=11 // pred_fallthru
          _
        // Predicated region
        $region17: #{audionet_forward.17} parent=11 // pred_check
          %p234 = pneg %p85
        $region18: #{audionet_forward.17} parent=11 // pred_check_branch
          %236 = sbr.rel (%p234) target = $region20
        $region19: #{audionet_forward.17} parent=11 // pred_region
          _
        $region20: #{audionet_forward.17} parent=11 // pred_fallthru
          _
        // Predicated region
        $region21: #{audionet_forward.17} parent=11 // pred_check
          %p237 = pneg %p106
        $region22: #{audionet_forward.17} parent=11 // pred_check_branch
          %239 = sbr.rel (%p237) target = $region24
        $region23: #{audionet_forward.17} parent=11 // pred_region
          _
        $region24: #{audionet_forward.17} parent=11 // pred_fallthru
          _
        // Predicated region
        $region25: #{audionet_forward.17} parent=11 // pred_check
          %p240 = pneg %p127
        $region26: #{audionet_forward.17} parent=11 // pred_check_branch
          %242 = sbr.rel (%p240) target = $region28
        $region27: #{audionet_forward.17} parent=11 // pred_region
          _
        $region28: #{audionet_forward.17} parent=11 // pred_fallthru
          _
        // Predicated region
        $region29: #{audionet_forward.17} parent=11 // pred_check
          %p243 = pneg %p148
        $region30: #{audionet_forward.17} parent=11 // pred_check_branch
          %245 = sbr.rel (%p243) target = $region32
        $region31: #{audionet_forward.17} parent=11 // pred_region
          _
        $region32: #{audionet_forward.17} parent=11 // pred_fallthru
          _
        // Predicated region
        $region33: #{audionet_forward.17} parent=11 // pred_check
          %p246 = pneg %p169
        $region34: #{audionet_forward.17} parent=11 // pred_check_branch
          %248 = sbr.rel (%p246) target = $region36
        $region35: #{audionet_forward.17} parent=11 // pred_region
          _
        $region36: #{audionet_forward.17} parent=11 // pred_fallthru
          _
        // Predicated region
        $region37: #{audionet_forward.17} parent=11 // pred_check
          %p249 = pneg %p190
        $region38: #{audionet_forward.17} parent=11 // pred_check_branch
          %251 = sbr.rel (%p249) target = $region40
        $region39: #{audionet_forward.17} parent=11 // pred_region
          _
        $region40: #{audionet_forward.17} parent=11 // pred_fallthru
          _
      $region12: #{audionet_forward.17} parent=5 // pred_fallthru
        _
      %p252 = scmp.lt.s32.totalorder %s17, 2
      // Predicated region
      $region41: #{audionet_forward.17} parent=5 // pred_check
        %p253 = pneg %p252
      $region42: #{audionet_forward.17} parent=5 // pred_check_branch
        %255 = sbr.rel (%p253) target = $region44
      $region43: #{audionet_forward.17} parent=5 // pred_region
        // Predicated region
        $region45: #{audionet_forward.17} parent=43 // pred_check
          %p256 = pneg %p37
        $region46: #{audionet_forward.17} parent=43 // pred_check_branch
          %258 = sbr.rel (%p256) target = $region48
        $region47: #{audionet_forward.17} parent=43 // pred_region
          %p259 = scmp.lt.s32.totalorder %s17, 1
          %s260 = scalar_select %p259, %s17, 1
          %s261 = smul.addr %s260, 4
          %s262 = scalar_lea.vmem %s0, %s261
        $region48: #{audionet_forward.17} parent=43 // pred_fallthru
          _
      $region44: #{audionet_forward.17} parent=5 // pred_fallthru
        _
      %p263 = scmp.le.s32.totalorder 1, %s17
      %p264 = scmp.lt.s32.totalorder %s17, 3
      %p265 = pnand %p263, %p264
      %p266 = pneg %p265
      // Predicated region
      $region49: #{audionet_forward.17} parent=5 // pred_check
        _
      $region50: #{audionet_forward.17} parent=5 // pred_check_branch
        %268 = sbr.rel (%p265) target = $region52
      $region51: #{audionet_forward.17} parent=5 // pred_region
        %s269 = ssub.s32 %s17, 1
        %p270 = scmp.lt.s32.totalorder %s22, 1
        %s271 = scalar_select %p270, %s22, 1
        %s272 = smul.addr %s271, 4
        %s273 = scalar_lea.vmem %s0, %s272
        %p274 = pneg %p43
        %p275 = pneg %p40
        %p276 = pneg %p64
        %p277 = pneg %p61
        %p278 = pneg %p85
        %p279 = pneg %p82
        %p280 = pneg %p106
        %p281 = pneg %p103
        %p282 = pneg %p127
        %p283 = pneg %p124
        %p284 = pneg %p148
        %p285 = pneg %p145
        %p286 = pneg %p169
        %p287 = pneg %p166
        %p288 = pneg %p190
        %p289 = pneg %p187
        %p290 = pneg %p216
        %p291 = pneg %p213
        %s292 = sand.u32 %s203, 1
        %s293 = scalar_lea.sflag [#allocation4], %s292
        %s294 = sand.u32 %s203, 1
        %s295 = smul.addr %s294, 2
        %s296 = scalar_lea.vmem [#allocation3], %s295
        %p297 = scmp.lt.s32.totalorder %s22, 1
        %s298 = scalar_select %p297, %s22, 1
        %s299 = smul.addr %s298, 4
        %s300 = scalar_lea.vmem %s0, %s299
        %v302 = vld [vmem:[%s300] sm:$0xf]
        %303 = vst [vmem:[#allocation2] sm:$0xff] 0.0
        %304 = vst [vmem:[#allocation2 + $0x8] sm:$0x7f] 0.0
        %305 = vst [vmem:[#allocation2 + $0x8] sm:$0xf] %v302
        %v306 = vld [vmem:[#allocation2 + $0x5] sm:$0xf]
        %v307 = vld [vmem:[%s4] sm:$0x1]
        %v309 = vlaneseq
        %v310 = vshrl.u32 %v309, 7
        %v311 = vsub.s32 0, %v310
        %v312 = vrot.slane %v307, %v311
        %v314 = vmul.f32 %v306, %v312
        %v315 = vld [vmem:[%s1] sm:$0xf]
        %317 = vset.pattern.permute.xlu0 0
        %318 = vperm.xlu0 %317, %v315
        %v319 = vpop.permute.xlu0 %318
        %v321 = vmul.f32 %v314, %v319
        %v322 = vld [vmem:[#allocation2 + $0x6] sm:$0xf]
        %s323 = scalar_lea.vmem %s4, 1
        %v324 = vld [vmem:[%s323] sm:$0x1]
        %v326 = vlaneseq
        %v327 = vshrl.u32 %v326, 7
        %v328 = vsub.s32 0, %v327
        %v329 = vrot.slane %v324, %v328
        %v331 = vmul.f32 %v322, %v329
        %s332 = scalar_lea.vmem %s1, 4
        %v333 = vld [vmem:[%s332] sm:$0xf]
        %335 = vset.pattern.permute.xlu0 0
        %336 = vperm.xlu0 %335, %v333
        %v337 = vpop.permute.xlu0 %336
        %v339 = vmul.f32 %v331, %v337
        %v340 = vld [vmem:[#allocation2 + $0x7] sm:$0xf]
        %s341 = scalar_lea.vmem %s4, 2
        %v342 = vld [vmem:[%s341] sm:$0x1]
        %v344 = vlaneseq
        %v345 = vshrl.u32 %v344, 7
        %v346 = vsub.s32 0, %v345
        %v347 = vrot.slane %v342, %v346
        %v349 = vmul.f32 %v340, %v347
        %s350 = scalar_lea.vmem %s1, 8
        %v351 = vld [vmem:[%s350] sm:$0xf]
        %353 = vset.pattern.permute.xlu0 0
        %354 = vperm.xlu0 %353, %v351
        %v355 = vpop.permute.xlu0 %354
        %v357 = vmul.f32 %v349, %v355
        %s358 = scalar_lea.vmem %s4, 3
        %v359 = vld [vmem:[%s358] sm:$0x1]
        %v361 = vlaneseq
        %v362 = vshrl.u32 %v361, 7
        %v363 = vsub.s32 0, %v362
        %v364 = vrot.slane %v359, %v363
        %v366 = vmul.f32 %v340, %v364
        %s367 = scalar_lea.vmem %s1, 12
        %v368 = vld [vmem:[%s367] sm:$0xf]
        %370 = vset.pattern.permute.xlu0 0
        %371 = vperm.xlu0 %370, %v368
        %v372 = vpop.permute.xlu0 %371
        %v374 = vmul.f32 %v366, %v372
        %v375 = vld [vmem:[#allocation2 + $0x8] sm:$0xf]
        %s376 = scalar_lea.vmem %s4, 4
        %v377 = vld [vmem:[%s376] sm:$0x1]
        %v379 = vlaneseq
        %v380 = vshrl.u32 %v379, 7
        %v381 = vsub.s32 0, %v380
        %v382 = vrot.slane %v377, %v381
        %v384 = vmul.f32 %v375, %v382
        %v385 = vld [vmem:[#allocation2 + $0x9] sm:$0xf]
        %s386 = scalar_lea.vmem %s4, 5
        %v387 = vld [vmem:[%s386] sm:$0x1]
        %v389 = vlaneseq
        %v390 = vshrl.u32 %v389, 7
        %v391 = vsub.s32 0, %v390
        %v392 = vrot.slane %v387, %v391
        %v394 = vmul.f32 %v385, %v392
        %s395 = scalar_lea.vmem %s1, 20
        %v396 = vld [vmem:[%s395] sm:$0xf]
        %398 = vset.pattern.permute.xlu0 0
        %399 = vperm.xlu0 %398, %v396
        %v400 = vpop.permute.xlu0 %399
        %v402 = vmul.f32 %v394, %v400
        %s403 = scalar_lea.vmem %s4, 6
        %v404 = vld [vmem:[%s403] sm:$0x1]
        %v406 = vlaneseq
        %v407 = vshrl.u32 %v406, 7
        %v408 = vsub.s32 0, %v407
        %v409 = vrot.slane %v404, %v408
        %v411 = vmul.f32 %v385, %v409
        %s412 = scalar_lea.vmem %s1, 24
        %v413 = vld [vmem:[%s412] sm:$0xf]
        %415 = vset.pattern.permute.xlu0 0
        %416 = vperm.xlu0 %415, %v413
        %v417 = vpop.permute.xlu0 %416
        %v419 = vmul.f32 %v411, %v417
        %v420 = vld [vmem:[#allocation2 + $0xa] sm:$0xf]
        %s421 = scalar_lea.vmem %s4, 7
        %v422 = vld [vmem:[%s421] sm:$0x1]
        %v424 = vlaneseq
        %v425 = vshrl.u32 %v424, 7
        %v426 = vsub.s32 0, %v425
        %v427 = vrot.slane %v422, %v426
        %v429 = vmul.f32 %v420, %v427
        %s430 = scalar_lea.vmem %s1, 28
        %v431 = vld [vmem:[%s430] sm:$0xf]
        %433 = vset.pattern.permute.xlu0 0
        %434 = vperm.xlu0 %433, %v431
        %v435 = vpop.permute.xlu0 %434
        %v437 = vmul.f32 %v429, %v435
        %v438 = vld [vmem:[#allocation2 + $0xb] sm:$0xf]
        %s439 = scalar_lea.vmem %s4, 8
        %v440 = vld [vmem:[%s439] sm:$0x1]
        %v442 = vlaneseq
        %v443 = vshrl.u32 %v442, 7
        %v444 = vsub.s32 0, %v443
        %v445 = vrot.slane %v440, %v444
        %v447 = vmul.f32 %v438, %v445
        %s448 = scalar_lea.vmem %s1, 32
        %v449 = vld [vmem:[%s448] sm:$0xf]
        %451 = vset.pattern.permute.xlu0 0
        %452 = vperm.xlu0 %451, %v449
        %v453 = vpop.permute.xlu0 %452
        %v455 = vmul.f32 %v447, %v453
        %v456 = vadd.f32 %v321, %v339
        %v457 = vadd.f32 %v456, %v357
        %v458 = vadd.f32 %v374, %v384
        %v459 = vadd.f32 %v458, %v402
        %v460 = vadd.f32 %v457, %v459
        %v461 = vadd.f32 %v419, %v437
        %v462 = vadd.f32 %v461, %v455
        %v463 = vadd.f32 %v460, %v462
        %v464 = vld [vmem:[%s5] sm:$0x1]
        %v466 = vlaneseq
        %v467 = vshrl.u32 %v466, 7
        %v468 = vsub.s32 0, %v467
        %v469 = vrot.slane %v464, %v468
        %v471 = vadd.f32 %v463, %v469
        %v472 = vmax.f32 %v471, 0.0
        %v473 = vpack.c.bf16 %v472, %v472
        %v474 = vld [vmem:[%s6] sm:$0xf]
        %v475 = vld [vmem:[%s6 + $0x4] sm:$0xf]
        %v476 = vld [vmem:[%s6 + $0x8] sm:$0xf]
        %v477 = vld [vmem:[%s6 + $0xc] sm:$0xf]
        %v478 = vld [vmem:[%s6 + $0x10] sm:$0xf]
        %v479 = vld [vmem:[%s6 + $0x14] sm:$0xf]
        %v480 = vld [vmem:[%s6 + $0x18] sm:$0xf]
        %v481 = vld [vmem:[%s6 + $0x1c] sm:$0xf]
        %v482 = vld [vmem:[%s6 + $0x20] sm:$0xf]
        %v483 = vld [vmem:[%s6 + $0x24] sm:$0xf]
        %v484 = vld [vmem:[%s6 + $0x28] sm:$0xf]
        %v485 = vld [vmem:[%s6 + $0x2c] sm:$0xf]
        %v486 = vld [vmem:[%s6 + $0x30] sm:$0xf]
        %v487 = vld [vmem:[%s6 + $0x34] sm:$0xf]
        %v488 = vld [vmem:[%s6 + $0x38] sm:$0xf]
        %v489 = vld [vmem:[%s6 + $0x3c] sm:$0xf]
        %v490 = vld [vmem:[%s7] sm:$0x1]
        %v492 = vlaneseq
        %v493 = vshrl.u32 %v492, 7
        %v494 = vsub.s32 0, %v493
        %v495 = vrot.slane %v490, %v494
        %v513 = vunpack.c.l.b16 %v474
        %v514 = vunpack.c.l.b16 %v475
        %v515 = vunpack.c.l.b16 %v476
        %v516 = vunpack.c.l.b16 %v477
        %v517 = vunpack.c.l.b16 %v478
        %v518 = vunpack.c.l.b16 %v479
        %v519 = vunpack.c.l.b16 %v480
        %v520 = vunpack.c.l.b16 %v481
        %v521 = vunpack.c.l.b16 %v482
        %v522 = vunpack.c.l.b16 %v483
        %v523 = vunpack.c.l.b16 %v484
        %v524 = vunpack.c.l.b16 %v485
        %v525 = vunpack.c.l.b16 %v486
        %v526 = vunpack.c.l.b16 %v487
        %v527 = vunpack.c.l.b16 %v488
        %v528 = vunpack.c.l.b16 %v489
        %v529 = vpack.c.b16 %v514, %v513
        %v530 = vpack.c.b16 %v516, %v515
        %v531 = vpack.c.b16 %v518, %v517
        %v532 = vpack.c.b16 %v520, %v519
        %v533 = vpack.c.b16 %v522, %v521
        %v534 = vpack.c.b16 %v524, %v523
        %v535 = vpack.c.b16 %v526, %v525
        %v536 = vpack.c.b16 %v528, %v527
        %545 = vmatprep.subr.bf16.mxu0 0
        %546 = vmatpush1.bf16.msra.mxu0 %v529
        %547 = vmatprep.subr.bf16.mxu0 0
        %548 = vmatpush1.bf16.msra.mxu0 %v530
        %549 = vmatprep.subr.bf16.mxu0 0
        %550 = vmatpush1.bf16.msra.mxu0 %v531
        %551 = vmatprep.subr.bf16.mxu0 0
        %552 = vmatpush1.bf16.msra.mxu0 %v532
        %553 = vmatprep.subr.bf16.mxu0 0
        %554 = vmatpush1.bf16.msra.mxu0 %v533
        %555 = vmatprep.subr.bf16.mxu0 0
        %556 = vmatpush1.bf16.msra.mxu0 %v534
        %557 = vmatprep.subr.bf16.mxu0 0
        %558 = vmatpush1.bf16.msra.mxu0 %v535
        %559 = vmatprep.subr.bf16.mxu0 0
        %560 = vmatpush1.bf16.msra.mxu0 %v536
        %561 = vmatprep.subr.bf16.mxu0 0
        %562 = vmatpush1.bf16.msra.mxu0 0
        %563 = vmatprep.subr.bf16.mxu0 0
        %564 = vmatpush1.bf16.msra.mxu0 0
        %565 = vmatprep.subr.bf16.mxu0 0
        %566 = vmatpush1.bf16.msra.mxu0 0
        %567 = vmatprep.subr.bf16.mxu0 0
        %568 = vmatpush1.bf16.msra.mxu0 0
        %569 = vmatprep.subr.bf16.mxu0 0
        %570 = vmatpush1.bf16.msra.mxu0 0
        %571 = vmatprep.subr.bf16.mxu0 0
        %572 = vmatpush1.bf16.msra.mxu0 0
        %573 = vmatprep.subr.bf16.mxu0 0
        %574 = vmatpush1.bf16.msra.mxu0 0
        %575 = vmatprep.subr.bf16.mxu0 0
        %576 = vmatpush1.bf16.msra.mxu0 0
        %577 = vmatprep.mubr.bf16.mxu0 0
        %578 = vmatmul.mubr.bf16.gmra.mrb[0].mxu0 %v473
        %v579 = vpop.f32.mrb[0].mxu0
        %v580 = vadd.f32 %v495, %v579
        %v581 = vpop.f32.mrb[0].mxu0
        %v582 = vpop.f32.mrb[0].mxu0
        %v583 = vpop.f32.mrb[0].mxu0
        %584 = vdwg.mxu0
        %v585 = vadd.f32 %v580, %v302
        %v586 = vmax.f32 %v585, 0.0
        %v588 = vrot.slane %v586, 2
        %v590 = vadd.f32 %v586, %v588
        %v591 = vmul.f32 %v590, 0.5
        %592 = vst [vmem:[%s296] sm:$0x3] %v591
        %s593 = sand.u32 %s203, 1
        %s594 = scalar_lea.sflag [#allocation4], %s593
        %s595 = sand.u32 %s203, 1
        %s596 = smul.addr %s595, 2
        %s597 = scalar_lea.vmem [#allocation3], %s596
        // Predicated region
        $region53: #{audionet_forward.17} parent=51 // pred_check
          %p598 = pneg %p213
        $region54: #{audionet_forward.17} parent=51 // pred_check_branch
          %600 = sbr.rel (%p598) target = $region56
        $region55: #{audionet_forward.17} parent=51 // pred_region
          %s602 = ssub.s32 32, 32
          %603 = vsyncadd %s594, %s602
          %s604 = smul.addr %s22, 32
          %s605 = scalar_lea.hbm %s8, %s604
          %s607 = sshll.u32 %s597, 4
          %s608 = int_to_ptr.vmem [resolvable:$true] %s607
          %610 = dma.vmem_to_hbm [thread:$0]  %s608, 32, %s605, %s594
        $region56: #{audionet_forward.17} parent=51 // pred_fallthru
          _
      $region52: #{audionet_forward.17} parent=5 // pred_fallthru
        _
      %p611 = scmp.le.s32.totalorder 2, %s17
      // Predicated region
      $region57: #{audionet_forward.17} parent=5 // pred_check
        %p612 = pneg %p611
      $region58: #{audionet_forward.17} parent=5 // pred_check_branch
        %614 = sbr.rel (%p612) target = $region60
      $region59: #{audionet_forward.17} parent=5 // pred_region
        %s615 = ssub.s32 %s17, 2
        // Predicated region
        $region61: #{audionet_forward.17} parent=59 // pred_check
          %p616 = pneg %p219
        $region62: #{audionet_forward.17} parent=59 // pred_check_branch
          %618 = sbr.rel (%p616) target = $region64
        $region63: #{audionet_forward.17} parent=59 // pred_region
          %s619 = sand.u32 %s204, 1
          %s620 = scalar_lea.sflag [#allocation4], %s619
          %s621 = sand.u32 %s204, 1
          %s622 = smul.addr %s621, 2
          %s623 = scalar_lea.vmem [#allocation3], %s622
          %624 = dma.done %s620, 32
        $region64: #{audionet_forward.17} parent=59 // pred_fallthru
          _
      $region60: #{audionet_forward.17} parent=5 // pred_fallthru
        _
    $region6: #{audionet_forward.17} parent=1 // loop_footer
      %s21 = sadd.s32 1, %s17
    $region7: #{audionet_forward.17} parent=1 // loop_footer_branch
      %16 = sbr.rel target = $region3
    $region8: #{audionet_forward.17} parent=1 // loop_exit
      _
    %625 = vsyncpa [#allocation4], 1
    %s626 = scalar_lea.sflag [#allocation4], 1
    %627 = vsyncpa %s626, 1

// kernel: audionet_forward.14
$region0: #{audionet_forward.14}
  #allocation0 [shape = 'u32[]', space=smem, size = 0x4, offset = 0x4, fixed_abs, tag = 'smem constant byte address 0x4 - core index']
  #allocation1 [shape = 'u32[144,128]{1,0:T(1,128)}', space=vmem, size = 0x12000, scoped, tag = 'internal scratch']
  #allocation2 [shape = 'f32[12,64]{1,0:T(8,128)}', space=vmem, size = 0x2000, scoped, tag = 'scratch operand']
  #allocation3 [shape = 'f32[12,64]{1,0:T(8,128)}', space=vmem, size = 0x2000, scoped, tag = 'scratch operand']
  #allocation4 [shape = 'f32[12,64]{1,0:T(8,128)}', space=vmem, size = 0x2000, scoped, tag = 'scratch operand']
  #allocation5 [shape = 'f32[12,64]{1,0:T(8,128)}', space=vmem, size = 0x2000, scoped, tag = 'scratch operand']
  %s0 = inlined_call_operand.vmem [shape: f32[2,4,32], index: 0, kind: input, shape index: {}]
  %s1 = inlined_call_operand.vmem [shape: f32[2,4,32], index: 1, kind: input, shape index: {}]
  %s2 = inlined_call_operand.vmem [shape: f32[2,4,32], index: 2, kind: input, shape index: {}]
  %s3 = inlined_call_operand.vmem [shape: f32[2,4,32], index: 3, kind: input, shape index: {}]
  %s4 = inlined_call_operand.vmem [shape: f32[9,4,1], index: 4, kind: input, shape index: {}]
  %s5 = inlined_call_operand.vmem [shape: bf16[32,64], index: 5, kind: input, shape index: {}]
  %s6 = inlined_call_operand.vmem [shape: f32[1,64], index: 6, kind: input, shape index: {}]
  %s7 = inlined_call_operand.vmem [shape: f32[9,1,64], index: 7, kind: input, shape index: {}]
  %s8 = inlined_call_operand.vmem [shape: f32[1,64], index: 8, kind: input, shape index: {}]
  %s9 = inlined_call_operand.vmem [shape: bf16[64,64], index: 9, kind: input, shape index: {}]
  %s10 = inlined_call_operand.vmem [shape: f32[1,64], index: 10, kind: input, shape index: {}]
  %s11 = inlined_call_operand.vmem [shape: f32[2,4,64], index: 11, kind: output, shape index: {}]
  %s12 = sld [smem:[#allocation0]]
  $region77: #{audionet_forward.14} parent=0
    _
  %s14 = ssub.s32 1, %s12
  %s15 = scalar_select 0, %s14, %s12
  loop: start=0, step=1, limit=4
  $region2: #{audionet_forward.14} parent=0 // loop_pre_header
    _
  $region3: #{audionet_forward.14} parent=0 // loop_header
    %s17 = sphi 0, %s21
    %p18 = scmp.ge.s32.totalorder %s17, 4
    %s27 = sphi 0, %s29
    %s30 = sphi 0, %s27
    %s31 = sphi 0, %s30
    %s47 = sphi 0, %s31
    %s53 = sphi 0, %s55
    %s56 = sphi 0, %s53
    %s57 = sphi 0, %s56
    %s73 = sphi 0, %s57
    %s79 = sphi 0, %s81
    %s82 = sphi 0, %s79
    %s83 = sphi 0, %s82
    %s99 = sphi 0, %s83
    %s105 = sphi 0, %s107
    %s108 = sphi 0, %s105
    %s109 = sphi 0, %s108
    %s125 = sphi 0, %s109
    %s129 = sphi 0, %s129
    %s131 = sphi 0, %s129
    %s132 = sphi 0, %s131
    %s146 = sphi 0, %s132
    %s150 = sphi 0, %s150
    %s152 = sphi 0, %s150
    %s153 = sphi 0, %s152
    %s167 = sphi 0, %s153
    %s171 = sphi 0, %s171
    %s173 = sphi 0, %s171
    %s174 = sphi 0, %s173
    %s188 = sphi 0, %s174
    %s192 = sphi 0, %s192
    %s194 = sphi 0, %s192
    %s195 = sphi 0, %s194
    %s209 = sphi 0, %s195
    %s213 = sphi 0, %s213
    %s215 = sphi 0, %s213
    %s216 = sphi 0, %s215
    %s230 = sphi 0, %s216
    %s234 = sphi 0, %s234
    %s236 = sphi 0, %s234
    %s237 = sphi 0, %s236
    %s251 = sphi 0, %s237
    %s255 = sphi 0, %s255
    %s257 = sphi 0, %s255
    %s258 = sphi 0, %s257
    %s272 = sphi 0, %s258
    %s278 = sphi 0, %s280
    %s281 = sphi 0, %s278
    %s282 = sphi 0, %s281
    %s298 = sphi 0, %s282
  $region4: #{audionet_forward.14} parent=0 // loop_header_branch
    %20 = sbr.rel (%p18) target = $region8
  $region5: #{audionet_forward.14} parent=0 // loop_body
    %s22 = ssub.s32 %s17, 1
    %s23 = ssub.s32 %s17, 2
    %s24 = sadd.s32 %s17, 1
    %s25 = ssub.s32 %s17, %s24
    %p26 = scmp.eq.s32.totalorder %s25, 0
    %s28 = sadd.s32 %s27, 1
    %s29 = scalar_select %p26, %s27, %s28
    %p32 = pneg %p26
    %p33 = scmp.eq.s32.totalorder %s17, 1
    %p34 = por %p32, %p33
    %p35 = scmp.ne.s32.totalorder %s27, %s30
    %p36 = scmp.eq.s32.totalorder %s17, 0
    %p37 = por %p35, %p36
    %p38 = scmp.ne.s32.totalorder %s27, %s30
    %p39 = scmp.eq.s32.totalorder %s22, 1
    %p40 = por %p38, %p39
    %p41 = scmp.ne.s32.totalorder %s30, %s31
    %p42 = scmp.eq.s32.totalorder %s22, 0
    %p43 = por %p41, %p42
    %p44 = scmp.ne.s32.totalorder %s30, %s31
    %p45 = scmp.eq.s32.totalorder %s23, 1
    %p46 = por %p44, %p45
    %p48 = scmp.ne.s32.totalorder %s31, %s47
    %p49 = scmp.eq.s32.totalorder %s23, 0
    %p50 = por %p48, %p49
    %s51 = ssub.s32 %s17, %s24
    %p52 = scmp.eq.s32.totalorder %s51, 0
    %s54 = sadd.s32 %s53, 1
    %s55 = scalar_select %p52, %s53, %s54
    %p58 = pneg %p52
    %p59 = scmp.eq.s32.totalorder %s17, 1
    %p60 = por %p58, %p59
    %p61 = scmp.ne.s32.totalorder %s53, %s56
    %p62 = scmp.eq.s32.totalorder %s17, 0
    %p63 = por %p61, %p62
    %p64 = scmp.ne.s32.totalorder %s53, %s56
    %p65 = scmp.eq.s32.totalorder %s22, 1
    %p66 = por %p64, %p65
    %p67 = scmp.ne.s32.totalorder %s56, %s57
    %p68 = scmp.eq.s32.totalorder %s22, 0
    %p69 = por %p67, %p68
    %p70 = scmp.ne.s32.totalorder %s56, %s57
    %p71 = scmp.eq.s32.totalorder %s23, 1
    %p72 = por %p70, %p71
    %p74 = scmp.ne.s32.totalorder %s57, %s73
    %p75 = scmp.eq.s32.totalorder %s23, 0
    %p76 = por %p74, %p75
    %s77 = ssub.s32 %s17, %s24
    %p78 = scmp.eq.s32.totalorder %s77, 0
    %s80 = sadd.s32 %s79, 1
    %s81 = scalar_select %p78, %s79, %s80
    %p84 = pneg %p78
    %p85 = scmp.eq.s32.totalorder %s17, 1
    %p86 = por %p84, %p85
    %p87 = scmp.ne.s32.totalorder %s79, %s82
    %p88 = scmp.eq.s32.totalorder %s17, 0
    %p89 = por %p87, %p88
    %p90 = scmp.ne.s32.totalorder %s79, %s82
    %p91 = scmp.eq.s32.totalorder %s22, 1
    %p92 = por %p90, %p91
    %p93 = scmp.ne.s32.totalorder %s82, %s83
    %p94 = scmp.eq.s32.totalorder %s22, 0
    %p95 = por %p93, %p94
    %p96 = scmp.ne.s32.totalorder %s82, %s83
    %p97 = scmp.eq.s32.totalorder %s23, 1
    %p98 = por %p96, %p97
    %p100 = scmp.ne.s32.totalorder %s83, %s99
    %p101 = scmp.eq.s32.totalorder %s23, 0
    %p102 = por %p100, %p101
    %s103 = ssub.s32 %s17, %s24
    %p104 = scmp.eq.s32.totalorder %s103, 0
    %s106 = sadd.s32 %s105, 1
    %s107 = scalar_select %p104, %s105, %s106
    %p110 = pneg %p104
    %p111 = scmp.eq.s32.totalorder %s17, 1
    %p112 = por %p110, %p111
    %p113 = scmp.ne.s32.totalorder %s105, %s108
    %p114 = scmp.eq.s32.totalorder %s17, 0
    %p115 = por %p113, %p114
    %p116 = scmp.ne.s32.totalorder %s105, %s108
    %p117 = scmp.eq.s32.totalorder %s22, 1
    %p118 = por %p116, %p117
    %p119 = scmp.ne.s32.totalorder %s108, %s109
    %p120 = scmp.eq.s32.totalorder %s22, 0
    %p121 = por %p119, %p120
    %p122 = scmp.ne.s32.totalorder %s108, %s109
    %p123 = scmp.eq.s32.totalorder %s23, 1
    %p124 = por %p122, %p123
    %p126 = scmp.ne.s32.totalorder %s109, %s125
    %p127 = scmp.eq.s32.totalorder %s23, 0
    %p128 = por %p126, %p127
    %s130 = sadd.s32 %s129, 1
    %p133 = scmp.eq.s32.totalorder %s17, 1
    %p134 = scmp.ne.s32.totalorder %s129, %s131
    %p135 = scmp.eq.s32.totalorder %s17, 0
    %p136 = por %p134, %p135
    %p137 = scmp.ne.s32.totalorder %s129, %s131
    %p138 = scmp.eq.s32.totalorder %s22, 1
    %p139 = por %p137, %p138
    %p140 = scmp.ne.s32.totalorder %s131, %s132
    %p141 = scmp.eq.s32.totalorder %s22, 0
    %p142 = por %p140, %p141
    %p143 = scmp.ne.s32.totalorder %s131, %s132
    %p144 = scmp.eq.s32.totalorder %s23, 1
    %p145 = por %p143, %p144
    %p147 = scmp.ne.s32.totalorder %s132, %s146
    %p148 = scmp.eq.s32.totalorder %s23, 0
    %p149 = por %p147, %p148
    %s151 = sadd.s32 %s150, 1
    %p154 = scmp.eq.s32.totalorder %s17, 1
    %p155 = scmp.ne.s32.totalorder %s150, %s152
    %p156 = scmp.eq.s32.totalorder %s17, 0
    %p157 = por %p155, %p156
    %p158 = scmp.ne.s32.totalorder %s150, %s152
    %p159 = scmp.eq.s32.totalorder %s22, 1
    %p160 = por %p158, %p159
    %p161 = scmp.ne.s32.totalorder %s152, %s153
    %p162 = scmp.eq.s32.totalorder %s22, 0
    %p163 = por %p161, %p162
    %p164 = scmp.ne.s32.totalorder %s152, %s153
    %p165 = scmp.eq.s32.totalorder %s23, 1
    %p166 = por %p164, %p165
    %p168 = scmp.ne.s32.totalorder %s153, %s167
    %p169 = scmp.eq.s32.totalorder %s23, 0
    %p170 = por %p168, %p169
    %s172 = sadd.s32 %s171, 1
    %p175 = scmp.eq.s32.totalorder %s17, 1
    %p176 = scmp.ne.s32.totalorder %s171, %s173
    %p177 = scmp.eq.s32.totalorder %s17, 0
    %p178 = por %p176, %p177
    %p179 = scmp.ne.s32.totalorder %s171, %s173
    %p180 = scmp.eq.s32.totalorder %s22, 1
    %p181 = por %p179, %p180
    %p182 = scmp.ne.s32.totalorder %s173, %s174
    %p183 = scmp.eq.s32.totalorder %s22, 0
    %p184 = por %p182, %p183
    %p185 = scmp.ne.s32.totalorder %s173, %s174
    %p186 = scmp.eq.s32.totalorder %s23, 1
    %p187 = por %p185, %p186
    %p189 = scmp.ne.s32.totalorder %s174, %s188
    %p190 = scmp.eq.s32.totalorder %s23, 0
    %p191 = por %p189, %p190
    %s193 = sadd.s32 %s192, 1
    %p196 = scmp.eq.s32.totalorder %s17, 1
    %p197 = scmp.ne.s32.totalorder %s192, %s194
    %p198 = scmp.eq.s32.totalorder %s17, 0
    %p199 = por %p197, %p198
    %p200 = scmp.ne.s32.totalorder %s192, %s194
    %p201 = scmp.eq.s32.totalorder %s22, 1
    %p202 = por %p200, %p201
    %p203 = scmp.ne.s32.totalorder %s194, %s195
    %p204 = scmp.eq.s32.totalorder %s22, 0
    %p205 = por %p203, %p204
    %p206 = scmp.ne.s32.totalorder %s194, %s195
    %p207 = scmp.eq.s32.totalorder %s23, 1
    %p208 = por %p206, %p207
    %p210 = scmp.ne.s32.totalorder %s195, %s209
    %p211 = scmp.eq.s32.totalorder %s23, 0
    %p212 = por %p210, %p211
    %s214 = sadd.s32 %s213, 1
    %p217 = scmp.eq.s32.totalorder %s17, 1
    %p218 = scmp.ne.s32.totalorder %s213, %s215
    %p219 = scmp.eq.s32.totalorder %s17, 0
    %p220 = por %p218, %p219
    %p221 = scmp.ne.s32.totalorder %s213, %s215
    %p222 = scmp.eq.s32.totalorder %s22, 1
    %p223 = por %p221, %p222
    %p224 = scmp.ne.s32.totalorder %s215, %s216
    %p225 = scmp.eq.s32.totalorder %s22, 0
    %p226 = por %p224, %p225
    %p227 = scmp.ne.s32.totalorder %s215, %s216
    %p228 = scmp.eq.s32.totalorder %s23, 1
    %p229 = por %p227, %p228
    %p231 = scmp.ne.s32.totalorder %s216, %s230
    %p232 = scmp.eq.s32.totalorder %s23, 0
    %p233 = por %p231, %p232
    %s235 = sadd.s32 %s234, 1
    %p238 = scmp.eq.s32.totalorder %s17, 1
    %p239 = scmp.ne.s32.totalorder %s234, %s236
    %p240 = scmp.eq.s32.totalorder %s17, 0
    %p241 = por %p239, %p240
    %p242 = scmp.ne.s32.totalorder %s234, %s236
    %p243 = scmp.eq.s32.totalorder %s22, 1
    %p244 = por %p242, %p243
    %p245 = scmp.ne.s32.totalorder %s236, %s237
    %p246 = scmp.eq.s32.totalorder %s22, 0
    %p247 = por %p245, %p246
    %p248 = scmp.ne.s32.totalorder %s236, %s237
    %p249 = scmp.eq.s32.totalorder %s23, 1
    %p250 = por %p248, %p249
    %p252 = scmp.ne.s32.totalorder %s237, %s251
    %p253 = scmp.eq.s32.totalorder %s23, 0
    %p254 = por %p252, %p253
    %s256 = sadd.s32 %s255, 1
    %p259 = scmp.eq.s32.totalorder %s17, 1
    %p260 = scmp.ne.s32.totalorder %s255, %s257
    %p261 = scmp.eq.s32.totalorder %s17, 0
    %p262 = por %p260, %p261
    %p263 = scmp.ne.s32.totalorder %s255, %s257
    %p264 = scmp.eq.s32.totalorder %s22, 1
    %p265 = por %p263, %p264
    %p266 = scmp.ne.s32.totalorder %s257, %s258
    %p267 = scmp.eq.s32.totalorder %s22, 0
    %p268 = por %p266, %p267
    %p269 = scmp.ne.s32.totalorder %s257, %s258
    %p270 = scmp.eq.s32.totalorder %s23, 1
    %p271 = por %p269, %p270
    %p273 = scmp.ne.s32.totalorder %s258, %s272
    %p274 = scmp.eq.s32.totalorder %s23, 0
    %p275 = por %p273, %p274
    %s276 = ssub.s32 %s17, %s24
    %p277 = scmp.eq.s32.totalorder %s276, 0
    %s279 = sadd.s32 %s278, 1
    %s280 = scalar_select %p277, %s278, %s279
    %p283 = pneg %p277
    %p284 = scmp.eq.s32.totalorder %s17, 1
    %p285 = por %p283, %p284
    %p286 = scmp.ne.s32.totalorder %s278, %s281
    %p287 = scmp.eq.s32.totalorder %s17, 0
    %p288 = por %p286, %p287
    %p289 = scmp.ne.s32.totalorder %s278, %s281
    %p290 = scmp.eq.s32.totalorder %s22, 1
    %p291 = por %p289, %p290
    %p292 = scmp.ne.s32.totalorder %s281, %s282
    %p293 = scmp.eq.s32.totalorder %s22, 0
    %p294 = por %p292, %p293
    %p295 = scmp.ne.s32.totalorder %s281, %s282
    %p296 = scmp.eq.s32.totalorder %s23, 1
    %p297 = por %p295, %p296
    %p299 = scmp.ne.s32.totalorder %s282, %s298
    %p300 = scmp.eq.s32.totalorder %s23, 0
    %p301 = por %p299, %p300
    %p302 = scmp.le.s32.totalorder 1, %s17
    %p303 = scmp.lt.s32.totalorder %s17, 3
    %p304 = pnand %p302, %p303
    %p305 = pneg %p304
    // Predicated region
    $region9: #{audionet_forward.14} parent=5 // pred_check
      _
    $region10: #{audionet_forward.14} parent=5 // pred_check_branch
      %307 = sbr.rel (%p304) target = $region12
    $region11: #{audionet_forward.14} parent=5 // pred_region
      %s308 = ssub.s32 %s17, 1
      // Predicated region
      $region13: #{audionet_forward.14} parent=11 // pred_check
        %p309 = pneg %p142
      $region14: #{audionet_forward.14} parent=11 // pred_check_branch
        %311 = sbr.rel (%p309) target = $region16
      $region15: #{audionet_forward.14} parent=11 // pred_region
        _
      $region16: #{audionet_forward.14} parent=11 // pred_fallthru
        _
      // Predicated region
      $region17: #{audionet_forward.14} parent=11 // pred_check
        %p312 = pneg %p163
      $region18: #{audionet_forward.14} parent=11 // pred_check_branch
        %314 = sbr.rel (%p312) target = $region20
      $region19: #{audionet_forward.14} parent=11 // pred_region
        _
      $region20: #{audionet_forward.14} parent=11 // pred_fallthru
        _
      // Predicated region
      $region21: #{audionet_forward.14} parent=11 // pred_check
        %p315 = pneg %p184
      $region22: #{audionet_forward.14} parent=11 // pred_check_branch
        %317 = sbr.rel (%p315) target = $region24
      $region23: #{audionet_forward.14} parent=11 // pred_region
        _
      $region24: #{audionet_forward.14} parent=11 // pred_fallthru
        _
      // Predicated region
      $region25: #{audionet_forward.14} parent=11 // pred_check
        %p318 = pneg %p205
      $region26: #{audionet_forward.14} parent=11 // pred_check_branch
        %320 = sbr.rel (%p318) target = $region28
      $region27: #{audionet_forward.14} parent=11 // pred_region
        _
      $region28: #{audionet_forward.14} parent=11 // pred_fallthru
        _
      // Predicated region
      $region29: #{audionet_forward.14} parent=11 // pred_check
        %p321 = pneg %p226
      $region30: #{audionet_forward.14} parent=11 // pred_check_branch
        %323 = sbr.rel (%p321) target = $region32
      $region31: #{audionet_forward.14} parent=11 // pred_region
        _
      $region32: #{audionet_forward.14} parent=11 // pred_fallthru
        _
      // Predicated region
      $region33: #{audionet_forward.14} parent=11 // pred_check
        %p324 = pneg %p247
      $region34: #{audionet_forward.14} parent=11 // pred_check_branch
        %326 = sbr.rel (%p324) target = $region36
      $region35: #{audionet_forward.14} parent=11 // pred_region
        _
      $region36: #{audionet_forward.14} parent=11 // pred_fallthru
        _
      // Predicated region
      $region37: #{audionet_forward.14} parent=11 // pred_check
        %p327 = pneg %p268
      $region38: #{audionet_forward.14} parent=11 // pred_check_branch
        %329 = sbr.rel (%p327) target = $region40
      $region39: #{audionet_forward.14} parent=11 // pred_region
        _
      $region40: #{audionet_forward.14} parent=11 // pred_fallthru
        _
    $region12: #{audionet_forward.14} parent=5 // pred_fallthru
      _
    %p330 = scmp.lt.s32.totalorder %s17, 2
    // Predicated region
    $region41: #{audionet_forward.14} parent=5 // pred_check
      %p331 = pneg %p330
    $region42: #{audionet_forward.14} parent=5 // pred_check_branch
      %333 = sbr.rel (%p331) target = $region44
    $region43: #{audionet_forward.14} parent=5 // pred_region
      // Predicated region
      $region45: #{audionet_forward.14} parent=43 // pred_check
        %p334 = pneg %p37
      $region46: #{audionet_forward.14} parent=43 // pred_check_branch
        %336 = sbr.rel (%p334) target = $region48
      $region47: #{audionet_forward.14} parent=43 // pred_region
        %p337 = scmp.lt.s32.totalorder %s17, 1
        %s338 = scalar_select %p337, %s17, 1
        %s339 = smul.addr %s338, 4
        %s340 = scalar_lea.vmem %s0, %s339
      $region48: #{audionet_forward.14} parent=43 // pred_fallthru
        _
      // Predicated region
      $region49: #{audionet_forward.14} parent=43 // pred_check
        %p341 = pneg %p63
      $region50: #{audionet_forward.14} parent=43 // pred_check_branch
        %343 = sbr.rel (%p341) target = $region52
      $region51: #{audionet_forward.14} parent=43 // pred_region
        %p344 = scmp.lt.s32.totalorder %s17, 1
        %s345 = scalar_select %p344, %s17, 1
        %s346 = smul.addr %s345, 4
        %s347 = scalar_lea.vmem %s1, %s346
      $region52: #{audionet_forward.14} parent=43 // pred_fallthru
        _
      // Predicated region
      $region53: #{audionet_forward.14} parent=43 // pred_check
        %p348 = pneg %p89
      $region54: #{audionet_forward.14} parent=43 // pred_check_branch
        %350 = sbr.rel (%p348) target = $region56
      $region55: #{audionet_forward.14} parent=43 // pred_region
        %p351 = scmp.lt.s32.totalorder %s17, 1
        %s352 = scalar_select %p351, %s17, 1
        %s353 = smul.addr %s352, 4
        %s354 = scalar_lea.vmem %s2, %s353
      $region56: #{audionet_forward.14} parent=43 // pred_fallthru
        _
      // Predicated region
      $region57: #{audionet_forward.14} parent=43 // pred_check
        %p355 = pneg %p115
      $region58: #{audionet_forward.14} parent=43 // pred_check_branch
        %357 = sbr.rel (%p355) target = $region60
      $region59: #{audionet_forward.14} parent=43 // pred_region
        %p358 = scmp.lt.s32.totalorder %s17, 1
        %s359 = scalar_select %p358, %s17, 1
        %s360 = smul.addr %s359, 4
        %s361 = scalar_lea.vmem %s3, %s360
      $region60: #{audionet_forward.14} parent=43 // pred_fallthru
        _
    $region44: #{audionet_forward.14} parent=5 // pred_fallthru
      _
    %p362 = scmp.le.s32.totalorder 1, %s17
    %p363 = scmp.lt.s32.totalorder %s17, 3
    %p364 = pnand %p362, %p363
    %p365 = pneg %p364
    // Predicated region
    $region61: #{audionet_forward.14} parent=5 // pred_check
      _
    $region62: #{audionet_forward.14} parent=5 // pred_check_branch
      %367 = sbr.rel (%p364) target = $region64
    $region63: #{audionet_forward.14} parent=5 // pred_region
      %s368 = ssub.s32 %s17, 1
      %p369 = scmp.lt.s32.totalorder %s22, 1
      %s370 = scalar_select %p369, %s22, 1
      %s371 = smul.addr %s370, 4
      %s372 = scalar_lea.vmem %s0, %s371
      %p373 = pneg %p43
      %p374 = pneg %p40
      %p375 = scmp.lt.s32.totalorder %s22, 1
      %s376 = scalar_select %p375, %s22, 1
      %s377 = smul.addr %s376, 4
      %s378 = scalar_lea.vmem %s1, %s377
      %p379 = pneg %p69
      %p380 = pneg %p66
      %p381 = scmp.lt.s32.totalorder %s22, 1
      %s382 = scalar_select %p381, %s22, 1
      %s383 = smul.addr %s382, 4
      %s384 = scalar_lea.vmem %s2, %s383
      %p385 = pneg %p95
      %p386 = pneg %p92
      %p387 = scmp.lt.s32.totalorder %s22, 1
      %s388 = scalar_select %p387, %s22, 1
      %s389 = smul.addr %s388, 4
      %s390 = scalar_lea.vmem %s3, %s389
      %p391 = pneg %p121
      %p392 = pneg %p118
      %p393 = pneg %p142
      %p394 = pneg %p139
      %p395 = pneg %p163
      %p396 = pneg %p160
      %p397 = pneg %p184
      %p398 = pneg %p181
      %p399 = pneg %p205
      %p400 = pneg %p202
      %p401 = pneg %p226
      %p402 = pneg %p223
      %p403 = pneg %p247
      %p404 = pneg %p244
      %p405 = pneg %p268
      %p406 = pneg %p265
      %p407 = pneg %p294
      %p408 = pneg %p291
      %p409 = scmp.lt.s32.totalorder %s22, 1
      %s410 = scalar_select %p409, %s22, 1
      %s411 = smul.addr %s410, 4
      %s412 = scalar_lea.vmem %s11, %s411
      %p413 = scmp.lt.s32.totalorder %s22, 1
      %s414 = scalar_select %p413, %s22, 1
      %s415 = smul.addr %s414, 4
      %s416 = scalar_lea.vmem %s0, %s415
      %p417 = scmp.lt.s32.totalorder %s22, 1
      %s418 = scalar_select %p417, %s22, 1
      %s419 = smul.addr %s418, 4
      %s420 = scalar_lea.vmem %s1, %s419
      %p421 = scmp.lt.s32.totalorder %s22, 1
      %s422 = scalar_select %p421, %s22, 1
      %s423 = smul.addr %s422, 4
      %s424 = scalar_lea.vmem %s2, %s423
      %p425 = scmp.lt.s32.totalorder %s22, 1
      %s426 = scalar_select %p425, %s22, 1
      %s427 = smul.addr %s426, 4
      %s428 = scalar_lea.vmem %s3, %s427
      %p429 = scmp.lt.s32.totalorder %s22, 1
      %s430 = scalar_select %p429, %s22, 1
      %s431 = smul.addr %s430, 4
      %s432 = scalar_lea.vmem %s11, %s431
      %v434 = vld [vmem:[%s416] sm:$0xf]
      %v435 = vpack.c.bf16 %v434, %v434
      %v436 = vld [vmem:[%s5] sm:$0xf]
      %v437 = vld [vmem:[%s5 + $0x4] sm:$0xf]
      %v438 = vld [vmem:[%s5 + $0x8] sm:$0xf]
      %v439 = vld [vmem:[%s5 + $0xc] sm:$0xf]
      %v440 = vld [vmem:[%s6] sm:$0x1]
      %v442 = vlaneseq
      %v443 = vshrl.u32 %v442, 7
      %v444 = vsub.s32 0, %v443
      %v445 = vrot.slane %v440, %v444
      %v451 = vunpack.c.l.b16 %v436
      %v452 = vunpack.c.l.b16 %v437
      %v453 = vunpack.c.l.b16 %v438
      %v454 = vunpack.c.l.b16 %v439
      %v455 = vpack.c.b16 %v452, %v451
      %v456 = vpack.c.b16 %v454, %v453
      %vm459 = vcmask 261120
      %v461 = vsel %vm459, %v435, 0
      %463 = vmatprep.subr.bf16.mxu0 0
      %464 = vmatpush1.bf16.msra.mxu0 %v455
      %465 = vmatprep.subr.bf16.mxu0 0
      %466 = vmatpush1.bf16.msra.mxu0 %v456
      %467 = vmatprep.subr.bf16.mxu0 0
      %468 = vmatpush1.bf16.msra.mxu0 0
      %469 = vmatprep.subr.bf16.mxu0 0
      %470 = vmatpush1.bf16.msra.mxu0 0
      %471 = vmatprep.subr.bf16.mxu0 0
      %472 = vmatpush1.bf16.msra.mxu0 0
      %473 = vmatprep.subr.bf16.mxu0 0
      %474 = vmatpush1.bf16.msra.mxu0 0
      %475 = vmatprep.subr.bf16.mxu0 0
      %476 = vmatpush1.bf16.msra.mxu0 0
      %477 = vmatprep.subr.bf16.mxu0 0
      %478 = vmatpush1.bf16.msra.mxu0 0
      %479 = vmatprep.subr.bf16.mxu0 0
      %480 = vmatpush1.bf16.msra.mxu0 0
      %481 = vmatprep.subr.bf16.mxu0 0
      %482 = vmatpush1.bf16.msra.mxu0 0
      %483 = vmatprep.subr.bf16.mxu0 0
      %484 = vmatpush1.bf16.msra.mxu0 0
      %485 = vmatprep.subr.bf16.mxu0 0
      %486 = vmatpush1.bf16.msra.mxu0 0
      %487 = vmatprep.subr.bf16.mxu0 0
      %488 = vmatpush1.bf16.msra.mxu0 0
      %489 = vmatprep.subr.bf16.mxu0 0
      %490 = vmatpush1.bf16.msra.mxu0 0
      %491 = vmatprep.subr.bf16.mxu0 0
      %492 = vmatpush1.bf16.msra.mxu0 0
      %493 = vmatprep.subr.bf16.mxu0 0
      %494 = vmatpush1.bf16.msra.mxu0 0
      %495 = vmatprep.mubr.bf16.mxu0 0
      %496 = vmatmul.mubr.bf16.gmra.mrb[0].mxu0 %v461
      %v497 = vpop.f32.mrb[0].mxu0
      %v498 = vadd.f32 %v445, %v497
      %v499 = vpop.f32.mrb[0].mxu0
      %v500 = vpop.f32.mrb[0].mxu0
      %v501 = vpop.f32.mrb[0].mxu0
      %502 = vdwg.mxu0
      %v503 = vmax.f32 %v498, 0.0
      %vm504 = vcmask 523264
      %505 = vst.msk [vmem:[#allocation2] sm:$0xff] %vm504, 0.0
      %vm506 = vcmask 519168
      %507 = vst.msk [vmem:[#allocation2 + $0x8] sm:$0xf] %vm506, 0.0
      %508 = vst.msk [vmem:[#allocation2 + $0x8] sm:$0xf] %vm506, %v503
      %v509 = vld [vmem:[%s420] sm:$0xf]
      %v510 = vpack.c.bf16 %v509, %v509
      %v511 = vld [vmem:[%s5] sm:$0xf]
      %v512 = vld [vmem:[%s5 + $0x4] sm:$0xf]
      %v513 = vld [vmem:[%s5 + $0x8] sm:$0xf]
      %v514 = vld [vmem:[%s5 + $0xc] sm:$0xf]
      %v515 = vld [vmem:[%s6] sm:$0x1]
      %v517 = vlaneseq
      %v518 = vshrl.u32 %v517, 7
      %v519 = vsub.s32 0, %v518
      %v520 = vrot.slane %v515, %v519
      %v526 = vunpack.c.l.b16 %v511
      %v527 = vunpack.c.l.b16 %v512
      %v528 = vunpack.c.l.b16 %v513
      %v529 = vunpack.c.l.b16 %v514
      %v530 = vpack.c.b16 %v527, %v526
      %v531 = vpack.c.b16 %v529, %v528
      %v535 = vsel %vm459, %v510, 0
      %537 = vmatprep.subr.bf16.mxu0 0
      %538 = vmatpush1.bf16.msra.mxu0 %v530
      %539 = vmatprep.subr.bf16.mxu0 0
      %540 = vmatpush1.bf16.msra.mxu0 %v531
      %541 = vmatprep.subr.bf16.mxu0 0
      %542 = vmatpush1.bf16.msra.mxu0 0
      %543 = vmatprep.subr.bf16.mxu0 0
      %544 = vmatpush1.bf16.msra.mxu0 0
      %545 = vmatprep.subr.bf16.mxu0 0
      %546 = vmatpush1.bf16.msra.mxu0 0
      %547 = vmatprep.subr.bf16.mxu0 0
      %548 = vmatpush1.bf16.msra.mxu0 0
      %549 = vmatprep.subr.bf16.mxu0 0
      %550 = vmatpush1.bf16.msra.mxu0 0
      %551 = vmatprep.subr.bf16.mxu0 0
      %552 = vmatpush1.bf16.msra.mxu0 0
      %553 = vmatprep.subr.bf16.mxu0 0
      %554 = vmatpush1.bf16.msra.mxu0 0
      %555 = vmatprep.subr.bf16.mxu0 0
      %556 = vmatpush1.bf16.msra.mxu0 0
      %557 = vmatprep.subr.bf16.mxu0 0
      %558 = vmatpush1.bf16.msra.mxu0 0
      %559 = vmatprep.subr.bf16.mxu0 0
      %560 = vmatpush1.bf16.msra.mxu0 0
      %561 = vmatprep.subr.bf16.mxu0 0
      %562 = vmatpush1.bf16.msra.mxu0 0
      %563 = vmatprep.subr.bf16.mxu0 0
      %564 = vmatpush1.bf16.msra.mxu0 0
      %565 = vmatprep.subr.bf16.mxu0 0
      %566 = vmatpush1.bf16.msra.mxu0 0
      %567 = vmatprep.subr.bf16.mxu0 0
      %568 = vmatpush1.bf16.msra.mxu0 0
      %569 = vmatprep.mubr.bf16.mxu0 0
      %570 = vmatmul.mubr.bf16.gmra.mrb[0].mxu0 %v535
      %v571 = vpop.f32.mrb[0].mxu0
      %v572 = vadd.f32 %v520, %v571
      %v573 = vpop.f32.mrb[0].mxu0
      %v574 = vpop.f32.mrb[0].mxu0
      %v575 = vpop.f32.mrb[0].mxu0
      %576 = vdwg.mxu0
      %v577 = vmax.f32 %v572, 0.0
      %578 = vst.msk [vmem:[#allocation3] sm:$0xff] %vm504, 0.0
      %579 = vst.msk [vmem:[#allocation3 + $0x8] sm:$0xf] %vm506, 0.0
      %580 = vst.msk [vmem:[#allocation3 + $0x8] sm:$0xf] %vm506, %v577
      %v581 = vld [vmem:[%s424] sm:$0xf]
      %v582 = vpack.c.bf16 %v581, %v581
      %v583 = vld [vmem:[%s5] sm:$0xf]
      %v584 = vld [vmem:[%s5 + $0x4] sm:$0xf]
      %v585 = vld [vmem:[%s5 + $0x8] sm:$0xf]
      %v586 = vld [vmem:[%s5 + $0xc] sm:$0xf]
      %v587 = vld [vmem:[%s6] sm:$0x1]
      %v589 = vlaneseq
      %v590 = vshrl.u32 %v589, 7
      %v591 = vsub.s32 0, %v590
      %v592 = vrot.slane %v587, %v591
      %v598 = vunpack.c.l.b16 %v583
      %v599 = vunpack.c.l.b16 %v584
      %v600 = vunpack.c.l.b16 %v585
      %v601 = vunpack.c.l.b16 %v586
      %v602 = vpack.c.b16 %v599, %v598
      %v603 = vpack.c.b16 %v601, %v600
      %v607 = vsel %vm459, %v582, 0
      %609 = vmatprep.subr.bf16.mxu0 0
      %610 = vmatpush1.bf16.msra.mxu0 %v602
      %611 = vmatprep.subr.bf16.mxu0 0
      %612 = vmatpush1.bf16.msra.mxu0 %v603
      %613 = vmatprep.subr.bf16.mxu0 0
      %614 = vmatpush1.bf16.msra.mxu0 0
      %615 = vmatprep.subr.bf16.mxu0 0
      %616 = vmatpush1.bf16.msra.mxu0 0
      %617 = vmatprep.subr.bf16.mxu0 0
      %618 = vmatpush1.bf16.msra.mxu0 0
      %619 = vmatprep.subr.bf16.mxu0 0
      %620 = vmatpush1.bf16.msra.mxu0 0
      %621 = vmatprep.subr.bf16.mxu0 0
      %622 = vmatpush1.bf16.msra.mxu0 0
      %623 = vmatprep.subr.bf16.mxu0 0
      %624 = vmatpush1.bf16.msra.mxu0 0
      %625 = vmatprep.subr.bf16.mxu0 0
      %626 = vmatpush1.bf16.msra.mxu0 0
      %627 = vmatprep.subr.bf16.mxu0 0
      %628 = vmatpush1.bf16.msra.mxu0 0
      %629 = vmatprep.subr.bf16.mxu0 0
      %630 = vmatpush1.bf16.msra.mxu0 0
      %631 = vmatprep.subr.bf16.mxu0 0
      %632 = vmatpush1.bf16.msra.mxu0 0
      %633 = vmatprep.subr.bf16.mxu0 0
      %634 = vmatpush1.bf16.msra.mxu0 0
      %635 = vmatprep.subr.bf16.mxu0 0
      %636 = vmatpush1.bf16.msra.mxu0 0
      %637 = vmatprep.subr.bf16.mxu0 0
      %638 = vmatpush1.bf16.msra.mxu0 0
      %639 = vmatprep.subr.bf16.mxu0 0
      %640 = vmatpush1.bf16.msra.mxu0 0
      %641 = vmatprep.mubr.bf16.mxu0 0
      %642 = vmatmul.mubr.bf16.gmra.mrb[0].mxu0 %v607
      %v643 = vpop.f32.mrb[0].mxu0
      %v644 = vadd.f32 %v592, %v643
      %v645 = vpop.f32.mrb[0].mxu0
      %v646 = vpop.f32.mrb[0].mxu0
      %v647 = vpop.f32.mrb[0].mxu0
      %648 = vdwg.mxu0
      %v649 = vmax.f32 %v644, 0.0
      %650 = vst.msk [vmem:[#allocation4] sm:$0xff] %vm504, 0.0
      %651 = vst.msk [vmem:[#allocation4 + $0x8] sm:$0xf] %vm506, 0.0
      %652 = vst.msk [vmem:[#allocation4 + $0x8] sm:$0xf] %vm506, %v649
      %v653 = vld [vmem:[%s428] sm:$0xf]
      %v654 = vpack.c.bf16 %v653, %v653
      %v655 = vld [vmem:[%s5] sm:$0xf]
      %v656 = vld [vmem:[%s5 + $0x4] sm:$0xf]
      %v657 = vld [vmem:[%s5 + $0x8] sm:$0xf]
      %v658 = vld [vmem:[%s5 + $0xc] sm:$0xf]
      %v659 = vld [vmem:[%s6] sm:$0x1]
      %v661 = vlaneseq
      %v662 = vshrl.u32 %v661, 7
      %v663 = vsub.s32 0, %v662
      %v664 = vrot.slane %v659, %v663
      %v670 = vunpack.c.l.b16 %v655
      %v671 = vunpack.c.l.b16 %v656
      %v672 = vunpack.c.l.b16 %v657
      %v673 = vunpack.c.l.b16 %v658
      %v674 = vpack.c.b16 %v671, %v670
      %v675 = vpack.c.b16 %v673, %v672
      %v679 = vsel %vm459, %v654, 0
      %681 = vmatprep.subr.bf16.mxu0 0
      %682 = vmatpush1.bf16.msra.mxu0 %v674
      %683 = vmatprep.subr.bf16.mxu0 0
      %684 = vmatpush1.bf16.msra.mxu0 %v675
      %685 = vmatprep.subr.bf16.mxu0 0
      %686 = vmatpush1.bf16.msra.mxu0 0
      %687 = vmatprep.subr.bf16.mxu0 0
      %688 = vmatpush1.bf16.msra.mxu0 0
      %689 = vmatprep.subr.bf16.mxu0 0
      %690 = vmatpush1.bf16.msra.mxu0 0
      %691 = vmatprep.subr.bf16.mxu0 0
      %692 = vmatpush1.bf16.msra.mxu0 0
      %693 = vmatprep.subr.bf16.mxu0 0
      %694 = vmatpush1.bf16.msra.mxu0 0
      %695 = vmatprep.subr.bf16.mxu0 0
      %696 = vmatpush1.bf16.msra.mxu0 0
      %697 = vmatprep.subr.bf16.mxu0 0
      %698 = vmatpush1.bf16.msra.mxu0 0
      %699 = vmatprep.subr.bf16.mxu0 0
      %700 = vmatpush1.bf16.msra.mxu0 0
      %701 = vmatprep.subr.bf16.mxu0 0
      %702 = vmatpush1.bf16.msra.mxu0 0
      %703 = vmatprep.subr.bf16.mxu0 0
      %704 = vmatpush1.bf16.msra.mxu0 0
      %705 = vmatprep.subr.bf16.mxu0 0
      %706 = vmatpush1.bf16.msra.mxu0 0
      %707 = vmatprep.subr.bf16.mxu0 0
      %708 = vmatpush1.bf16.msra.mxu0 0
      %709 = vmatprep.subr.bf16.mxu0 0
      %710 = vmatpush1.bf16.msra.mxu0 0
      %711 = vmatprep.subr.bf16.mxu0 0
      %712 = vmatpush1.bf16.msra.mxu0 0
      %713 = vmatprep.mubr.bf16.mxu0 0
      %714 = vmatmul.mubr.bf16.gmra.mrb[0].mxu0 %v679
      %v715 = vpop.f32.mrb[0].mxu0
      %v716 = vadd.f32 %v664, %v715
      %v717 = vpop.f32.mrb[0].mxu0
      %v718 = vpop.f32.mrb[0].mxu0
      %v719 = vpop.f32.mrb[0].mxu0
      %720 = vdwg.mxu0
      %v721 = vmax.f32 %v716, 0.0
      %722 = vst.msk [vmem:[#allocation5] sm:$0xff] %vm504, 0.0
      %723 = vst.msk [vmem:[#allocation5 + $0x8] sm:$0xf] %vm506, 0.0
      %724 = vst.msk [vmem:[#allocation5 + $0x8] sm:$0xf] %vm506, %v721
      %v725 = vld [vmem:[#allocation5 + $0x5] sm:$0xf]
      %v726 = vld [vmem:[%s7] sm:$0x1]
      %v728 = vlaneseq
      %v729 = vshrl.u32 %v728, 7
      %v730 = vsub.s32 0, %v729
      %v731 = vrot.slane %v726, %v730
      %v733 = vmul.f32 %v725, %v731
      %v734 = vld [vmem:[%s4] sm:$0xf]
      %736 = vset.pattern.permute.xlu0 0
      %737 = vperm.xlu0 %736, %v734
      %v738 = vpop.permute.xlu0 %737
      %v740 = vmul.f32 %v733, %v738
      %v741 = vld [vmem:[#allocation4 + $0x6] sm:$0xf]
      %s742 = scalar_lea.vmem %s7, 1
      %v743 = vld [vmem:[%s742] sm:$0x1]
      %v745 = vlaneseq
      %v746 = vshrl.u32 %v745, 7
      %v747 = vsub.s32 0, %v746
      %v748 = vrot.slane %v743, %v747
      %v750 = vmul.f32 %v741, %v748
      %s751 = scalar_lea.vmem %s4, 4
      %v752 = vld [vmem:[%s751] sm:$0xf]
      %754 = vset.pattern.permute.xlu0 0
      %755 = vperm.xlu0 %754, %v752
      %v756 = vpop.permute.xlu0 %755
      %v758 = vmul.f32 %v750, %v756
      %v759 = vld [vmem:[#allocation5 + $0x6] sm:$0xf]
      %s760 = scalar_lea.vmem %s7, 2
      %v761 = vld [vmem:[%s760] sm:$0x1]
      %v763 = vlaneseq
      %v764 = vshrl.u32 %v763, 7
      %v765 = vsub.s32 0, %v764
      %v766 = vrot.slane %v761, %v765
      %v768 = vmul.f32 %v759, %v766
      %s769 = scalar_lea.vmem %s4, 8
      %v770 = vld [vmem:[%s769] sm:$0xf]
      %772 = vset.pattern.permute.xlu0 0
      %773 = vperm.xlu0 %772, %v770
      %v774 = vpop.permute.xlu0 %773
      %v776 = vmul.f32 %v768, %v774
      %v777 = vld [vmem:[#allocation3 + $0x7] sm:$0xf]
      %s778 = scalar_lea.vmem %s7, 3
      %v779 = vld [vmem:[%s778] sm:$0x1]
      %v781 = vlaneseq
      %v782 = vshrl.u32 %v781, 7
      %v783 = vsub.s32 0, %v782
      %v784 = vrot.slane %v779, %v783
      %v786 = vmul.f32 %v777, %v784
      %s787 = scalar_lea.vmem %s4, 12
      %v788 = vld [vmem:[%s787] sm:$0xf]
      %790 = vset.pattern.permute.xlu0 0
      %791 = vperm.xlu0 %790, %v788
      %v792 = vpop.permute.xlu0 %791
      %v794 = vmul.f32 %v786, %v792
      %v795 = vld [vmem:[#allocation2 + $0x8] sm:$0xf]
      %s796 = scalar_lea.vmem %s7, 4
      %v797 = vld [vmem:[%s796] sm:$0x1]
      %v799 = vlaneseq
      %v800 = vshrl.u32 %v799, 7
      %v801 = vsub.s32 0, %v800
      %v802 = vrot.slane %v797, %v801
      %v804 = vmul.f32 %v795, %v802
      %v805 = vld [vmem:[#allocation3 + $0x8] sm:$0xf]
      %s806 = scalar_lea.vmem %s7, 5
      %v807 = vld [vmem:[%s806] sm:$0x1]
      %v809 = vlaneseq
      %v810 = vshrl.u32 %v809, 7
      %v811 = vsub.s32 0, %v810
      %v812 = vrot.slane %v807, %v811
      %v814 = vmul.f32 %v805, %v812
      %s815 = scalar_lea.vmem %s4, 20
      %v816 = vld [vmem:[%s815] sm:$0xf]
      %818 = vset.pattern.permute.xlu0 0
      %819 = vperm.xlu0 %818, %v816
      %v820 = vpop.permute.xlu0 %819
      %v822 = vmul.f32 %v814, %v820
      %v823 = vld [vmem:[#allocation5 + $0x7] sm:$0xf]
      %s824 = scalar_lea.vmem %s7, 6
      %v825 = vld [vmem:[%s824] sm:$0x1]
      %v827 = vlaneseq
      %v828 = vshrl.u32 %v827, 7
      %v829 = vsub.s32 0, %v828
      %v830 = vrot.slane %v825, %v829
      %v832 = vmul.f32 %v823, %v830
      %s833 = scalar_lea.vmem %s4, 24
      %v834 = vld [vmem:[%s833] sm:$0xf]
      %836 = vset.pattern.permute.xlu0 0
      %837 = vperm.xlu0 %836, %v834
      %v838 = vpop.permute.xlu0 %837
      %v840 = vmul.f32 %v832, %v838
      %v841 = vld [vmem:[#allocation4 + $0x8] sm:$0xf]
      %s842 = scalar_lea.vmem %s7, 7
      %v843 = vld [vmem:[%s842] sm:$0x1]
      %v845 = vlaneseq
      %v846 = vshrl.u32 %v845, 7
      %v847 = vsub.s32 0, %v846
      %v848 = vrot.slane %v843, %v847
      %v850 = vmul.f32 %v841, %v848
      %s851 = scalar_lea.vmem %s4, 28
      %v852 = vld [vmem:[%s851] sm:$0xf]
      %854 = vset.pattern.permute.xlu0 0
      %855 = vperm.xlu0 %854, %v852
      %v856 = vpop.permute.xlu0 %855
      %v858 = vmul.f32 %v850, %v856
      %v859 = vld [vmem:[#allocation5 + $0x8] sm:$0xf]
      %s860 = scalar_lea.vmem %s7, 8
      %v861 = vld [vmem:[%s860] sm:$0x1]
      %v863 = vlaneseq
      %v864 = vshrl.u32 %v863, 7
      %v865 = vsub.s32 0, %v864
      %v866 = vrot.slane %v861, %v865
      %v868 = vmul.f32 %v859, %v866
      %s869 = scalar_lea.vmem %s4, 32
      %v870 = vld [vmem:[%s869] sm:$0xf]
      %872 = vset.pattern.permute.xlu0 0
      %873 = vperm.xlu0 %872, %v870
      %v874 = vpop.permute.xlu0 %873
      %v876 = vmul.f32 %v868, %v874
      %v877 = vadd.f32 %v740, %v758
      %v878 = vadd.f32 %v877, %v776
      %v879 = vadd.f32 %v794, %v804
      %v880 = vadd.f32 %v879, %v822
      %v881 = vadd.f32 %v878, %v880
      %v882 = vadd.f32 %v840, %v858
      %v883 = vadd.f32 %v882, %v876
      %v884 = vadd.f32 %v881, %v883
      %v885 = vld [vmem:[%s8] sm:$0x1]
      %v887 = vlaneseq
      %v888 = vshrl.u32 %v887, 7
      %v889 = vsub.s32 0, %v888
      %v890 = vrot.slane %v885, %v889
      %v892 = vadd.f32 %v884, %v890
      %v893 = vmax.f32 %v892, 0.0
      %v894 = vpack.c.bf16 %v893, %v893
      %v895 = vld [vmem:[%s9] sm:$0xf]
      %v896 = vld [vmem:[%s9 + $0x4] sm:$0xf]
      %v897 = vld [vmem:[%s9 + $0x8] sm:$0xf]
      %v898 = vld [vmem:[%s9 + $0xc] sm:$0xf]
      %v899 = vld [vmem:[%s9 + $0x10] sm:$0xf]
      %v900 = vld [vmem:[%s9 + $0x14] sm:$0xf]
      %v901 = vld [vmem:[%s9 + $0x18] sm:$0xf]
      %v902 = vld [vmem:[%s9 + $0x1c] sm:$0xf]
      %v903 = vld [vmem:[%s10] sm:$0x1]
      %v905 = vlaneseq
      %v906 = vshrl.u32 %v905, 7
      %v907 = vsub.s32 0, %v906
      %v908 = vrot.slane %v903, %v907
      %v918 = vunpack.c.l.b16 %v895
      %v919 = vunpack.c.l.b16 %v896
      %v920 = vunpack.c.l.b16 %v897
      %v921 = vunpack.c.l.b16 %v898
      %v922 = vunpack.c.l.b16 %v899
      %v923 = vunpack.c.l.b16 %v900
      %v924 = vunpack.c.l.b16 %v901
      %v925 = vunpack.c.l.b16 %v902
      %v926 = vpack.c.b16 %v919, %v918
      %v927 = vpack.c.b16 %v921, %v920
      %v928 = vpack.c.b16 %v923, %v922
      %v929 = vpack.c.b16 %v925, %v924
      %v935 = vsel %vm504, %v894, 0
      %937 = vmatprep.subr.bf16.mxu0 0
      %938 = vmatpush1.bf16.msra.mxu0 %v926
      %939 = vmatprep.subr.bf16.mxu0 0
      %940 = vmatpush1.bf16.msra.mxu0 %v927
      %941 = vmatprep.subr.bf16.mxu0 0
      %942 = vmatpush1.bf16.msra.mxu0 %v928
      %943 = vmatprep.subr.bf16.mxu0 0
      %944 = vmatpush1.bf16.msra.mxu0 %v929
      %945 = vmatprep.subr.bf16.mxu0 0
      %946 = vmatpush1.bf16.msra.mxu0 0
      %947 = vmatprep.subr.bf16.mxu0 0
      %948 = vmatpush1.bf16.msra.mxu0 0
      %949 = vmatprep.subr.bf16.mxu0 0
      %950 = vmatpush1.bf16.msra.mxu0 0
      %951 = vmatprep.subr.bf16.mxu0 0
      %952 = vmatpush1.bf16.msra.mxu0 0
      %953 = vmatprep.subr.bf16.mxu0 0
      %954 = vmatpush1.bf16.msra.mxu0 0
      %955 = vmatprep.subr.bf16.mxu0 0
      %956 = vmatpush1.bf16.msra.mxu0 0
      %957 = vmatprep.subr.bf16.mxu0 0
      %958 = vmatpush1.bf16.msra.mxu0 0
      %959 = vmatprep.subr.bf16.mxu0 0
      %960 = vmatpush1.bf16.msra.mxu0 0
      %961 = vmatprep.subr.bf16.mxu0 0
      %962 = vmatpush1.bf16.msra.mxu0 0
      %963 = vmatprep.subr.bf16.mxu0 0
      %964 = vmatpush1.bf16.msra.mxu0 0
      %965 = vmatprep.subr.bf16.mxu0 0
      %966 = vmatpush1.bf16.msra.mxu0 0
      %967 = vmatprep.subr.bf16.mxu0 0
      %968 = vmatpush1.bf16.msra.mxu0 0
      %969 = vmatprep.mubr.bf16.mxu0 0
      %970 = vmatmul.mubr.bf16.gmra.mrb[0].mxu0 %v935
      %v971 = vpop.f32.mrb[0].mxu0
      %v972 = vadd.f32 %v908, %v971
      %v973 = vpop.f32.mrb[0].mxu0
      %v974 = vpop.f32.mrb[0].mxu0
      %v975 = vpop.f32.mrb[0].mxu0
      %976 = vdwg.mxu0
      %977 = vst.msk [vmem:[%s432] sm:$0xf] %vm506, %v972
      %p978 = scmp.lt.s32.totalorder %s22, 1
      %s979 = scalar_select %p978, %s22, 1
      %s980 = smul.addr %s979, 4
      %s981 = scalar_lea.vmem %s11, %s980
      // Predicated region
      $region65: #{audionet_forward.14} parent=63 // pred_check
        %p982 = pneg %p291
      $region66: #{audionet_forward.14} parent=63 // pred_check_branch
        %984 = sbr.rel (%p982) target = $region68
      $region67: #{audionet_forward.14} parent=63 // pred_region
        _
      $region68: #{audionet_forward.14} parent=63 // pred_fallthru
        _
    $region64: #{audionet_forward.14} parent=5 // pred_fallthru
      _
    %p985 = scmp.le.s32.totalorder 2, %s17
    // Predicated region
    $region69: #{audionet_forward.14} parent=5 // pred_check
      %p986 = pneg %p985
    $region70: #{audionet_forward.14} parent=5 // pred_check_branch
      %988 = sbr.rel (%p986) target = $region72
    $region71: #{audionet_forward.14} parent=5 // pred_region
      %s989 = ssub.s32 %s17, 2
      // Predicated region
      $region73: #{audionet_forward.14} parent=71 // pred_check
        %p990 = pneg %p297
      $region74: #{audionet_forward.14} parent=71 // pred_check_branch
        %992 = sbr.rel (%p990) target = $region76
      $region75: #{audionet_forward.14} parent=71 // pred_region
        %p993 = scmp.lt.s32.totalorder %s23, 1
        %s994 = scalar_select %p993, %s23, 1
        %s995 = smul.addr %s994, 4
        %s996 = scalar_lea.vmem %s11, %s995
      $region76: #{audionet_forward.14} parent=71 // pred_fallthru
        _
    $region72: #{audionet_forward.14} parent=5 // pred_fallthru
      _
  $region6: #{audionet_forward.14} parent=0 // loop_footer
    %s21 = sadd.s32 1, %s17
  $region7: #{audionet_forward.14} parent=0 // loop_footer_branch
    %16 = sbr.rel target = $region3
  $region8: #{audionet_forward.14} parent=0 // loop_exit
    _

</llo_original>
